<compile_context>
chip_gen: v7x
topology: tpu7x:2x2x1
jax: 0.10.0
libtpu: 0.0.40
codegen_flags: <defaults>
</compile_context>

<pallas_src>
import functools

import jax
import jax.numpy as jnp
from jax.experimental import pallas as pl
from jax.experimental.pallas import tpu as pltpu


GRU_HIDDEN = 128


# ----------------------------------------------------------------------------
# Chip dispatch: single-TensorCore chips get the fused 2-layer GRU+FC kernel.
# ----------------------------------------------------------------------------
def _use_fused_gru():
    """True on chips exposing one TensorCore per Pallas device (v2/v3/v5e/v6e):
    there a direction-parallel grid runs sequentially anyway, so one fused kernel
    (fewer launches, inter-layer activations resident in VMEM) wins.  On v7x /
    v4 / v5p (2 TensorCores per device) keep the grid=(2,) parallel kernels."""
    try:
        kind = (jax.devices()[0].device_kind or "").lower()
    except Exception:
        return False
    if any(t in kind for t in ("v4", "v5p", "7x", "v7")):
        return False
    return any(t in kind for t in
               ("v2", "v3", "v5e", "v5 lite", "v5lite", "v6e", "v6 lite", "v6lite"))


# ----------------------------------------------------------------------------
# Fused Conv(im2col matmul) + InstanceNorm2d + LeakyReLU(0.01), grid over batch
# ----------------------------------------------------------------------------
def _conv_in_lrelu_kernel(p_ref, w_ref, b_ref, o_ref):
    x = p_ref[0]                                                   # (Ho*Wo, K) bf16
    y = jnp.dot(x, w_ref[...], preferred_element_type=jnp.float32) + b_ref[...]
    # InstanceNorm2d: per-(n, c) stats over H*W (biased variance, eps=1e-5), no affine.
    mean = jnp.mean(y, axis=0, keepdims=True)
    var = jnp.mean(jnp.square(y - mean), axis=0, keepdims=True)
    yn = (y - mean) * jax.lax.rsqrt(var + 1e-5)
    o_ref[0] = jnp.where(yn >= 0, yn, 0.01 * yn)                   # LeakyReLU(0.01)


def _im2col_nhwc(x, kh, kw, stride):
    # x: (N, H, W, C) -> (N, Ho*Wo, kh*kw*C)   (XLA glue, fused with the bf16 cast)
    N, H, W, C = x.shape
    Ho = (H - kh) // stride + 1
    Wo = (W - kw) // stride + 1
    cols = []
    for i in range(kh):
        for j in range(kw):
            cols.append(x[:, i:i + stride * Ho:stride, j:j + stride * Wo:stride, :])
    p = jnp.stack(cols, axis=3)                                    # (N, Ho, Wo, kh*kw, C)
    return p.reshape(N, Ho * Wo, kh * kw * C), Ho, Wo


def conv_in_lrelu(x, w_mat, b, kh, kw, stride):
    """x: (N, H, W, C_in) f32; w_mat: (kh*kw*C_in, C_out) bf16; b: (1, C_out) f32.
    Returns (N, Ho, Wo, C_out) f32 (conv -> InstanceNorm -> LeakyReLU)."""
    N = x.shape[0]
    cout = w_mat.shape[1]
    p, Ho, Wo = _im2col_nhwc(x.astype(jnp.bfloat16), kh, kw, stride)
    K = p.shape[-1]
    out = pl.pallas_call(
        _conv_in_lrelu_kernel,
        out_shape=jax.ShapeDtypeStruct((N, Ho * Wo, cout), jnp.float32),
        grid=(N,),
        in_specs=[
            pl.BlockSpec((1, Ho * Wo, K), lambda n: (n, 0, 0)),
            pl.BlockSpec((K, cout), lambda n: (0, 0)),
            pl.BlockSpec((1, cout), lambda n: (0, 0)),
        ],
        out_specs=pl.BlockSpec((1, Ho * Wo, cout), lambda n: (n, 0, 0)),
        compiler_params=pltpu.CompilerParams(dimension_semantics=("parallel",)),
    )(p, w_mat, b)
    return out.reshape(N, Ho, Wo, cout)


# ----------------------------------------------------------------------------
# Path A (v7x / megacore): per-layer bidirectional GRU, grid=(2,) over direction
# ----------------------------------------------------------------------------
def _gru_bidir_kernel(x_ref, wih_ref, bih_ref, whh_ref, bhh_ref, o_ref, gx_ref):
    # grid axis 0 = direction (0 forward, 1 backward / time-reversed)
    # x_ref  : (T*N, D)    f32  time-major input, flattened (shared by both dirs)
    # wih_ref: (1, D, 3H)  bf16 this direction's W_ih^T   (gate order r|z|n)
    # bih_ref: (1, 1, 3H)  f32
    # whh_ref: (1, H, 3H)  bf16 this direction's W_hh^T
    # bhh_ref: (1, 1, 3H)  f32
    # o_ref  : (T, N, H)   f32  this direction's lane-half of the (T, N, 2H) output
    # gx_ref : (T, N, 3H)  f32  VMEM scratch: hoisted input-gate preactivations
    T, N, H = o_ref.shape
    d = pl.program_id(0)

    # Hoisted input projection: one (T*N, D) @ (D, 3H) matmul instead of T small ones.
    gx = jnp.dot(x_ref[...].astype(jnp.bfloat16), wih_ref[0],
                 preferred_element_type=jnp.float32) + bih_ref[0]
    for t in range(T):                                   # static re-layout into (T, N, 3H)
        gx_ref[t] = gx[t * N:(t + 1) * N, :]

    whh = whh_ref[0]                                     # (H, 3H) bf16, hoisted loads
    bhh = bhh_ref[0]                                     # (1, 3H) f32

    def step(i, h):
        t = jnp.where(d == 0, i, T - 1 - i)              # backward walks reversed time
        gxt = gx_ref[t]                                  # (N, 3H) f32
        gh = jnp.dot(h.astype(jnp.bfloat16), whh,
                     preferred_element_type=jnp.float32) + bhh
        r = jax.nn.sigmoid(gxt[:, :H] + gh[:, :H])
        z = jax.nn.sigmoid(gxt[:, H:2 * H] + gh[:, H:2 * H])
        n = jnp.tanh(gxt[:, 2 * H:] + r * gh[:, 2 * H:])
        h_new = (1.0 - z) * n + z * h
        o_ref[t] = h_new
        return h_new

    jax.lax.fori_loop(0, T, step, jnp.zeros((N, H), jnp.float32), unroll=True)


def gru_bidir_layer(x_tm, lp):
    """x_tm: (T, N, D) time-major -> (T, N, 2H). Matches nn.GRU(bidirectional=True), h0=0."""
    T, N, D = x_tm.shape
    H = GRU_HIDDEN
    return pl.pallas_call(
        _gru_bidir_kernel,
        out_shape=jax.ShapeDtypeStruct((T, N, 2 * H), jnp.float32),
        grid=(2,),
        in_specs=[
            pl.BlockSpec((T * N, D), lambda d: (0, 0)),
            pl.BlockSpec((1, D, 3 * H), lambda d: (d, 0, 0)),
            pl.BlockSpec((1, 1, 3 * H), lambda d: (d, 0, 0)),
            pl.BlockSpec((1, H, 3 * H), lambda d: (d, 0, 0)),
            pl.BlockSpec((1, 1, 3 * H), lambda d: (d, 0, 0)),
        ],
        out_specs=pl.BlockSpec((T, N, H), lambda d: (0, 0, d)),   # fwd -> [:H], bwd -> [H:]
        scratch_shapes=[pltpu.VMEM((T, N, 3 * H), jnp.float32)],
        compiler_params=pltpu.CompilerParams(dimension_semantics=("parallel",)),
    )(x_tm.reshape(T * N, D), lp['w_ih'], lp['b_ih'], lp['w_hh'], lp['b_hh'])


# ----------------------------------------------------------------------------
# Fused FC + log_softmax (padded, lane-dense classes), M-tiled grid  (Path A tail)
# ----------------------------------------------------------------------------
def _fc_logsoftmax_kernel(x_ref, w_ref, b_ref, o_ref):
    logits = (jnp.dot(x_ref[...].astype(jnp.bfloat16), w_ref[...],
                      preferred_element_type=jnp.float32) + b_ref[...])
    m = jnp.max(logits, axis=-1, keepdims=True)
    s = logits - m
    lse = jnp.log(jnp.sum(jnp.exp(s), axis=-1, keepdims=True))
    o_ref[...] = s - lse


def fc_logsoftmax(x, w_mat, b, tm=512):
    """x: (M, K) f32; w_mat: (K, C_pad) bf16 (zero-padded cols); b: (1, C_pad) f32
    (-1e30 on pad classes).  Returns (M, C_pad) log_softmax (pad cols sliced outside)."""
    M, K = x.shape
    ncp = w_mat.shape[1]
    tm = min(tm, M)
    return pl.pallas_call(
        _fc_logsoftmax_kernel,
        out_shape=jax.ShapeDtypeStruct((M, ncp), jnp.float32),
        grid=(pl.cdiv(M, tm),),
        in_specs=[
            pl.BlockSpec((tm, K), lambda i: (i, 0)),
            pl.BlockSpec((K, ncp), lambda i: (0, 0)),
            pl.BlockSpec((1, ncp), lambda i: (0, 0)),
        ],
        out_specs=pl.BlockSpec((tm, ncp), lambda i: (i, 0)),
        compiler_params=pltpu.CompilerParams(dimension_semantics=("parallel",)),
    )(x, w_mat, b)


# ----------------------------------------------------------------------------
# Path B (single-TC chips): 2-layer bidirectional GRU + FC + log_softmax, ONE call
# ----------------------------------------------------------------------------
def _make_gru2_fc_kernel(T, N, H):
    def kernel(x_ref,
               wih0_ref, bih0_ref, whh0_ref, bhh0_ref,
               wih1_ref, bih1_ref, whh1_ref, bhh1_ref,
               fcw_ref, fcb_ref,
               o_ref,
               a0_ref, a1_ref):
        # x_ref : (T*N, D0) f32      o_ref : (T*N, C_pad) f32 (lane-dense log_softmax)
        # a0_ref/a1_ref: (T*N, 2H) f32 VMEM scratches -- layer outputs never hit HBM.
        # All indices below are static (Python-unrolled time loop, static directions).

        def run_layer(x_val, wih_r, bih_r, whh_r, bhh_r, out_ref):
            for d, reverse in ((0, False), (1, True)):
                wih = wih_r[d]                                    # (D, 3H) bf16
                bih = bih_r[d]                                    # (1, 3H) f32
                whh = whh_r[d]                                    # (H, 3H) bf16
                bhh = bhh_r[d]                                    # (1, 3H) f32
                # Hoisted input projection for the whole sequence (stays in VMEM).
                gx = jnp.dot(x_val.astype(jnp.bfloat16), wih,
                             preferred_element_type=jnp.float32) + bih   # (T*N, 3H)
                h = jnp.zeros((N, H), jnp.float32)
                col = d * H
                for i in range(T):                                # fully unrolled
                    t = T - 1 - i if reverse else i
                    gxt = gx[t * N:(t + 1) * N, :]
                    gh = jnp.dot(h.astype(jnp.bfloat16), whh,
                                 preferred_element_type=jnp.float32) + bhh
                    r = jax.nn.sigmoid(gxt[:, :H] + gh[:, :H])
                    z = jax.nn.sigmoid(gxt[:, H:2 * H] + gh[:, H:2 * H])
                    n = jnp.tanh(gxt[:, 2 * H:] + r * gh[:, 2 * H:])
                    h = (1.0 - z) * n + z * h
                    out_ref[t * N:(t + 1) * N, col:col + H] = h

        run_layer(x_ref[...], wih0_ref, bih0_ref, whh0_ref, bhh0_ref, a0_ref)
        run_layer(a0_ref[...], wih1_ref, bih1_ref, whh1_ref, bhh1_ref, a1_ref)

        # Fused FC + log_softmax over the padded (128-lane) class dimension.
        logits = (jnp.dot(a1_ref[...].astype(jnp.bfloat16), fcw_ref[...],
                          preferred_element_type=jnp.float32) + fcb_ref[...])
        m = jnp.max(logits, axis=-1, keepdims=True)
        s = logits - m
        lse = jnp.log(jnp.sum(jnp.exp(s), axis=-1, keepdims=True))
        o_ref[...] = s - lse

    return kernel


def gru2_fc_fused(x_tm, g0, g1, fc_w, fc_b):
    """x_tm: (T, N, D0) -> (T*N, C_pad) log_softmax (time-major rows, padded classes)."""
    T, N, D = x_tm.shape
    H = GRU_HIDDEN
    ncp = fc_w.shape[1]
    kernel = _make_gru2_fc_kernel(T, N, H)
    return pl.pallas_call(
        kernel,
        out_shape=jax.ShapeDtypeStruct((T * N, ncp), jnp.float32),
        scratch_shapes=[pltpu.VMEM((T * N, 2 * H), jnp.float32),
                        pltpu.VMEM((T * N, 2 * H), jnp.float32)],
    )(x_tm.reshape(T * N, D),
      g0['w_ih'], g0['b_ih'], g0['w_hh'], g0['b_hh'],
      g1['w_ih'], g1['b_ih'], g1['w_hh'], g1['b_hh'],
      fc_w, fc_b)


# ----------------------------------------------------------------------------
# Parameters (PyTorch layout) + one-time kernel-layout preparation
# ----------------------------------------------------------------------------
def init_params(key, in_channel, num_classes, cnn_output_height):
    gru_input = cnn_output_height * 64
    H = GRU_HIDDEN
    ks = list(jax.random.split(key, 32))

    def nrm(k, shape, scale=0.05):
        return jax.random.normal(k, shape, jnp.float32) * scale

    p = {}
    p['conv1_w'] = nrm(ks[0], (32, in_channel, 3, 3)); p['conv1_b'] = nrm(ks[1], (32,))
    p['conv2_w'] = nrm(ks[2], (32, 32, 3, 3));         p['conv2_b'] = nrm(ks[3], (32,))
    p['conv3_w'] = nrm(ks[4], (64, 32, 3, 3));         p['conv3_b'] = nrm(ks[5], (64,))
    p['conv4_w'] = nrm(ks[6], (64, 64, 3, 3));         p['conv4_b'] = nrm(ks[7], (64,))

    def gru_layer(koff, in_size):
        return {
            'w_ih_f': nrm(ks[koff + 0], (3 * H, in_size)),
            'w_hh_f': nrm(ks[koff + 1], (3 * H, H)),
            'b_ih_f': nrm(ks[koff + 2], (3 * H,)),
            'b_hh_f': nrm(ks[koff + 3], (3 * H,)),
            'w_ih_b': nrm(ks[koff + 4], (3 * H, in_size)),
            'w_hh_b': nrm(ks[koff + 5], (3 * H, H)),
            'b_ih_b': nrm(ks[koff + 6], (3 * H,)),
            'b_hh_b': nrm(ks[koff + 7], (3 * H,)),
        }

    p['gru0'] = gru_layer(8, gru_input)
    p['gru1'] = gru_layer(16, 2 * H)
    p['fc_w'] = nrm(ks[24], (num_classes, 2 * H))
    p['fc_b'] = nrm(ks[25], (num_classes,))
    return p


def prepare_params(p):
    """One-time re-layout of PyTorch-style params into kernel layouts (transposes,
    direction stacking, class padding, bf16 casts) -- hoisted out of the forward."""
    def conv(w, b):
        cout = w.shape[0]
        # (Cout, Cin, kh, kw) -> (kh*kw*Cin, Cout), matching im2col patch order (i, j, c).
        wm = jnp.transpose(w, (2, 3, 1, 0)).reshape(-1, cout).astype(jnp.bfloat16)
        return wm, b.reshape(1, cout).astype(jnp.float32)

    def gru(lp):
        return {
            'w_ih': jnp.stack([lp['w_ih_f'].T, lp['w_ih_b'].T]).astype(jnp.bfloat16),
            'b_ih': jnp.stack([lp['b_ih_f'].reshape(1, -1),
                               lp['b_ih_b'].reshape(1, -1)]).astype(jnp.float32),
            'w_hh': jnp.stack([lp['w_hh_f'].T, lp['w_hh_b'].T]).astype(jnp.bfloat16),
            'b_hh': jnp.stack([lp['b_hh_f'].reshape(1, -1),
                               lp['b_hh_b'].reshape(1, -1)]).astype(jnp.float32),
        }

    q = {}
    q['conv1_w'], q['conv1_b'] = conv(p['conv1_w'], p['conv1_b'])
    q['conv2_w'], q['conv2_b'] = conv(p['conv2_w'], p['conv2_b'])
    q['conv3_w'], q['conv3_b'] = conv(p['conv3_w'], p['conv3_b'])
    q['conv4_w'], q['conv4_b'] = conv(p['conv4_w'], p['conv4_b'])
    q['gru0'] = gru(p['gru0'])
    q['gru1'] = gru(p['gru1'])

    # FC: pad classes to a multiple of 128 lanes (zero weight cols, -1e30 pad bias)
    # so the log_softmax output store is lane-dense; pads are sliced off outside.
    nc = p['fc_w'].shape[0]
    ncp = max(128, ((nc + 127) // 128) * 128)
    fc_w = p['fc_w'].T.astype(jnp.bfloat16)                        # (2H, nc)
    q['fc_w'] = jnp.pad(fc_w, ((0, 0), (0, ncp - nc)))
    fc_b = jnp.full((ncp,), -1e30, jnp.float32).at[:nc].set(p['fc_b'].astype(jnp.float32))
    q['fc_b'] = fc_b.reshape(1, ncp)
    return q


# ----------------------------------------------------------------------------
# Model forward
# ----------------------------------------------------------------------------
def crnn_forward(x, q, cnn_output_height, num_classes):
    """x: (N, C, H, W) NCHW like the PyTorch module; returns (N, T, num_classes)."""
    N = x.shape[0]
    gru_input = cnn_output_height * 64

    # NCHW -> NHWC once; the whole CNN stays NHWC (channels on lanes).
    h = jnp.transpose(x, (0, 2, 3, 1))
    h = conv_in_lrelu(h, q['conv1_w'], q['conv1_b'], 3, 3, 1)
    h = conv_in_lrelu(h, q['conv2_w'], q['conv2_b'], 3, 3, 2)
    h = conv_in_lrelu(h, q['conv3_w'], q['conv3_b'], 3, 3, 1)
    h = conv_in_lrelu(h, q['conv4_w'], q['conv4_b'], 3, 3, 2)     # (N, Hc, Wc, 64)

    # torch: x.permute(0,3,2,1).reshape(N, -1, Hc*64) -> (N, T=Wc, Hc*64) with (h, c)
    # flattened c-fastest.  Here we go straight to time-major (T, N, Hc*C) for the GRU.
    _, Hc, Wc, C = h.shape
    assert Hc * C == gru_input
    h = jnp.transpose(h, (2, 0, 1, 3)).reshape(Wc, N, Hc * C)     # (T, N, gru_input)
    T = Wc
    ncp = q['fc_w'].shape[1]

    if _use_fused_gru():
        # Single-TC chips: one fused kernel for both GRU layers + FC + log_softmax.
        out = gru2_fc_fused(h, q['gru0'], q['gru1'], q['fc_w'], q['fc_b'])   # (T*N, ncp)
    else:
        # Megacore chips: direction-parallel per-layer GRU kernels + FC kernel.
        h = gru_bidir_layer(h, q['gru0'])                         # (T, N, 2H)
        h = gru_bidir_layer(h, q['gru1'])                         # (T, N, 2H)
        out = fc_logsoftmax(h.reshape(T * N, 2 * GRU_HIDDEN), q['fc_w'], q['fc_b'])

    out = out.reshape(T, N, ncp)[:, :, :num_classes]              # drop pad classes
    return jnp.transpose(out, (1, 0, 2))                          # (N, T, num_classes)


if __name__ == "__main__":
    key = jax.random.PRNGKey(0)
    kx, kp = jax.random.split(key)

    in_channel, num_classes = 3, 16
    Himg = Wimg = 32
    # CNN spatial trace: 32 -> 30 (3x3) -> 14 (3x3,s2) -> 12 (3x3) -> 5 (3x3,s2)
    cnn_output_height = 5

    x = jax.random.normal(kx, (2, in_channel, Himg, Wimg), jnp.float32)
    params = init_params(kp, in_channel, num_classes, cnn_output_height)
    prepared = prepare_params(params)          # one-time layout/dtype hoist (outside jit)

    fwd = jax.jit(functools.partial(crnn_forward,
                                    cnn_output_height=cnn_output_height,
                                    num_classes=num_classes))
    out = jax.block_until_ready(fwd(x, prepared))

    assert out.shape == (2, 5, num_classes), out.shape
    assert bool(jnp.all(jnp.isfinite(out)))
    # log_softmax rows must sum to 1 in prob space (checks the padded-class trick).
    assert bool(jnp.allclose(jnp.sum(jnp.exp(out), axis=-1), 1.0, atol=1e-3))
    print("KERNEL_OK")
</pallas_src>

<mosaic_0001>
module attributes {stable_mosaic.version = 11 : i64} {
  func.func @_conv_in_lrelu_kernel(%arg0: i32, %arg1: memref<1x900x27xbf16, #tpu.memory_space<vmem>>, %arg2: memref<27x32xbf16, #tpu.memory_space<vmem>>, %arg3: memref<1x32xf32, #tpu.memory_space<vmem>>, %arg4: memref<1x900x32xf32, #tpu.memory_space<vmem>>) attributes {dimension_semantics = [#tpu.dimension_semantics<parallel>], iteration_bounds = array<i64: 2>, scalar_prefetch = 0 : i64, scratch_operands = 0 : i64, tpu.core_type = #tpu.core_type<tc>, window_params = [{transform_indices = @transform_0, window_bounds = array<i64: 1, 900, 27>}, {pipeline_mode = #tpu.pipeline_mode<synchronous>, transform_indices = @transform_1, window_bounds = array<i64: 27, 32>}, {pipeline_mode = #tpu.pipeline_mode<synchronous>, transform_indices = @transform_2, window_bounds = array<i64: 1, 32>}, {transform_indices = @transform_3, window_bounds = array<i64: 1, 900, 32>}]} {
    %c0 = arith.constant 0 : index
    %c0_0 = arith.constant 0 : index
    %c0_1 = arith.constant 0 : index
    %0 = vector.load %arg1[%c0, %c0_0, %c0_1] : memref<1x900x27xbf16, #tpu.memory_space<vmem>>, vector<1x900x27xbf16>
    %1 = vector.shape_cast %0 : vector<1x900x27xbf16> to vector<900x27xbf16>
    %c0_2 = arith.constant 0 : index
    %c0_3 = arith.constant 0 : index
    %2 = vector.load %arg2[%c0_2, %c0_3] : memref<27x32xbf16, #tpu.memory_space<vmem>>, vector<27x32xbf16>
    %cst = arith.constant dense<0.000000e+00> : vector<900x32xf32>
    %3 = tpu.matmul %1, %2, %cst {dimension_numbers = #tpu.dot_dimension_numbers<[1], [0], [0], [1], [0, 0, 1, 1], [], []>} : vector<900x27xbf16>, vector<27x32xbf16>, vector<900x32xf32> -> vector<900x32xf32>
    %c0_4 = arith.constant 0 : index
    %c0_5 = arith.constant 0 : index
    %4 = vector.load %arg3[%c0_4, %c0_5] : memref<1x32xf32, #tpu.memory_space<vmem>>, vector<1x32xf32>
    %5 = vector.broadcast %4 : vector<1x32xf32> to vector<900x32xf32>
    %6 = arith.addf %3, %5 : vector<900x32xf32>
    %cst_6 = arith.constant dense<0.000000e+00> : vector<32xf32>
    %7 = vector.multi_reduction <add>, %6, %cst_6 [0] : vector<900x32xf32> to vector<32xf32>
    %8 = vector.shape_cast %7 : vector<32xf32> to vector<1x32xf32>
    %cst_7 = arith.constant 9.000000e+02 : f32
    %9 = vector.broadcast %cst_7 : f32 to vector<1x32xf32>
    %10 = arith.divf %8, %9 : vector<1x32xf32>
    %11 = vector.broadcast %10 : vector<1x32xf32> to vector<900x32xf32>
    %12 = arith.subf %6, %11 : vector<900x32xf32>
    %13 = arith.mulf %12, %12 : vector<900x32xf32>
    %cst_8 = arith.constant dense<0.000000e+00> : vector<32xf32>
    %14 = vector.multi_reduction <add>, %13, %cst_8 [0] : vector<900x32xf32> to vector<32xf32>
    %15 = vector.shape_cast %14 : vector<32xf32> to vector<1x32xf32>
    %cst_9 = arith.constant 9.000000e+02 : f32
    %16 = vector.broadcast %cst_9 : f32 to vector<1x32xf32>
    %17 = arith.divf %15, %16 : vector<1x32xf32>
    %18 = vector.broadcast %10 : vector<1x32xf32> to vector<900x32xf32>
    %19 = arith.subf %6, %18 : vector<900x32xf32>
    %cst_10 = arith.constant 9.99999974E-6 : f32
    %20 = vector.broadcast %cst_10 : f32 to vector<1x32xf32>
    %21 = arith.addf %17, %20 : vector<1x32xf32>
    %22 = math.rsqrt %21 : vector<1x32xf32>
    %23 = vector.broadcast %22 : vector<1x32xf32> to vector<900x32xf32>
    %24 = arith.mulf %19, %23 : vector<900x32xf32>
    %cst_11 = arith.constant 0.000000e+00 : f32
    %25 = vector.broadcast %cst_11 : f32 to vector<900x32xf32>
    %26 = arith.cmpf oge, %24, %25 : vector<900x32xf32>
    %cst_12 = arith.constant 0.00999999977 : f32
    %27 = vector.broadcast %cst_12 : f32 to vector<900x32xf32>
    %28 = arith.mulf %27, %24 : vector<900x32xf32>
    %29 = arith.select %26, %24, %28 : vector<900x32xi1>, vector<900x32xf32>
    %c0_13 = arith.constant 0 : index
    %c0_14 = arith.constant 0 : index
    %c0_15 = arith.constant 0 : index
    %30 = vector.load %arg4[%c0_13, %c0_14, %c0_15] : memref<1x900x32xf32, #tpu.memory_space<vmem>>, vector<1x900x32xf32>
    %31 = vector.shape_cast %30 : vector<1x900x32xf32> to vector<900x32xf32>
    %32 = vector.shape_cast %29 : vector<900x32xf32> to vector<1x900x32xf32>
    tpu.vector_store %arg4[%c0_13, %c0_14, %c0_15], %32 {strides = array<i32>} : memref<1x900x32xf32, #tpu.memory_space<vmem>>, vector<1x900x32xf32>,
    return
  }
  func.func @transform_0(%arg0: i32) -> (i32, i32, i32) {
    %c0_i32 = arith.constant 0 : i32
    %c0_i32_0 = arith.constant 0 : i32
    %c0_i32_1 = arith.constant 0 : i32
    return %arg0, %c0_i32, %c0_i32_0 : i32, i32, i32
  }
  func.func @transform_1(%arg0: i32) -> (i32, i32) {
    %c0_i32 = arith.constant 0 : i32
    %c0_i32_0 = arith.constant 0 : i32
    %c0_i32_1 = arith.constant 0 : i32
    return %c0_i32, %c0_i32_0 : i32, i32
  }
  func.func @transform_2(%arg0: i32) -> (i32, i32) {
    %c0_i32 = arith.constant 0 : i32
    %c0_i32_0 = arith.constant 0 : i32
    %c0_i32_1 = arith.constant 0 : i32
    return %c0_i32, %c0_i32_0 : i32, i32
  }
  func.func @transform_3(%arg0: i32) -> (i32, i32, i32) {
    %c0_i32 = arith.constant 0 : i32
    %c0_i32_0 = arith.constant 0 : i32
    %c0_i32_1 = arith.constant 0 : i32
    return %arg0, %c0_i32, %c0_i32_0 : i32, i32, i32
  }
}

module attributes {stable_mosaic.version = 11 : i64} {
  func.func @_conv_in_lrelu_kernel(%arg0: i32, %arg1: memref<1x196x288xbf16, #tpu.memory_space<vmem>>, %arg2: memref<288x32xbf16, #tpu.memory_space<vmem>>, %arg3: memref<1x32xf32, #tpu.memory_space<vmem>>, %arg4: memref<1x196x32xf32, #tpu.memory_space<vmem>>) attributes {dimension_semantics = [#tpu.dimension_semantics<parallel>], iteration_bounds = array<i64: 2>, scalar_prefetch = 0 : i64, scratch_operands = 0 : i64, tpu.core_type = #tpu.core_type<tc>, window_params = [{transform_indices = @transform_0, window_bounds = array<i64: 1, 196, 288>}, {pipeline_mode = #tpu.pipeline_mode<synchronous>, transform_indices = @transform_1, window_bounds = array<i64: 288, 32>}, {pipeline_mode = #tpu.pipeline_mode<synchronous>, transform_indices = @transform_2, window_bounds = array<i64: 1, 32>}, {transform_indices = @transform_3, window_bounds = array<i64: 1, 196, 32>}]} {
    %c0 = arith.constant 0 : index
    %c0_0 = arith.constant 0 : index
    %c0_1 = arith.constant 0 : index
    %0 = vector.load %arg1[%c0, %c0_0, %c0_1] : memref<1x196x288xbf16, #tpu.memory_space<vmem>>, vector<1x196x288xbf16>
    %1 = vector.shape_cast %0 : vector<1x196x288xbf16> to vector<196x288xbf16>
    %c0_2 = arith.constant 0 : index
    %c0_3 = arith.constant 0 : index
    %2 = vector.load %arg2[%c0_2, %c0_3] : memref<288x32xbf16, #tpu.memory_space<vmem>>, vector<288x32xbf16>
    %cst = arith.constant dense<0.000000e+00> : vector<196x32xf32>
    %3 = tpu.matmul %1, %2, %cst {dimension_numbers = #tpu.dot_dimension_numbers<[1], [0], [0], [1], [0, 0, 1, 1], [], []>} : vector<196x288xbf16>, vector<288x32xbf16>, vector<196x32xf32> -> vector<196x32xf32>
    %c0_4 = arith.constant 0 : index
    %c0_5 = arith.constant 0 : index
    %4 = vector.load %arg3[%c0_4, %c0_5] : memref<1x32xf32, #tpu.memory_space<vmem>>, vector<1x32xf32>
    %5 = vector.broadcast %4 : vector<1x32xf32> to vector<196x32xf32>
    %6 = arith.addf %3, %5 : vector<196x32xf32>
    %cst_6 = arith.constant dense<0.000000e+00> : vector<32xf32>
    %7 = vector.multi_reduction <add>, %6, %cst_6 [0] : vector<196x32xf32> to vector<32xf32>
    %8 = vector.shape_cast %7 : vector<32xf32> to vector<1x32xf32>
    %cst_7 = arith.constant 1.960000e+02 : f32
    %9 = vector.broadcast %cst_7 : f32 to vector<1x32xf32>
    %10 = arith.divf %8, %9 : vector<1x32xf32>
    %11 = vector.broadcast %10 : vector<1x32xf32> to vector<196x32xf32>
    %12 = arith.subf %6, %11 : vector<196x32xf32>
    %13 = arith.mulf %12, %12 : vector<196x32xf32>
    %cst_8 = arith.constant dense<0.000000e+00> : vector<32xf32>
    %14 = vector.multi_reduction <add>, %13, %cst_8 [0] : vector<196x32xf32> to vector<32xf32>
    %15 = vector.shape_cast %14 : vector<32xf32> to vector<1x32xf32>
    %cst_9 = arith.constant 1.960000e+02 : f32
    %16 = vector.broadcast %cst_9 : f32 to vector<1x32xf32>
    %17 = arith.divf %15, %16 : vector<1x32xf32>
    %18 = vector.broadcast %10 : vector<1x32xf32> to vector<196x32xf32>
    %19 = arith.subf %6, %18 : vector<196x32xf32>
    %cst_10 = arith.constant 9.99999974E-6 : f32
    %20 = vector.broadcast %cst_10 : f32 to vector<1x32xf32>
    %21 = arith.addf %17, %20 : vector<1x32xf32>
    %22 = math.rsqrt %21 : vector<1x32xf32>
    %23 = vector.broadcast %22 : vector<1x32xf32> to vector<196x32xf32>
    %24 = arith.mulf %19, %23 : vector<196x32xf32>
    %cst_11 = arith.constant 0.000000e+00 : f32
    %25 = vector.broadcast %cst_11 : f32 to vector<196x32xf32>
    %26 = arith.cmpf oge, %24, %25 : vector<196x32xf32>
    %cst_12 = arith.constant 0.00999999977 : f32
    %27 = vector.broadcast %cst_12 : f32 to vector<196x32xf32>
    %28 = arith.mulf %27, %24 : vector<196x32xf32>
    %29 = arith.select %26, %24, %28 : vector<196x32xi1>, vector<196x32xf32>
    %c0_13 = arith.constant 0 : index
    %c0_14 = arith.constant 0 : index
    %c0_15 = arith.constant 0 : index
    %30 = vector.load %arg4[%c0_13, %c0_14, %c0_15] : memref<1x196x32xf32, #tpu.memory_space<vmem>>, vector<1x196x32xf32>
    %31 = vector.shape_cast %30 : vector<1x196x32xf32> to vector<196x32xf32>
    %32 = vector.shape_cast %29 : vector<196x32xf32> to vector<1x196x32xf32>
    tpu.vector_store %arg4[%c0_13, %c0_14, %c0_15], %32 {strides = array<i32>} : memref<1x196x32xf32, #tpu.memory_space<vmem>>, vector<1x196x32xf32>,
    return
  }
  func.func @transform_0(%arg0: i32) -> (i32, i32, i32) {
    %c0_i32 = arith.constant 0 : i32
    %c0_i32_0 = arith.constant 0 : i32
    %c0_i32_1 = arith.constant 0 : i32
    return %arg0, %c0_i32, %c0_i32_0 : i32, i32, i32
  }
  func.func @transform_1(%arg0: i32) -> (i32, i32) {
    %c0_i32 = arith.constant 0 : i32
    %c0_i32_0 = arith.constant 0 : i32
    %c0_i32_1 = arith.constant 0 : i32
    return %c0_i32, %c0_i32_0 : i32, i32
  }
  func.func @transform_2(%arg0: i32) -> (i32, i32) {
    %c0_i32 = arith.constant 0 : i32
    %c0_i32_0 = arith.constant 0 : i32
    %c0_i32_1 = arith.constant 0 : i32
    return %c0_i32, %c0_i32_0 : i32, i32
  }
  func.func @transform_3(%arg0: i32) -> (i32, i32, i32) {
    %c0_i32 = arith.constant 0 : i32
    %c0_i32_0 = arith.constant 0 : i32
    %c0_i32_1 = arith.constant 0 : i32
    return %arg0, %c0_i32, %c0_i32_0 : i32, i32, i32
  }
}

module attributes {stable_mosaic.version = 11 : i64} {
  func.func @_conv_in_lrelu_kernel(%arg0: i32, %arg1: memref<1x144x288xbf16, #tpu.memory_space<vmem>>, %arg2: memref<288x64xbf16, #tpu.memory_space<vmem>>, %arg3: memref<1x64xf32, #tpu.memory_space<vmem>>, %arg4: memref<1x144x64xf32, #tpu.memory_space<vmem>>) attributes {dimension_semantics = [#tpu.dimension_semantics<parallel>], iteration_bounds = array<i64: 2>, scalar_prefetch = 0 : i64, scratch_operands = 0 : i64, tpu.core_type = #tpu.core_type<tc>, window_params = [{transform_indices = @transform_0, window_bounds = array<i64: 1, 144, 288>}, {pipeline_mode = #tpu.pipeline_mode<synchronous>, transform_indices = @transform_1, window_bounds = array<i64: 288, 64>}, {pipeline_mode = #tpu.pipeline_mode<synchronous>, transform_indices = @transform_2, window_bounds = array<i64: 1, 64>}, {transform_indices = @transform_3, window_bounds = array<i64: 1, 144, 64>}]} {
    %c0 = arith.constant 0 : index
    %c0_0 = arith.constant 0 : index
    %c0_1 = arith.constant 0 : index
    %0 = vector.load %arg1[%c0, %c0_0, %c0_1] : memref<1x144x288xbf16, #tpu.memory_space<vmem>>, vector<1x144x288xbf16>
    %1 = vector.shape_cast %0 : vector<1x144x288xbf16> to vector<144x288xbf16>
    %c0_2 = arith.constant 0 : index
    %c0_3 = arith.constant 0 : index
    %2 = vector.load %arg2[%c0_2, %c0_3] : memref<288x64xbf16, #tpu.memory_space<vmem>>, vector<288x64xbf16>
    %cst = arith.constant dense<0.000000e+00> : vector<144x64xf32>
    %3 = tpu.matmul %1, %2, %cst {dimension_numbers = #tpu.dot_dimension_numbers<[1], [0], [0], [1], [0, 0, 1, 1], [], []>} : vector<144x288xbf16>, vector<288x64xbf16>, vector<144x64xf32> -> vector<144x64xf32>
    %c0_4 = arith.constant 0 : index
    %c0_5 = arith.constant 0 : index
    %4 = vector.load %arg3[%c0_4, %c0_5] : memref<1x64xf32, #tpu.memory_space<vmem>>, vector<1x64xf32>
    %5 = vector.broadcast %4 : vector<1x64xf32> to vector<144x64xf32>
    %6 = arith.addf %3, %5 : vector<144x64xf32>
    %cst_6 = arith.constant dense<0.000000e+00> : vector<64xf32>
    %7 = vector.multi_reduction <add>, %6, %cst_6 [0] : vector<144x64xf32> to vector<64xf32>
    %8 = vector.shape_cast %7 : vector<64xf32> to vector<1x64xf32>
    %cst_7 = arith.constant 1.440000e+02 : f32
    %9 = vector.broadcast %cst_7 : f32 to vector<1x64xf32>
    %10 = arith.divf %8, %9 : vector<1x64xf32>
    %11 = vector.broadcast %10 : vector<1x64xf32> to vector<144x64xf32>
    %12 = arith.subf %6, %11 : vector<144x64xf32>
    %13 = arith.mulf %12, %12 : vector<144x64xf32>
    %cst_8 = arith.constant dense<0.000000e+00> : vector<64xf32>
    %14 = vector.multi_reduction <add>, %13, %cst_8 [0] : vector<144x64xf32> to vector<64xf32>
    %15 = vector.shape_cast %14 : vector<64xf32> to vector<1x64xf32>
    %cst_9 = arith.constant 1.440000e+02 : f32
    %16 = vector.broadcast %cst_9 : f32 to vector<1x64xf32>
    %17 = arith.divf %15, %16 : vector<1x64xf32>
    %18 = vector.broadcast %10 : vector<1x64xf32> to vector<144x64xf32>
    %19 = arith.subf %6, %18 : vector<144x64xf32>
    %cst_10 = arith.constant 9.99999974E-6 : f32
    %20 = vector.broadcast %cst_10 : f32 to vector<1x64xf32>
    %21 = arith.addf %17, %20 : vector<1x64xf32>
    %22 = math.rsqrt %21 : vector<1x64xf32>
    %23 = vector.broadcast %22 : vector<1x64xf32> to vector<144x64xf32>
    %24 = arith.mulf %19, %23 : vector<144x64xf32>
    %cst_11 = arith.constant 0.000000e+00 : f32
    %25 = vector.broadcast %cst_11 : f32 to vector<144x64xf32>
    %26 = arith.cmpf oge, %24, %25 : vector<144x64xf32>
    %cst_12 = arith.constant 0.00999999977 : f32
    %27 = vector.broadcast %cst_12 : f32 to vector<144x64xf32>
    %28 = arith.mulf %27, %24 : vector<144x64xf32>
    %29 = arith.select %26, %24, %28 : vector<144x64xi1>, vector<144x64xf32>
    %c0_13 = arith.constant 0 : index
    %c0_14 = arith.constant 0 : index
    %c0_15 = arith.constant 0 : index
    %30 = vector.load %arg4[%c0_13, %c0_14, %c0_15] : memref<1x144x64xf32, #tpu.memory_space<vmem>>, vector<1x144x64xf32>
    %31 = vector.shape_cast %30 : vector<1x144x64xf32> to vector<144x64xf32>
    %32 = vector.shape_cast %29 : vector<144x64xf32> to vector<1x144x64xf32>
    tpu.vector_store %arg4[%c0_13, %c0_14, %c0_15], %32 {strides = array<i32>} : memref<1x144x64xf32, #tpu.memory_space<vmem>>, vector<1x144x64xf32>,
    return
  }
  func.func @transform_0(%arg0: i32) -> (i32, i32, i32) {
    %c0_i32 = arith.constant 0 : i32
    %c0_i32_0 = arith.constant 0 : i32
    %c0_i32_1 = arith.constant 0 : i32
    return %arg0, %c0_i32, %c0_i32_0 : i32, i32, i32
  }
  func.func @transform_1(%arg0: i32) -> (i32, i32) {
    %c0_i32 = arith.constant 0 : i32
    %c0_i32_0 = arith.constant 0 : i32
    %c0_i32_1 = arith.constant 0 : i32
    return %c0_i32, %c0_i32_0 : i32, i32
  }
  func.func @transform_2(%arg0: i32) -> (i32, i32) {
    %c0_i32 = arith.constant 0 : i32
    %c0_i32_0 = arith.constant 0 : i32
    %c0_i32_1 = arith.constant 0 : i32
    return %c0_i32, %c0_i32_0 : i32, i32
  }
  func.func @transform_3(%arg0: i32) -> (i32, i32, i32) {
    %c0_i32 = arith.constant 0 : i32
    %c0_i32_0 = arith.constant 0 : i32
    %c0_i32_1 = arith.constant 0 : i32
    return %arg0, %c0_i32, %c0_i32_0 : i32, i32, i32
  }
}

module attributes {stable_mosaic.version = 11 : i64} {
  func.func @_conv_in_lrelu_kernel(%arg0: i32, %arg1: memref<1x25x576xbf16, #tpu.memory_space<vmem>>, %arg2: memref<576x64xbf16, #tpu.memory_space<vmem>>, %arg3: memref<1x64xf32, #tpu.memory_space<vmem>>, %arg4: memref<1x25x64xf32, #tpu.memory_space<vmem>>) attributes {dimension_semantics = [#tpu.dimension_semantics<parallel>], iteration_bounds = array<i64: 2>, scalar_prefetch = 0 : i64, scratch_operands = 0 : i64, tpu.core_type = #tpu.core_type<tc>, window_params = [{transform_indices = @transform_0, window_bounds = array<i64: 1, 25, 576>}, {pipeline_mode = #tpu.pipeline_mode<synchronous>, transform_indices = @transform_1, window_bounds = array<i64: 576, 64>}, {pipeline_mode = #tpu.pipeline_mode<synchronous>, transform_indices = @transform_2, window_bounds = array<i64: 1, 64>}, {transform_indices = @transform_3, window_bounds = array<i64: 1, 25, 64>}]} {
    %c0 = arith.constant 0 : index
    %c0_0 = arith.constant 0 : index
    %c0_1 = arith.constant 0 : index
    %0 = vector.load %arg1[%c0, %c0_0, %c0_1] : memref<1x25x576xbf16, #tpu.memory_space<vmem>>, vector<1x25x576xbf16>
    %1 = vector.shape_cast %0 : vector<1x25x576xbf16> to vector<25x576xbf16>
    %c0_2 = arith.constant 0 : index
    %c0_3 = arith.constant 0 : index
    %2 = vector.load %arg2[%c0_2, %c0_3] : memref<576x64xbf16, #tpu.memory_space<vmem>>, vector<576x64xbf16>
    %cst = arith.constant dense<0.000000e+00> : vector<25x64xf32>
    %3 = tpu.matmul %1, %2, %cst {dimension_numbers = #tpu.dot_dimension_numbers<[1], [0], [0], [1], [0, 0, 1, 1], [], []>} : vector<25x576xbf16>, vector<576x64xbf16>, vector<25x64xf32> -> vector<25x64xf32>
    %c0_4 = arith.constant 0 : index
    %c0_5 = arith.constant 0 : index
    %4 = vector.load %arg3[%c0_4, %c0_5] : memref<1x64xf32, #tpu.memory_space<vmem>>, vector<1x64xf32>
    %5 = vector.broadcast %4 : vector<1x64xf32> to vector<25x64xf32>
    %6 = arith.addf %3, %5 : vector<25x64xf32>
    %cst_6 = arith.constant dense<0.000000e+00> : vector<64xf32>
    %7 = vector.multi_reduction <add>, %6, %cst_6 [0] : vector<25x64xf32> to vector<64xf32>
    %8 = vector.shape_cast %7 : vector<64xf32> to vector<1x64xf32>
    %cst_7 = arith.constant 2.500000e+01 : f32
    %9 = vector.broadcast %cst_7 : f32 to vector<1x64xf32>
    %10 = arith.divf %8, %9 : vector<1x64xf32>
    %11 = vector.broadcast %10 : vector<1x64xf32> to vector<25x64xf32>
    %12 = arith.subf %6, %11 : vector<25x64xf32>
    %13 = arith.mulf %12, %12 : vector<25x64xf32>
    %cst_8 = arith.constant dense<0.000000e+00> : vector<64xf32>
    %14 = vector.multi_reduction <add>, %13, %cst_8 [0] : vector<25x64xf32> to vector<64xf32>
    %15 = vector.shape_cast %14 : vector<64xf32> to vector<1x64xf32>
    %cst_9 = arith.constant 2.500000e+01 : f32
    %16 = vector.broadcast %cst_9 : f32 to vector<1x64xf32>
    %17 = arith.divf %15, %16 : vector<1x64xf32>
    %18 = vector.broadcast %10 : vector<1x64xf32> to vector<25x64xf32>
    %19 = arith.subf %6, %18 : vector<25x64xf32>
    %cst_10 = arith.constant 9.99999974E-6 : f32
    %20 = vector.broadcast %cst_10 : f32 to vector<1x64xf32>
    %21 = arith.addf %17, %20 : vector<1x64xf32>
    %22 = math.rsqrt %21 : vector<1x64xf32>
    %23 = vector.broadcast %22 : vector<1x64xf32> to vector<25x64xf32>
    %24 = arith.mulf %19, %23 : vector<25x64xf32>
    %cst_11 = arith.constant 0.000000e+00 : f32
    %25 = vector.broadcast %cst_11 : f32 to vector<25x64xf32>
    %26 = arith.cmpf oge, %24, %25 : vector<25x64xf32>
    %cst_12 = arith.constant 0.00999999977 : f32
    %27 = vector.broadcast %cst_12 : f32 to vector<25x64xf32>
    %28 = arith.mulf %27, %24 : vector<25x64xf32>
    %29 = arith.select %26, %24, %28 : vector<25x64xi1>, vector<25x64xf32>
    %c0_13 = arith.constant 0 : index
    %c0_14 = arith.constant 0 : index
    %c0_15 = arith.constant 0 : index
    %30 = vector.load %arg4[%c0_13, %c0_14, %c0_15] : memref<1x25x64xf32, #tpu.memory_space<vmem>>, vector<1x25x64xf32>
    %31 = vector.shape_cast %30 : vector<1x25x64xf32> to vector<25x64xf32>
    %32 = vector.shape_cast %29 : vector<25x64xf32> to vector<1x25x64xf32>
    tpu.vector_store %arg4[%c0_13, %c0_14, %c0_15], %32 {strides = array<i32>} : memref<1x25x64xf32, #tpu.memory_space<vmem>>, vector<1x25x64xf32>,
    return
  }
  func.func @transform_0(%arg0: i32) -> (i32, i32, i32) {
    %c0_i32 = arith.constant 0 : i32
    %c0_i32_0 = arith.constant 0 : i32
    %c0_i32_1 = arith.constant 0 : i32
    return %arg0, %c0_i32, %c0_i32_0 : i32, i32, i32
  }
  func.func @transform_1(%arg0: i32) -> (i32, i32) {
    %c0_i32 = arith.constant 0 : i32
    %c0_i32_0 = arith.constant 0 : i32
    %c0_i32_1 = arith.constant 0 : i32
    return %c0_i32, %c0_i32_0 : i32, i32
  }
  func.func @transform_2(%arg0: i32) -> (i32, i32) {
    %c0_i32 = arith.constant 0 : i32
    %c0_i32_0 = arith.constant 0 : i32
    %c0_i32_1 = arith.constant 0 : i32
    return %c0_i32, %c0_i32_0 : i32, i32
  }
  func.func @transform_3(%arg0: i32) -> (i32, i32, i32) {
    %c0_i32 = arith.constant 0 : i32
    %c0_i32_0 = arith.constant 0 : i32
    %c0_i32_1 = arith.constant 0 : i32
    return %arg0, %c0_i32, %c0_i32_0 : i32, i32, i32
  }
}

module attributes {stable_mosaic.version = 11 : i64} {
  func.func @_gru_bidir_kernel(%arg0: i32, %arg1: memref<10x320xf32, #tpu.memory_space<vmem>>, %arg2: memref<1x320x384xbf16, #tpu.memory_space<vmem>>, %arg3: memref<1x1x384xf32, #tpu.memory_space<vmem>>, %arg4: memref<1x128x384xbf16, #tpu.memory_space<vmem>>, %arg5: memref<1x1x384xf32, #tpu.memory_space<vmem>>, %arg6: memref<5x2x128xf32, #tpu.memory_space<vmem>>, %arg7: memref<5x2x384xf32, #tpu.memory_space<vmem>>) attributes {dimension_semantics = [#tpu.dimension_semantics<parallel>], iteration_bounds = array<i64: 2>, scalar_prefetch = 0 : i64, scratch_operands = 1 : i64, tpu.core_type = #tpu.core_type<tc>, window_params = [{pipeline_mode = #tpu.pipeline_mode<synchronous>, transform_indices = @transform_0, window_bounds = array<i64: 10, 320>}, {transform_indices = @transform_1, window_bounds = array<i64: 1, 320, 384>}, {transform_indices = @transform_2, window_bounds = array<i64: 1, 1, 384>}, {transform_indices = @transform_3, window_bounds = array<i64: 1, 128, 384>}, {transform_indices = @transform_4, window_bounds = array<i64: 1, 1, 384>}, {transform_indices = @transform_5, window_bounds = array<i64: 5, 2, 128>}]} {
    %c0 = arith.constant 0 : index
    %c0_0 = arith.constant 0 : index
    %0 = vector.load %arg1[%c0, %c0_0] : memref<10x320xf32, #tpu.memory_space<vmem>>, vector<10x320xf32>
    %1 = arith.truncf %0 : vector<10x320xf32> to vector<10x320xbf16>
    %c0_1 = arith.constant 0 : index
    %c0_2 = arith.constant 0 : index
    %c0_3 = arith.constant 0 : index
    %2 = vector.load %arg2[%c0_1, %c0_2, %c0_3] : memref<1x320x384xbf16, #tpu.memory_space<vmem>>, vector<1x320x384xbf16>
    %3 = vector.shape_cast %2 : vector<1x320x384xbf16> to vector<320x384xbf16>
    %cst = arith.constant dense<0.000000e+00> : vector<10x384xf32>
    %4 = tpu.matmul %1, %3, %cst {dimension_numbers = #tpu.dot_dimension_numbers<[1], [0], [0], [1], [0, 0, 1, 1], [], []>} : vector<10x320xbf16>, vector<320x384xbf16>, vector<10x384xf32> -> vector<10x384xf32>
    %c0_4 = arith.constant 0 : index
    %c0_5 = arith.constant 0 : index
    %c0_6 = arith.constant 0 : index
    %5 = vector.load %arg3[%c0_4, %c0_5, %c0_6] : memref<1x1x384xf32, #tpu.memory_space<vmem>>, vector<1x1x384xf32>
    %6 = vector.shape_cast %5 : vector<1x1x384xf32> to vector<1x384xf32>
    %7 = vector.broadcast %6 : vector<1x384xf32> to vector<10x384xf32>
    %8 = arith.addf %4, %7 : vector<10x384xf32>
    %9 = vector.extract_strided_slice %8 {offsets = [0, 0], sizes = [2, 384], strides = [1, 1]} : vector<10x384xf32> to vector<2x384xf32>
    %c0_7 = arith.constant 0 : index
    %c0_8 = arith.constant 0 : index
    %c0_9 = arith.constant 0 : index
    %10 = vector.load %arg7[%c0_7, %c0_8, %c0_9] : memref<5x2x384xf32, #tpu.memory_space<vmem>>, vector<1x2x384xf32>
    %11 = vector.shape_cast %10 : vector<1x2x384xf32> to vector<2x384xf32>
    %12 = vector.shape_cast %9 : vector<2x384xf32> to vector<1x2x384xf32>
    tpu.vector_store %arg7[%c0_7, %c0_8, %c0_9], %12 {strides = array<i32>} : memref<5x2x384xf32, #tpu.memory_space<vmem>>, vector<1x2x384xf32>,
    %13 = vector.extract_strided_slice %8 {offsets = [2, 0], sizes = [2, 384], strides = [1, 1]} : vector<10x384xf32> to vector<2x384xf32>
    %c1 = arith.constant 1 : index
    %c0_10 = arith.constant 0 : index
    %c0_11 = arith.constant 0 : index
    %14 = vector.load %arg7[%c1, %c0_10, %c0_11] : memref<5x2x384xf32, #tpu.memory_space<vmem>>, vector<1x2x384xf32>
    %15 = vector.shape_cast %14 : vector<1x2x384xf32> to vector<2x384xf32>
    %16 = vector.shape_cast %13 : vector<2x384xf32> to vector<1x2x384xf32>
    tpu.vector_store %arg7[%c1, %c0_10, %c0_11], %16 {strides = array<i32>} : memref<5x2x384xf32, #tpu.memory_space<vmem>>, vector<1x2x384xf32>,
    %17 = vector.extract_strided_slice %8 {offsets = [4, 0], sizes = [2, 384], strides = [1, 1]} : vector<10x384xf32> to vector<2x384xf32>
    %c2 = arith.constant 2 : index
    %c0_12 = arith.constant 0 : index
    %c0_13 = arith.constant 0 : index
    %18 = vector.load %arg7[%c2, %c0_12, %c0_13] : memref<5x2x384xf32, #tpu.memory_space<vmem>>, vector<1x2x384xf32>
    %19 = vector.shape_cast %18 : vector<1x2x384xf32> to vector<2x384xf32>
    %20 = vector.shape_cast %17 : vector<2x384xf32> to vector<1x2x384xf32>
    tpu.vector_store %arg7[%c2, %c0_12, %c0_13], %20 {strides = array<i32>} : memref<5x2x384xf32, #tpu.memory_space<vmem>>, vector<1x2x384xf32>,
    %21 = vector.extract_strided_slice %8 {offsets = [6, 0], sizes = [2, 384], strides = [1, 1]} : vector<10x384xf32> to vector<2x384xf32>
    %c3 = arith.constant 3 : index
    %c0_14 = arith.constant 0 : index
    %c0_15 = arith.constant 0 : index
    %22 = vector.load %arg7[%c3, %c0_14, %c0_15] : memref<5x2x384xf32, #tpu.memory_space<vmem>>, vector<1x2x384xf32>
    %23 = vector.shape_cast %22 : vector<1x2x384xf32> to vector<2x384xf32>
    %24 = vector.shape_cast %21 : vector<2x384xf32> to vector<1x2x384xf32>
    tpu.vector_store %arg7[%c3, %c0_14, %c0_15], %24 {strides = array<i32>} : memref<5x2x384xf32, #tpu.memory_space<vmem>>, vector<1x2x384xf32>,
    %25 = vector.extract_strided_slice %8 {offsets = [8, 0], sizes = [2, 384], strides = [1, 1]} : vector<10x384xf32> to vector<2x384xf32>
    %c4 = arith.constant 4 : index
    %c0_16 = arith.constant 0 : index
    %c0_17 = arith.constant 0 : index
    %26 = vector.load %arg7[%c4, %c0_16, %c0_17] : memref<5x2x384xf32, #tpu.memory_space<vmem>>, vector<1x2x384xf32>
    %27 = vector.shape_cast %26 : vector<1x2x384xf32> to vector<2x384xf32>
    %28 = vector.shape_cast %25 : vector<2x384xf32> to vector<1x2x384xf32>
    tpu.vector_store %arg7[%c4, %c0_16, %c0_17], %28 {strides = array<i32>} : memref<5x2x384xf32, #tpu.memory_space<vmem>>, vector<1x2x384xf32>,
    %c0_18 = arith.constant 0 : index
    %c0_19 = arith.constant 0 : index
    %c0_20 = arith.constant 0 : index
    %29 = vector.load %arg4[%c0_18, %c0_19, %c0_20] : memref<1x128x384xbf16, #tpu.memory_space<vmem>>, vector<1x128x384xbf16>
    %30 = vector.shape_cast %29 : vector<1x128x384xbf16> to vector<128x384xbf16>
    %c0_21 = arith.constant 0 : index
    %c0_22 = arith.constant 0 : index
    %c0_23 = arith.constant 0 : index
    %31 = vector.load %arg5[%c0_21, %c0_22, %c0_23] : memref<1x1x384xf32, #tpu.memory_space<vmem>>, vector<1x1x384xf32>
    %32 = vector.shape_cast %31 : vector<1x1x384xf32> to vector<1x384xf32>
    %cst_24 = arith.constant 0.000000e+00 : f32
    %33 = vector.broadcast %cst_24 : f32 to vector<2x128xf32>
    %c0_i32 = arith.constant 0 : i32
    %c0_i32_25 = arith.constant 0 : i32
    %34 = arith.cmpi eq, %arg0, %c0_i32_25 : i32
    %c4_i32 = arith.constant 4 : i32
    %35 = arith.subi %c4_i32, %c0_i32 : i32
    %36 = arith.select %34, %c0_i32, %35 : i32
    %37 = arith.index_cast %36 : i32 to index
    %c0_26 = arith.constant 0 : index
    %c0_27 = arith.constant 0 : index
    %38 = vector.load %arg7[%37, %c0_26, %c0_27] : memref<5x2x384xf32, #tpu.memory_space<vmem>>, vector<1x2x384xf32>
    %39 = vector.shape_cast %38 : vector<1x2x384xf32> to vector<2x384xf32>
    %40 = arith.truncf %33 : vector<2x128xf32> to vector<2x128xbf16>
    %cst_28 = arith.constant dense<0.000000e+00> : vector<2x384xf32>
    %41 = tpu.matmul %40, %30, %cst_28 {dimension_numbers = #tpu.dot_dimension_numbers<[1], [0], [0], [1], [0, 0, 1, 1], [], []>} : vector<2x128xbf16>, vector<128x384xbf16>, vector<2x384xf32> -> vector<2x384xf32>
    %42 = vector.broadcast %32 : vector<1x384xf32> to vector<2x384xf32>
    %43 = arith.addf %41, %42 : vector<2x384xf32>
    %44 = vector.extract_strided_slice %39 {offsets = [0, 0], sizes = [2, 128], strides = [1, 1]} : vector<2x384xf32> to vector<2x128xf32>
    %45 = vector.extract_strided_slice %43 {offsets = [0, 0], sizes = [2, 128], strides = [1, 1]} : vector<2x384xf32> to vector<2x128xf32>
    %46 = arith.addf %44, %45 : vector<2x128xf32>
    %47 = arith.negf %46 : vector<2x128xf32>
    %48 = math.exp %47 : vector<2x128xf32>
    %cst_29 = arith.constant 1.000000e+00 : f32
    %49 = vector.broadcast %cst_29 : f32 to vector<2x128xf32>
    %50 = arith.addf %49, %48 : vector<2x128xf32>
    %51 = arith.divf %49, %50 : vector<2x128xf32>
    %52 = vector.extract_strided_slice %39 {offsets = [0, 128], sizes = [2, 128], strides = [1, 1]} : vector<2x384xf32> to vector<2x128xf32>
    %53 = vector.extract_strided_slice %43 {offsets = [0, 128], sizes = [2, 128], strides = [1, 1]} : vector<2x384xf32> to vector<2x128xf32>
    %54 = arith.addf %52, %53 : vector<2x128xf32>
    %55 = arith.negf %54 : vector<2x128xf32>
    %56 = math.exp %55 : vector<2x128xf32>
    %cst_30 = arith.constant 1.000000e+00 : f32
    %57 = vector.broadcast %cst_30 : f32 to vector<2x128xf32>
    %58 = arith.addf %57, %56 : vector<2x128xf32>
    %59 = arith.divf %57, %58 : vector<2x128xf32>
    %60 = vector.extract_strided_slice %39 {offsets = [0, 256], sizes = [2, 128], strides = [1, 1]} : vector<2x384xf32> to vector<2x128xf32>
    %61 = vector.extract_strided_slice %43 {offsets = [0, 256], sizes = [2, 128], strides = [1, 1]} : vector<2x384xf32> to vector<2x128xf32>
    %62 = arith.mulf %51, %61 : vector<2x128xf32>
    %63 = arith.addf %60, %62 : vector<2x128xf32>
    %64 = math.tanh %63 : vector<2x128xf32>
    %cst_31 = arith.constant 1.000000e+00 : f32
    %65 = vector.broadcast %cst_31 : f32 to vector<2x128xf32>
    %66 = arith.subf %65, %59 : vector<2x128xf32>
    %67 = arith.mulf %66, %64 : vector<2x128xf32>
    %68 = arith.mulf %59, %33 : vector<2x128xf32>
    %69 = arith.addf %67, %68 : vector<2x128xf32>
    %70 = arith.index_cast %36 : i32 to index
    %c0_32 = arith.constant 0 : index
    %c0_33 = arith.constant 0 : index
    %71 = vector.load %arg6[%70, %c0_32, %c0_33] : memref<5x2x128xf32, #tpu.memory_space<vmem>>, vector<1x2x128xf32>
    %72 = vector.shape_cast %71 : vector<1x2x128xf32> to vector<2x128xf32>
    %73 = vector.shape_cast %69 : vector<2x128xf32> to vector<1x2x128xf32>
    tpu.vector_store %arg6[%70, %c0_32, %c0_33], %73 {strides = array<i32>} : memref<5x2x128xf32, #tpu.memory_space<vmem>>, vector<1x2x128xf32>,
    %c1_i32 = arith.constant 1 : i32
    %c0_i32_34 = arith.constant 0 : i32
    %74 = arith.cmpi eq, %arg0, %c0_i32_34 : i32
    %c4_i32_35 = arith.constant 4 : i32
    %75 = arith.subi %c4_i32_35, %c1_i32 : i32
    %76 = arith.select %74, %c1_i32, %75 : i32
    %77 = arith.index_cast %76 : i32 to index
    %c0_36 = arith.constant 0 : index
    %c0_37 = arith.constant 0 : index
    %78 = vector.load %arg7[%77, %c0_36, %c0_37] : memref<5x2x384xf32, #tpu.memory_space<vmem>>, vector<1x2x384xf32>
    %79 = vector.shape_cast %78 : vector<1x2x384xf32> to vector<2x384xf32>
    %80 = arith.truncf %69 : vector<2x128xf32> to vector<2x128xbf16>
    %cst_38 = arith.constant dense<0.000000e+00> : vector<2x384xf32>
    %81 = tpu.matmul %80, %30, %cst_38 {dimension_numbers = #tpu.dot_dimension_numbers<[1], [0], [0], [1], [0, 0, 1, 1], [], []>} : vector<2x128xbf16>, vector<128x384xbf16>, vector<2x384xf32> -> vector<2x384xf32>
    %82 = vector.broadcast %32 : vector<1x384xf32> to vector<2x384xf32>
    %83 = arith.addf %81, %82 : vector<2x384xf32>
    %84 = vector.extract_strided_slice %79 {offsets = [0, 0], sizes = [2, 128], strides = [1, 1]} : vector<2x384xf32> to vector<2x128xf32>
    %85 = vector.extract_strided_slice %83 {offsets = [0, 0], sizes = [2, 128], strides = [1, 1]} : vector<2x384xf32> to vector<2x128xf32>
    %86 = arith.addf %84, %85 : vector<2x128xf32>
    %87 = arith.negf %86 : vector<2x128xf32>
    %88 = math.exp %87 : vector<2x128xf32>
    %cst_39 = arith.constant 1.000000e+00 : f32
    %89 = vector.broadcast %cst_39 : f32 to vector<2x128xf32>
    %90 = arith.addf %89, %88 : vector<2x128xf32>
    %91 = arith.divf %89, %90 : vector<2x128xf32>
    %92 = vector.extract_strided_slice %79 {offsets = [0, 128], sizes = [2, 128], strides = [1, 1]} : vector<2x384xf32> to vector<2x128xf32>
    %93 = vector.extract_strided_slice %83 {offsets = [0, 128], sizes = [2, 128], strides = [1, 1]} : vector<2x384xf32> to vector<2x128xf32>
    %94 = arith.addf %92, %93 : vector<2x128xf32>
    %95 = arith.negf %94 : vector<2x128xf32>
    %96 = math.exp %95 : vector<2x128xf32>
    %cst_40 = arith.constant 1.000000e+00 : f32
    %97 = vector.broadcast %cst_40 : f32 to vector<2x128xf32>
    %98 = arith.addf %97, %96 : vector<2x128xf32>
    %99 = arith.divf %97, %98 : vector<2x128xf32>
    %100 = vector.extract_strided_slice %79 {offsets = [0, 256], sizes = [2, 128], strides = [1, 1]} : vector<2x384xf32> to vector<2x128xf32>
    %101 = vector.extract_strided_slice %83 {offsets = [0, 256], sizes = [2, 128], strides = [1, 1]} : vector<2x384xf32> to vector<2x128xf32>
    %102 = arith.mulf %91, %101 : vector<2x128xf32>
    %103 = arith.addf %100, %102 : vector<2x128xf32>
    %104 = math.tanh %103 : vector<2x128xf32>
    %cst_41 = arith.constant 1.000000e+00 : f32
    %105 = vector.broadcast %cst_41 : f32 to vector<2x128xf32>
    %106 = arith.subf %105, %99 : vector<2x128xf32>
    %107 = arith.mulf %106, %104 : vector<2x128xf32>
    %108 = arith.mulf %99, %69 : vector<2x128xf32>
    %109 = arith.addf %107, %108 : vector<2x128xf32>
    %110 = arith.index_cast %76 : i32 to index
    %c0_42 = arith.constant 0 : index
    %c0_43 = arith.constant 0 : index
    %111 = vector.load %arg6[%110, %c0_42, %c0_43] : memref<5x2x128xf32, #tpu.memory_space<vmem>>, vector<1x2x128xf32>
    %112 = vector.shape_cast %111 : vector<1x2x128xf32> to vector<2x128xf32>
    %113 = vector.shape_cast %109 : vector<2x128xf32> to vector<1x2x128xf32>
    tpu.vector_store %arg6[%110, %c0_42, %c0_43], %113 {strides = array<i32>} : memref<5x2x128xf32, #tpu.memory_space<vmem>>, vector<1x2x128xf32>,
    %c2_i32 = arith.constant 2 : i32
    %c0_i32_44 = arith.constant 0 : i32
    %114 = arith.cmpi eq, %arg0, %c0_i32_44 : i32
    %c4_i32_45 = arith.constant 4 : i32
    %115 = arith.subi %c4_i32_45, %c2_i32 : i32
    %116 = arith.select %114, %c2_i32, %115 : i32
    %117 = arith.index_cast %116 : i32 to index
    %c0_46 = arith.constant 0 : index
    %c0_47 = arith.constant 0 : index
    %118 = vector.load %arg7[%117, %c0_46, %c0_47] : memref<5x2x384xf32, #tpu.memory_space<vmem>>, vector<1x2x384xf32>
    %119 = vector.shape_cast %118 : vector<1x2x384xf32> to vector<2x384xf32>
    %120 = arith.truncf %109 : vector<2x128xf32> to vector<2x128xbf16>
    %cst_48 = arith.constant dense<0.000000e+00> : vector<2x384xf32>
    %121 = tpu.matmul %120, %30, %cst_48 {dimension_numbers = #tpu.dot_dimension_numbers<[1], [0], [0], [1], [0, 0, 1, 1], [], []>} : vector<2x128xbf16>, vector<128x384xbf16>, vector<2x384xf32> -> vector<2x384xf32>
    %122 = vector.broadcast %32 : vector<1x384xf32> to vector<2x384xf32>
    %123 = arith.addf %121, %122 : vector<2x384xf32>
    %124 = vector.extract_strided_slice %119 {offsets = [0, 0], sizes = [2, 128], strides = [1, 1]} : vector<2x384xf32> to vector<2x128xf32>
    %125 = vector.extract_strided_slice %123 {offsets = [0, 0], sizes = [2, 128], strides = [1, 1]} : vector<2x384xf32> to vector<2x128xf32>
    %126 = arith.addf %124, %125 : vector<2x128xf32>
    %127 = arith.negf %126 : vector<2x128xf32>
    %128 = math.exp %127 : vector<2x128xf32>
    %cst_49 = arith.constant 1.000000e+00 : f32
    %129 = vector.broadcast %cst_49 : f32 to vector<2x128xf32>
    %130 = arith.addf %129, %128 : vector<2x128xf32>
    %131 = arith.divf %129, %130 : vector<2x128xf32>
    %132 = vector.extract_strided_slice %119 {offsets = [0, 128], sizes = [2, 128], strides = [1, 1]} : vector<2x384xf32> to vector<2x128xf32>
    %133 = vector.extract_strided_slice %123 {offsets = [0, 128], sizes = [2, 128], strides = [1, 1]} : vector<2x384xf32> to vector<2x128xf32>
    %134 = arith.addf %132, %133 : vector<2x128xf32>
    %135 = arith.negf %134 : vector<2x128xf32>
    %136 = math.exp %135 : vector<2x128xf32>
    %cst_50 = arith.constant 1.000000e+00 : f32
    %137 = vector.broadcast %cst_50 : f32 to vector<2x128xf32>
    %138 = arith.addf %137, %136 : vector<2x128xf32>
    %139 = arith.divf %137, %138 : vector<2x128xf32>
    %140 = vector.extract_strided_slice %119 {offsets = [0, 256], sizes = [2, 128], strides = [1, 1]} : vector<2x384xf32> to vector<2x128xf32>
    %141 = vector.extract_strided_slice %123 {offsets = [0, 256], sizes = [2, 128], strides = [1, 1]} : vector<2x384xf32> to vector<2x128xf32>
    %142 = arith.mulf %131, %141 : vector<2x128xf32>
    %143 = arith.addf %140, %142 : vector<2x128xf32>
    %144 = math.tanh %143 : vector<2x128xf32>
    %cst_51 = arith.constant 1.000000e+00 : f32
    %145 = vector.broadcast %cst_51 : f32 to vector<2x128xf32>
    %146 = arith.subf %145, %139 : vector<2x128xf32>
    %147 = arith.mulf %146, %144 : vector<2x128xf32>
    %148 = arith.mulf %139, %109 : vector<2x128xf32>
    %149 = arith.addf %147, %148 : vector<2x128xf32>
    %150 = arith.index_cast %116 : i32 to index
    %c0_52 = arith.constant 0 : index
    %c0_53 = arith.constant 0 : index
    %151 = vector.load %arg6[%150, %c0_52, %c0_53] : memref<5x2x128xf32, #tpu.memory_space<vmem>>, vector<1x2x128xf32>
    %152 = vector.shape_cast %151 : vector<1x2x128xf32> to vector<2x128xf32>
    %153 = vector.shape_cast %149 : vector<2x128xf32> to vector<1x2x128xf32>
    tpu.vector_store %arg6[%150, %c0_52, %c0_53], %153 {strides = array<i32>} : memref<5x2x128xf32, #tpu.memory_space<vmem>>, vector<1x2x128xf32>,
    %c3_i32 = arith.constant 3 : i32
    %c0_i32_54 = arith.constant 0 : i32
    %154 = arith.cmpi eq, %arg0, %c0_i32_54 : i32
    %c4_i32_55 = arith.constant 4 : i32
    %155 = arith.subi %c4_i32_55, %c3_i32 : i32
    %156 = arith.select %154, %c3_i32, %155 : i32
    %157 = arith.index_cast %156 : i32 to index
    %c0_56 = arith.constant 0 : index
    %c0_57 = arith.constant 0 : index
    %158 = vector.load %arg7[%157, %c0_56, %c0_57] : memref<5x2x384xf32, #tpu.memory_space<vmem>>, vector<1x2x384xf32>
    %159 = vector.shape_cast %158 : vector<1x2x384xf32> to vector<2x384xf32>
    %160 = arith.truncf %149 : vector<2x128xf32> to vector<2x128xbf16>
    %cst_58 = arith.constant dense<0.000000e+00> : vector<2x384xf32>
    %161 = tpu.matmul %160, %30, %cst_58 {dimension_numbers = #tpu.dot_dimension_numbers<[1], [0], [0], [1], [0, 0, 1, 1], [], []>} : vector<2x128xbf16>, vector<128x384xbf16>, vector<2x384xf32> -> vector<2x384xf32>
    %162 = vector.broadcast %32 : vector<1x384xf32> to vector<2x384xf32>
    %163 = arith.addf %161, %162 : vector<2x384xf32>
    %164 = vector.extract_strided_slice %159 {offsets = [0, 0], sizes = [2, 128], strides = [1, 1]} : vector<2x384xf32> to vector<2x128xf32>
    %165 = vector.extract_strided_slice %163 {offsets = [0, 0], sizes = [2, 128], strides = [1, 1]} : vector<2x384xf32> to vector<2x128xf32>
    %166 = arith.addf %164, %165 : vector<2x128xf32>
    %167 = arith.negf %166 : vector<2x128xf32>
    %168 = math.exp %167 : vector<2x128xf32>
    %cst_59 = arith.constant 1.000000e+00 : f32
    %169 = vector.broadcast %cst_59 : f32 to vector<2x128xf32>
    %170 = arith.addf %169, %168 : vector<2x128xf32>
    %171 = arith.divf %169, %170 : vector<2x128xf32>
    %172 = vector.extract_strided_slice %159 {offsets = [0, 128], sizes = [2, 128], strides = [1, 1]} : vector<2x384xf32> to vector<2x128xf32>
    %173 = vector.extract_strided_slice %163 {offsets = [0, 128], sizes = [2, 128], strides = [1, 1]} : vector<2x384xf32> to vector<2x128xf32>
    %174 = arith.addf %172, %173 : vector<2x128xf32>
    %175 = arith.negf %174 : vector<2x128xf32>
    %176 = math.exp %175 : vector<2x128xf32>
    %cst_60 = arith.constant 1.000000e+00 : f32
    %177 = vector.broadcast %cst_60 : f32 to vector<2x128xf32>
    %178 = arith.addf %177, %176 : vector<2x128xf32>
    %179 = arith.divf %177, %178 : vector<2x128xf32>
    %180 = vector.extract_strided_slice %159 {offsets = [0, 256], sizes = [2, 128], strides = [1, 1]} : vector<2x384xf32> to vector<2x128xf32>
    %181 = vector.extract_strided_slice %163 {offsets = [0, 256], sizes = [2, 128], strides = [1, 1]} : vector<2x384xf32> to vector<2x128xf32>
    %182 = arith.mulf %171, %181 : vector<2x128xf32>
    %183 = arith.addf %180, %182 : vector<2x128xf32>
    %184 = math.tanh %183 : vector<2x128xf32>
    %cst_61 = arith.constant 1.000000e+00 : f32
    %185 = vector.broadcast %cst_61 : f32 to vector<2x128xf32>
    %186 = arith.subf %185, %179 : vector<2x128xf32>
    %187 = arith.mulf %186, %184 : vector<2x128xf32>
    %188 = arith.mulf %179, %149 : vector<2x128xf32>
    %189 = arith.addf %187, %188 : vector<2x128xf32>
    %190 = arith.index_cast %156 : i32 to index
    %c0_62 = arith.constant 0 : index
    %c0_63 = arith.constant 0 : index
    %191 = vector.load %arg6[%190, %c0_62, %c0_63] : memref<5x2x128xf32, #tpu.memory_space<vmem>>, vector<1x2x128xf32>
    %192 = vector.shape_cast %191 : vector<1x2x128xf32> to vector<2x128xf32>
    %193 = vector.shape_cast %189 : vector<2x128xf32> to vector<1x2x128xf32>
    tpu.vector_store %arg6[%190, %c0_62, %c0_63], %193 {strides = array<i32>} : memref<5x2x128xf32, #tpu.memory_space<vmem>>, vector<1x2x128xf32>,
    %c4_i32_64 = arith.constant 4 : i32
    %c0_i32_65 = arith.constant 0 : i32
    %194 = arith.cmpi eq, %arg0, %c0_i32_65 : i32
    %c4_i32_66 = arith.constant 4 : i32
    %195 = arith.subi %c4_i32_66, %c4_i32_64 : i32
    %196 = arith.select %194, %c4_i32_64, %195 : i32
    %197 = arith.index_cast %196 : i32 to index
    %c0_67 = arith.constant 0 : index
    %c0_68 = arith.constant 0 : index
    %198 = vector.load %arg7[%197, %c0_67, %c0_68] : memref<5x2x384xf32, #tpu.memory_space<vmem>>, vector<1x2x384xf32>
    %199 = vector.shape_cast %198 : vector<1x2x384xf32> to vector<2x384xf32>
    %200 = arith.truncf %189 : vector<2x128xf32> to vector<2x128xbf16>
    %cst_69 = arith.constant dense<0.000000e+00> : vector<2x384xf32>
    %201 = tpu.matmul %200, %30, %cst_69 {dimension_numbers = #tpu.dot_dimension_numbers<[1], [0], [0], [1], [0, 0, 1, 1], [], []>} : vector<2x128xbf16>, vector<128x384xbf16>, vector<2x384xf32> -> vector<2x384xf32>
    %202 = vector.broadcast %32 : vector<1x384xf32> to vector<2x384xf32>
    %203 = arith.addf %201, %202 : vector<2x384xf32>
    %204 = vector.extract_strided_slice %199 {offsets = [0, 0], sizes = [2, 128], strides = [1, 1]} : vector<2x384xf32> to vector<2x128xf32>
    %205 = vector.extract_strided_slice %203 {offsets = [0, 0], sizes = [2, 128], strides = [1, 1]} : vector<2x384xf32> to vector<2x128xf32>
    %206 = arith.addf %204, %205 : vector<2x128xf32>
    %207 = arith.negf %206 : vector<2x128xf32>
    %208 = math.exp %207 : vector<2x128xf32>
    %cst_70 = arith.constant 1.000000e+00 : f32
    %209 = vector.broadcast %cst_70 : f32 to vector<2x128xf32>
    %210 = arith.addf %209, %208 : vector<2x128xf32>
    %211 = arith.divf %209, %210 : vector<2x128xf32>
    %212 = vector.extract_strided_slice %199 {offsets = [0, 128], sizes = [2, 128], strides = [1, 1]} : vector<2x384xf32> to vector<2x128xf32>
    %213 = vector.extract_strided_slice %203 {offsets = [0, 128], sizes = [2, 128], strides = [1, 1]} : vector<2x384xf32> to vector<2x128xf32>
    %214 = arith.addf %212, %213 : vector<2x128xf32>
    %215 = arith.negf %214 : vector<2x128xf32>
    %216 = math.exp %215 : vector<2x128xf32>
    %cst_71 = arith.constant 1.000000e+00 : f32
    %217 = vector.broadcast %cst_71 : f32 to vector<2x128xf32>
    %218 = arith.addf %217, %216 : vector<2x128xf32>
    %219 = arith.divf %217, %218 : vector<2x128xf32>
    %220 = vector.extract_strided_slice %199 {offsets = [0, 256], sizes = [2, 128], strides = [1, 1]} : vector<2x384xf32> to vector<2x128xf32>
    %221 = vector.extract_strided_slice %203 {offsets = [0, 256], sizes = [2, 128], strides = [1, 1]} : vector<2x384xf32> to vector<2x128xf32>
    %222 = arith.mulf %211, %221 : vector<2x128xf32>
    %223 = arith.addf %220, %222 : vector<2x128xf32>
    %224 = math.tanh %223 : vector<2x128xf32>
    %cst_72 = arith.constant 1.000000e+00 : f32
    %225 = vector.broadcast %cst_72 : f32 to vector<2x128xf32>
    %226 = arith.subf %225, %219 : vector<2x128xf32>
    %227 = arith.mulf %226, %224 : vector<2x128xf32>
    %228 = arith.mulf %219, %189 : vector<2x128xf32>
    %229 = arith.addf %227, %228 : vector<2x128xf32>
    %230 = arith.index_cast %196 : i32 to index
    %c0_73 = arith.constant 0 : index
    %c0_74 = arith.constant 0 : index
    %231 = vector.load %arg6[%230, %c0_73, %c0_74] : memref<5x2x128xf32, #tpu.memory_space<vmem>>, vector<1x2x128xf32>
    %232 = vector.shape_cast %231 : vector<1x2x128xf32> to vector<2x128xf32>
    %233 = vector.shape_cast %229 : vector<2x128xf32> to vector<1x2x128xf32>
    tpu.vector_store %arg6[%230, %c0_73, %c0_74], %233 {strides = array<i32>} : memref<5x2x128xf32, #tpu.memory_space<vmem>>, vector<1x2x128xf32>,
    %c5_i32 = arith.constant 5 : i32
    return
  }
  func.func @transform_0(%arg0: i32) -> (i32, i32) {
    %c0_i32 = arith.constant 0 : i32
    %c0_i32_0 = arith.constant 0 : i32
    %c0_i32_1 = arith.constant 0 : i32
    return %c0_i32, %c0_i32_0 : i32, i32
  }
  func.func @transform_1(%arg0: i32) -> (i32, i32, i32) {
    %c0_i32 = arith.constant 0 : i32
    %c0_i32_0 = arith.constant 0 : i32
    %c0_i32_1 = arith.constant 0 : i32
    return %arg0, %c0_i32, %c0_i32_0 : i32, i32, i32
  }
  func.func @transform_2(%arg0: i32) -> (i32, i32, i32) {
    %c0_i32 = arith.constant 0 : i32
    %c0_i32_0 = arith.constant 0 : i32
    %c0_i32_1 = arith.constant 0 : i32
    return %arg0, %c0_i32, %c0_i32_0 : i32, i32, i32
  }
  func.func @transform_3(%arg0: i32) -> (i32, i32, i32) {
    %c0_i32 = arith.constant 0 : i32
    %c0_i32_0 = arith.constant 0 : i32
    %c0_i32_1 = arith.constant 0 : i32
    return %arg0, %c0_i32, %c0_i32_0 : i32, i32, i32
  }
  func.func @transform_4(%arg0: i32) -> (i32, i32, i32) {
    %c0_i32 = arith.constant 0 : i32
    %c0_i32_0 = arith.constant 0 : i32
    %c0_i32_1 = arith.constant 0 : i32
    return %arg0, %c0_i32, %c0_i32_0 : i32, i32, i32
  }
  func.func @transform_5(%arg0: i32) -> (i32, i32, i32) {
    %c0_i32 = arith.constant 0 : i32
    %c0_i32_0 = arith.constant 0 : i32
    %c0_i32_1 = arith.constant 0 : i32
    return %c0_i32, %c0_i32_0, %arg0 : i32, i32, i32
  }
}

module attributes {stable_mosaic.version = 11 : i64} {
  func.func @_gru_bidir_kernel(%arg0: i32, %arg1: memref<10x256xf32, #tpu.memory_space<vmem>>, %arg2: memref<1x256x384xbf16, #tpu.memory_space<vmem>>, %arg3: memref<1x1x384xf32, #tpu.memory_space<vmem>>, %arg4: memref<1x128x384xbf16, #tpu.memory_space<vmem>>, %arg5: memref<1x1x384xf32, #tpu.memory_space<vmem>>, %arg6: memref<5x2x128xf32, #tpu.memory_space<vmem>>, %arg7: memref<5x2x384xf32, #tpu.memory_space<vmem>>) attributes {dimension_semantics = [#tpu.dimension_semantics<parallel>], iteration_bounds = array<i64: 2>, scalar_prefetch = 0 : i64, scratch_operands = 1 : i64, tpu.core_type = #tpu.core_type<tc>, window_params = [{pipeline_mode = #tpu.pipeline_mode<synchronous>, transform_indices = @transform_0, window_bounds = array<i64: 10, 256>}, {transform_indices = @transform_1, window_bounds = array<i64: 1, 256, 384>}, {transform_indices = @transform_2, window_bounds = array<i64: 1, 1, 384>}, {transform_indices = @transform_3, window_bounds = array<i64: 1, 128, 384>}, {transform_indices = @transform_4, window_bounds = array<i64: 1, 1, 384>}, {transform_indices = @transform_5, window_bounds = array<i64: 5, 2, 128>}]} {
    %c0 = arith.constant 0 : index
    %c0_0 = arith.constant 0 : index
    %0 = vector.load %arg1[%c0, %c0_0] : memref<10x256xf32, #tpu.memory_space<vmem>>, vector<10x256xf32>
    %1 = arith.truncf %0 : vector<10x256xf32> to vector<10x256xbf16>
    %c0_1 = arith.constant 0 : index
    %c0_2 = arith.constant 0 : index
    %c0_3 = arith.constant 0 : index
    %2 = vector.load %arg2[%c0_1, %c0_2, %c0_3] : memref<1x256x384xbf16, #tpu.memory_space<vmem>>, vector<1x256x384xbf16>
    %3 = vector.shape_cast %2 : vector<1x256x384xbf16> to vector<256x384xbf16>
    %cst = arith.constant dense<0.000000e+00> : vector<10x384xf32>
    %4 = tpu.matmul %1, %3, %cst {dimension_numbers = #tpu.dot_dimension_numbers<[1], [0], [0], [1], [0, 0, 1, 1], [], []>} : vector<10x256xbf16>, vector<256x384xbf16>, vector<10x384xf32> -> vector<10x384xf32>
    %c0_4 = arith.constant 0 : index
    %c0_5 = arith.constant 0 : index
    %c0_6 = arith.constant 0 : index
    %5 = vector.load %arg3[%c0_4, %c0_5, %c0_6] : memref<1x1x384xf32, #tpu.memory_space<vmem>>, vector<1x1x384xf32>
    %6 = vector.shape_cast %5 : vector<1x1x384xf32> to vector<1x384xf32>
    %7 = vector.broadcast %6 : vector<1x384xf32> to vector<10x384xf32>
    %8 = arith.addf %4, %7 : vector<10x384xf32>
    %9 = vector.extract_strided_slice %8 {offsets = [0, 0], sizes = [2, 384], strides = [1, 1]} : vector<10x384xf32> to vector<2x384xf32>
    %c0_7 = arith.constant 0 : index
    %c0_8 = arith.constant 0 : index
    %c0_9 = arith.constant 0 : index
    %10 = vector.load %arg7[%c0_7, %c0_8, %c0_9] : memref<5x2x384xf32, #tpu.memory_space<vmem>>, vector<1x2x384xf32>
    %11 = vector.shape_cast %10 : vector<1x2x384xf32> to vector<2x384xf32>
    %12 = vector.shape_cast %9 : vector<2x384xf32> to vector<1x2x384xf32>
    tpu.vector_store %arg7[%c0_7, %c0_8, %c0_9], %12 {strides = array<i32>} : memref<5x2x384xf32, #tpu.memory_space<vmem>>, vector<1x2x384xf32>,
    %13 = vector.extract_strided_slice %8 {offsets = [2, 0], sizes = [2, 384], strides = [1, 1]} : vector<10x384xf32> to vector<2x384xf32>
    %c1 = arith.constant 1 : index
    %c0_10 = arith.constant 0 : index
    %c0_11 = arith.constant 0 : index
    %14 = vector.load %arg7[%c1, %c0_10, %c0_11] : memref<5x2x384xf32, #tpu.memory_space<vmem>>, vector<1x2x384xf32>
    %15 = vector.shape_cast %14 : vector<1x2x384xf32> to vector<2x384xf32>
    %16 = vector.shape_cast %13 : vector<2x384xf32> to vector<1x2x384xf32>
    tpu.vector_store %arg7[%c1, %c0_10, %c0_11], %16 {strides = array<i32>} : memref<5x2x384xf32, #tpu.memory_space<vmem>>, vector<1x2x384xf32>,
    %17 = vector.extract_strided_slice %8 {offsets = [4, 0], sizes = [2, 384], strides = [1, 1]} : vector<10x384xf32> to vector<2x384xf32>
    %c2 = arith.constant 2 : index
    %c0_12 = arith.constant 0 : index
    %c0_13 = arith.constant 0 : index
    %18 = vector.load %arg7[%c2, %c0_12, %c0_13] : memref<5x2x384xf32, #tpu.memory_space<vmem>>, vector<1x2x384xf32>
    %19 = vector.shape_cast %18 : vector<1x2x384xf32> to vector<2x384xf32>
    %20 = vector.shape_cast %17 : vector<2x384xf32> to vector<1x2x384xf32>
    tpu.vector_store %arg7[%c2, %c0_12, %c0_13], %20 {strides = array<i32>} : memref<5x2x384xf32, #tpu.memory_space<vmem>>, vector<1x2x384xf32>,
    %21 = vector.extract_strided_slice %8 {offsets = [6, 0], sizes = [2, 384], strides = [1, 1]} : vector<10x384xf32> to vector<2x384xf32>
    %c3 = arith.constant 3 : index
    %c0_14 = arith.constant 0 : index
    %c0_15 = arith.constant 0 : index
    %22 = vector.load %arg7[%c3, %c0_14, %c0_15] : memref<5x2x384xf32, #tpu.memory_space<vmem>>, vector<1x2x384xf32>
    %23 = vector.shape_cast %22 : vector<1x2x384xf32> to vector<2x384xf32>
    %24 = vector.shape_cast %21 : vector<2x384xf32> to vector<1x2x384xf32>
    tpu.vector_store %arg7[%c3, %c0_14, %c0_15], %24 {strides = array<i32>} : memref<5x2x384xf32, #tpu.memory_space<vmem>>, vector<1x2x384xf32>,
    %25 = vector.extract_strided_slice %8 {offsets = [8, 0], sizes = [2, 384], strides = [1, 1]} : vector<10x384xf32> to vector<2x384xf32>
    %c4 = arith.constant 4 : index
    %c0_16 = arith.constant 0 : index
    %c0_17 = arith.constant 0 : index
    %26 = vector.load %arg7[%c4, %c0_16, %c0_17] : memref<5x2x384xf32, #tpu.memory_space<vmem>>, vector<1x2x384xf32>
    %27 = vector.shape_cast %26 : vector<1x2x384xf32> to vector<2x384xf32>
    %28 = vector.shape_cast %25 : vector<2x384xf32> to vector<1x2x384xf32>
    tpu.vector_store %arg7[%c4, %c0_16, %c0_17], %28 {strides = array<i32>} : memref<5x2x384xf32, #tpu.memory_space<vmem>>, vector<1x2x384xf32>,
    %c0_18 = arith.constant 0 : index
    %c0_19 = arith.constant 0 : index
    %c0_20 = arith.constant 0 : index
    %29 = vector.load %arg4[%c0_18, %c0_19, %c0_20] : memref<1x128x384xbf16, #tpu.memory_space<vmem>>, vector<1x128x384xbf16>
    %30 = vector.shape_cast %29 : vector<1x128x384xbf16> to vector<128x384xbf16>
    %c0_21 = arith.constant 0 : index
    %c0_22 = arith.constant 0 : index
    %c0_23 = arith.constant 0 : index
    %31 = vector.load %arg5[%c0_21, %c0_22, %c0_23] : memref<1x1x384xf32, #tpu.memory_space<vmem>>, vector<1x1x384xf32>
    %32 = vector.shape_cast %31 : vector<1x1x384xf32> to vector<1x384xf32>
    %cst_24 = arith.constant 0.000000e+00 : f32
    %33 = vector.broadcast %cst_24 : f32 to vector<2x128xf32>
    %c0_i32 = arith.constant 0 : i32
    %c0_i32_25 = arith.constant 0 : i32
    %34 = arith.cmpi eq, %arg0, %c0_i32_25 : i32
    %c4_i32 = arith.constant 4 : i32
    %35 = arith.subi %c4_i32, %c0_i32 : i32
    %36 = arith.select %34, %c0_i32, %35 : i32
    %37 = arith.index_cast %36 : i32 to index
    %c0_26 = arith.constant 0 : index
    %c0_27 = arith.constant 0 : index
    %38 = vector.load %arg7[%37, %c0_26, %c0_27] : memref<5x2x384xf32, #tpu.memory_space<vmem>>, vector<1x2x384xf32>
    %39 = vector.shape_cast %38 : vector<1x2x384xf32> to vector<2x384xf32>
    %40 = arith.truncf %33 : vector<2x128xf32> to vector<2x128xbf16>
    %cst_28 = arith.constant dense<0.000000e+00> : vector<2x384xf32>
    %41 = tpu.matmul %40, %30, %cst_28 {dimension_numbers = #tpu.dot_dimension_numbers<[1], [0], [0], [1], [0, 0, 1, 1], [], []>} : vector<2x128xbf16>, vector<128x384xbf16>, vector<2x384xf32> -> vector<2x384xf32>
    %42 = vector.broadcast %32 : vector<1x384xf32> to vector<2x384xf32>
    %43 = arith.addf %41, %42 : vector<2x384xf32>
    %44 = vector.extract_strided_slice %39 {offsets = [0, 0], sizes = [2, 128], strides = [1, 1]} : vector<2x384xf32> to vector<2x128xf32>
    %45 = vector.extract_strided_slice %43 {offsets = [0, 0], sizes = [2, 128], strides = [1, 1]} : vector<2x384xf32> to vector<2x128xf32>
    %46 = arith.addf %44, %45 : vector<2x128xf32>
    %47 = arith.negf %46 : vector<2x128xf32>
    %48 = math.exp %47 : vector<2x128xf32>
    %cst_29 = arith.constant 1.000000e+00 : f32
    %49 = vector.broadcast %cst_29 : f32 to vector<2x128xf32>
    %50 = arith.addf %49, %48 : vector<2x128xf32>
    %51 = arith.divf %49, %50 : vector<2x128xf32>
    %52 = vector.extract_strided_slice %39 {offsets = [0, 128], sizes = [2, 128], strides = [1, 1]} : vector<2x384xf32> to vector<2x128xf32>
    %53 = vector.extract_strided_slice %43 {offsets = [0, 128], sizes = [2, 128], strides = [1, 1]} : vector<2x384xf32> to vector<2x128xf32>
    %54 = arith.addf %52, %53 : vector<2x128xf32>
    %55 = arith.negf %54 : vector<2x128xf32>
    %56 = math.exp %55 : vector<2x128xf32>
    %cst_30 = arith.constant 1.000000e+00 : f32
    %57 = vector.broadcast %cst_30 : f32 to vector<2x128xf32>
    %58 = arith.addf %57, %56 : vector<2x128xf32>
    %59 = arith.divf %57, %58 : vector<2x128xf32>
    %60 = vector.extract_strided_slice %39 {offsets = [0, 256], sizes = [2, 128], strides = [1, 1]} : vector<2x384xf32> to vector<2x128xf32>
    %61 = vector.extract_strided_slice %43 {offsets = [0, 256], sizes = [2, 128], strides = [1, 1]} : vector<2x384xf32> to vector<2x128xf32>
    %62 = arith.mulf %51, %61 : vector<2x128xf32>
    %63 = arith.addf %60, %62 : vector<2x128xf32>
    %64 = math.tanh %63 : vector<2x128xf32>
    %cst_31 = arith.constant 1.000000e+00 : f32
    %65 = vector.broadcast %cst_31 : f32 to vector<2x128xf32>
    %66 = arith.subf %65, %59 : vector<2x128xf32>
    %67 = arith.mulf %66, %64 : vector<2x128xf32>
    %68 = arith.mulf %59, %33 : vector<2x128xf32>
    %69 = arith.addf %67, %68 : vector<2x128xf32>
    %70 = arith.index_cast %36 : i32 to index
    %c0_32 = arith.constant 0 : index
    %c0_33 = arith.constant 0 : index
    %71 = vector.load %arg6[%70, %c0_32, %c0_33] : memref<5x2x128xf32, #tpu.memory_space<vmem>>, vector<1x2x128xf32>
    %72 = vector.shape_cast %71 : vector<1x2x128xf32> to vector<2x128xf32>
    %73 = vector.shape_cast %69 : vector<2x128xf32> to vector<1x2x128xf32>
    tpu.vector_store %arg6[%70, %c0_32, %c0_33], %73 {strides = array<i32>} : memref<5x2x128xf32, #tpu.memory_space<vmem>>, vector<1x2x128xf32>,
    %c1_i32 = arith.constant 1 : i32
    %c0_i32_34 = arith.constant 0 : i32
    %74 = arith.cmpi eq, %arg0, %c0_i32_34 : i32
    %c4_i32_35 = arith.constant 4 : i32
    %75 = arith.subi %c4_i32_35, %c1_i32 : i32
    %76 = arith.select %74, %c1_i32, %75 : i32
    %77 = arith.index_cast %76 : i32 to index
    %c0_36 = arith.constant 0 : index
    %c0_37 = arith.constant 0 : index
    %78 = vector.load %arg7[%77, %c0_36, %c0_37] : memref<5x2x384xf32, #tpu.memory_space<vmem>>, vector<1x2x384xf32>
    %79 = vector.shape_cast %78 : vector<1x2x384xf32> to vector<2x384xf32>
    %80 = arith.truncf %69 : vector<2x128xf32> to vector<2x128xbf16>
    %cst_38 = arith.constant dense<0.000000e+00> : vector<2x384xf32>
    %81 = tpu.matmul %80, %30, %cst_38 {dimension_numbers = #tpu.dot_dimension_numbers<[1], [0], [0], [1], [0, 0, 1, 1], [], []>} : vector<2x128xbf16>, vector<128x384xbf16>, vector<2x384xf32> -> vector<2x384xf32>
    %82 = vector.broadcast %32 : vector<1x384xf32> to vector<2x384xf32>
    %83 = arith.addf %81, %82 : vector<2x384xf32>
    %84 = vector.extract_strided_slice %79 {offsets = [0, 0], sizes = [2, 128], strides = [1, 1]} : vector<2x384xf32> to vector<2x128xf32>
    %85 = vector.extract_strided_slice %83 {offsets = [0, 0], sizes = [2, 128], strides = [1, 1]} : vector<2x384xf32> to vector<2x128xf32>
    %86 = arith.addf %84, %85 : vector<2x128xf32>
    %87 = arith.negf %86 : vector<2x128xf32>
    %88 = math.exp %87 : vector<2x128xf32>
    %cst_39 = arith.constant 1.000000e+00 : f32
    %89 = vector.broadcast %cst_39 : f32 to vector<2x128xf32>
    %90 = arith.addf %89, %88 : vector<2x128xf32>
    %91 = arith.divf %89, %90 : vector<2x128xf32>
    %92 = vector.extract_strided_slice %79 {offsets = [0, 128], sizes = [2, 128], strides = [1, 1]} : vector<2x384xf32> to vector<2x128xf32>
    %93 = vector.extract_strided_slice %83 {offsets = [0, 128], sizes = [2, 128], strides = [1, 1]} : vector<2x384xf32> to vector<2x128xf32>
    %94 = arith.addf %92, %93 : vector<2x128xf32>
    %95 = arith.negf %94 : vector<2x128xf32>
    %96 = math.exp %95 : vector<2x128xf32>
    %cst_40 = arith.constant 1.000000e+00 : f32
    %97 = vector.broadcast %cst_40 : f32 to vector<2x128xf32>
    %98 = arith.addf %97, %96 : vector<2x128xf32>
    %99 = arith.divf %97, %98 : vector<2x128xf32>
    %100 = vector.extract_strided_slice %79 {offsets = [0, 256], sizes = [2, 128], strides = [1, 1]} : vector<2x384xf32> to vector<2x128xf32>
    %101 = vector.extract_strided_slice %83 {offsets = [0, 256], sizes = [2, 128], strides = [1, 1]} : vector<2x384xf32> to vector<2x128xf32>
    %102 = arith.mulf %91, %101 : vector<2x128xf32>
    %103 = arith.addf %100, %102 : vector<2x128xf32>
    %104 = math.tanh %103 : vector<2x128xf32>
    %cst_41 = arith.constant 1.000000e+00 : f32
    %105 = vector.broadcast %cst_41 : f32 to vector<2x128xf32>
    %106 = arith.subf %105, %99 : vector<2x128xf32>
    %107 = arith.mulf %106, %104 : vector<2x128xf32>
    %108 = arith.mulf %99, %69 : vector<2x128xf32>
    %109 = arith.addf %107, %108 : vector<2x128xf32>
    %110 = arith.index_cast %76 : i32 to index
    %c0_42 = arith.constant 0 : index
    %c0_43 = arith.constant 0 : index
    %111 = vector.load %arg6[%110, %c0_42, %c0_43] : memref<5x2x128xf32, #tpu.memory_space<vmem>>, vector<1x2x128xf32>
    %112 = vector.shape_cast %111 : vector<1x2x128xf32> to vector<2x128xf32>
    %113 = vector.shape_cast %109 : vector<2x128xf32> to vector<1x2x128xf32>
    tpu.vector_store %arg6[%110, %c0_42, %c0_43], %113 {strides = array<i32>} : memref<5x2x128xf32, #tpu.memory_space<vmem>>, vector<1x2x128xf32>,
    %c2_i32 = arith.constant 2 : i32
    %c0_i32_44 = arith.constant 0 : i32
    %114 = arith.cmpi eq, %arg0, %c0_i32_44 : i32
    %c4_i32_45 = arith.constant 4 : i32
    %115 = arith.subi %c4_i32_45, %c2_i32 : i32
    %116 = arith.select %114, %c2_i32, %115 : i32
    %117 = arith.index_cast %116 : i32 to index
    %c0_46 = arith.constant 0 : index
    %c0_47 = arith.constant 0 : index
    %118 = vector.load %arg7[%117, %c0_46, %c0_47] : memref<5x2x384xf32, #tpu.memory_space<vmem>>, vector<1x2x384xf32>
    %119 = vector.shape_cast %118 : vector<1x2x384xf32> to vector<2x384xf32>
    %120 = arith.truncf %109 : vector<2x128xf32> to vector<2x128xbf16>
    %cst_48 = arith.constant dense<0.000000e+00> : vector<2x384xf32>
    %121 = tpu.matmul %120, %30, %cst_48 {dimension_numbers = #tpu.dot_dimension_numbers<[1], [0], [0], [1], [0, 0, 1, 1], [], []>} : vector<2x128xbf16>, vector<128x384xbf16>, vector<2x384xf32> -> vector<2x384xf32>
    %122 = vector.broadcast %32 : vector<1x384xf32> to vector<2x384xf32>
    %123 = arith.addf %121, %122 : vector<2x384xf32>
    %124 = vector.extract_strided_slice %119 {offsets = [0, 0], sizes = [2, 128], strides = [1, 1]} : vector<2x384xf32> to vector<2x128xf32>
    %125 = vector.extract_strided_slice %123 {offsets = [0, 0], sizes = [2, 128], strides = [1, 1]} : vector<2x384xf32> to vector<2x128xf32>
    %126 = arith.addf %124, %125 : vector<2x128xf32>
    %127 = arith.negf %126 : vector<2x128xf32>
    %128 = math.exp %127 : vector<2x128xf32>
    %cst_49 = arith.constant 1.000000e+00 : f32
    %129 = vector.broadcast %cst_49 : f32 to vector<2x128xf32>
    %130 = arith.addf %129, %128 : vector<2x128xf32>
    %131 = arith.divf %129, %130 : vector<2x128xf32>
    %132 = vector.extract_strided_slice %119 {offsets = [0, 128], sizes = [2, 128], strides = [1, 1]} : vector<2x384xf32> to vector<2x128xf32>
    %133 = vector.extract_strided_slice %123 {offsets = [0, 128], sizes = [2, 128], strides = [1, 1]} : vector<2x384xf32> to vector<2x128xf32>
    %134 = arith.addf %132, %133 : vector<2x128xf32>
    %135 = arith.negf %134 : vector<2x128xf32>
    %136 = math.exp %135 : vector<2x128xf32>
    %cst_50 = arith.constant 1.000000e+00 : f32
    %137 = vector.broadcast %cst_50 : f32 to vector<2x128xf32>
    %138 = arith.addf %137, %136 : vector<2x128xf32>
    %139 = arith.divf %137, %138 : vector<2x128xf32>
    %140 = vector.extract_strided_slice %119 {offsets = [0, 256], sizes = [2, 128], strides = [1, 1]} : vector<2x384xf32> to vector<2x128xf32>
    %141 = vector.extract_strided_slice %123 {offsets = [0, 256], sizes = [2, 128], strides = [1, 1]} : vector<2x384xf32> to vector<2x128xf32>
    %142 = arith.mulf %131, %141 : vector<2x128xf32>
    %143 = arith.addf %140, %142 : vector<2x128xf32>
    %144 = math.tanh %143 : vector<2x128xf32>
    %cst_51 = arith.constant 1.000000e+00 : f32
    %145 = vector.broadcast %cst_51 : f32 to vector<2x128xf32>
    %146 = arith.subf %145, %139 : vector<2x128xf32>
    %147 = arith.mulf %146, %144 : vector<2x128xf32>
    %148 = arith.mulf %139, %109 : vector<2x128xf32>
    %149 = arith.addf %147, %148 : vector<2x128xf32>
    %150 = arith.index_cast %116 : i32 to index
    %c0_52 = arith.constant 0 : index
    %c0_53 = arith.constant 0 : index
    %151 = vector.load %arg6[%150, %c0_52, %c0_53] : memref<5x2x128xf32, #tpu.memory_space<vmem>>, vector<1x2x128xf32>
    %152 = vector.shape_cast %151 : vector<1x2x128xf32> to vector<2x128xf32>
    %153 = vector.shape_cast %149 : vector<2x128xf32> to vector<1x2x128xf32>
    tpu.vector_store %arg6[%150, %c0_52, %c0_53], %153 {strides = array<i32>} : memref<5x2x128xf32, #tpu.memory_space<vmem>>, vector<1x2x128xf32>,
    %c3_i32 = arith.constant 3 : i32
    %c0_i32_54 = arith.constant 0 : i32
    %154 = arith.cmpi eq, %arg0, %c0_i32_54 : i32
    %c4_i32_55 = arith.constant 4 : i32
    %155 = arith.subi %c4_i32_55, %c3_i32 : i32
    %156 = arith.select %154, %c3_i32, %155 : i32
    %157 = arith.index_cast %156 : i32 to index
    %c0_56 = arith.constant 0 : index
    %c0_57 = arith.constant 0 : index
    %158 = vector.load %arg7[%157, %c0_56, %c0_57] : memref<5x2x384xf32, #tpu.memory_space<vmem>>, vector<1x2x384xf32>
    %159 = vector.shape_cast %158 : vector<1x2x384xf32> to vector<2x384xf32>
    %160 = arith.truncf %149 : vector<2x128xf32> to vector<2x128xbf16>
    %cst_58 = arith.constant dense<0.000000e+00> : vector<2x384xf32>
    %161 = tpu.matmul %160, %30, %cst_58 {dimension_numbers = #tpu.dot_dimension_numbers<[1], [0], [0], [1], [0, 0, 1, 1], [], []>} : vector<2x128xbf16>, vector<128x384xbf16>, vector<2x384xf32> -> vector<2x384xf32>
    %162 = vector.broadcast %32 : vector<1x384xf32> to vector<2x384xf32>
    %163 = arith.addf %161, %162 : vector<2x384xf32>
    %164 = vector.extract_strided_slice %159 {offsets = [0, 0], sizes = [2, 128], strides = [1, 1]} : vector<2x384xf32> to vector<2x128xf32>
    %165 = vector.extract_strided_slice %163 {offsets = [0, 0], sizes = [2, 128], strides = [1, 1]} : vector<2x384xf32> to vector<2x128xf32>
    %166 = arith.addf %164, %165 : vector<2x128xf32>
    %167 = arith.negf %166 : vector<2x128xf32>
    %168 = math.exp %167 : vector<2x128xf32>
    %cst_59 = arith.constant 1.000000e+00 : f32
    %169 = vector.broadcast %cst_59 : f32 to vector<2x128xf32>
    %170 = arith.addf %169, %168 : vector<2x128xf32>
    %171 = arith.divf %169, %170 : vector<2x128xf32>
    %172 = vector.extract_strided_slice %159 {offsets = [0, 128], sizes = [2, 128], strides = [1, 1]} : vector<2x384xf32> to vector<2x128xf32>
    %173 = vector.extract_strided_slice %163 {offsets = [0, 128], sizes = [2, 128], strides = [1, 1]} : vector<2x384xf32> to vector<2x128xf32>
    %174 = arith.addf %172, %173 : vector<2x128xf32>
    %175 = arith.negf %174 : vector<2x128xf32>
    %176 = math.exp %175 : vector<2x128xf32>
    %cst_60 = arith.constant 1.000000e+00 : f32
    %177 = vector.broadcast %cst_60 : f32 to vector<2x128xf32>
    %178 = arith.addf %177, %176 : vector<2x128xf32>
    %179 = arith.divf %177, %178 : vector<2x128xf32>
    %180 = vector.extract_strided_slice %159 {offsets = [0, 256], sizes = [2, 128], strides = [1, 1]} : vector<2x384xf32> to vector<2x128xf32>
    %181 = vector.extract_strided_slice %163 {offsets = [0, 256], sizes = [2, 128], strides = [1, 1]} : vector<2x384xf32> to vector<2x128xf32>
    %182 = arith.mulf %171, %181 : vector<2x128xf32>
    %183 = arith.addf %180, %182 : vector<2x128xf32>
    %184 = math.tanh %183 : vector<2x128xf32>
    %cst_61 = arith.constant 1.000000e+00 : f32
    %185 = vector.broadcast %cst_61 : f32 to vector<2x128xf32>
    %186 = arith.subf %185, %179 : vector<2x128xf32>
    %187 = arith.mulf %186, %184 : vector<2x128xf32>
    %188 = arith.mulf %179, %149 : vector<2x128xf32>
    %189 = arith.addf %187, %188 : vector<2x128xf32>
    %190 = arith.index_cast %156 : i32 to index
    %c0_62 = arith.constant 0 : index
    %c0_63 = arith.constant 0 : index
    %191 = vector.load %arg6[%190, %c0_62, %c0_63] : memref<5x2x128xf32, #tpu.memory_space<vmem>>, vector<1x2x128xf32>
    %192 = vector.shape_cast %191 : vector<1x2x128xf32> to vector<2x128xf32>
    %193 = vector.shape_cast %189 : vector<2x128xf32> to vector<1x2x128xf32>
    tpu.vector_store %arg6[%190, %c0_62, %c0_63], %193 {strides = array<i32>} : memref<5x2x128xf32, #tpu.memory_space<vmem>>, vector<1x2x128xf32>,
    %c4_i32_64 = arith.constant 4 : i32
    %c0_i32_65 = arith.constant 0 : i32
    %194 = arith.cmpi eq, %arg0, %c0_i32_65 : i32
    %c4_i32_66 = arith.constant 4 : i32
    %195 = arith.subi %c4_i32_66, %c4_i32_64 : i32
    %196 = arith.select %194, %c4_i32_64, %195 : i32
    %197 = arith.index_cast %196 : i32 to index
    %c0_67 = arith.constant 0 : index
    %c0_68 = arith.constant 0 : index
    %198 = vector.load %arg7[%197, %c0_67, %c0_68] : memref<5x2x384xf32, #tpu.memory_space<vmem>>, vector<1x2x384xf32>
    %199 = vector.shape_cast %198 : vector<1x2x384xf32> to vector<2x384xf32>
    %200 = arith.truncf %189 : vector<2x128xf32> to vector<2x128xbf16>
    %cst_69 = arith.constant dense<0.000000e+00> : vector<2x384xf32>
    %201 = tpu.matmul %200, %30, %cst_69 {dimension_numbers = #tpu.dot_dimension_numbers<[1], [0], [0], [1], [0, 0, 1, 1], [], []>} : vector<2x128xbf16>, vector<128x384xbf16>, vector<2x384xf32> -> vector<2x384xf32>
    %202 = vector.broadcast %32 : vector<1x384xf32> to vector<2x384xf32>
    %203 = arith.addf %201, %202 : vector<2x384xf32>
    %204 = vector.extract_strided_slice %199 {offsets = [0, 0], sizes = [2, 128], strides = [1, 1]} : vector<2x384xf32> to vector<2x128xf32>
    %205 = vector.extract_strided_slice %203 {offsets = [0, 0], sizes = [2, 128], strides = [1, 1]} : vector<2x384xf32> to vector<2x128xf32>
    %206 = arith.addf %204, %205 : vector<2x128xf32>
    %207 = arith.negf %206 : vector<2x128xf32>
    %208 = math.exp %207 : vector<2x128xf32>
    %cst_70 = arith.constant 1.000000e+00 : f32
    %209 = vector.broadcast %cst_70 : f32 to vector<2x128xf32>
    %210 = arith.addf %209, %208 : vector<2x128xf32>
    %211 = arith.divf %209, %210 : vector<2x128xf32>
    %212 = vector.extract_strided_slice %199 {offsets = [0, 128], sizes = [2, 128], strides = [1, 1]} : vector<2x384xf32> to vector<2x128xf32>
    %213 = vector.extract_strided_slice %203 {offsets = [0, 128], sizes = [2, 128], strides = [1, 1]} : vector<2x384xf32> to vector<2x128xf32>
    %214 = arith.addf %212, %213 : vector<2x128xf32>
    %215 = arith.negf %214 : vector<2x128xf32>
    %216 = math.exp %215 : vector<2x128xf32>
    %cst_71 = arith.constant 1.000000e+00 : f32
    %217 = vector.broadcast %cst_71 : f32 to vector<2x128xf32>
    %218 = arith.addf %217, %216 : vector<2x128xf32>
    %219 = arith.divf %217, %218 : vector<2x128xf32>
    %220 = vector.extract_strided_slice %199 {offsets = [0, 256], sizes = [2, 128], strides = [1, 1]} : vector<2x384xf32> to vector<2x128xf32>
    %221 = vector.extract_strided_slice %203 {offsets = [0, 256], sizes = [2, 128], strides = [1, 1]} : vector<2x384xf32> to vector<2x128xf32>
    %222 = arith.mulf %211, %221 : vector<2x128xf32>
    %223 = arith.addf %220, %222 : vector<2x128xf32>
    %224 = math.tanh %223 : vector<2x128xf32>
    %cst_72 = arith.constant 1.000000e+00 : f32
    %225 = vector.broadcast %cst_72 : f32 to vector<2x128xf32>
    %226 = arith.subf %225, %219 : vector<2x128xf32>
    %227 = arith.mulf %226, %224 : vector<2x128xf32>
    %228 = arith.mulf %219, %189 : vector<2x128xf32>
    %229 = arith.addf %227, %228 : vector<2x128xf32>
    %230 = arith.index_cast %196 : i32 to index
    %c0_73 = arith.constant 0 : index
    %c0_74 = arith.constant 0 : index
    %231 = vector.load %arg6[%230, %c0_73, %c0_74] : memref<5x2x128xf32, #tpu.memory_space<vmem>>, vector<1x2x128xf32>
    %232 = vector.shape_cast %231 : vector<1x2x128xf32> to vector<2x128xf32>
    %233 = vector.shape_cast %229 : vector<2x128xf32> to vector<1x2x128xf32>
    tpu.vector_store %arg6[%230, %c0_73, %c0_74], %233 {strides = array<i32>} : memref<5x2x128xf32, #tpu.memory_space<vmem>>, vector<1x2x128xf32>,
    %c5_i32 = arith.constant 5 : i32
    return
  }
  func.func @transform_0(%arg0: i32) -> (i32, i32) {
    %c0_i32 = arith.constant 0 : i32
    %c0_i32_0 = arith.constant 0 : i32
    %c0_i32_1 = arith.constant 0 : i32
    return %c0_i32, %c0_i32_0 : i32, i32
  }
  func.func @transform_1(%arg0: i32) -> (i32, i32, i32) {
    %c0_i32 = arith.constant 0 : i32
    %c0_i32_0 = arith.constant 0 : i32
    %c0_i32_1 = arith.constant 0 : i32
    return %arg0, %c0_i32, %c0_i32_0 : i32, i32, i32
  }
  func.func @transform_2(%arg0: i32) -> (i32, i32, i32) {
    %c0_i32 = arith.constant 0 : i32
    %c0_i32_0 = arith.constant 0 : i32
    %c0_i32_1 = arith.constant 0 : i32
    return %arg0, %c0_i32, %c0_i32_0 : i32, i32, i32
  }
  func.func @transform_3(%arg0: i32) -> (i32, i32, i32) {
    %c0_i32 = arith.constant 0 : i32
    %c0_i32_0 = arith.constant 0 : i32
    %c0_i32_1 = arith.constant 0 : i32
    return %arg0, %c0_i32, %c0_i32_0 : i32, i32, i32
  }
  func.func @transform_4(%arg0: i32) -> (i32, i32, i32) {
    %c0_i32 = arith.constant 0 : i32
    %c0_i32_0 = arith.constant 0 : i32
    %c0_i32_1 = arith.constant 0 : i32
    return %arg0, %c0_i32, %c0_i32_0 : i32, i32, i32
  }
  func.func @transform_5(%arg0: i32) -> (i32, i32, i32) {
    %c0_i32 = arith.constant 0 : i32
    %c0_i32_0 = arith.constant 0 : i32
    %c0_i32_1 = arith.constant 0 : i32
    return %c0_i32, %c0_i32_0, %arg0 : i32, i32, i32
  }
}

module attributes {stable_mosaic.version = 11 : i64} {
  func.func @_fc_logsoftmax_kernel(%arg0: i32, %arg1: memref<10x256xf32, #tpu.memory_space<vmem>>, %arg2: memref<256x128xbf16, #tpu.memory_space<vmem>>, %arg3: memref<1x128xf32, #tpu.memory_space<vmem>>, %arg4: memref<10x128xf32, #tpu.memory_space<vmem>>) attributes {dimension_semantics = [#tpu.dimension_semantics<parallel>], iteration_bounds = array<i64: 1>, scalar_prefetch = 0 : i64, scratch_operands = 0 : i64, tpu.core_type = #tpu.core_type<tc>, window_params = [{transform_indices = @transform_0, window_bounds = array<i64: 10, 256>}, {pipeline_mode = #tpu.pipeline_mode<synchronous>, transform_indices = @transform_1, window_bounds = array<i64: 256, 128>}, {pipeline_mode = #tpu.pipeline_mode<synchronous>, transform_indices = @transform_2, window_bounds = array<i64: 1, 128>}, {transform_indices = @transform_3, window_bounds = array<i64: 10, 128>}]} {
    %c0 = arith.constant 0 : index
    %c0_0 = arith.constant 0 : index
    %0 = vector.load %arg1[%c0, %c0_0] : memref<10x256xf32, #tpu.memory_space<vmem>>, vector<10x256xf32>
    %1 = arith.truncf %0 : vector<10x256xf32> to vector<10x256xbf16>
    %c0_1 = arith.constant 0 : index
    %c0_2 = arith.constant 0 : index
    %2 = vector.load %arg2[%c0_1, %c0_2] : memref<256x128xbf16, #tpu.memory_space<vmem>>, vector<256x128xbf16>
    %cst = arith.constant dense<0.000000e+00> : vector<10x128xf32>
    %3 = tpu.matmul %1, %2, %cst {dimension_numbers = #tpu.dot_dimension_numbers<[1], [0], [0], [1], [0, 0, 1, 1], [], []>} : vector<10x256xbf16>, vector<256x128xbf16>, vector<10x128xf32> -> vector<10x128xf32>
    %c0_3 = arith.constant 0 : index
    %c0_4 = arith.constant 0 : index
    %4 = vector.load %arg3[%c0_3, %c0_4] : memref<1x128xf32, #tpu.memory_space<vmem>>, vector<1x128xf32>
    %5 = vector.broadcast %4 : vector<1x128xf32> to vector<10x128xf32>
    %6 = arith.addf %3, %5 : vector<10x128xf32>
    %cst_5 = arith.constant dense<0xFF800000> : vector<10xf32>
    %7 = vector.multi_reduction <maximumf>, %6, %cst_5 [1] : vector<10x128xf32> to vector<10xf32>
    %8 = vector.shape_cast %7 : vector<10xf32> to vector<10x1xf32>
    %9 = vector.broadcast %8 : vector<10x1xf32> to vector<10x128xf32>
    %10 = arith.subf %6, %9 : vector<10x128xf32>
    %11 = math.exp %10 : vector<10x128xf32>
    %cst_6 = arith.constant dense<0.000000e+00> : vector<10xf32>
    %12 = vector.multi_reduction <add>, %11, %cst_6 [1] : vector<10x128xf32> to vector<10xf32>
    %13 = vector.shape_cast %12 : vector<10xf32> to vector<10x1xf32>
    %14 = math.log %13 : vector<10x1xf32>
    %15 = vector.broadcast %14 : vector<10x1xf32> to vector<10x128xf32>
    %16 = arith.subf %10, %15 : vector<10x128xf32>
    %c0_7 = arith.constant 0 : index
    %c0_8 = arith.constant 0 : index
    %17 = vector.load %arg4[%c0_7, %c0_8] : memref<10x128xf32, #tpu.memory_space<vmem>>, vector<10x128xf32>
    tpu.vector_store %arg4[%c0_7, %c0_8], %16 {strides = array<i32>} : memref<10x128xf32, #tpu.memory_space<vmem>>, vector<10x128xf32>,
    return
  }
  func.func @transform_0(%arg0: i32) -> (i32, i32) {
    %c0_i32 = arith.constant 0 : i32
    %c0_i32_0 = arith.constant 0 : i32
    return %arg0, %c0_i32 : i32, i32
  }
  func.func @transform_1(%arg0: i32) -> (i32, i32) {
    %c0_i32 = arith.constant 0 : i32
    %c0_i32_0 = arith.constant 0 : i32
    %c0_i32_1 = arith.constant 0 : i32
    return %c0_i32, %c0_i32_0 : i32, i32
  }
  func.func @transform_2(%arg0: i32) -> (i32, i32) {
    %c0_i32 = arith.constant 0 : i32
    %c0_i32_0 = arith.constant 0 : i32
    %c0_i32_1 = arith.constant 0 : i32
    return %c0_i32, %c0_i32_0 : i32, i32
  }
  func.func @transform_3(%arg0: i32) -> (i32, i32) {
    %c0_i32 = arith.constant 0 : i32
    %c0_i32_0 = arith.constant 0 : i32
    return %arg0, %c0_i32 : i32, i32
  }
}

</mosaic_0001>

<llo_original>
// kernel: crnn_forward.7
$region0: #{crnn_forward.7}
  #allocation0 [shape = 'u32[]', space=smem, size = 0x4, offset = 0x4, fixed_abs, tag = 'smem constant byte address 0x4 - core index']
  #allocation1 [shape = 'u32[144,128]{1,0:T(1,128)}', space=vmem, size = 0x12000, scoped, tag = 'internal scratch']
  %s0 = inlined_call_operand.vmem [shape: bf16[2,900,27], index: 0, kind: input, shape index: {}]
  %s1 = inlined_call_operand.vmem [shape: bf16[27,32], index: 1, kind: input, shape index: {}]
  %s2 = inlined_call_operand.vmem [shape: f32[1,32], index: 2, kind: input, shape index: {}]
  %s3 = inlined_call_operand.vmem [shape: f32[2,900,32], index: 3, kind: output, shape index: {}]
  %s4 = sld [smem:[#allocation0]]
  $region45: #{crnn_forward.7} parent=0
    _
  %s6 = ssub.s32 1, %s4
  %s7 = scalar_select 0, %s6, %s4
  loop: start=0, step=1, limit=4
  $region2: #{crnn_forward.7} parent=0 // loop_pre_header
    _
  $region3: #{crnn_forward.7} parent=0 // loop_header
    %s9 = sphi 0, %s13
    %p10 = scmp.ge.s32.totalorder %s9, 4
    %s19 = sphi 0, %s21
    %s22 = sphi 0, %s19
    %s23 = sphi 0, %s22
    %s39 = sphi 0, %s23
    %s43 = sphi 0, %s43
    %s45 = sphi 0, %s43
    %s46 = sphi 0, %s45
    %s60 = sphi 0, %s46
    %s64 = sphi 0, %s64
    %s66 = sphi 0, %s64
    %s67 = sphi 0, %s66
    %s81 = sphi 0, %s67
    %s87 = sphi 0, %s89
    %s90 = sphi 0, %s87
    %s91 = sphi 0, %s90
    %s107 = sphi 0, %s91
  $region4: #{crnn_forward.7} parent=0 // loop_header_branch
    %12 = sbr.rel (%p10) target = $region8
  $region5: #{crnn_forward.7} parent=0 // loop_body
    %s14 = ssub.s32 %s9, 1
    %s15 = ssub.s32 %s9, 2
    %s16 = sadd.s32 %s9, 1
    %s17 = ssub.s32 %s9, %s16
    %p18 = scmp.eq.s32.totalorder %s17, 0
    %s20 = sadd.s32 %s19, 1
    %s21 = scalar_select %p18, %s19, %s20
    %p24 = pneg %p18
    %p25 = scmp.eq.s32.totalorder %s9, 1
    %p26 = por %p24, %p25
    %p27 = scmp.ne.s32.totalorder %s19, %s22
    %p28 = scmp.eq.s32.totalorder %s9, 0
    %p29 = por %p27, %p28
    %p30 = scmp.ne.s32.totalorder %s19, %s22
    %p31 = scmp.eq.s32.totalorder %s14, 1
    %p32 = por %p30, %p31
    %p33 = scmp.ne.s32.totalorder %s22, %s23
    %p34 = scmp.eq.s32.totalorder %s14, 0
    %p35 = por %p33, %p34
    %p36 = scmp.ne.s32.totalorder %s22, %s23
    %p37 = scmp.eq.s32.totalorder %s15, 1
    %p38 = por %p36, %p37
    %p40 = scmp.ne.s32.totalorder %s23, %s39
    %p41 = scmp.eq.s32.totalorder %s15, 0
    %p42 = por %p40, %p41
    %s44 = sadd.s32 %s43, 1
    %p47 = scmp.eq.s32.totalorder %s9, 1
    %p48 = scmp.ne.s32.totalorder %s43, %s45
    %p49 = scmp.eq.s32.totalorder %s9, 0
    %p50 = por %p48, %p49
    %p51 = scmp.ne.s32.totalorder %s43, %s45
    %p52 = scmp.eq.s32.totalorder %s14, 1
    %p53 = por %p51, %p52
    %p54 = scmp.ne.s32.totalorder %s45, %s46
    %p55 = scmp.eq.s32.totalorder %s14, 0
    %p56 = por %p54, %p55
    %p57 = scmp.ne.s32.totalorder %s45, %s46
    %p58 = scmp.eq.s32.totalorder %s15, 1
    %p59 = por %p57, %p58
    %p61 = scmp.ne.s32.totalorder %s46, %s60
    %p62 = scmp.eq.s32.totalorder %s15, 0
    %p63 = por %p61, %p62
    %s65 = sadd.s32 %s64, 1
    %p68 = scmp.eq.s32.totalorder %s9, 1
    %p69 = scmp.ne.s32.totalorder %s64, %s66
    %p70 = scmp.eq.s32.totalorder %s9, 0
    %p71 = por %p69, %p70
    %p72 = scmp.ne.s32.totalorder %s64, %s66
    %p73 = scmp.eq.s32.totalorder %s14, 1
    %p74 = por %p72, %p73
    %p75 = scmp.ne.s32.totalorder %s66, %s67
    %p76 = scmp.eq.s32.totalorder %s14, 0
    %p77 = por %p75, %p76
    %p78 = scmp.ne.s32.totalorder %s66, %s67
    %p79 = scmp.eq.s32.totalorder %s15, 1
    %p80 = por %p78, %p79
    %p82 = scmp.ne.s32.totalorder %s67, %s81
    %p83 = scmp.eq.s32.totalorder %s15, 0
    %p84 = por %p82, %p83
    %s85 = ssub.s32 %s9, %s16
    %p86 = scmp.eq.s32.totalorder %s85, 0
    %s88 = sadd.s32 %s87, 1
    %s89 = scalar_select %p86, %s87, %s88
    %p92 = pneg %p86
    %p93 = scmp.eq.s32.totalorder %s9, 1
    %p94 = por %p92, %p93
    %p95 = scmp.ne.s32.totalorder %s87, %s90
    %p96 = scmp.eq.s32.totalorder %s9, 0
    %p97 = por %p95, %p96
    %p98 = scmp.ne.s32.totalorder %s87, %s90
    %p99 = scmp.eq.s32.totalorder %s14, 1
    %p100 = por %p98, %p99
    %p101 = scmp.ne.s32.totalorder %s90, %s91
    %p102 = scmp.eq.s32.totalorder %s14, 0
    %p103 = por %p101, %p102
    %p104 = scmp.ne.s32.totalorder %s90, %s91
    %p105 = scmp.eq.s32.totalorder %s15, 1
    %p106 = por %p104, %p105
    %p108 = scmp.ne.s32.totalorder %s91, %s107
    %p109 = scmp.eq.s32.totalorder %s15, 0
    %p110 = por %p108, %p109
    %p111 = scmp.le.s32.totalorder 1, %s9
    %p112 = scmp.lt.s32.totalorder %s9, 3
    %p113 = pnand %p111, %p112
    %p114 = pneg %p113
    // Predicated region
    $region9: #{crnn_forward.7} parent=5 // pred_check
      _
    $region10: #{crnn_forward.7} parent=5 // pred_check_branch
      %116 = sbr.rel (%p113) target = $region12
    $region11: #{crnn_forward.7} parent=5 // pred_region
      %s117 = ssub.s32 %s9, 1
      // Predicated region
      $region13: #{crnn_forward.7} parent=11 // pred_check
        %p118 = pneg %p56
      $region14: #{crnn_forward.7} parent=11 // pred_check_branch
        %120 = sbr.rel (%p118) target = $region16
      $region15: #{crnn_forward.7} parent=11 // pred_region
        _
      $region16: #{crnn_forward.7} parent=11 // pred_fallthru
        _
      // Predicated region
      $region17: #{crnn_forward.7} parent=11 // pred_check
        %p121 = pneg %p77
      $region18: #{crnn_forward.7} parent=11 // pred_check_branch
        %123 = sbr.rel (%p121) target = $region20
      $region19: #{crnn_forward.7} parent=11 // pred_region
        _
      $region20: #{crnn_forward.7} parent=11 // pred_fallthru
        _
    $region12: #{crnn_forward.7} parent=5 // pred_fallthru
      _
    %p124 = scmp.lt.s32.totalorder %s9, 2
    // Predicated region
    $region21: #{crnn_forward.7} parent=5 // pred_check
      %p125 = pneg %p124
    $region22: #{crnn_forward.7} parent=5 // pred_check_branch
      %127 = sbr.rel (%p125) target = $region24
    $region23: #{crnn_forward.7} parent=5 // pred_region
      // Predicated region
      $region25: #{crnn_forward.7} parent=23 // pred_check
        %p128 = pneg %p29
      $region26: #{crnn_forward.7} parent=23 // pred_check_branch
        %130 = sbr.rel (%p128) target = $region28
      $region27: #{crnn_forward.7} parent=23 // pred_region
        %p131 = scmp.lt.s32.totalorder %s9, 1
        %s132 = scalar_select %p131, %s9, 1
        %s133 = smul.addr %s132, 113
        %s134 = smul.addr %s133, 4
        %s135 = scalar_lea.vmem %s0, %s134
      $region28: #{crnn_forward.7} parent=23 // pred_fallthru
        _
    $region24: #{crnn_forward.7} parent=5 // pred_fallthru
      _
    %p136 = scmp.le.s32.totalorder 1, %s9
    %p137 = scmp.lt.s32.totalorder %s9, 3
    %p138 = pnand %p136, %p137
    %p139 = pneg %p138
    // Predicated region
    $region29: #{crnn_forward.7} parent=5 // pred_check
      _
    $region30: #{crnn_forward.7} parent=5 // pred_check_branch
      %141 = sbr.rel (%p138) target = $region32
    $region31: #{crnn_forward.7} parent=5 // pred_region
      %s142 = ssub.s32 %s9, 1
      %p143 = scmp.lt.s32.totalorder %s14, 1
      %s144 = scalar_select %p143, %s14, 1
      %s145 = smul.addr %s144, 113
      %s146 = smul.addr %s145, 4
      %s147 = scalar_lea.vmem %s0, %s146
      %p148 = pneg %p35
      %p149 = pneg %p32
      %p150 = pneg %p56
      %p151 = pneg %p53
      %p152 = pneg %p77
      %p153 = pneg %p74
      %p154 = pneg %p103
      %p155 = pneg %p100
      %p156 = scmp.lt.s32.totalorder %s14, 1
      %s157 = scalar_select %p156, %s14, 1
      %s158 = smul.addr %s157, 113
      %s159 = smul.addr %s158, 8
      %s160 = scalar_lea.vmem %s3, %s159
      %p161 = scmp.lt.s32.totalorder %s14, 1
      %s162 = scalar_select %p161, %s14, 1
      %s163 = smul.addr %s162, 113
      %s164 = smul.addr %s163, 4
      %s165 = scalar_lea.vmem %s0, %s164
      %p166 = scmp.lt.s32.totalorder %s14, 1
      %s167 = scalar_select %p166, %s14, 1
      %s168 = smul.addr %s167, 113
      %s169 = smul.addr %s168, 8
      %s170 = scalar_lea.vmem %s3, %s169
      %v172 = vld [vmem:[%s165] sm:$0xf]
      %v173 = vld [vmem:[%s165 + $0x4] sm:$0xf]
      %v174 = vld [vmem:[%s165 + $0x8] sm:$0xf]
      %v175 = vld [vmem:[%s165 + $0xc] sm:$0xf]
      %v176 = vld [vmem:[%s165 + $0x10] sm:$0xf]
      %v177 = vld [vmem:[%s165 + $0x14] sm:$0xf]
      %v178 = vld [vmem:[%s165 + $0x18] sm:$0xf]
      %v179 = vld [vmem:[%s165 + $0x1c] sm:$0xf]
      %v180 = vld [vmem:[%s165 + $0x20] sm:$0xf]
      %v181 = vld [vmem:[%s165 + $0x24] sm:$0xf]
      %v182 = vld [vmem:[%s165 + $0x28] sm:$0xf]
      %v183 = vld [vmem:[%s165 + $0x2c] sm:$0xf]
      %v184 = vld [vmem:[%s165 + $0x30] sm:$0xf]
      %v185 = vld [vmem:[%s165 + $0x34] sm:$0xf]
      %v186 = vld [vmem:[%s165 + $0x38] sm:$0xf]
      %v187 = vld [vmem:[%s165 + $0x3c] sm:$0xf]
      %v188 = vld [vmem:[%s165 + $0x40] sm:$0xf]
      %v189 = vld [vmem:[%s165 + $0x44] sm:$0xf]
      %v190 = vld [vmem:[%s165 + $0x48] sm:$0xf]
      %v191 = vld [vmem:[%s165 + $0x4c] sm:$0xf]
      %v192 = vld [vmem:[%s165 + $0x50] sm:$0xf]
      %v193 = vld [vmem:[%s165 + $0x54] sm:$0xf]
      %v194 = vld [vmem:[%s165 + $0x58] sm:$0xf]
      %v195 = vld [vmem:[%s165 + $0x5c] sm:$0xf]
      %v196 = vld [vmem:[%s165 + $0x60] sm:$0xf]
      %v197 = vld [vmem:[%s165 + $0x64] sm:$0xf]
      %v198 = vld [vmem:[%s165 + $0x68] sm:$0xf]
      %v199 = vld [vmem:[%s165 + $0x6c] sm:$0xf]
      %v200 = vld [vmem:[%s165 + $0x70] sm:$0xf]
      %v201 = vld [vmem:[%s165 + $0x74] sm:$0xf]
      %v202 = vld [vmem:[%s165 + $0x78] sm:$0xf]
      %v203 = vld [vmem:[%s165 + $0x7c] sm:$0xf]
      %v204 = vld [vmem:[%s165 + $0x80] sm:$0xf]
      %v205 = vld [vmem:[%s165 + $0x84] sm:$0xf]
      %v206 = vld [vmem:[%s165 + $0x88] sm:$0xf]
      %v207 = vld [vmem:[%s165 + $0x8c] sm:$0xf]
      %v208 = vld [vmem:[%s165 + $0x90] sm:$0xf]
      %v209 = vld [vmem:[%s165 + $0x94] sm:$0xf]
      %v210 = vld [vmem:[%s165 + $0x98] sm:$0xf]
      %v211 = vld [vmem:[%s165 + $0x9c] sm:$0xf]
      %v212 = vld [vmem:[%s165 + $0xa0] sm:$0xf]
      %v213 = vld [vmem:[%s165 + $0xa4] sm:$0xf]
      %v214 = vld [vmem:[%s165 + $0xa8] sm:$0xf]
      %v215 = vld [vmem:[%s165 + $0xac] sm:$0xf]
      %v216 = vld [vmem:[%s165 + $0xb0] sm:$0xf]
      %v217 = vld [vmem:[%s165 + $0xb4] sm:$0xf]
      %v218 = vld [vmem:[%s165 + $0xb8] sm:$0xf]
      %v219 = vld [vmem:[%s165 + $0xbc] sm:$0xf]
      %v220 = vld [vmem:[%s165 + $0xc0] sm:$0xf]
      %v221 = vld [vmem:[%s165 + $0xc4] sm:$0xf]
      %v222 = vld [vmem:[%s165 + $0xc8] sm:$0xf]
      %v223 = vld [vmem:[%s165 + $0xcc] sm:$0xf]
      %v224 = vld [vmem:[%s165 + $0xd0] sm:$0xf]
      %v225 = vld [vmem:[%s165 + $0xd4] sm:$0xf]
      %v226 = vld [vmem:[%s165 + $0xd8] sm:$0xf]
      %v227 = vld [vmem:[%s165 + $0xdc] sm:$0xf]
      %v228 = vld [vmem:[%s165 + $0xe0] sm:$0xf]
      %v229 = vld [vmem:[%s165 + $0xe4] sm:$0xf]
      %v230 = vld [vmem:[%s165 + $0xe8] sm:$0xf]
      %v231 = vld [vmem:[%s165 + $0xec] sm:$0xf]
      %v232 = vld [vmem:[%s165 + $0xf0] sm:$0xf]
      %v233 = vld [vmem:[%s165 + $0xf4] sm:$0xf]
      %v234 = vld [vmem:[%s165 + $0xf8] sm:$0xf]
      %v235 = vld [vmem:[%s165 + $0xfc] sm:$0xf]
      %v236 = vld [vmem:[%s165 + $0x100] sm:$0xf]
      %v237 = vld [vmem:[%s165 + $0x104] sm:$0xf]
      %v238 = vld [vmem:[%s165 + $0x108] sm:$0xf]
      %v239 = vld [vmem:[%s165 + $0x10c] sm:$0xf]
      %v240 = vld [vmem:[%s165 + $0x110] sm:$0xf]
      %v241 = vld [vmem:[%s165 + $0x114] sm:$0xf]
      %v242 = vld [vmem:[%s165 + $0x118] sm:$0xf]
      %v243 = vld [vmem:[%s165 + $0x11c] sm:$0xf]
      %v244 = vld [vmem:[%s165 + $0x120] sm:$0xf]
      %v245 = vld [vmem:[%s165 + $0x124] sm:$0xf]
      %v246 = vld [vmem:[%s165 + $0x128] sm:$0xf]
      %v247 = vld [vmem:[%s165 + $0x12c] sm:$0xf]
      %v248 = vld [vmem:[%s165 + $0x130] sm:$0xf]
      %v249 = vld [vmem:[%s165 + $0x134] sm:$0xf]
      %v250 = vld [vmem:[%s165 + $0x138] sm:$0xf]
      %v251 = vld [vmem:[%s165 + $0x13c] sm:$0xf]
      %v252 = vld [vmem:[%s165 + $0x140] sm:$0xf]
      %v253 = vld [vmem:[%s165 + $0x144] sm:$0xf]
      %v254 = vld [vmem:[%s165 + $0x148] sm:$0xf]
      %v255 = vld [vmem:[%s165 + $0x14c] sm:$0xf]
      %v256 = vld [vmem:[%s165 + $0x150] sm:$0xf]
      %v257 = vld [vmem:[%s165 + $0x154] sm:$0xf]
      %v258 = vld [vmem:[%s165 + $0x158] sm:$0xf]
      %v259 = vld [vmem:[%s165 + $0x15c] sm:$0xf]
      %v260 = vld [vmem:[%s165 + $0x160] sm:$0xf]
      %v261 = vld [vmem:[%s165 + $0x164] sm:$0xf]
      %v262 = vld [vmem:[%s165 + $0x168] sm:$0xf]
      %v263 = vld [vmem:[%s165 + $0x16c] sm:$0xf]
      %v264 = vld [vmem:[%s165 + $0x170] sm:$0xf]
      %v265 = vld [vmem:[%s165 + $0x174] sm:$0xf]
      %v266 = vld [vmem:[%s165 + $0x178] sm:$0xf]
      %v267 = vld [vmem:[%s165 + $0x17c] sm:$0xf]
      %v268 = vld [vmem:[%s165 + $0x180] sm:$0xf]
      %v269 = vld [vmem:[%s165 + $0x184] sm:$0xf]
      %v270 = vld [vmem:[%s165 + $0x188] sm:$0xf]
      %v271 = vld [vmem:[%s165 + $0x18c] sm:$0xf]
      %v272 = vld [vmem:[%s165 + $0x190] sm:$0xf]
      %v273 = vld [vmem:[%s165 + $0x194] sm:$0xf]
      %v274 = vld [vmem:[%s165 + $0x198] sm:$0xf]
      %v275 = vld [vmem:[%s165 + $0x19c] sm:$0xf]
      %v276 = vld [vmem:[%s165 + $0x1a0] sm:$0xf]
      %v277 = vld [vmem:[%s165 + $0x1a4] sm:$0xf]
      %v278 = vld [vmem:[%s165 + $0x1a8] sm:$0xf]
      %v279 = vld [vmem:[%s165 + $0x1ac] sm:$0xf]
      %v280 = vld [vmem:[%s165 + $0x1b0] sm:$0xf]
      %v281 = vld [vmem:[%s165 + $0x1b4] sm:$0xf]
      %v282 = vld [vmem:[%s165 + $0x1b8] sm:$0xf]
      %v283 = vld [vmem:[%s165 + $0x1bc] sm:$0xf]
      %v284 = vld [vmem:[%s165 + $0x1c0] sm:$0x3]
      %v285 = vld [vmem:[%s1] sm:$0xf]
      %v286 = vld [vmem:[%s1 + $0x4] sm:$0xf]
      %v287 = vld [vmem:[%s1 + $0x8] sm:$0xf]
      %v288 = vld [vmem:[%s1 + $0xc] sm:$0x3]
      %v289 = vld [vmem:[%s2] sm:$0x1]
      %v291 = vlaneseq
      %v292 = vshrl.u32 %v291, 7
      %v293 = vsub.s32 0, %v292
      %v294 = vrot.slane %v289, %v293
      %v409 = vunpack.c.l.b16 %v172
      %v410 = vunpack.c.l.b16 %v173
      %v411 = vunpack.c.l.b16 %v174
      %v412 = vunpack.c.l.b16 %v175
      %v413 = vunpack.c.l.b16 %v176
      %v414 = vunpack.c.l.b16 %v177
      %v415 = vunpack.c.l.b16 %v178
      %v416 = vunpack.c.l.b16 %v179
      %v417 = vunpack.c.l.b16 %v180
      %v418 = vunpack.c.l.b16 %v181
      %v419 = vunpack.c.l.b16 %v182
      %v420 = vunpack.c.l.b16 %v183
      %v421 = vunpack.c.l.b16 %v184
      %v422 = vunpack.c.l.b16 %v185
      %v423 = vunpack.c.l.b16 %v186
      %v424 = vunpack.c.l.b16 %v187
      %v425 = vunpack.c.l.b16 %v188
      %v426 = vunpack.c.l.b16 %v189
      %v427 = vunpack.c.l.b16 %v190
      %v428 = vunpack.c.l.b16 %v191
      %v429 = vunpack.c.l.b16 %v192
      %v430 = vunpack.c.l.b16 %v193
      %v431 = vunpack.c.l.b16 %v194
      %v432 = vunpack.c.l.b16 %v195
      %v433 = vunpack.c.l.b16 %v196
      %v434 = vunpack.c.l.b16 %v197
      %v435 = vunpack.c.l.b16 %v198
      %v436 = vunpack.c.l.b16 %v199
      %v437 = vunpack.c.l.b16 %v200
      %v438 = vunpack.c.l.b16 %v201
      %v439 = vunpack.c.l.b16 %v202
      %v440 = vunpack.c.l.b16 %v203
      %v441 = vunpack.c.l.b16 %v204
      %v442 = vunpack.c.l.b16 %v205
      %v443 = vunpack.c.l.b16 %v206
      %v444 = vunpack.c.l.b16 %v207
      %v445 = vunpack.c.l.b16 %v208
      %v446 = vunpack.c.l.b16 %v209
      %v447 = vunpack.c.l.b16 %v210
      %v448 = vunpack.c.l.b16 %v211
      %v449 = vunpack.c.l.b16 %v212
      %v450 = vunpack.c.l.b16 %v213
      %v451 = vunpack.c.l.b16 %v214
      %v452 = vunpack.c.l.b16 %v215
      %v453 = vunpack.c.l.b16 %v216
      %v454 = vunpack.c.l.b16 %v217
      %v455 = vunpack.c.l.b16 %v218
      %v456 = vunpack.c.l.b16 %v219
      %v457 = vunpack.c.l.b16 %v220
      %v458 = vunpack.c.l.b16 %v221
      %v459 = vunpack.c.l.b16 %v222
      %v460 = vunpack.c.l.b16 %v223
      %v461 = vunpack.c.l.b16 %v224
      %v462 = vunpack.c.l.b16 %v225
      %v463 = vunpack.c.l.b16 %v226
      %v464 = vunpack.c.l.b16 %v227
      %v465 = vunpack.c.l.b16 %v228
      %v466 = vunpack.c.l.b16 %v229
      %v467 = vunpack.c.l.b16 %v230
      %v468 = vunpack.c.l.b16 %v231
      %v469 = vunpack.c.l.b16 %v232
      %v470 = vunpack.c.l.b16 %v233
      %v471 = vunpack.c.l.b16 %v234
      %v472 = vunpack.c.l.b16 %v235
      %v473 = vunpack.c.l.b16 %v236
      %v474 = vunpack.c.l.b16 %v237
      %v475 = vunpack.c.l.b16 %v238
      %v476 = vunpack.c.l.b16 %v239
      %v477 = vunpack.c.l.b16 %v240
      %v478 = vunpack.c.l.b16 %v241
      %v479 = vunpack.c.l.b16 %v242
      %v480 = vunpack.c.l.b16 %v243
      %v481 = vunpack.c.l.b16 %v244
      %v482 = vunpack.c.l.b16 %v245
      %v483 = vunpack.c.l.b16 %v246
      %v484 = vunpack.c.l.b16 %v247
      %v485 = vunpack.c.l.b16 %v248
      %v486 = vunpack.c.l.b16 %v249
      %v487 = vunpack.c.l.b16 %v250
      %v488 = vunpack.c.l.b16 %v251
      %v489 = vunpack.c.l.b16 %v252
      %v490 = vunpack.c.l.b16 %v253
      %v491 = vunpack.c.l.b16 %v254
      %v492 = vunpack.c.l.b16 %v255
      %v493 = vunpack.c.l.b16 %v256
      %v494 = vunpack.c.l.b16 %v257
      %v495 = vunpack.c.l.b16 %v258
      %v496 = vunpack.c.l.b16 %v259
      %v497 = vunpack.c.l.b16 %v260
      %v498 = vunpack.c.l.b16 %v261
      %v499 = vunpack.c.l.b16 %v262
      %v500 = vunpack.c.l.b16 %v263
      %v501 = vunpack.c.l.b16 %v264
      %v502 = vunpack.c.l.b16 %v265
      %v503 = vunpack.c.l.b16 %v266
      %v504 = vunpack.c.l.b16 %v267
      %v505 = vunpack.c.l.b16 %v268
      %v506 = vunpack.c.l.b16 %v269
      %v507 = vunpack.c.l.b16 %v270
      %v508 = vunpack.c.l.b16 %v271
      %v509 = vunpack.c.l.b16 %v272
      %v510 = vunpack.c.l.b16 %v273
      %v511 = vunpack.c.l.b16 %v274
      %v512 = vunpack.c.l.b16 %v275
      %v513 = vunpack.c.l.b16 %v276
      %v514 = vunpack.c.l.b16 %v277
      %v515 = vunpack.c.l.b16 %v278
      %v516 = vunpack.c.l.b16 %v279
      %v517 = vunpack.c.l.b16 %v280
      %v518 = vunpack.c.l.b16 %v281
      %v519 = vunpack.c.l.b16 %v282
      %v520 = vunpack.c.l.b16 %v283
      %v521 = vunpack.c.l.b16 %v284
      %v522 = vpack.c.b16 %v410, %v409
      %v523 = vpack.c.b16 %v412, %v411
      %v524 = vpack.c.b16 %v414, %v413
      %v525 = vpack.c.b16 %v416, %v415
      %v526 = vpack.c.b16 %v418, %v417
      %v527 = vpack.c.b16 %v420, %v419
      %v528 = vpack.c.b16 %v422, %v421
      %v529 = vpack.c.b16 %v424, %v423
      %v530 = vpack.c.b16 %v426, %v425
      %v531 = vpack.c.b16 %v428, %v427
      %v532 = vpack.c.b16 %v430, %v429
      %v533 = vpack.c.b16 %v432, %v431
      %v534 = vpack.c.b16 %v434, %v433
      %v535 = vpack.c.b16 %v436, %v435
      %v536 = vpack.c.b16 %v438, %v437
      %v537 = vpack.c.b16 %v440, %v439
      %v538 = vpack.c.b16 %v442, %v441
      %v539 = vpack.c.b16 %v444, %v443
      %v540 = vpack.c.b16 %v446, %v445
      %v541 = vpack.c.b16 %v448, %v447
      %v542 = vpack.c.b16 %v450, %v449
      %v543 = vpack.c.b16 %v452, %v451
      %v544 = vpack.c.b16 %v454, %v453
      %v545 = vpack.c.b16 %v456, %v455
      %v546 = vpack.c.b16 %v458, %v457
      %v547 = vpack.c.b16 %v460, %v459
      %v548 = vpack.c.b16 %v462, %v461
      %v549 = vpack.c.b16 %v464, %v463
      %v550 = vpack.c.b16 %v466, %v465
      %v551 = vpack.c.b16 %v468, %v467
      %v552 = vpack.c.b16 %v470, %v469
      %v553 = vpack.c.b16 %v472, %v471
      %v554 = vpack.c.b16 %v474, %v473
      %v555 = vpack.c.b16 %v476, %v475
      %v556 = vpack.c.b16 %v478, %v477
      %v557 = vpack.c.b16 %v480, %v479
      %v558 = vpack.c.b16 %v482, %v481
      %v559 = vpack.c.b16 %v484, %v483
      %v560 = vpack.c.b16 %v486, %v485
      %v561 = vpack.c.b16 %v488, %v487
      %v562 = vpack.c.b16 %v490, %v489
      %v563 = vpack.c.b16 %v492, %v491
      %v564 = vpack.c.b16 %v494, %v493
      %v565 = vpack.c.b16 %v496, %v495
      %v566 = vpack.c.b16 %v498, %v497
      %v567 = vpack.c.b16 %v500, %v499
      %v568 = vpack.c.b16 %v502, %v501
      %v569 = vpack.c.b16 %v504, %v503
      %v570 = vpack.c.b16 %v506, %v505
      %v571 = vpack.c.b16 %v508, %v507
      %v572 = vpack.c.b16 %v510, %v509
      %v573 = vpack.c.b16 %v512, %v511
      %v574 = vpack.c.b16 %v514, %v513
      %v575 = vpack.c.b16 %v516, %v515
      %v576 = vpack.c.b16 %v518, %v517
      %v577 = vpack.c.b16 %v520, %v519
      %v578 = vpack.c.b16 %v521, %v521
      %v583 = vunpack.c.l.b16 %v285
      %v584 = vunpack.c.l.b16 %v286
      %v585 = vunpack.c.l.b16 %v287
      %v586 = vunpack.c.l.b16 %v288
      %v587 = vpack.c.b16 %v584, %v583
      %v588 = vpack.c.b16 %v586, %v585
      %vm590 = vcmask 220160
      %v592 = vsel %vm590, %v522, 0
      %v595 = vsel %vm590, %v523, 0
      %v598 = vsel %vm590, %v524, 0
      %v601 = vsel %vm590, %v525, 0
      %v604 = vsel %vm590, %v526, 0
      %v607 = vsel %vm590, %v527, 0
      %v610 = vsel %vm590, %v528, 0
      %v613 = vsel %vm590, %v529, 0
      %v616 = vsel %vm590, %v530, 0
      %v619 = vsel %vm590, %v531, 0
      %v622 = vsel %vm590, %v532, 0
      %v625 = vsel %vm590, %v533, 0
      %v628 = vsel %vm590, %v534, 0
      %v631 = vsel %vm590, %v535, 0
      %v634 = vsel %vm590, %v536, 0
      %v637 = vsel %vm590, %v537, 0
      %v640 = vsel %vm590, %v538, 0
      %v643 = vsel %vm590, %v539, 0
      %v646 = vsel %vm590, %v540, 0
      %v649 = vsel %vm590, %v541, 0
      %v652 = vsel %vm590, %v542, 0
      %v655 = vsel %vm590, %v543, 0
      %v658 = vsel %vm590, %v544, 0
      %v661 = vsel %vm590, %v545, 0
      %v664 = vsel %vm590, %v546, 0
      %v667 = vsel %vm590, %v547, 0
      %v670 = vsel %vm590, %v548, 0
      %v673 = vsel %vm590, %v549, 0
      %v676 = vsel %vm590, %v550, 0
      %v679 = vsel %vm590, %v551, 0
      %v682 = vsel %vm590, %v552, 0
      %v685 = vsel %vm590, %v553, 0
      %v688 = vsel %vm590, %v554, 0
      %v691 = vsel %vm590, %v555, 0
      %v694 = vsel %vm590, %v556, 0
      %v697 = vsel %vm590, %v557, 0
      %v700 = vsel %vm590, %v558, 0
      %v703 = vsel %vm590, %v559, 0
      %v706 = vsel %vm590, %v560, 0
      %v709 = vsel %vm590, %v561, 0
      %v712 = vsel %vm590, %v562, 0
      %v715 = vsel %vm590, %v563, 0
      %v718 = vsel %vm590, %v564, 0
      %v721 = vsel %vm590, %v565, 0
      %v724 = vsel %vm590, %v566, 0
      %v727 = vsel %vm590, %v567, 0
      %v730 = vsel %vm590, %v568, 0
      %v733 = vsel %vm590, %v569, 0
      %v736 = vsel %vm590, %v570, 0
      %v739 = vsel %vm590, %v571, 0
      %v742 = vsel %vm590, %v572, 0
      %v745 = vsel %vm590, %v573, 0
      %v748 = vsel %vm590, %v574, 0
      %v751 = vsel %vm590, %v575, 0
      %v754 = vsel %vm590, %v576, 0
      %v757 = vsel %vm590, %v577, 0
      %v760 = vsel %vm590, %v578, 0
      %vm762 = vcmask 1044480
      %vm763 = vcmask 1045504
      %v764 = vsel %vm762, 4294967295, 65535
      %v765 = vsel %vm763, %v764, 0
      %v767 = vand.u32 %v588, %v765
      %769 = vmatprep.subr.bf16.mxu0 0
      %770 = vmatpush1.bf16.msra.mxu0 %v587
      %771 = vmatprep.subr.bf16.mxu0 0
      %772 = vmatpush1.bf16.msra.mxu0 %v767
      %773 = vmatprep.subr.bf16.mxu0 0
      %774 = vmatpush1.bf16.msra.mxu0 0
      %775 = vmatprep.subr.bf16.mxu0 0
      %776 = vmatpush1.bf16.msra.mxu0 0
      %777 = vmatprep.subr.bf16.mxu0 0
      %778 = vmatpush1.bf16.msra.mxu0 0
      %779 = vmatprep.subr.bf16.mxu0 0
      %780 = vmatpush1.bf16.msra.mxu0 0
      %781 = vmatprep.subr.bf16.mxu0 0
      %782 = vmatpush1.bf16.msra.mxu0 0
      %783 = vmatprep.subr.bf16.mxu0 0
      %784 = vmatpush1.bf16.msra.mxu0 0
      %785 = vmatprep.subr.bf16.mxu0 0
      %786 = vmatpush1.bf16.msra.mxu0 0
      %787 = vmatprep.subr.bf16.mxu0 0
      %788 = vmatpush1.bf16.msra.mxu0 0
      %789 = vmatprep.subr.bf16.mxu0 0
      %790 = vmatpush1.bf16.msra.mxu0 0
      %791 = vmatprep.subr.bf16.mxu0 0
      %792 = vmatpush1.bf16.msra.mxu0 0
      %793 = vmatprep.subr.bf16.mxu0 0
      %794 = vmatpush1.bf16.msra.mxu0 0
      %795 = vmatprep.subr.bf16.mxu0 0
      %796 = vmatpush1.bf16.msra.mxu0 0
      %797 = vmatprep.subr.bf16.mxu0 0
      %798 = vmatpush1.bf16.msra.mxu0 0
      %799 = vmatprep.subr.bf16.mxu0 0
      %800 = vmatpush1.bf16.msra.mxu0 0
      %801 = vmatprep.mubr.bf16.mxu0 0
      %802 = vmatmul.mubr.bf16.gmra.mrb[0].mxu0 %v592
      %v803 = vpop.f32.mrb[0].mxu0
      %v804 = vadd.f32 %v294, %v803
      %v805 = vpop.f32.mrb[0].mxu0
      %v806 = vpop.f32.mrb[0].mxu0
      %v807 = vadd.f32 %v294, %v806
      %v808 = vpop.f32.mrb[0].mxu0
      %809 = vmatprep.mubr.bf16.mxu0 0
      %810 = vmatmul.mubr.bf16.gmra.mrb[0].mxu0 %v595
      %v811 = vpop.f32.mrb[0].mxu0
      %v812 = vadd.f32 %v294, %v811
      %v813 = vpop.f32.mrb[0].mxu0
      %v814 = vpop.f32.mrb[0].mxu0
      %v815 = vadd.f32 %v294, %v814
      %v816 = vpop.f32.mrb[0].mxu0
      %817 = vmatprep.mubr.bf16.mxu0 0
      %818 = vmatmul.mubr.bf16.gmra.mrb[0].mxu0 %v598
      %v819 = vpop.f32.mrb[0].mxu0
      %v820 = vadd.f32 %v294, %v819
      %v821 = vpop.f32.mrb[0].mxu0
      %v822 = vpop.f32.mrb[0].mxu0
      %v823 = vadd.f32 %v294, %v822
      %v824 = vpop.f32.mrb[0].mxu0
      %825 = vmatprep.mubr.bf16.mxu0 0
      %826 = vmatmul.mubr.bf16.gmra.mrb[0].mxu0 %v601
      %v827 = vpop.f32.mrb[0].mxu0
      %v828 = vadd.f32 %v294, %v827
      %v829 = vpop.f32.mrb[0].mxu0
      %v830 = vpop.f32.mrb[0].mxu0
      %v831 = vadd.f32 %v294, %v830
      %v832 = vpop.f32.mrb[0].mxu0
      %833 = vmatprep.mubr.bf16.mxu0 0
      %834 = vmatmul.mubr.bf16.gmra.mrb[0].mxu0 %v604
      %v835 = vpop.f32.mrb[0].mxu0
      %v836 = vadd.f32 %v294, %v835
      %v837 = vpop.f32.mrb[0].mxu0
      %v838 = vpop.f32.mrb[0].mxu0
      %v839 = vadd.f32 %v294, %v838
      %v840 = vpop.f32.mrb[0].mxu0
      %841 = vmatprep.mubr.bf16.mxu0 0
      %842 = vmatmul.mubr.bf16.gmra.mrb[0].mxu0 %v607
      %v843 = vpop.f32.mrb[0].mxu0
      %v844 = vadd.f32 %v294, %v843
      %v845 = vpop.f32.mrb[0].mxu0
      %v846 = vpop.f32.mrb[0].mxu0
      %v847 = vadd.f32 %v294, %v846
      %v848 = vpop.f32.mrb[0].mxu0
      %849 = vmatprep.mubr.bf16.mxu0 0
      %850 = vmatmul.mubr.bf16.gmra.mrb[0].mxu0 %v610
      %v851 = vpop.f32.mrb[0].mxu0
      %v852 = vadd.f32 %v294, %v851
      %v853 = vpop.f32.mrb[0].mxu0
      %v854 = vpop.f32.mrb[0].mxu0
      %v855 = vadd.f32 %v294, %v854
      %v856 = vpop.f32.mrb[0].mxu0
      %857 = vmatprep.mubr.bf16.mxu0 0
      %858 = vmatmul.mubr.bf16.gmra.mrb[0].mxu0 %v613
      %v859 = vpop.f32.mrb[0].mxu0
      %v860 = vadd.f32 %v294, %v859
      %v861 = vpop.f32.mrb[0].mxu0
      %v862 = vpop.f32.mrb[0].mxu0
      %v863 = vadd.f32 %v294, %v862
      %v864 = vpop.f32.mrb[0].mxu0
      %865 = vmatprep.mubr.bf16.mxu0 0
      %866 = vmatmul.mubr.bf16.gmra.mrb[0].mxu0 %v616
      %v867 = vpop.f32.mrb[0].mxu0
      %v868 = vadd.f32 %v294, %v867
      %v869 = vpop.f32.mrb[0].mxu0
      %v870 = vpop.f32.mrb[0].mxu0
      %v871 = vadd.f32 %v294, %v870
      %v872 = vpop.f32.mrb[0].mxu0
      %873 = vmatprep.mubr.bf16.mxu0 0
      %874 = vmatmul.mubr.bf16.gmra.mrb[0].mxu0 %v619
      %v875 = vpop.f32.mrb[0].mxu0
      %v876 = vadd.f32 %v294, %v875
      %v877 = vpop.f32.mrb[0].mxu0
      %v878 = vpop.f32.mrb[0].mxu0
      %v879 = vadd.f32 %v294, %v878
      %v880 = vpop.f32.mrb[0].mxu0
      %881 = vmatprep.mubr.bf16.mxu0 0
      %882 = vmatmul.mubr.bf16.gmra.mrb[0].mxu0 %v622
      %v883 = vpop.f32.mrb[0].mxu0
      %v884 = vadd.f32 %v294, %v883
      %v885 = vpop.f32.mrb[0].mxu0
      %v886 = vpop.f32.mrb[0].mxu0
      %v887 = vadd.f32 %v294, %v886
      %v888 = vpop.f32.mrb[0].mxu0
      %889 = vmatprep.mubr.bf16.mxu0 0
      %890 = vmatmul.mubr.bf16.gmra.mrb[0].mxu0 %v625
      %v891 = vpop.f32.mrb[0].mxu0
      %v892 = vadd.f32 %v294, %v891
      %v893 = vpop.f32.mrb[0].mxu0
      %v894 = vpop.f32.mrb[0].mxu0
      %v895 = vadd.f32 %v294, %v894
      %v896 = vpop.f32.mrb[0].mxu0
      %897 = vmatprep.mubr.bf16.mxu0 0
      %898 = vmatmul.mubr.bf16.gmra.mrb[0].mxu0 %v628
      %v899 = vpop.f32.mrb[0].mxu0
      %v900 = vadd.f32 %v294, %v899
      %v901 = vpop.f32.mrb[0].mxu0
      %v902 = vpop.f32.mrb[0].mxu0
      %v903 = vadd.f32 %v294, %v902
      %v904 = vpop.f32.mrb[0].mxu0
      %905 = vmatprep.mubr.bf16.mxu0 0
      %906 = vmatmul.mubr.bf16.gmra.mrb[0].mxu0 %v631
      %v907 = vpop.f32.mrb[0].mxu0
      %v908 = vadd.f32 %v294, %v907
      %v909 = vpop.f32.mrb[0].mxu0
      %v910 = vpop.f32.mrb[0].mxu0
      %v911 = vadd.f32 %v294, %v910
      %v912 = vpop.f32.mrb[0].mxu0
      %913 = vmatprep.mubr.bf16.mxu0 0
      %914 = vmatmul.mubr.bf16.gmra.mrb[0].mxu0 %v634
      %v915 = vpop.f32.mrb[0].mxu0
      %v916 = vadd.f32 %v294, %v915
      %v917 = vpop.f32.mrb[0].mxu0
      %v918 = vpop.f32.mrb[0].mxu0
      %v919 = vadd.f32 %v294, %v918
      %v920 = vpop.f32.mrb[0].mxu0
      %921 = vmatprep.mubr.bf16.mxu0 0
      %922 = vmatmul.mubr.bf16.gmra.mrb[0].mxu0 %v637
      %v923 = vpop.f32.mrb[0].mxu0
      %v924 = vadd.f32 %v294, %v923
      %v925 = vpop.f32.mrb[0].mxu0
      %v926 = vpop.f32.mrb[0].mxu0
      %v927 = vadd.f32 %v294, %v926
      %v928 = vpop.f32.mrb[0].mxu0
      %929 = vmatprep.mubr.bf16.mxu0 0
      %930 = vmatmul.mubr.bf16.gmra.mrb[0].mxu0 %v640
      %v931 = vpop.f32.mrb[0].mxu0
      %v932 = vadd.f32 %v294, %v931
      %v933 = vpop.f32.mrb[0].mxu0
      %v934 = vpop.f32.mrb[0].mxu0
      %v935 = vadd.f32 %v294, %v934
      %v936 = vpop.f32.mrb[0].mxu0
      %937 = vmatprep.mubr.bf16.mxu0 0
      %938 = vmatmul.mubr.bf16.gmra.mrb[0].mxu0 %v643
      %v939 = vpop.f32.mrb[0].mxu0
      %v940 = vadd.f32 %v294, %v939
      %v941 = vpop.f32.mrb[0].mxu0
      %v942 = vpop.f32.mrb[0].mxu0
      %v943 = vadd.f32 %v294, %v942
      %v944 = vpop.f32.mrb[0].mxu0
      %945 = vmatprep.mubr.bf16.mxu0 0
      %946 = vmatmul.mubr.bf16.gmra.mrb[0].mxu0 %v646
      %v947 = vpop.f32.mrb[0].mxu0
      %v948 = vadd.f32 %v294, %v947
      %v949 = vpop.f32.mrb[0].mxu0
      %v950 = vpop.f32.mrb[0].mxu0
      %v951 = vadd.f32 %v294, %v950
      %v952 = vpop.f32.mrb[0].mxu0
      %953 = vmatprep.mubr.bf16.mxu0 0
      %954 = vmatmul.mubr.bf16.gmra.mrb[0].mxu0 %v649
      %v955 = vpop.f32.mrb[0].mxu0
      %v956 = vadd.f32 %v294, %v955
      %v957 = vpop.f32.mrb[0].mxu0
      %v958 = vpop.f32.mrb[0].mxu0
      %v959 = vadd.f32 %v294, %v958
      %v960 = vpop.f32.mrb[0].mxu0
      %961 = vmatprep.mubr.bf16.mxu0 0
      %962 = vmatmul.mubr.bf16.gmra.mrb[0].mxu0 %v652
      %v963 = vpop.f32.mrb[0].mxu0
      %v964 = vadd.f32 %v294, %v963
      %v965 = vpop.f32.mrb[0].mxu0
      %v966 = vpop.f32.mrb[0].mxu0
      %v967 = vadd.f32 %v294, %v966
      %v968 = vpop.f32.mrb[0].mxu0
      %969 = vmatprep.mubr.bf16.mxu0 0
      %970 = vmatmul.mubr.bf16.gmra.mrb[0].mxu0 %v655
      %v971 = vpop.f32.mrb[0].mxu0
      %v972 = vadd.f32 %v294, %v971
      %v973 = vpop.f32.mrb[0].mxu0
      %v974 = vpop.f32.mrb[0].mxu0
      %v975 = vadd.f32 %v294, %v974
      %v976 = vpop.f32.mrb[0].mxu0
      %977 = vmatprep.mubr.bf16.mxu0 0
      %978 = vmatmul.mubr.bf16.gmra.mrb[0].mxu0 %v658
      %v979 = vpop.f32.mrb[0].mxu0
      %v980 = vadd.f32 %v294, %v979
      %v981 = vpop.f32.mrb[0].mxu0
      %v982 = vpop.f32.mrb[0].mxu0
      %v983 = vadd.f32 %v294, %v982
      %v984 = vpop.f32.mrb[0].mxu0
      %985 = vmatprep.mubr.bf16.mxu0 0
      %986 = vmatmul.mubr.bf16.gmra.mrb[0].mxu0 %v661
      %v987 = vpop.f32.mrb[0].mxu0
      %v988 = vadd.f32 %v294, %v987
      %v989 = vpop.f32.mrb[0].mxu0
      %v990 = vpop.f32.mrb[0].mxu0
      %v991 = vadd.f32 %v294, %v990
      %v992 = vpop.f32.mrb[0].mxu0
      %993 = vmatprep.mubr.bf16.mxu0 0
      %994 = vmatmul.mubr.bf16.gmra.mrb[0].mxu0 %v664
      %v995 = vpop.f32.mrb[0].mxu0
      %v996 = vadd.f32 %v294, %v995
      %v997 = vpop.f32.mrb[0].mxu0
      %v998 = vpop.f32.mrb[0].mxu0
      %v999 = vadd.f32 %v294, %v998
      %v1000 = vpop.f32.mrb[0].mxu0
      %1001 = vmatprep.mubr.bf16.mxu0 0
      %1002 = vmatmul.mubr.bf16.gmra.mrb[0].mxu0 %v667
      %v1003 = vpop.f32.mrb[0].mxu0
      %v1004 = vadd.f32 %v294, %v1003
      %v1005 = vpop.f32.mrb[0].mxu0
      %v1006 = vpop.f32.mrb[0].mxu0
      %v1007 = vadd.f32 %v294, %v1006
      %v1008 = vpop.f32.mrb[0].mxu0
      %1009 = vmatprep.mubr.bf16.mxu0 0
      %1010 = vmatmul.mubr.bf16.gmra.mrb[0].mxu0 %v670
      %v1011 = vpop.f32.mrb[0].mxu0
      %v1012 = vadd.f32 %v294, %v1011
      %v1013 = vpop.f32.mrb[0].mxu0
      %v1014 = vpop.f32.mrb[0].mxu0
      %v1015 = vadd.f32 %v294, %v1014
      %v1016 = vpop.f32.mrb[0].mxu0
      %1017 = vmatprep.mubr.bf16.mxu0 0
      %1018 = vmatmul.mubr.bf16.gmra.mrb[0].mxu0 %v673
      %v1019 = vpop.f32.mrb[0].mxu0
      %v1020 = vadd.f32 %v294, %v1019
      %v1021 = vpop.f32.mrb[0].mxu0
      %v1022 = vpop.f32.mrb[0].mxu0
      %v1023 = vadd.f32 %v294, %v1022
      %v1024 = vpop.f32.mrb[0].mxu0
      %1025 = vmatprep.mubr.bf16.mxu0 0
      %1026 = vmatmul.mubr.bf16.gmra.mrb[0].mxu0 %v676
      %v1027 = vpop.f32.mrb[0].mxu0
      %v1028 = vadd.f32 %v294, %v1027
      %v1029 = vpop.f32.mrb[0].mxu0
      %v1030 = vpop.f32.mrb[0].mxu0
      %v1031 = vadd.f32 %v294, %v1030
      %v1032 = vpop.f32.mrb[0].mxu0
      %1033 = vmatprep.mubr.bf16.mxu0 0
      %1034 = vmatmul.mubr.bf16.gmra.mrb[0].mxu0 %v679
      %v1035 = vpop.f32.mrb[0].mxu0
      %v1036 = vadd.f32 %v294, %v1035
      %v1037 = vpop.f32.mrb[0].mxu0
      %v1038 = vpop.f32.mrb[0].mxu0
      %v1039 = vadd.f32 %v294, %v1038
      %v1040 = vpop.f32.mrb[0].mxu0
      %1041 = vmatprep.mubr.bf16.mxu0 0
      %1042 = vmatmul.mubr.bf16.gmra.mrb[0].mxu0 %v682
      %v1043 = vpop.f32.mrb[0].mxu0
      %v1044 = vadd.f32 %v294, %v1043
      %v1045 = vpop.f32.mrb[0].mxu0
      %v1046 = vpop.f32.mrb[0].mxu0
      %v1047 = vadd.f32 %v294, %v1046
      %v1048 = vpop.f32.mrb[0].mxu0
      %1049 = vmatprep.mubr.bf16.mxu0 0
      %1050 = vmatmul.mubr.bf16.gmra.mrb[0].mxu0 %v685
      %v1051 = vpop.f32.mrb[0].mxu0
      %v1052 = vadd.f32 %v294, %v1051
      %v1053 = vpop.f32.mrb[0].mxu0
      %v1054 = vpop.f32.mrb[0].mxu0
      %v1055 = vadd.f32 %v294, %v1054
      %v1056 = vpop.f32.mrb[0].mxu0
      %1057 = vmatprep.mubr.bf16.mxu0 0
      %1058 = vmatmul.mubr.bf16.gmra.mrb[0].mxu0 %v688
      %v1059 = vpop.f32.mrb[0].mxu0
      %v1060 = vadd.f32 %v294, %v1059
      %v1061 = vpop.f32.mrb[0].mxu0
      %v1062 = vpop.f32.mrb[0].mxu0
      %v1063 = vadd.f32 %v294, %v1062
      %v1064 = vpop.f32.mrb[0].mxu0
      %1065 = vmatprep.mubr.bf16.mxu0 0
      %1066 = vmatmul.mubr.bf16.gmra.mrb[0].mxu0 %v691
      %v1067 = vpop.f32.mrb[0].mxu0
      %v1068 = vadd.f32 %v294, %v1067
      %v1069 = vpop.f32.mrb[0].mxu0
      %v1070 = vpop.f32.mrb[0].mxu0
      %v1071 = vadd.f32 %v294, %v1070
      %v1072 = vpop.f32.mrb[0].mxu0
      %1073 = vmatprep.mubr.bf16.mxu0 0
      %1074 = vmatmul.mubr.bf16.gmra.mrb[0].mxu0 %v694
      %v1075 = vpop.f32.mrb[0].mxu0
      %v1076 = vadd.f32 %v294, %v1075
      %v1077 = vpop.f32.mrb[0].mxu0
      %v1078 = vpop.f32.mrb[0].mxu0
      %v1079 = vadd.f32 %v294, %v1078
      %v1080 = vpop.f32.mrb[0].mxu0
      %1081 = vmatprep.mubr.bf16.mxu0 0
      %1082 = vmatmul.mubr.bf16.gmra.mrb[0].mxu0 %v697
      %v1083 = vpop.f32.mrb[0].mxu0
      %v1084 = vadd.f32 %v294, %v1083
      %v1085 = vpop.f32.mrb[0].mxu0
      %v1086 = vpop.f32.mrb[0].mxu0
      %v1087 = vadd.f32 %v294, %v1086
      %v1088 = vpop.f32.mrb[0].mxu0
      %1089 = vmatprep.mubr.bf16.mxu0 0
      %1090 = vmatmul.mubr.bf16.gmra.mrb[0].mxu0 %v700
      %v1091 = vpop.f32.mrb[0].mxu0
      %v1092 = vadd.f32 %v294, %v1091
      %v1093 = vpop.f32.mrb[0].mxu0
      %v1094 = vpop.f32.mrb[0].mxu0
      %v1095 = vadd.f32 %v294, %v1094
      %v1096 = vpop.f32.mrb[0].mxu0
      %1097 = vmatprep.mubr.bf16.mxu0 0
      %1098 = vmatmul.mubr.bf16.gmra.mrb[0].mxu0 %v703
      %v1099 = vpop.f32.mrb[0].mxu0
      %v1100 = vadd.f32 %v294, %v1099
      %v1101 = vpop.f32.mrb[0].mxu0
      %v1102 = vpop.f32.mrb[0].mxu0
      %v1103 = vadd.f32 %v294, %v1102
      %v1104 = vpop.f32.mrb[0].mxu0
      %1105 = vmatprep.mubr.bf16.mxu0 0
      %1106 = vmatmul.mubr.bf16.gmra.mrb[0].mxu0 %v706
      %v1107 = vpop.f32.mrb[0].mxu0
      %v1108 = vadd.f32 %v294, %v1107
      %v1109 = vpop.f32.mrb[0].mxu0
      %v1110 = vpop.f32.mrb[0].mxu0
      %v1111 = vadd.f32 %v294, %v1110
      %v1112 = vpop.f32.mrb[0].mxu0
      %1113 = vmatprep.mubr.bf16.mxu0 0
      %1114 = vmatmul.mubr.bf16.gmra.mrb[0].mxu0 %v709
      %v1115 = vpop.f32.mrb[0].mxu0
      %v1116 = vadd.f32 %v294, %v1115
      %v1117 = vpop.f32.mrb[0].mxu0
      %v1118 = vpop.f32.mrb[0].mxu0
      %v1119 = vadd.f32 %v294, %v1118
      %v1120 = vpop.f32.mrb[0].mxu0
      %1121 = vmatprep.mubr.bf16.mxu0 0
      %1122 = vmatmul.mubr.bf16.gmra.mrb[0].mxu0 %v712
      %v1123 = vpop.f32.mrb[0].mxu0
      %v1124 = vadd.f32 %v294, %v1123
      %v1125 = vpop.f32.mrb[0].mxu0
      %v1126 = vpop.f32.mrb[0].mxu0
      %v1127 = vadd.f32 %v294, %v1126
      %v1128 = vpop.f32.mrb[0].mxu0
      %1129 = vmatprep.mubr.bf16.mxu0 0
      %1130 = vmatmul.mubr.bf16.gmra.mrb[0].mxu0 %v715
      %v1131 = vpop.f32.mrb[0].mxu0
      %v1132 = vadd.f32 %v294, %v1131
      %v1133 = vpop.f32.mrb[0].mxu0
      %v1134 = vpop.f32.mrb[0].mxu0
      %v1135 = vadd.f32 %v294, %v1134
      %v1136 = vpop.f32.mrb[0].mxu0
      %1137 = vmatprep.mubr.bf16.mxu0 0
      %1138 = vmatmul.mubr.bf16.gmra.mrb[0].mxu0 %v718
      %v1139 = vpop.f32.mrb[0].mxu0
      %v1140 = vadd.f32 %v294, %v1139
      %v1141 = vpop.f32.mrb[0].mxu0
      %v1142 = vpop.f32.mrb[0].mxu0
      %v1143 = vadd.f32 %v294, %v1142
      %v1144 = vpop.f32.mrb[0].mxu0
      %1145 = vmatprep.mubr.bf16.mxu0 0
      %1146 = vmatmul.mubr.bf16.gmra.mrb[0].mxu0 %v721
      %v1147 = vpop.f32.mrb[0].mxu0
      %v1148 = vadd.f32 %v294, %v1147
      %v1149 = vpop.f32.mrb[0].mxu0
      %v1150 = vpop.f32.mrb[0].mxu0
      %v1151 = vadd.f32 %v294, %v1150
      %v1152 = vpop.f32.mrb[0].mxu0
      %1153 = vmatprep.mubr.bf16.mxu0 0
      %1154 = vmatmul.mubr.bf16.gmra.mrb[0].mxu0 %v724
      %v1155 = vpop.f32.mrb[0].mxu0
      %v1156 = vadd.f32 %v294, %v1155
      %v1157 = vpop.f32.mrb[0].mxu0
      %v1158 = vpop.f32.mrb[0].mxu0
      %v1159 = vadd.f32 %v294, %v1158
      %v1160 = vpop.f32.mrb[0].mxu0
      %1161 = vmatprep.mubr.bf16.mxu0 0
      %1162 = vmatmul.mubr.bf16.gmra.mrb[0].mxu0 %v727
      %v1163 = vpop.f32.mrb[0].mxu0
      %v1164 = vadd.f32 %v294, %v1163
      %v1165 = vpop.f32.mrb[0].mxu0
      %v1166 = vpop.f32.mrb[0].mxu0
      %v1167 = vadd.f32 %v294, %v1166
      %v1168 = vpop.f32.mrb[0].mxu0
      %1169 = vmatprep.mubr.bf16.mxu0 0
      %1170 = vmatmul.mubr.bf16.gmra.mrb[0].mxu0 %v730
      %v1171 = vpop.f32.mrb[0].mxu0
      %v1172 = vadd.f32 %v294, %v1171
      %v1173 = vpop.f32.mrb[0].mxu0
      %v1174 = vpop.f32.mrb[0].mxu0
      %v1175 = vadd.f32 %v294, %v1174
      %v1176 = vpop.f32.mrb[0].mxu0
      %1177 = vmatprep.mubr.bf16.mxu0 0
      %1178 = vmatmul.mubr.bf16.gmra.mrb[0].mxu0 %v733
      %v1179 = vpop.f32.mrb[0].mxu0
      %v1180 = vadd.f32 %v294, %v1179
      %v1181 = vpop.f32.mrb[0].mxu0
      %v1182 = vpop.f32.mrb[0].mxu0
      %v1183 = vadd.f32 %v294, %v1182
      %v1184 = vpop.f32.mrb[0].mxu0
      %1185 = vmatprep.mubr.bf16.mxu0 0
      %1186 = vmatmul.mubr.bf16.gmra.mrb[0].mxu0 %v736
      %v1187 = vpop.f32.mrb[0].mxu0
      %v1188 = vadd.f32 %v294, %v1187
      %v1189 = vpop.f32.mrb[0].mxu0
      %v1190 = vpop.f32.mrb[0].mxu0
      %v1191 = vadd.f32 %v294, %v1190
      %v1192 = vpop.f32.mrb[0].mxu0
      %1193 = vmatprep.mubr.bf16.mxu0 0
      %1194 = vmatmul.mubr.bf16.gmra.mrb[0].mxu0 %v739
      %v1195 = vpop.f32.mrb[0].mxu0
      %v1196 = vadd.f32 %v294, %v1195
      %v1197 = vpop.f32.mrb[0].mxu0
      %v1198 = vpop.f32.mrb[0].mxu0
      %v1199 = vadd.f32 %v294, %v1198
      %v1200 = vpop.f32.mrb[0].mxu0
      %1201 = vmatprep.mubr.bf16.mxu0 0
      %1202 = vmatmul.mubr.bf16.gmra.mrb[0].mxu0 %v742
      %v1203 = vpop.f32.mrb[0].mxu0
      %v1204 = vadd.f32 %v294, %v1203
      %v1205 = vpop.f32.mrb[0].mxu0
      %v1206 = vpop.f32.mrb[0].mxu0
      %v1207 = vadd.f32 %v294, %v1206
      %v1208 = vpop.f32.mrb[0].mxu0
      %1209 = vmatprep.mubr.bf16.mxu0 0
      %1210 = vmatmul.mubr.bf16.gmra.mrb[0].mxu0 %v745
      %v1211 = vpop.f32.mrb[0].mxu0
      %v1212 = vadd.f32 %v294, %v1211
      %v1213 = vpop.f32.mrb[0].mxu0
      %v1214 = vpop.f32.mrb[0].mxu0
      %v1215 = vadd.f32 %v294, %v1214
      %v1216 = vpop.f32.mrb[0].mxu0
      %1217 = vmatprep.mubr.bf16.mxu0 0
      %1218 = vmatmul.mubr.bf16.gmra.mrb[0].mxu0 %v748
      %v1219 = vpop.f32.mrb[0].mxu0
      %v1220 = vadd.f32 %v294, %v1219
      %v1221 = vpop.f32.mrb[0].mxu0
      %v1222 = vpop.f32.mrb[0].mxu0
      %v1223 = vadd.f32 %v294, %v1222
      %v1224 = vpop.f32.mrb[0].mxu0
      %1225 = vmatprep.mubr.bf16.mxu0 0
      %1226 = vmatmul.mubr.bf16.gmra.mrb[0].mxu0 %v751
      %v1227 = vpop.f32.mrb[0].mxu0
      %v1228 = vadd.f32 %v294, %v1227
      %v1229 = vpop.f32.mrb[0].mxu0
      %v1230 = vpop.f32.mrb[0].mxu0
      %v1231 = vadd.f32 %v294, %v1230
      %v1232 = vpop.f32.mrb[0].mxu0
      %1233 = vmatprep.mubr.bf16.mxu0 0
      %1234 = vmatmul.mubr.bf16.gmra.mrb[0].mxu0 %v754
      %v1235 = vpop.f32.mrb[0].mxu0
      %v1236 = vadd.f32 %v294, %v1235
      %v1237 = vpop.f32.mrb[0].mxu0
      %v1238 = vpop.f32.mrb[0].mxu0
      %v1239 = vadd.f32 %v294, %v1238
      %v1240 = vpop.f32.mrb[0].mxu0
      %1241 = vmatprep.mubr.bf16.mxu0 0
      %1242 = vmatmul.mubr.bf16.gmra.mrb[0].mxu0 %v757
      %v1243 = vpop.f32.mrb[0].mxu0
      %v1244 = vadd.f32 %v294, %v1243
      %v1245 = vpop.f32.mrb[0].mxu0
      %v1246 = vpop.f32.mrb[0].mxu0
      %v1247 = vadd.f32 %v294, %v1246
      %v1248 = vpop.f32.mrb[0].mxu0
      %1249 = vmatprep.mubr.bf16.mxu0 0
      %1250 = vmatmul.mubr.bf16.gmra.mrb[0].mxu0 %v760
      %v1251 = vpop.f32.mrb[0].mxu0
      %v1252 = vadd.f32 %v294, %v1251
      %v1253 = vpop.f32.mrb[0].mxu0
      %v1254 = vpop.f32.mrb[0].mxu0
      %v1255 = vpop.f32.mrb[0].mxu0
      %1256 = vdwg.mxu0
      %vm1257 = vcmask 261120
      %v1258 = vsel %vm1257, %v804, 0.0
      %v1259 = vsel %vm1257, %v807, 0.0
      %v1260 = vadd.f32 %v1258, %v1259
      %v1261 = vsel %vm1257, %v812, 0.0
      %v1262 = vadd.f32 %v1260, %v1261
      %v1263 = vsel %vm1257, %v815, 0.0
      %v1264 = vadd.f32 %v1262, %v1263
      %v1265 = vsel %vm1257, %v820, 0.0
      %v1266 = vadd.f32 %v1264, %v1265
      %v1267 = vsel %vm1257, %v823, 0.0
      %v1268 = vadd.f32 %v1266, %v1267
      %v1269 = vsel %vm1257, %v828, 0.0
      %v1270 = vadd.f32 %v1268, %v1269
      %v1271 = vsel %vm1257, %v831, 0.0
      %v1272 = vadd.f32 %v1270, %v1271
      %v1273 = vsel %vm1257, %v836, 0.0
      %v1274 = vadd.f32 %v1272, %v1273
      %v1275 = vsel %vm1257, %v839, 0.0
      %v1276 = vadd.f32 %v1274, %v1275
      %v1277 = vsel %vm1257, %v844, 0.0
      %v1278 = vadd.f32 %v1276, %v1277
      %v1279 = vsel %vm1257, %v847, 0.0
      %v1280 = vadd.f32 %v1278, %v1279
      %v1281 = vsel %vm1257, %v852, 0.0
      %v1282 = vadd.f32 %v1280, %v1281
      %v1283 = vsel %vm1257, %v855, 0.0
      %v1284 = vadd.f32 %v1282, %v1283
      %v1285 = vsel %vm1257, %v860, 0.0
      %v1286 = vadd.f32 %v1284, %v1285
      %v1287 = vsel %vm1257, %v863, 0.0
      %v1288 = vadd.f32 %v1286, %v1287
      %v1289 = vsel %vm1257, %v868, 0.0
      %v1290 = vadd.f32 %v1288, %v1289
      %v1291 = vsel %vm1257, %v871, 0.0
      %v1292 = vadd.f32 %v1290, %v1291
      %v1293 = vsel %vm1257, %v876, 0.0
      %v1294 = vadd.f32 %v1292, %v1293
      %v1295 = vsel %vm1257, %v879, 0.0
      %v1296 = vadd.f32 %v1294, %v1295
      %v1297 = vsel %vm1257, %v884, 0.0
      %v1298 = vadd.f32 %v1296, %v1297
      %v1299 = vsel %vm1257, %v887, 0.0
      %v1300 = vadd.f32 %v1298, %v1299
      %v1301 = vsel %vm1257, %v892, 0.0
      %v1302 = vadd.f32 %v1300, %v1301
      %v1303 = vsel %vm1257, %v895, 0.0
      %v1304 = vadd.f32 %v1302, %v1303
      %v1305 = vsel %vm1257, %v900, 0.0
      %v1306 = vadd.f32 %v1304, %v1305
      %v1307 = vsel %vm1257, %v903, 0.0
      %v1308 = vadd.f32 %v1306, %v1307
      %v1309 = vsel %vm1257, %v908, 0.0
      %v1310 = vadd.f32 %v1308, %v1309
      %v1311 = vsel %vm1257, %v911, 0.0
      %v1312 = vadd.f32 %v1310, %v1311
      %v1313 = vsel %vm1257, %v916, 0.0
      %v1314 = vadd.f32 %v1312, %v1313
      %v1315 = vsel %vm1257, %v919, 0.0
      %v1316 = vadd.f32 %v1314, %v1315
      %v1317 = vsel %vm1257, %v924, 0.0
      %v1318 = vadd.f32 %v1316, %v1317
      %v1319 = vsel %vm1257, %v927, 0.0
      %v1320 = vadd.f32 %v1318, %v1319
      %v1321 = vsel %vm1257, %v932, 0.0
      %v1322 = vadd.f32 %v1320, %v1321
      %v1323 = vsel %vm1257, %v935, 0.0
      %v1324 = vadd.f32 %v1322, %v1323
      %v1325 = vsel %vm1257, %v940, 0.0
      %v1326 = vadd.f32 %v1324, %v1325
      %v1327 = vsel %vm1257, %v943, 0.0
      %v1328 = vadd.f32 %v1326, %v1327
      %v1329 = vsel %vm1257, %v948, 0.0
      %v1330 = vadd.f32 %v1328, %v1329
      %v1331 = vsel %vm1257, %v951, 0.0
      %v1332 = vadd.f32 %v1330, %v1331
      %v1333 = vsel %vm1257, %v956, 0.0
      %v1334 = vadd.f32 %v1332, %v1333
      %v1335 = vsel %vm1257, %v959, 0.0
      %v1336 = vadd.f32 %v1334, %v1335
      %v1337 = vsel %vm1257, %v964, 0.0
      %v1338 = vadd.f32 %v1336, %v1337
      %v1339 = vsel %vm1257, %v967, 0.0
      %v1340 = vadd.f32 %v1338, %v1339
      %v1341 = vsel %vm1257, %v972, 0.0
      %v1342 = vadd.f32 %v1340, %v1341
      %v1343 = vsel %vm1257, %v975, 0.0
      %v1344 = vadd.f32 %v1342, %v1343
      %v1345 = vsel %vm1257, %v980, 0.0
      %v1346 = vadd.f32 %v1344, %v1345
      %v1347 = vsel %vm1257, %v983, 0.0
      %v1348 = vadd.f32 %v1346, %v1347
      %v1349 = vsel %vm1257, %v988, 0.0
      %v1350 = vadd.f32 %v1348, %v1349
      %v1351 = vsel %vm1257, %v991, 0.0
      %v1352 = vadd.f32 %v1350, %v1351
      %v1353 = vsel %vm1257, %v996, 0.0
      %v1354 = vadd.f32 %v1352, %v1353
      %v1355 = vsel %vm1257, %v999, 0.0
      %v1356 = vadd.f32 %v1354, %v1355
      %v1357 = vsel %vm1257, %v1004, 0.0
      %v1358 = vadd.f32 %v1356, %v1357
      %v1359 = vsel %vm1257, %v1007, 0.0
      %v1360 = vadd.f32 %v1358, %v1359
      %v1361 = vsel %vm1257, %v1012, 0.0
      %v1362 = vadd.f32 %v1360, %v1361
      %v1363 = vsel %vm1257, %v1015, 0.0
      %v1364 = vadd.f32 %v1362, %v1363
      %v1365 = vsel %vm1257, %v1020, 0.0
      %v1366 = vadd.f32 %v1364, %v1365
      %v1367 = vsel %vm1257, %v1023, 0.0
      %v1368 = vadd.f32 %v1366, %v1367
      %v1369 = vsel %vm1257, %v1028, 0.0
      %v1370 = vadd.f32 %v1368, %v1369
      %v1371 = vsel %vm1257, %v1031, 0.0
      %v1372 = vadd.f32 %v1370, %v1371
      %v1373 = vsel %vm1257, %v1036, 0.0
      %v1374 = vadd.f32 %v1372, %v1373
      %v1375 = vsel %vm1257, %v1039, 0.0
      %v1376 = vadd.f32 %v1374, %v1375
      %v1377 = vsel %vm1257, %v1044, 0.0
      %v1378 = vadd.f32 %v1376, %v1377
      %v1379 = vsel %vm1257, %v1047, 0.0
      %v1380 = vadd.f32 %v1378, %v1379
      %v1381 = vsel %vm1257, %v1052, 0.0
      %v1382 = vadd.f32 %v1380, %v1381
      %v1383 = vsel %vm1257, %v1055, 0.0
      %v1384 = vadd.f32 %v1382, %v1383
      %v1385 = vsel %vm1257, %v1060, 0.0
      %v1386 = vadd.f32 %v1384, %v1385
      %v1387 = vsel %vm1257, %v1063, 0.0
      %v1388 = vadd.f32 %v1386, %v1387
      %v1389 = vsel %vm1257, %v1068, 0.0
      %v1390 = vadd.f32 %v1388, %v1389
      %v1391 = vsel %vm1257, %v1071, 0.0
      %v1392 = vadd.f32 %v1390, %v1391
      %v1393 = vsel %vm1257, %v1076, 0.0
      %v1394 = vadd.f32 %v1392, %v1393
      %v1395 = vsel %vm1257, %v1079, 0.0
      %v1396 = vadd.f32 %v1394, %v1395
      %v1397 = vsel %vm1257, %v1084, 0.0
      %v1398 = vadd.f32 %v1396, %v1397
      %v1399 = vsel %vm1257, %v1087, 0.0
      %v1400 = vadd.f32 %v1398, %v1399
      %v1401 = vsel %vm1257, %v1092, 0.0
      %v1402 = vadd.f32 %v1400, %v1401
      %v1403 = vsel %vm1257, %v1095, 0.0
      %v1404 = vadd.f32 %v1402, %v1403
      %v1405 = vsel %vm1257, %v1100, 0.0
      %v1406 = vadd.f32 %v1404, %v1405
      %v1407 = vsel %vm1257, %v1103, 0.0
      %v1408 = vadd.f32 %v1406, %v1407
      %v1409 = vsel %vm1257, %v1108, 0.0
      %v1410 = vadd.f32 %v1408, %v1409
      %v1411 = vsel %vm1257, %v1111, 0.0
      %v1412 = vadd.f32 %v1410, %v1411
      %v1413 = vsel %vm1257, %v1116, 0.0
      %v1414 = vadd.f32 %v1412, %v1413
      %v1415 = vsel %vm1257, %v1119, 0.0
      %v1416 = vadd.f32 %v1414, %v1415
      %v1417 = vsel %vm1257, %v1124, 0.0
      %v1418 = vadd.f32 %v1416, %v1417
      %v1419 = vsel %vm1257, %v1127, 0.0
      %v1420 = vadd.f32 %v1418, %v1419
      %v1421 = vsel %vm1257, %v1132, 0.0
      %v1422 = vadd.f32 %v1420, %v1421
      %v1423 = vsel %vm1257, %v1135, 0.0
      %v1424 = vadd.f32 %v1422, %v1423
      %v1425 = vsel %vm1257, %v1140, 0.0
      %v1426 = vadd.f32 %v1424, %v1425
      %v1427 = vsel %vm1257, %v1143, 0.0
      %v1428 = vadd.f32 %v1426, %v1427
      %v1429 = vsel %vm1257, %v1148, 0.0
      %v1430 = vadd.f32 %v1428, %v1429
      %v1431 = vsel %vm1257, %v1151, 0.0
      %v1432 = vadd.f32 %v1430, %v1431
      %v1433 = vsel %vm1257, %v1156, 0.0
      %v1434 = vadd.f32 %v1432, %v1433
      %v1435 = vsel %vm1257, %v1159, 0.0
      %v1436 = vadd.f32 %v1434, %v1435
      %v1437 = vsel %vm1257, %v1164, 0.0
      %v1438 = vadd.f32 %v1436, %v1437
      %v1439 = vsel %vm1257, %v1167, 0.0
      %v1440 = vadd.f32 %v1438, %v1439
      %v1441 = vsel %vm1257, %v1172, 0.0
      %v1442 = vadd.f32 %v1440, %v1441
      %v1443 = vsel %vm1257, %v1175, 0.0
      %v1444 = vadd.f32 %v1442, %v1443
      %v1445 = vsel %vm1257, %v1180, 0.0
      %v1446 = vadd.f32 %v1444, %v1445
      %v1447 = vsel %vm1257, %v1183, 0.0
      %v1448 = vadd.f32 %v1446, %v1447
      %v1449 = vsel %vm1257, %v1188, 0.0
      %v1450 = vadd.f32 %v1448, %v1449
      %v1451 = vsel %vm1257, %v1191, 0.0
      %v1452 = vadd.f32 %v1450, %v1451
      %v1453 = vsel %vm1257, %v1196, 0.0
      %v1454 = vadd.f32 %v1452, %v1453
      %v1455 = vsel %vm1257, %v1199, 0.0
      %v1456 = vadd.f32 %v1454, %v1455
      %v1457 = vsel %vm1257, %v1204, 0.0
      %v1458 = vadd.f32 %v1456, %v1457
      %v1459 = vsel %vm1257, %v1207, 0.0
      %v1460 = vadd.f32 %v1458, %v1459
      %v1461 = vsel %vm1257, %v1212, 0.0
      %v1462 = vadd.f32 %v1460, %v1461
      %v1463 = vsel %vm1257, %v1215, 0.0
      %v1464 = vadd.f32 %v1462, %v1463
      %v1465 = vsel %vm1257, %v1220, 0.0
      %v1466 = vadd.f32 %v1464, %v1465
      %v1467 = vsel %vm1257, %v1223, 0.0
      %v1468 = vadd.f32 %v1466, %v1467
      %v1469 = vsel %vm1257, %v1228, 0.0
      %v1470 = vadd.f32 %v1468, %v1469
      %v1471 = vsel %vm1257, %v1231, 0.0
      %v1472 = vadd.f32 %v1470, %v1471
      %v1473 = vsel %vm1257, %v1236, 0.0
      %v1474 = vadd.f32 %v1472, %v1473
      %v1475 = vsel %vm1257, %v1239, 0.0
      %v1476 = vadd.f32 %v1474, %v1475
      %v1477 = vsel %vm1257, %v1244, 0.0
      %v1478 = vadd.f32 %v1476, %v1477
      %v1479 = vsel %vm1257, %v1247, 0.0
      %v1480 = vadd.f32 %v1478, %v1479
      %vm1481 = vcmask 257024
      %v1482 = vsel %vm1481, %v1252, 0.0
      %v1483 = vadd.f32 %v1480, %v1482
      %v1484 = vrot.slane %v1483, 4
      %v1485 = vadd.f32 %v1483, %v1484
      %v1486 = vrot.slane %v1485, 2
      %v1487 = vadd.f32 %v1485, %v1486
      %v1488 = vrot.slane %v1487, 1
      %v1489 = vadd.f32 %v1487, %v1488
      %v1490 = vrcp.pop 900.0
      %v1491 = vmul.f32 %v1489, %v1490
      %v1492 = vsub.f32 %v804, %v1491
      %v1493 = vsub.f32 %v807, %v1491
      %v1494 = vsub.f32 %v812, %v1491
      %v1495 = vsub.f32 %v815, %v1491
      %v1496 = vsub.f32 %v820, %v1491
      %v1497 = vsub.f32 %v823, %v1491
      %v1498 = vsub.f32 %v828, %v1491
      %v1499 = vsub.f32 %v831, %v1491
      %v1500 = vsub.f32 %v836, %v1491
      %v1501 = vsub.f32 %v839, %v1491
      %v1502 = vsub.f32 %v844, %v1491
      %v1503 = vsub.f32 %v847, %v1491
      %v1504 = vsub.f32 %v852, %v1491
      %v1505 = vsub.f32 %v855, %v1491
      %v1506 = vsub.f32 %v860, %v1491
      %v1507 = vsub.f32 %v863, %v1491
      %v1508 = vsub.f32 %v868, %v1491
      %v1509 = vsub.f32 %v871, %v1491
      %v1510 = vsub.f32 %v876, %v1491
      %v1511 = vsub.f32 %v879, %v1491
      %v1512 = vsub.f32 %v884, %v1491
      %v1513 = vsub.f32 %v887, %v1491
      %v1514 = vsub.f32 %v892, %v1491
      %v1515 = vsub.f32 %v895, %v1491
      %v1516 = vsub.f32 %v900, %v1491
      %v1517 = vsub.f32 %v903, %v1491
      %v1518 = vsub.f32 %v908, %v1491
      %v1519 = vsub.f32 %v911, %v1491
      %v1520 = vsub.f32 %v916, %v1491
      %v1521 = vsub.f32 %v919, %v1491
      %v1522 = vsub.f32 %v924, %v1491
      %v1523 = vsub.f32 %v927, %v1491
      %v1524 = vsub.f32 %v932, %v1491
      %v1525 = vsub.f32 %v935, %v1491
      %v1526 = vsub.f32 %v940, %v1491
      %v1527 = vsub.f32 %v943, %v1491
      %v1528 = vsub.f32 %v948, %v1491
      %v1529 = vsub.f32 %v951, %v1491
      %v1530 = vsub.f32 %v956, %v1491
      %v1531 = vsub.f32 %v959, %v1491
      %v1532 = vsub.f32 %v964, %v1491
      %v1533 = vsub.f32 %v967, %v1491
      %v1534 = vsub.f32 %v972, %v1491
      %v1535 = vsub.f32 %v975, %v1491
      %v1536 = vsub.f32 %v980, %v1491
      %v1537 = vsub.f32 %v983, %v1491
      %v1538 = vsub.f32 %v988, %v1491
      %v1539 = vsub.f32 %v991, %v1491
      %v1540 = vsub.f32 %v996, %v1491
      %v1541 = vsub.f32 %v999, %v1491
      %v1542 = vsub.f32 %v1004, %v1491
      %v1543 = vsub.f32 %v1007, %v1491
      %v1544 = vsub.f32 %v1012, %v1491
      %v1545 = vsub.f32 %v1015, %v1491
      %v1546 = vsub.f32 %v1020, %v1491
      %v1547 = vsub.f32 %v1023, %v1491
      %v1548 = vsub.f32 %v1028, %v1491
      %v1549 = vsub.f32 %v1031, %v1491
      %v1550 = vsub.f32 %v1036, %v1491
      %v1551 = vsub.f32 %v1039, %v1491
      %v1552 = vsub.f32 %v1044, %v1491
      %v1553 = vsub.f32 %v1047, %v1491
      %v1554 = vsub.f32 %v1052, %v1491
      %v1555 = vsub.f32 %v1055, %v1491
      %v1556 = vsub.f32 %v1060, %v1491
      %v1557 = vsub.f32 %v1063, %v1491
      %v1558 = vsub.f32 %v1068, %v1491
      %v1559 = vsub.f32 %v1071, %v1491
      %v1560 = vsub.f32 %v1076, %v1491
      %v1561 = vsub.f32 %v1079, %v1491
      %v1562 = vsub.f32 %v1084, %v1491
      %v1563 = vsub.f32 %v1087, %v1491
      %v1564 = vsub.f32 %v1092, %v1491
      %v1565 = vsub.f32 %v1095, %v1491
      %v1566 = vsub.f32 %v1100, %v1491
      %v1567 = vsub.f32 %v1103, %v1491
      %v1568 = vsub.f32 %v1108, %v1491
      %v1569 = vsub.f32 %v1111, %v1491
      %v1570 = vsub.f32 %v1116, %v1491
      %v1571 = vsub.f32 %v1119, %v1491
      %v1572 = vsub.f32 %v1124, %v1491
      %v1573 = vsub.f32 %v1127, %v1491
      %v1574 = vsub.f32 %v1132, %v1491
      %v1575 = vsub.f32 %v1135, %v1491
      %v1576 = vsub.f32 %v1140, %v1491
      %v1577 = vsub.f32 %v1143, %v1491
      %v1578 = vsub.f32 %v1148, %v1491
      %v1579 = vsub.f32 %v1151, %v1491
      %v1580 = vsub.f32 %v1156, %v1491
      %v1581 = vsub.f32 %v1159, %v1491
      %v1582 = vsub.f32 %v1164, %v1491
      %v1583 = vsub.f32 %v1167, %v1491
      %v1584 = vsub.f32 %v1172, %v1491
      %v1585 = vsub.f32 %v1175, %v1491
      %v1586 = vsub.f32 %v1180, %v1491
      %v1587 = vsub.f32 %v1183, %v1491
      %v1588 = vsub.f32 %v1188, %v1491
      %v1589 = vsub.f32 %v1191, %v1491
      %v1590 = vsub.f32 %v1196, %v1491
      %v1591 = vsub.f32 %v1199, %v1491
      %v1592 = vsub.f32 %v1204, %v1491
      %v1593 = vsub.f32 %v1207, %v1491
      %v1594 = vsub.f32 %v1212, %v1491
      %v1595 = vsub.f32 %v1215, %v1491
      %v1596 = vsub.f32 %v1220, %v1491
      %v1597 = vsub.f32 %v1223, %v1491
      %v1598 = vsub.f32 %v1228, %v1491
      %v1599 = vsub.f32 %v1231, %v1491
      %v1600 = vsub.f32 %v1236, %v1491
      %v1601 = vsub.f32 %v1239, %v1491
      %v1602 = vsub.f32 %v1244, %v1491
      %v1603 = vsub.f32 %v1247, %v1491
      %v1604 = vsub.f32 %v1252, %v1491
      %v1605 = vmul.f32 %v1492, %v1492
      %v1606 = vmul.f32 %v1493, %v1493
      %v1607 = vmul.f32 %v1494, %v1494
      %v1608 = vmul.f32 %v1495, %v1495
      %v1609 = vmul.f32 %v1496, %v1496
      %v1610 = vmul.f32 %v1497, %v1497
      %v1611 = vmul.f32 %v1498, %v1498
      %v1612 = vmul.f32 %v1499, %v1499
      %v1613 = vmul.f32 %v1500, %v1500
      %v1614 = vmul.f32 %v1501, %v1501
      %v1615 = vmul.f32 %v1502, %v1502
      %v1616 = vmul.f32 %v1503, %v1503
      %v1617 = vmul.f32 %v1504, %v1504
      %v1618 = vmul.f32 %v1505, %v1505
      %v1619 = vmul.f32 %v1506, %v1506
      %v1620 = vmul.f32 %v1507, %v1507
      %v1621 = vmul.f32 %v1508, %v1508
      %v1622 = vmul.f32 %v1509, %v1509
      %v1623 = vmul.f32 %v1510, %v1510
      %v1624 = vmul.f32 %v1511, %v1511
      %v1625 = vmul.f32 %v1512, %v1512
      %v1626 = vmul.f32 %v1513, %v1513
      %v1627 = vmul.f32 %v1514, %v1514
      %v1628 = vmul.f32 %v1515, %v1515
      %v1629 = vmul.f32 %v1516, %v1516
      %v1630 = vmul.f32 %v1517, %v1517
      %v1631 = vmul.f32 %v1518, %v1518
      %v1632 = vmul.f32 %v1519, %v1519
      %v1633 = vmul.f32 %v1520, %v1520
      %v1634 = vmul.f32 %v1521, %v1521
      %v1635 = vmul.f32 %v1522, %v1522
      %v1636 = vmul.f32 %v1523, %v1523
      %v1637 = vmul.f32 %v1524, %v1524
      %v1638 = vmul.f32 %v1525, %v1525
      %v1639 = vmul.f32 %v1526, %v1526
      %v1640 = vmul.f32 %v1527, %v1527
      %v1641 = vmul.f32 %v1528, %v1528
      %v1642 = vmul.f32 %v1529, %v1529
      %v1643 = vmul.f32 %v1530, %v1530
      %v1644 = vmul.f32 %v1531, %v1531
      %v1645 = vmul.f32 %v1532, %v1532
      %v1646 = vmul.f32 %v1533, %v1533
      %v1647 = vmul.f32 %v1534, %v1534
      %v1648 = vmul.f32 %v1535, %v1535
      %v1649 = vmul.f32 %v1536, %v1536
      %v1650 = vmul.f32 %v1537, %v1537
      %v1651 = vmul.f32 %v1538, %v1538
      %v1652 = vmul.f32 %v1539, %v1539
      %v1653 = vmul.f32 %v1540, %v1540
      %v1654 = vmul.f32 %v1541, %v1541
      %v1655 = vmul.f32 %v1542, %v1542
      %v1656 = vmul.f32 %v1543, %v1543
      %v1657 = vmul.f32 %v1544, %v1544
      %v1658 = vmul.f32 %v1545, %v1545
      %v1659 = vmul.f32 %v1546, %v1546
      %v1660 = vmul.f32 %v1547, %v1547
      %v1661 = vmul.f32 %v1548, %v1548
      %v1662 = vmul.f32 %v1549, %v1549
      %v1663 = vmul.f32 %v1550, %v1550
      %v1664 = vmul.f32 %v1551, %v1551
      %v1665 = vmul.f32 %v1552, %v1552
      %v1666 = vmul.f32 %v1553, %v1553
      %v1667 = vmul.f32 %v1554, %v1554
      %v1668 = vmul.f32 %v1555, %v1555
      %v1669 = vmul.f32 %v1556, %v1556
      %v1670 = vmul.f32 %v1557, %v1557
      %v1671 = vmul.f32 %v1558, %v1558
      %v1672 = vmul.f32 %v1559, %v1559
      %v1673 = vmul.f32 %v1560, %v1560
      %v1674 = vmul.f32 %v1561, %v1561
      %v1675 = vmul.f32 %v1562, %v1562
      %v1676 = vmul.f32 %v1563, %v1563
      %v1677 = vmul.f32 %v1564, %v1564
      %v1678 = vmul.f32 %v1565, %v1565
      %v1679 = vmul.f32 %v1566, %v1566
      %v1680 = vmul.f32 %v1567, %v1567
      %v1681 = vmul.f32 %v1568, %v1568
      %v1682 = vmul.f32 %v1569, %v1569
      %v1683 = vmul.f32 %v1570, %v1570
      %v1684 = vmul.f32 %v1571, %v1571
      %v1685 = vmul.f32 %v1572, %v1572
      %v1686 = vmul.f32 %v1573, %v1573
      %v1687 = vmul.f32 %v1574, %v1574
      %v1688 = vmul.f32 %v1575, %v1575
      %v1689 = vmul.f32 %v1576, %v1576
      %v1690 = vmul.f32 %v1577, %v1577
      %v1691 = vmul.f32 %v1578, %v1578
      %v1692 = vmul.f32 %v1579, %v1579
      %v1693 = vmul.f32 %v1580, %v1580
      %v1694 = vmul.f32 %v1581, %v1581
      %v1695 = vmul.f32 %v1582, %v1582
      %v1696 = vmul.f32 %v1583, %v1583
      %v1697 = vmul.f32 %v1584, %v1584
      %v1698 = vmul.f32 %v1585, %v1585
      %v1699 = vmul.f32 %v1586, %v1586
      %v1700 = vmul.f32 %v1587, %v1587
      %v1701 = vmul.f32 %v1588, %v1588
      %v1702 = vmul.f32 %v1589, %v1589
      %v1703 = vmul.f32 %v1590, %v1590
      %v1704 = vmul.f32 %v1591, %v1591
      %v1705 = vmul.f32 %v1592, %v1592
      %v1706 = vmul.f32 %v1593, %v1593
      %v1707 = vmul.f32 %v1594, %v1594
      %v1708 = vmul.f32 %v1595, %v1595
      %v1709 = vmul.f32 %v1596, %v1596
      %v1710 = vmul.f32 %v1597, %v1597
      %v1711 = vmul.f32 %v1598, %v1598
      %v1712 = vmul.f32 %v1599, %v1599
      %v1713 = vmul.f32 %v1600, %v1600
      %v1714 = vmul.f32 %v1601, %v1601
      %v1715 = vmul.f32 %v1602, %v1602
      %v1716 = vmul.f32 %v1603, %v1603
      %v1717 = vmul.f32 %v1604, %v1604
      %v1718 = vsel %vm1257, %v1605, 0.0
      %v1719 = vsel %vm1257, %v1606, 0.0
      %v1720 = vadd.f32 %v1718, %v1719
      %v1721 = vsel %vm1257, %v1607, 0.0
      %v1722 = vadd.f32 %v1720, %v1721
      %v1723 = vsel %vm1257, %v1608, 0.0
      %v1724 = vadd.f32 %v1722, %v1723
      %v1725 = vsel %vm1257, %v1609, 0.0
      %v1726 = vadd.f32 %v1724, %v1725
      %v1727 = vsel %vm1257, %v1610, 0.0
      %v1728 = vadd.f32 %v1726, %v1727
      %v1729 = vsel %vm1257, %v1611, 0.0
      %v1730 = vadd.f32 %v1728, %v1729
      %v1731 = vsel %vm1257, %v1612, 0.0
      %v1732 = vadd.f32 %v1730, %v1731
      %v1733 = vsel %vm1257, %v1613, 0.0
      %v1734 = vadd.f32 %v1732, %v1733
      %v1735 = vsel %vm1257, %v1614, 0.0
      %v1736 = vadd.f32 %v1734, %v1735
      %v1737 = vsel %vm1257, %v1615, 0.0
      %v1738 = vadd.f32 %v1736, %v1737
      %v1739 = vsel %vm1257, %v1616, 0.0
      %v1740 = vadd.f32 %v1738, %v1739
      %v1741 = vsel %vm1257, %v1617, 0.0
      %v1742 = vadd.f32 %v1740, %v1741
      %v1743 = vsel %vm1257, %v1618, 0.0
      %v1744 = vadd.f32 %v1742, %v1743
      %v1745 = vsel %vm1257, %v1619, 0.0
      %v1746 = vadd.f32 %v1744, %v1745
      %v1747 = vsel %vm1257, %v1620, 0.0
      %v1748 = vadd.f32 %v1746, %v1747
      %v1749 = vsel %vm1257, %v1621, 0.0
      %v1750 = vadd.f32 %v1748, %v1749
      %v1751 = vsel %vm1257, %v1622, 0.0
      %v1752 = vadd.f32 %v1750, %v1751
      %v1753 = vsel %vm1257, %v1623, 0.0
      %v1754 = vadd.f32 %v1752, %v1753
      %v1755 = vsel %vm1257, %v1624, 0.0
      %v1756 = vadd.f32 %v1754, %v1755
      %v1757 = vsel %vm1257, %v1625, 0.0
      %v1758 = vadd.f32 %v1756, %v1757
      %v1759 = vsel %vm1257, %v1626, 0.0
      %v1760 = vadd.f32 %v1758, %v1759
      %v1761 = vsel %vm1257, %v1627, 0.0
      %v1762 = vadd.f32 %v1760, %v1761
      %v1763 = vsel %vm1257, %v1628, 0.0
      %v1764 = vadd.f32 %v1762, %v1763
      %v1765 = vsel %vm1257, %v1629, 0.0
      %v1766 = vadd.f32 %v1764, %v1765
      %v1767 = vsel %vm1257, %v1630, 0.0
      %v1768 = vadd.f32 %v1766, %v1767
      %v1769 = vsel %vm1257, %v1631, 0.0
      %v1770 = vadd.f32 %v1768, %v1769
      %v1771 = vsel %vm1257, %v1632, 0.0
      %v1772 = vadd.f32 %v1770, %v1771
      %v1773 = vsel %vm1257, %v1633, 0.0
      %v1774 = vadd.f32 %v1772, %v1773
      %v1775 = vsel %vm1257, %v1634, 0.0
      %v1776 = vadd.f32 %v1774, %v1775
      %v1777 = vsel %vm1257, %v1635, 0.0
      %v1778 = vadd.f32 %v1776, %v1777
      %v1779 = vsel %vm1257, %v1636, 0.0
      %v1780 = vadd.f32 %v1778, %v1779
      %v1781 = vsel %vm1257, %v1637, 0.0
      %v1782 = vadd.f32 %v1780, %v1781
      %v1783 = vsel %vm1257, %v1638, 0.0
      %v1784 = vadd.f32 %v1782, %v1783
      %v1785 = vsel %vm1257, %v1639, 0.0
      %v1786 = vadd.f32 %v1784, %v1785
      %v1787 = vsel %vm1257, %v1640, 0.0
      %v1788 = vadd.f32 %v1786, %v1787
      %v1789 = vsel %vm1257, %v1641, 0.0
      %v1790 = vadd.f32 %v1788, %v1789
      %v1791 = vsel %vm1257, %v1642, 0.0
      %v1792 = vadd.f32 %v1790, %v1791
      %v1793 = vsel %vm1257, %v1643, 0.0
      %v1794 = vadd.f32 %v1792, %v1793
      %v1795 = vsel %vm1257, %v1644, 0.0
      %v1796 = vadd.f32 %v1794, %v1795
      %v1797 = vsel %vm1257, %v1645, 0.0
      %v1798 = vadd.f32 %v1796, %v1797
      %v1799 = vsel %vm1257, %v1646, 0.0
      %v1800 = vadd.f32 %v1798, %v1799
      %v1801 = vsel %vm1257, %v1647, 0.0
      %v1802 = vadd.f32 %v1800, %v1801
      %v1803 = vsel %vm1257, %v1648, 0.0
      %v1804 = vadd.f32 %v1802, %v1803
      %v1805 = vsel %vm1257, %v1649, 0.0
      %v1806 = vadd.f32 %v1804, %v1805
      %v1807 = vsel %vm1257, %v1650, 0.0
      %v1808 = vadd.f32 %v1806, %v1807
      %v1809 = vsel %vm1257, %v1651, 0.0
      %v1810 = vadd.f32 %v1808, %v1809
      %v1811 = vsel %vm1257, %v1652, 0.0
      %v1812 = vadd.f32 %v1810, %v1811
      %v1813 = vsel %vm1257, %v1653, 0.0
      %v1814 = vadd.f32 %v1812, %v1813
      %v1815 = vsel %vm1257, %v1654, 0.0
      %v1816 = vadd.f32 %v1814, %v1815
      %v1817 = vsel %vm1257, %v1655, 0.0
      %v1818 = vadd.f32 %v1816, %v1817
      %v1819 = vsel %vm1257, %v1656, 0.0
      %v1820 = vadd.f32 %v1818, %v1819
      %v1821 = vsel %vm1257, %v1657, 0.0
      %v1822 = vadd.f32 %v1820, %v1821
      %v1823 = vsel %vm1257, %v1658, 0.0
      %v1824 = vadd.f32 %v1822, %v1823
      %v1825 = vsel %vm1257, %v1659, 0.0
      %v1826 = vadd.f32 %v1824, %v1825
      %v1827 = vsel %vm1257, %v1660, 0.0
      %v1828 = vadd.f32 %v1826, %v1827
      %v1829 = vsel %vm1257, %v1661, 0.0
      %v1830 = vadd.f32 %v1828, %v1829
      %v1831 = vsel %vm1257, %v1662, 0.0
      %v1832 = vadd.f32 %v1830, %v1831
      %v1833 = vsel %vm1257, %v1663, 0.0
      %v1834 = vadd.f32 %v1832, %v1833
      %v1835 = vsel %vm1257, %v1664, 0.0
      %v1836 = vadd.f32 %v1834, %v1835
      %v1837 = vsel %vm1257, %v1665, 0.0
      %v1838 = vadd.f32 %v1836, %v1837
      %v1839 = vsel %vm1257, %v1666, 0.0
      %v1840 = vadd.f32 %v1838, %v1839
      %v1841 = vsel %vm1257, %v1667, 0.0
      %v1842 = vadd.f32 %v1840, %v1841
      %v1843 = vsel %vm1257, %v1668, 0.0
      %v1844 = vadd.f32 %v1842, %v1843
      %v1845 = vsel %vm1257, %v1669, 0.0
      %v1846 = vadd.f32 %v1844, %v1845
      %v1847 = vsel %vm1257, %v1670, 0.0
      %v1848 = vadd.f32 %v1846, %v1847
      %v1849 = vsel %vm1257, %v1671, 0.0
      %v1850 = vadd.f32 %v1848, %v1849
      %v1851 = vsel %vm1257, %v1672, 0.0
      %v1852 = vadd.f32 %v1850, %v1851
      %v1853 = vsel %vm1257, %v1673, 0.0
      %v1854 = vadd.f32 %v1852, %v1853
      %v1855 = vsel %vm1257, %v1674, 0.0
      %v1856 = vadd.f32 %v1854, %v1855
      %v1857 = vsel %vm1257, %v1675, 0.0
      %v1858 = vadd.f32 %v1856, %v1857
      %v1859 = vsel %vm1257, %v1676, 0.0
      %v1860 = vadd.f32 %v1858, %v1859
      %v1861 = vsel %vm1257, %v1677, 0.0
      %v1862 = vadd.f32 %v1860, %v1861
      %v1863 = vsel %vm1257, %v1678, 0.0
      %v1864 = vadd.f32 %v1862, %v1863
      %v1865 = vsel %vm1257, %v1679, 0.0
      %v1866 = vadd.f32 %v1864, %v1865
      %v1867 = vsel %vm1257, %v1680, 0.0
      %v1868 = vadd.f32 %v1866, %v1867
      %v1869 = vsel %vm1257, %v1681, 0.0
      %v1870 = vadd.f32 %v1868, %v1869
      %v1871 = vsel %vm1257, %v1682, 0.0
      %v1872 = vadd.f32 %v1870, %v1871
      %v1873 = vsel %vm1257, %v1683, 0.0
      %v1874 = vadd.f32 %v1872, %v1873
      %v1875 = vsel %vm1257, %v1684, 0.0
      %v1876 = vadd.f32 %v1874, %v1875
      %v1877 = vsel %vm1257, %v1685, 0.0
      %v1878 = vadd.f32 %v1876, %v1877
      %v1879 = vsel %vm1257, %v1686, 0.0
      %v1880 = vadd.f32 %v1878, %v1879
      %v1881 = vsel %vm1257, %v1687, 0.0
      %v1882 = vadd.f32 %v1880, %v1881
      %v1883 = vsel %vm1257, %v1688, 0.0
      %v1884 = vadd.f32 %v1882, %v1883
      %v1885 = vsel %vm1257, %v1689, 0.0
      %v1886 = vadd.f32 %v1884, %v1885
      %v1887 = vsel %vm1257, %v1690, 0.0
      %v1888 = vadd.f32 %v1886, %v1887
      %v1889 = vsel %vm1257, %v1691, 0.0
      %v1890 = vadd.f32 %v1888, %v1889
      %v1891 = vsel %vm1257, %v1692, 0.0
      %v1892 = vadd.f32 %v1890, %v1891
      %v1893 = vsel %vm1257, %v1693, 0.0
      %v1894 = vadd.f32 %v1892, %v1893
      %v1895 = vsel %vm1257, %v1694, 0.0
      %v1896 = vadd.f32 %v1894, %v1895
      %v1897 = vsel %vm1257, %v1695, 0.0
      %v1898 = vadd.f32 %v1896, %v1897
      %v1899 = vsel %vm1257, %v1696, 0.0
      %v1900 = vadd.f32 %v1898, %v1899
      %v1901 = vsel %vm1257, %v1697, 0.0
      %v1902 = vadd.f32 %v1900, %v1901
      %v1903 = vsel %vm1257, %v1698, 0.0
      %v1904 = vadd.f32 %v1902, %v1903
      %v1905 = vsel %vm1257, %v1699, 0.0
      %v1906 = vadd.f32 %v1904, %v1905
      %v1907 = vsel %vm1257, %v1700, 0.0
      %v1908 = vadd.f32 %v1906, %v1907
      %v1909 = vsel %vm1257, %v1701, 0.0
      %v1910 = vadd.f32 %v1908, %v1909
      %v1911 = vsel %vm1257, %v1702, 0.0
      %v1912 = vadd.f32 %v1910, %v1911
      %v1913 = vsel %vm1257, %v1703, 0.0
      %v1914 = vadd.f32 %v1912, %v1913
      %v1915 = vsel %vm1257, %v1704, 0.0
      %v1916 = vadd.f32 %v1914, %v1915
      %v1917 = vsel %vm1257, %v1705, 0.0
      %v1918 = vadd.f32 %v1916, %v1917
      %v1919 = vsel %vm1257, %v1706, 0.0
      %v1920 = vadd.f32 %v1918, %v1919
      %v1921 = vsel %vm1257, %v1707, 0.0
      %v1922 = vadd.f32 %v1920, %v1921
      %v1923 = vsel %vm1257, %v1708, 0.0
      %v1924 = vadd.f32 %v1922, %v1923
      %v1925 = vsel %vm1257, %v1709, 0.0
      %v1926 = vadd.f32 %v1924, %v1925
      %v1927 = vsel %vm1257, %v1710, 0.0
      %v1928 = vadd.f32 %v1926, %v1927
      %v1929 = vsel %vm1257, %v1711, 0.0
      %v1930 = vadd.f32 %v1928, %v1929
      %v1931 = vsel %vm1257, %v1712, 0.0
      %v1932 = vadd.f32 %v1930, %v1931
      %v1933 = vsel %vm1257, %v1713, 0.0
      %v1934 = vadd.f32 %v1932, %v1933
      %v1935 = vsel %vm1257, %v1714, 0.0
      %v1936 = vadd.f32 %v1934, %v1935
      %v1937 = vsel %vm1257, %v1715, 0.0
      %v1938 = vadd.f32 %v1936, %v1937
      %v1939 = vsel %vm1257, %v1716, 0.0
      %v1940 = vadd.f32 %v1938, %v1939
      %v1941 = vsel %vm1481, %v1717, 0.0
      %v1942 = vadd.f32 %v1940, %v1941
      %v1943 = vrot.slane %v1942, 4
      %v1944 = vadd.f32 %v1942, %v1943
      %v1945 = vrot.slane %v1944, 2
      %v1946 = vadd.f32 %v1944, %v1945
      %v1947 = vrot.slane %v1946, 1
      %v1948 = vadd.f32 %v1946, %v1947
      %v1949 = vmul.f32 %v1948, %v1490
      %v1950 = vadd.f32 %v1949, 1e-05
      %v1951 = vrsqrt.pop %v1950
      %v1952 = vmul.f32 %v1492, %v1951
      %v1953 = vmul.f32 %v1493, %v1951
      %v1954 = vmul.f32 %v1494, %v1951
      %v1955 = vmul.f32 %v1495, %v1951
      %v1956 = vmul.f32 %v1496, %v1951
      %v1957 = vmul.f32 %v1497, %v1951
      %v1958 = vmul.f32 %v1498, %v1951
      %v1959 = vmul.f32 %v1499, %v1951
      %v1960 = vmul.f32 %v1500, %v1951
      %v1961 = vmul.f32 %v1501, %v1951
      %v1962 = vmul.f32 %v1502, %v1951
      %v1963 = vmul.f32 %v1503, %v1951
      %v1964 = vmul.f32 %v1504, %v1951
      %v1965 = vmul.f32 %v1505, %v1951
      %v1966 = vmul.f32 %v1506, %v1951
      %v1967 = vmul.f32 %v1507, %v1951
      %v1968 = vmul.f32 %v1508, %v1951
      %v1969 = vmul.f32 %v1509, %v1951
      %v1970 = vmul.f32 %v1510, %v1951
      %v1971 = vmul.f32 %v1511, %v1951
      %v1972 = vmul.f32 %v1512, %v1951
      %v1973 = vmul.f32 %v1513, %v1951
      %v1974 = vmul.f32 %v1514, %v1951
      %v1975 = vmul.f32 %v1515, %v1951
      %v1976 = vmul.f32 %v1516, %v1951
      %v1977 = vmul.f32 %v1517, %v1951
      %v1978 = vmul.f32 %v1518, %v1951
      %v1979 = vmul.f32 %v1519, %v1951
      %v1980 = vmul.f32 %v1520, %v1951
      %v1981 = vmul.f32 %v1521, %v1951
      %v1982 = vmul.f32 %v1522, %v1951
      %v1983 = vmul.f32 %v1523, %v1951
      %v1984 = vmul.f32 %v1524, %v1951
      %v1985 = vmul.f32 %v1525, %v1951
      %v1986 = vmul.f32 %v1526, %v1951
      %v1987 = vmul.f32 %v1527, %v1951
      %v1988 = vmul.f32 %v1528, %v1951
      %v1989 = vmul.f32 %v1529, %v1951
      %v1990 = vmul.f32 %v1530, %v1951
      %v1991 = vmul.f32 %v1531, %v1951
      %v1992 = vmul.f32 %v1532, %v1951
      %v1993 = vmul.f32 %v1533, %v1951
      %v1994 = vmul.f32 %v1534, %v1951
      %v1995 = vmul.f32 %v1535, %v1951
      %v1996 = vmul.f32 %v1536, %v1951
      %v1997 = vmul.f32 %v1537, %v1951
      %v1998 = vmul.f32 %v1538, %v1951
      %v1999 = vmul.f32 %v1539, %v1951
      %v2000 = vmul.f32 %v1540, %v1951
      %v2001 = vmul.f32 %v1541, %v1951
      %v2002 = vmul.f32 %v1542, %v1951
      %v2003 = vmul.f32 %v1543, %v1951
      %v2004 = vmul.f32 %v1544, %v1951
      %v2005 = vmul.f32 %v1545, %v1951
      %v2006 = vmul.f32 %v1546, %v1951
      %v2007 = vmul.f32 %v1547, %v1951
      %v2008 = vmul.f32 %v1548, %v1951
      %v2009 = vmul.f32 %v1549, %v1951
      %v2010 = vmul.f32 %v1550, %v1951
      %v2011 = vmul.f32 %v1551, %v1951
      %v2012 = vmul.f32 %v1552, %v1951
      %v2013 = vmul.f32 %v1553, %v1951
      %v2014 = vmul.f32 %v1554, %v1951
      %v2015 = vmul.f32 %v1555, %v1951
      %v2016 = vmul.f32 %v1556, %v1951
      %v2017 = vmul.f32 %v1557, %v1951
      %v2018 = vmul.f32 %v1558, %v1951
      %v2019 = vmul.f32 %v1559, %v1951
      %v2020 = vmul.f32 %v1560, %v1951
      %v2021 = vmul.f32 %v1561, %v1951
      %v2022 = vmul.f32 %v1562, %v1951
      %v2023 = vmul.f32 %v1563, %v1951
      %v2024 = vmul.f32 %v1564, %v1951
      %v2025 = vmul.f32 %v1565, %v1951
      %v2026 = vmul.f32 %v1566, %v1951
      %v2027 = vmul.f32 %v1567, %v1951
      %v2028 = vmul.f32 %v1568, %v1951
      %v2029 = vmul.f32 %v1569, %v1951
      %v2030 = vmul.f32 %v1570, %v1951
      %v2031 = vmul.f32 %v1571, %v1951
      %v2032 = vmul.f32 %v1572, %v1951
      %v2033 = vmul.f32 %v1573, %v1951
      %v2034 = vmul.f32 %v1574, %v1951
      %v2035 = vmul.f32 %v1575, %v1951
      %v2036 = vmul.f32 %v1576, %v1951
      %v2037 = vmul.f32 %v1577, %v1951
      %v2038 = vmul.f32 %v1578, %v1951
      %v2039 = vmul.f32 %v1579, %v1951
      %v2040 = vmul.f32 %v1580, %v1951
      %v2041 = vmul.f32 %v1581, %v1951
      %v2042 = vmul.f32 %v1582, %v1951
      %v2043 = vmul.f32 %v1583, %v1951
      %v2044 = vmul.f32 %v1584, %v1951
      %v2045 = vmul.f32 %v1585, %v1951
      %v2046 = vmul.f32 %v1586, %v1951
      %v2047 = vmul.f32 %v1587, %v1951
      %v2048 = vmul.f32 %v1588, %v1951
      %v2049 = vmul.f32 %v1589, %v1951
      %v2050 = vmul.f32 %v1590, %v1951
      %v2051 = vmul.f32 %v1591, %v1951
      %v2052 = vmul.f32 %v1592, %v1951
      %v2053 = vmul.f32 %v1593, %v1951
      %v2054 = vmul.f32 %v1594, %v1951
      %v2055 = vmul.f32 %v1595, %v1951
      %v2056 = vmul.f32 %v1596, %v1951
      %v2057 = vmul.f32 %v1597, %v1951
      %v2058 = vmul.f32 %v1598, %v1951
      %v2059 = vmul.f32 %v1599, %v1951
      %v2060 = vmul.f32 %v1600, %v1951
      %v2061 = vmul.f32 %v1601, %v1951
      %v2062 = vmul.f32 %v1602, %v1951
      %v2063 = vmul.f32 %v1603, %v1951
      %v2064 = vmul.f32 %v1604, %v1951
      %vm2065 = vcmp.ge.f32.partialorder %v1952, 0.0
      %vm2066 = vcmp.ge.f32.partialorder %v1953, 0.0
      %vm2067 = vcmp.ge.f32.partialorder %v1954, 0.0
      %vm2068 = vcmp.ge.f32.partialorder %v1955, 0.0
      %vm2069 = vcmp.ge.f32.partialorder %v1956, 0.0
      %vm2070 = vcmp.ge.f32.partialorder %v1957, 0.0
      %vm2071 = vcmp.ge.f32.partialorder %v1958, 0.0
      %vm2072 = vcmp.ge.f32.partialorder %v1959, 0.0
      %vm2073 = vcmp.ge.f32.partialorder %v1960, 0.0
      %vm2074 = vcmp.ge.f32.partialorder %v1961, 0.0
      %vm2075 = vcmp.ge.f32.partialorder %v1962, 0.0
      %vm2076 = vcmp.ge.f32.partialorder %v1963, 0.0
      %vm2077 = vcmp.ge.f32.partialorder %v1964, 0.0
      %vm2078 = vcmp.ge.f32.partialorder %v1965, 0.0
      %vm2079 = vcmp.ge.f32.partialorder %v1966, 0.0
      %vm2080 = vcmp.ge.f32.partialorder %v1967, 0.0
      %vm2081 = vcmp.ge.f32.partialorder %v1968, 0.0
      %vm2082 = vcmp.ge.f32.partialorder %v1969, 0.0
      %vm2083 = vcmp.ge.f32.partialorder %v1970, 0.0
      %vm2084 = vcmp.ge.f32.partialorder %v1971, 0.0
      %vm2085 = vcmp.ge.f32.partialorder %v1972, 0.0
      %vm2086 = vcmp.ge.f32.partialorder %v1973, 0.0
      %vm2087 = vcmp.ge.f32.partialorder %v1974, 0.0
      %vm2088 = vcmp.ge.f32.partialorder %v1975, 0.0
      %vm2089 = vcmp.ge.f32.partialorder %v1976, 0.0
      %vm2090 = vcmp.ge.f32.partialorder %v1977, 0.0
      %vm2091 = vcmp.ge.f32.partialorder %v1978, 0.0
      %vm2092 = vcmp.ge.f32.partialorder %v1979, 0.0
      %vm2093 = vcmp.ge.f32.partialorder %v1980, 0.0
      %vm2094 = vcmp.ge.f32.partialorder %v1981, 0.0
      %vm2095 = vcmp.ge.f32.partialorder %v1982, 0.0
      %vm2096 = vcmp.ge.f32.partialorder %v1983, 0.0
      %vm2097 = vcmp.ge.f32.partialorder %v1984, 0.0
      %vm2098 = vcmp.ge.f32.partialorder %v1985, 0.0
      %vm2099 = vcmp.ge.f32.partialorder %v1986, 0.0
      %vm2100 = vcmp.ge.f32.partialorder %v1987, 0.0
      %vm2101 = vcmp.ge.f32.partialorder %v1988, 0.0
      %vm2102 = vcmp.ge.f32.partialorder %v1989, 0.0
      %vm2103 = vcmp.ge.f32.partialorder %v1990, 0.0
      %vm2104 = vcmp.ge.f32.partialorder %v1991, 0.0
      %vm2105 = vcmp.ge.f32.partialorder %v1992, 0.0
      %vm2106 = vcmp.ge.f32.partialorder %v1993, 0.0
      %vm2107 = vcmp.ge.f32.partialorder %v1994, 0.0
      %vm2108 = vcmp.ge.f32.partialorder %v1995, 0.0
      %vm2109 = vcmp.ge.f32.partialorder %v1996, 0.0
      %vm2110 = vcmp.ge.f32.partialorder %v1997, 0.0
      %vm2111 = vcmp.ge.f32.partialorder %v1998, 0.0
      %vm2112 = vcmp.ge.f32.partialorder %v1999, 0.0
      %vm2113 = vcmp.ge.f32.partialorder %v2000, 0.0
      %vm2114 = vcmp.ge.f32.partialorder %v2001, 0.0
      %vm2115 = vcmp.ge.f32.partialorder %v2002, 0.0
      %vm2116 = vcmp.ge.f32.partialorder %v2003, 0.0
      %vm2117 = vcmp.ge.f32.partialorder %v2004, 0.0
      %vm2118 = vcmp.ge.f32.partialorder %v2005, 0.0
      %vm2119 = vcmp.ge.f32.partialorder %v2006, 0.0
      %vm2120 = vcmp.ge.f32.partialorder %v2007, 0.0
      %vm2121 = vcmp.ge.f32.partialorder %v2008, 0.0
      %vm2122 = vcmp.ge.f32.partialorder %v2009, 0.0
      %vm2123 = vcmp.ge.f32.partialorder %v2010, 0.0
      %vm2124 = vcmp.ge.f32.partialorder %v2011, 0.0
      %vm2125 = vcmp.ge.f32.partialorder %v2012, 0.0
      %vm2126 = vcmp.ge.f32.partialorder %v2013, 0.0
      %vm2127 = vcmp.ge.f32.partialorder %v2014, 0.0
      %vm2128 = vcmp.ge.f32.partialorder %v2015, 0.0
      %vm2129 = vcmp.ge.f32.partialorder %v2016, 0.0
      %vm2130 = vcmp.ge.f32.partialorder %v2017, 0.0
      %vm2131 = vcmp.ge.f32.partialorder %v2018, 0.0
      %vm2132 = vcmp.ge.f32.partialorder %v2019, 0.0
      %vm2133 = vcmp.ge.f32.partialorder %v2020, 0.0
      %vm2134 = vcmp.ge.f32.partialorder %v2021, 0.0
      %vm2135 = vcmp.ge.f32.partialorder %v2022, 0.0
      %vm2136 = vcmp.ge.f32.partialorder %v2023, 0.0
      %vm2137 = vcmp.ge.f32.partialorder %v2024, 0.0
      %vm2138 = vcmp.ge.f32.partialorder %v2025, 0.0
      %vm2139 = vcmp.ge.f32.partialorder %v2026, 0.0
      %vm2140 = vcmp.ge.f32.partialorder %v2027, 0.0
      %vm2141 = vcmp.ge.f32.partialorder %v2028, 0.0
      %vm2142 = vcmp.ge.f32.partialorder %v2029, 0.0
      %vm2143 = vcmp.ge.f32.partialorder %v2030, 0.0
      %vm2144 = vcmp.ge.f32.partialorder %v2031, 0.0
      %vm2145 = vcmp.ge.f32.partialorder %v2032, 0.0
      %vm2146 = vcmp.ge.f32.partialorder %v2033, 0.0
      %vm2147 = vcmp.ge.f32.partialorder %v2034, 0.0
      %vm2148 = vcmp.ge.f32.partialorder %v2035, 0.0
      %vm2149 = vcmp.ge.f32.partialorder %v2036, 0.0
      %vm2150 = vcmp.ge.f32.partialorder %v2037, 0.0
      %vm2151 = vcmp.ge.f32.partialorder %v2038, 0.0
      %vm2152 = vcmp.ge.f32.partialorder %v2039, 0.0
      %vm2153 = vcmp.ge.f32.partialorder %v2040, 0.0
      %vm2154 = vcmp.ge.f32.partialorder %v2041, 0.0
      %vm2155 = vcmp.ge.f32.partialorder %v2042, 0.0
      %vm2156 = vcmp.ge.f32.partialorder %v2043, 0.0
      %vm2157 = vcmp.ge.f32.partialorder %v2044, 0.0
      %vm2158 = vcmp.ge.f32.partialorder %v2045, 0.0
      %vm2159 = vcmp.ge.f32.partialorder %v2046, 0.0
      %vm2160 = vcmp.ge.f32.partialorder %v2047, 0.0
      %vm2161 = vcmp.ge.f32.partialorder %v2048, 0.0
      %vm2162 = vcmp.ge.f32.partialorder %v2049, 0.0
      %vm2163 = vcmp.ge.f32.partialorder %v2050, 0.0
      %vm2164 = vcmp.ge.f32.partialorder %v2051, 0.0
      %vm2165 = vcmp.ge.f32.partialorder %v2052, 0.0
      %vm2166 = vcmp.ge.f32.partialorder %v2053, 0.0
      %vm2167 = vcmp.ge.f32.partialorder %v2054, 0.0
      %vm2168 = vcmp.ge.f32.partialorder %v2055, 0.0
      %vm2169 = vcmp.ge.f32.partialorder %v2056, 0.0
      %vm2170 = vcmp.ge.f32.partialorder %v2057, 0.0
      %vm2171 = vcmp.ge.f32.partialorder %v2058, 0.0
      %vm2172 = vcmp.ge.f32.partialorder %v2059, 0.0
      %vm2173 = vcmp.ge.f32.partialorder %v2060, 0.0
      %vm2174 = vcmp.ge.f32.partialorder %v2061, 0.0
      %vm2175 = vcmp.ge.f32.partialorder %v2062, 0.0
      %vm2176 = vcmp.ge.f32.partialorder %v2063, 0.0
      %vm2177 = vcmp.ge.f32.partialorder %v2064, 0.0
      %v2178 = vmul.f32 %v1952, 0.01
      %v2179 = vmul.f32 %v1953, 0.01
      %v2180 = vmul.f32 %v1954, 0.01
      %v2181 = vmul.f32 %v1955, 0.01
      %v2182 = vmul.f32 %v1956, 0.01
      %v2183 = vmul.f32 %v1957, 0.01
      %v2184 = vmul.f32 %v1958, 0.01
      %v2185 = vmul.f32 %v1959, 0.01
      %v2186 = vmul.f32 %v1960, 0.01
      %v2187 = vmul.f32 %v1961, 0.01
      %v2188 = vmul.f32 %v1962, 0.01
      %v2189 = vmul.f32 %v1963, 0.01
      %v2190 = vmul.f32 %v1964, 0.01
      %v2191 = vmul.f32 %v1965, 0.01
      %v2192 = vmul.f32 %v1966, 0.01
      %v2193 = vmul.f32 %v1967, 0.01
      %v2194 = vmul.f32 %v1968, 0.01
      %v2195 = vmul.f32 %v1969, 0.01
      %v2196 = vmul.f32 %v1970, 0.01
      %v2197 = vmul.f32 %v1971, 0.01
      %v2198 = vmul.f32 %v1972, 0.01
      %v2199 = vmul.f32 %v1973, 0.01
      %v2200 = vmul.f32 %v1974, 0.01
      %v2201 = vmul.f32 %v1975, 0.01
      %v2202 = vmul.f32 %v1976, 0.01
      %v2203 = vmul.f32 %v1977, 0.01
      %v2204 = vmul.f32 %v1978, 0.01
      %v2205 = vmul.f32 %v1979, 0.01
      %v2206 = vmul.f32 %v1980, 0.01
      %v2207 = vmul.f32 %v1981, 0.01
      %v2208 = vmul.f32 %v1982, 0.01
      %v2209 = vmul.f32 %v1983, 0.01
      %v2210 = vmul.f32 %v1984, 0.01
      %v2211 = vmul.f32 %v1985, 0.01
      %v2212 = vmul.f32 %v1986, 0.01
      %v2213 = vmul.f32 %v1987, 0.01
      %v2214 = vmul.f32 %v1988, 0.01
      %v2215 = vmul.f32 %v1989, 0.01
      %v2216 = vmul.f32 %v1990, 0.01
      %v2217 = vmul.f32 %v1991, 0.01
      %v2218 = vmul.f32 %v1992, 0.01
      %v2219 = vmul.f32 %v1993, 0.01
      %v2220 = vmul.f32 %v1994, 0.01
      %v2221 = vmul.f32 %v1995, 0.01
      %v2222 = vmul.f32 %v1996, 0.01
      %v2223 = vmul.f32 %v1997, 0.01
      %v2224 = vmul.f32 %v1998, 0.01
      %v2225 = vmul.f32 %v1999, 0.01
      %v2226 = vmul.f32 %v2000, 0.01
      %v2227 = vmul.f32 %v2001, 0.01
      %v2228 = vmul.f32 %v2002, 0.01
      %v2229 = vmul.f32 %v2003, 0.01
      %v2230 = vmul.f32 %v2004, 0.01
      %v2231 = vmul.f32 %v2005, 0.01
      %v2232 = vmul.f32 %v2006, 0.01
      %v2233 = vmul.f32 %v2007, 0.01
      %v2234 = vmul.f32 %v2008, 0.01
      %v2235 = vmul.f32 %v2009, 0.01
      %v2236 = vmul.f32 %v2010, 0.01
      %v2237 = vmul.f32 %v2011, 0.01
      %v2238 = vmul.f32 %v2012, 0.01
      %v2239 = vmul.f32 %v2013, 0.01
      %v2240 = vmul.f32 %v2014, 0.01
      %v2241 = vmul.f32 %v2015, 0.01
      %v2242 = vmul.f32 %v2016, 0.01
      %v2243 = vmul.f32 %v2017, 0.01
      %v2244 = vmul.f32 %v2018, 0.01
      %v2245 = vmul.f32 %v2019, 0.01
      %v2246 = vmul.f32 %v2020, 0.01
      %v2247 = vmul.f32 %v2021, 0.01
      %v2248 = vmul.f32 %v2022, 0.01
      %v2249 = vmul.f32 %v2023, 0.01
      %v2250 = vmul.f32 %v2024, 0.01
      %v2251 = vmul.f32 %v2025, 0.01
      %v2252 = vmul.f32 %v2026, 0.01
      %v2253 = vmul.f32 %v2027, 0.01
      %v2254 = vmul.f32 %v2028, 0.01
      %v2255 = vmul.f32 %v2029, 0.01
      %v2256 = vmul.f32 %v2030, 0.01
      %v2257 = vmul.f32 %v2031, 0.01
      %v2258 = vmul.f32 %v2032, 0.01
      %v2259 = vmul.f32 %v2033, 0.01
      %v2260 = vmul.f32 %v2034, 0.01
      %v2261 = vmul.f32 %v2035, 0.01
      %v2262 = vmul.f32 %v2036, 0.01
      %v2263 = vmul.f32 %v2037, 0.01
      %v2264 = vmul.f32 %v2038, 0.01
      %v2265 = vmul.f32 %v2039, 0.01
      %v2266 = vmul.f32 %v2040, 0.01
      %v2267 = vmul.f32 %v2041, 0.01
      %v2268 = vmul.f32 %v2042, 0.01
      %v2269 = vmul.f32 %v2043, 0.01
      %v2270 = vmul.f32 %v2044, 0.01
      %v2271 = vmul.f32 %v2045, 0.01
      %v2272 = vmul.f32 %v2046, 0.01
      %v2273 = vmul.f32 %v2047, 0.01
      %v2274 = vmul.f32 %v2048, 0.01
      %v2275 = vmul.f32 %v2049, 0.01
      %v2276 = vmul.f32 %v2050, 0.01
      %v2277 = vmul.f32 %v2051, 0.01
      %v2278 = vmul.f32 %v2052, 0.01
      %v2279 = vmul.f32 %v2053, 0.01
      %v2280 = vmul.f32 %v2054, 0.01
      %v2281 = vmul.f32 %v2055, 0.01
      %v2282 = vmul.f32 %v2056, 0.01
      %v2283 = vmul.f32 %v2057, 0.01
      %v2284 = vmul.f32 %v2058, 0.01
      %v2285 = vmul.f32 %v2059, 0.01
      %v2286 = vmul.f32 %v2060, 0.01
      %v2287 = vmul.f32 %v2061, 0.01
      %v2288 = vmul.f32 %v2062, 0.01
      %v2289 = vmul.f32 %v2063, 0.01
      %v2290 = vmul.f32 %v2064, 0.01
      %v2291 = vsel %vm2065, %v1952, %v2178
      %v2292 = vsel %vm2066, %v1953, %v2179
      %v2293 = vsel %vm2067, %v1954, %v2180
      %v2294 = vsel %vm2068, %v1955, %v2181
      %v2295 = vsel %vm2069, %v1956, %v2182
      %v2296 = vsel %vm2070, %v1957, %v2183
      %v2297 = vsel %vm2071, %v1958, %v2184
      %v2298 = vsel %vm2072, %v1959, %v2185
      %v2299 = vsel %vm2073, %v1960, %v2186
      %v2300 = vsel %vm2074, %v1961, %v2187
      %v2301 = vsel %vm2075, %v1962, %v2188
      %v2302 = vsel %vm2076, %v1963, %v2189
      %v2303 = vsel %vm2077, %v1964, %v2190
      %v2304 = vsel %vm2078, %v1965, %v2191
      %v2305 = vsel %vm2079, %v1966, %v2192
      %v2306 = vsel %vm2080, %v1967, %v2193
      %v2307 = vsel %vm2081, %v1968, %v2194
      %v2308 = vsel %vm2082, %v1969, %v2195
      %v2309 = vsel %vm2083, %v1970, %v2196
      %v2310 = vsel %vm2084, %v1971, %v2197
      %v2311 = vsel %vm2085, %v1972, %v2198
      %v2312 = vsel %vm2086, %v1973, %v2199
      %v2313 = vsel %vm2087, %v1974, %v2200
      %v2314 = vsel %vm2088, %v1975, %v2201
      %v2315 = vsel %vm2089, %v1976, %v2202
      %v2316 = vsel %vm2090, %v1977, %v2203
      %v2317 = vsel %vm2091, %v1978, %v2204
      %v2318 = vsel %vm2092, %v1979, %v2205
      %v2319 = vsel %vm2093, %v1980, %v2206
      %v2320 = vsel %vm2094, %v1981, %v2207
      %v2321 = vsel %vm2095, %v1982, %v2208
      %v2322 = vsel %vm2096, %v1983, %v2209
      %v2323 = vsel %vm2097, %v1984, %v2210
      %v2324 = vsel %vm2098, %v1985, %v2211
      %v2325 = vsel %vm2099, %v1986, %v2212
      %v2326 = vsel %vm2100, %v1987, %v2213
      %v2327 = vsel %vm2101, %v1988, %v2214
      %v2328 = vsel %vm2102, %v1989, %v2215
      %v2329 = vsel %vm2103, %v1990, %v2216
      %v2330 = vsel %vm2104, %v1991, %v2217
      %v2331 = vsel %vm2105, %v1992, %v2218
      %v2332 = vsel %vm2106, %v1993, %v2219
      %v2333 = vsel %vm2107, %v1994, %v2220
      %v2334 = vsel %vm2108, %v1995, %v2221
      %v2335 = vsel %vm2109, %v1996, %v2222
      %v2336 = vsel %vm2110, %v1997, %v2223
      %v2337 = vsel %vm2111, %v1998, %v2224
      %v2338 = vsel %vm2112, %v1999, %v2225
      %v2339 = vsel %vm2113, %v2000, %v2226
      %v2340 = vsel %vm2114, %v2001, %v2227
      %v2341 = vsel %vm2115, %v2002, %v2228
      %v2342 = vsel %vm2116, %v2003, %v2229
      %v2343 = vsel %vm2117, %v2004, %v2230
      %v2344 = vsel %vm2118, %v2005, %v2231
      %v2345 = vsel %vm2119, %v2006, %v2232
      %v2346 = vsel %vm2120, %v2007, %v2233
      %v2347 = vsel %vm2121, %v2008, %v2234
      %v2348 = vsel %vm2122, %v2009, %v2235
      %v2349 = vsel %vm2123, %v2010, %v2236
      %v2350 = vsel %vm2124, %v2011, %v2237
      %v2351 = vsel %vm2125, %v2012, %v2238
      %v2352 = vsel %vm2126, %v2013, %v2239
      %v2353 = vsel %vm2127, %v2014, %v2240
      %v2354 = vsel %vm2128, %v2015, %v2241
      %v2355 = vsel %vm2129, %v2016, %v2242
      %v2356 = vsel %vm2130, %v2017, %v2243
      %v2357 = vsel %vm2131, %v2018, %v2244
      %v2358 = vsel %vm2132, %v2019, %v2245
      %v2359 = vsel %vm2133, %v2020, %v2246
      %v2360 = vsel %vm2134, %v2021, %v2247
      %v2361 = vsel %vm2135, %v2022, %v2248
      %v2362 = vsel %vm2136, %v2023, %v2249
      %v2363 = vsel %vm2137, %v2024, %v2250
      %v2364 = vsel %vm2138, %v2025, %v2251
      %v2365 = vsel %vm2139, %v2026, %v2252
      %v2366 = vsel %vm2140, %v2027, %v2253
      %v2367 = vsel %vm2141, %v2028, %v2254
      %v2368 = vsel %vm2142, %v2029, %v2255
      %v2369 = vsel %vm2143, %v2030, %v2256
      %v2370 = vsel %vm2144, %v2031, %v2257
      %v2371 = vsel %vm2145, %v2032, %v2258
      %v2372 = vsel %vm2146, %v2033, %v2259
      %v2373 = vsel %vm2147, %v2034, %v2260
      %v2374 = vsel %vm2148, %v2035, %v2261
      %v2375 = vsel %vm2149, %v2036, %v2262
      %v2376 = vsel %vm2150, %v2037, %v2263
      %v2377 = vsel %vm2151, %v2038, %v2264
      %v2378 = vsel %vm2152, %v2039, %v2265
      %v2379 = vsel %vm2153, %v2040, %v2266
      %v2380 = vsel %vm2154, %v2041, %v2267
      %v2381 = vsel %vm2155, %v2042, %v2268
      %v2382 = vsel %vm2156, %v2043, %v2269
      %v2383 = vsel %vm2157, %v2044, %v2270
      %v2384 = vsel %vm2158, %v2045, %v2271
      %v2385 = vsel %vm2159, %v2046, %v2272
      %v2386 = vsel %vm2160, %v2047, %v2273
      %v2387 = vsel %vm2161, %v2048, %v2274
      %v2388 = vsel %vm2162, %v2049, %v2275
      %v2389 = vsel %vm2163, %v2050, %v2276
      %v2390 = vsel %vm2164, %v2051, %v2277
      %v2391 = vsel %vm2165, %v2052, %v2278
      %v2392 = vsel %vm2166, %v2053, %v2279
      %v2393 = vsel %vm2167, %v2054, %v2280
      %v2394 = vsel %vm2168, %v2055, %v2281
      %v2395 = vsel %vm2169, %v2056, %v2282
      %v2396 = vsel %vm2170, %v2057, %v2283
      %v2397 = vsel %vm2171, %v2058, %v2284
      %v2398 = vsel %vm2172, %v2059, %v2285
      %v2399 = vsel %vm2173, %v2060, %v2286
      %v2400 = vsel %vm2174, %v2061, %v2287
      %v2401 = vsel %vm2175, %v2062, %v2288
      %v2402 = vsel %vm2176, %v2063, %v2289
      %v2403 = vsel %vm2177, %v2064, %v2290
      %2404 = vst.msk [vmem:[%s170] sm:$0xff] %vm1257, %v2291
      %2405 = vst.msk [vmem:[%s170 + $0x8] sm:$0xff] %vm1257, %v2292
      %2406 = vst.msk [vmem:[%s170 + $0x10] sm:$0xff] %vm1257, %v2293
      %2407 = vst.msk [vmem:[%s170 + $0x18] sm:$0xff] %vm1257, %v2294
      %2408 = vst.msk [vmem:[%s170 + $0x20] sm:$0xff] %vm1257, %v2295
      %2409 = vst.msk [vmem:[%s170 + $0x28] sm:$0xff] %vm1257, %v2296
      %2410 = vst.msk [vmem:[%s170 + $0x30] sm:$0xff] %vm1257, %v2297
      %2411 = vst.msk [vmem:[%s170 + $0x38] sm:$0xff] %vm1257, %v2298
      %2412 = vst.msk [vmem:[%s170 + $0x40] sm:$0xff] %vm1257, %v2299
      %2413 = vst.msk [vmem:[%s170 + $0x48] sm:$0xff] %vm1257, %v2300
      %2414 = vst.msk [vmem:[%s170 + $0x50] sm:$0xff] %vm1257, %v2301
      %2415 = vst.msk [vmem:[%s170 + $0x58] sm:$0xff] %vm1257, %v2302
      %2416 = vst.msk [vmem:[%s170 + $0x60] sm:$0xff] %vm1257, %v2303
      %2417 = vst.msk [vmem:[%s170 + $0x68] sm:$0xff] %vm1257, %v2304
      %2418 = vst.msk [vmem:[%s170 + $0x70] sm:$0xff] %vm1257, %v2305
      %2419 = vst.msk [vmem:[%s170 + $0x78] sm:$0xff] %vm1257, %v2306
      %2420 = vst.msk [vmem:[%s170 + $0x80] sm:$0xff] %vm1257, %v2307
      %2421 = vst.msk [vmem:[%s170 + $0x88] sm:$0xff] %vm1257, %v2308
      %2422 = vst.msk [vmem:[%s170 + $0x90] sm:$0xff] %vm1257, %v2309
      %2423 = vst.msk [vmem:[%s170 + $0x98] sm:$0xff] %vm1257, %v2310
      %2424 = vst.msk [vmem:[%s170 + $0xa0] sm:$0xff] %vm1257, %v2311
      %2425 = vst.msk [vmem:[%s170 + $0xa8] sm:$0xff] %vm1257, %v2312
      %2426 = vst.msk [vmem:[%s170 + $0xb0] sm:$0xff] %vm1257, %v2313
      %2427 = vst.msk [vmem:[%s170 + $0xb8] sm:$0xff] %vm1257, %v2314
      %2428 = vst.msk [vmem:[%s170 + $0xc0] sm:$0xff] %vm1257, %v2315
      %2429 = vst.msk [vmem:[%s170 + $0xc8] sm:$0xff] %vm1257, %v2316
      %2430 = vst.msk [vmem:[%s170 + $0xd0] sm:$0xff] %vm1257, %v2317
      %2431 = vst.msk [vmem:[%s170 + $0xd8] sm:$0xff] %vm1257, %v2318
      %2432 = vst.msk [vmem:[%s170 + $0xe0] sm:$0xff] %vm1257, %v2319
      %2433 = vst.msk [vmem:[%s170 + $0xe8] sm:$0xff] %vm1257, %v2320
      %2434 = vst.msk [vmem:[%s170 + $0xf0] sm:$0xff] %vm1257, %v2321
      %2435 = vst.msk [vmem:[%s170 + $0xf8] sm:$0xff] %vm1257, %v2322
      %2436 = vst.msk [vmem:[%s170 + $0x100] sm:$0xff] %vm1257, %v2323
      %2437 = vst.msk [vmem:[%s170 + $0x108] sm:$0xff] %vm1257, %v2324
      %2438 = vst.msk [vmem:[%s170 + $0x110] sm:$0xff] %vm1257, %v2325
      %2439 = vst.msk [vmem:[%s170 + $0x118] sm:$0xff] %vm1257, %v2326
      %2440 = vst.msk [vmem:[%s170 + $0x120] sm:$0xff] %vm1257, %v2327
      %2441 = vst.msk [vmem:[%s170 + $0x128] sm:$0xff] %vm1257, %v2328
      %2442 = vst.msk [vmem:[%s170 + $0x130] sm:$0xff] %vm1257, %v2329
      %2443 = vst.msk [vmem:[%s170 + $0x138] sm:$0xff] %vm1257, %v2330
      %2444 = vst.msk [vmem:[%s170 + $0x140] sm:$0xff] %vm1257, %v2331
      %2445 = vst.msk [vmem:[%s170 + $0x148] sm:$0xff] %vm1257, %v2332
      %2446 = vst.msk [vmem:[%s170 + $0x150] sm:$0xff] %vm1257, %v2333
      %2447 = vst.msk [vmem:[%s170 + $0x158] sm:$0xff] %vm1257, %v2334
      %2448 = vst.msk [vmem:[%s170 + $0x160] sm:$0xff] %vm1257, %v2335
      %2449 = vst.msk [vmem:[%s170 + $0x168] sm:$0xff] %vm1257, %v2336
      %2450 = vst.msk [vmem:[%s170 + $0x170] sm:$0xff] %vm1257, %v2337
      %2451 = vst.msk [vmem:[%s170 + $0x178] sm:$0xff] %vm1257, %v2338
      %2452 = vst.msk [vmem:[%s170 + $0x180] sm:$0xff] %vm1257, %v2339
      %2453 = vst.msk [vmem:[%s170 + $0x188] sm:$0xff] %vm1257, %v2340
      %2454 = vst.msk [vmem:[%s170 + $0x190] sm:$0xff] %vm1257, %v2341
      %2455 = vst.msk [vmem:[%s170 + $0x198] sm:$0xff] %vm1257, %v2342
      %2456 = vst.msk [vmem:[%s170 + $0x1a0] sm:$0xff] %vm1257, %v2343
      %2457 = vst.msk [vmem:[%s170 + $0x1a8] sm:$0xff] %vm1257, %v2344
      %2458 = vst.msk [vmem:[%s170 + $0x1b0] sm:$0xff] %vm1257, %v2345
      %2459 = vst.msk [vmem:[%s170 + $0x1b8] sm:$0xff] %vm1257, %v2346
      %2460 = vst.msk [vmem:[%s170 + $0x1c0] sm:$0xff] %vm1257, %v2347
      %2461 = vst.msk [vmem:[%s170 + $0x1c8] sm:$0xff] %vm1257, %v2348
      %2462 = vst.msk [vmem:[%s170 + $0x1d0] sm:$0xff] %vm1257, %v2349
      %2463 = vst.msk [vmem:[%s170 + $0x1d8] sm:$0xff] %vm1257, %v2350
      %2464 = vst.msk [vmem:[%s170 + $0x1e0] sm:$0xff] %vm1257, %v2351
      %2465 = vst.msk [vmem:[%s170 + $0x1e8] sm:$0xff] %vm1257, %v2352
      %2466 = vst.msk [vmem:[%s170 + $0x1f0] sm:$0xff] %vm1257, %v2353
      %2467 = vst.msk [vmem:[%s170 + $0x1f8] sm:$0xff] %vm1257, %v2354
      %2468 = vst.msk [vmem:[%s170 + $0x200] sm:$0xff] %vm1257, %v2355
      %2469 = vst.msk [vmem:[%s170 + $0x208] sm:$0xff] %vm1257, %v2356
      %2470 = vst.msk [vmem:[%s170 + $0x210] sm:$0xff] %vm1257, %v2357
      %2471 = vst.msk [vmem:[%s170 + $0x218] sm:$0xff] %vm1257, %v2358
      %2472 = vst.msk [vmem:[%s170 + $0x220] sm:$0xff] %vm1257, %v2359
      %2473 = vst.msk [vmem:[%s170 + $0x228] sm:$0xff] %vm1257, %v2360
      %2474 = vst.msk [vmem:[%s170 + $0x230] sm:$0xff] %vm1257, %v2361
      %2475 = vst.msk [vmem:[%s170 + $0x238] sm:$0xff] %vm1257, %v2362
      %2476 = vst.msk [vmem:[%s170 + $0x240] sm:$0xff] %vm1257, %v2363
      %2477 = vst.msk [vmem:[%s170 + $0x248] sm:$0xff] %vm1257, %v2364
      %2478 = vst.msk [vmem:[%s170 + $0x250] sm:$0xff] %vm1257, %v2365
      %2479 = vst.msk [vmem:[%s170 + $0x258] sm:$0xff] %vm1257, %v2366
      %2480 = vst.msk [vmem:[%s170 + $0x260] sm:$0xff] %vm1257, %v2367
      %2481 = vst.msk [vmem:[%s170 + $0x268] sm:$0xff] %vm1257, %v2368
      %2482 = vst.msk [vmem:[%s170 + $0x270] sm:$0xff] %vm1257, %v2369
      %2483 = vst.msk [vmem:[%s170 + $0x278] sm:$0xff] %vm1257, %v2370
      %2484 = vst.msk [vmem:[%s170 + $0x280] sm:$0xff] %vm1257, %v2371
      %2485 = vst.msk [vmem:[%s170 + $0x288] sm:$0xff] %vm1257, %v2372
      %2486 = vst.msk [vmem:[%s170 + $0x290] sm:$0xff] %vm1257, %v2373
      %2487 = vst.msk [vmem:[%s170 + $0x298] sm:$0xff] %vm1257, %v2374
      %2488 = vst.msk [vmem:[%s170 + $0x2a0] sm:$0xff] %vm1257, %v2375
      %2489 = vst.msk [vmem:[%s170 + $0x2a8] sm:$0xff] %vm1257, %v2376
      %2490 = vst.msk [vmem:[%s170 + $0x2b0] sm:$0xff] %vm1257, %v2377
      %2491 = vst.msk [vmem:[%s170 + $0x2b8] sm:$0xff] %vm1257, %v2378
      %2492 = vst.msk [vmem:[%s170 + $0x2c0] sm:$0xff] %vm1257, %v2379
      %2493 = vst.msk [vmem:[%s170 + $0x2c8] sm:$0xff] %vm1257, %v2380
      %2494 = vst.msk [vmem:[%s170 + $0x2d0] sm:$0xff] %vm1257, %v2381
      %2495 = vst.msk [vmem:[%s170 + $0x2d8] sm:$0xff] %vm1257, %v2382
      %2496 = vst.msk [vmem:[%s170 + $0x2e0] sm:$0xff] %vm1257, %v2383
      %2497 = vst.msk [vmem:[%s170 + $0x2e8] sm:$0xff] %vm1257, %v2384
      %2498 = vst.msk [vmem:[%s170 + $0x2f0] sm:$0xff] %vm1257, %v2385
      %2499 = vst.msk [vmem:[%s170 + $0x2f8] sm:$0xff] %vm1257, %v2386
      %2500 = vst.msk [vmem:[%s170 + $0x300] sm:$0xff] %vm1257, %v2387
      %2501 = vst.msk [vmem:[%s170 + $0x308] sm:$0xff] %vm1257, %v2388
      %2502 = vst.msk [vmem:[%s170 + $0x310] sm:$0xff] %vm1257, %v2389
      %2503 = vst.msk [vmem:[%s170 + $0x318] sm:$0xff] %vm1257, %v2390
      %2504 = vst.msk [vmem:[%s170 + $0x320] sm:$0xff] %vm1257, %v2391
      %2505 = vst.msk [vmem:[%s170 + $0x328] sm:$0xff] %vm1257, %v2392
      %2506 = vst.msk [vmem:[%s170 + $0x330] sm:$0xff] %vm1257, %v2393
      %2507 = vst.msk [vmem:[%s170 + $0x338] sm:$0xff] %vm1257, %v2394
      %2508 = vst.msk [vmem:[%s170 + $0x340] sm:$0xff] %vm1257, %v2395
      %2509 = vst.msk [vmem:[%s170 + $0x348] sm:$0xff] %vm1257, %v2396
      %2510 = vst.msk [vmem:[%s170 + $0x350] sm:$0xff] %vm1257, %v2397
      %2511 = vst.msk [vmem:[%s170 + $0x358] sm:$0xff] %vm1257, %v2398
      %2512 = vst.msk [vmem:[%s170 + $0x360] sm:$0xff] %vm1257, %v2399
      %2513 = vst.msk [vmem:[%s170 + $0x368] sm:$0xff] %vm1257, %v2400
      %2514 = vst.msk [vmem:[%s170 + $0x370] sm:$0xff] %vm1257, %v2401
      %2515 = vst.msk [vmem:[%s170 + $0x378] sm:$0xff] %vm1257, %v2402
      %2516 = vst.msk [vmem:[%s170 + $0x380] sm:$0xf] %vm1481, %v2403
      %p2517 = scmp.lt.s32.totalorder %s14, 1
      %s2518 = scalar_select %p2517, %s14, 1
      %s2519 = smul.addr %s2518, 113
      %s2520 = smul.addr %s2519, 8
      %s2521 = scalar_lea.vmem %s3, %s2520
      // Predicated region
      $region33: #{crnn_forward.7} parent=31 // pred_check
        %p2522 = pneg %p100
      $region34: #{crnn_forward.7} parent=31 // pred_check_branch
        %2524 = sbr.rel (%p2522) target = $region36
      $region35: #{crnn_forward.7} parent=31 // pred_region
        _
      $region36: #{crnn_forward.7} parent=31 // pred_fallthru
        _
    $region32: #{crnn_forward.7} parent=5 // pred_fallthru
      _
    %p2525 = scmp.le.s32.totalorder 2, %s9
    // Predicated region
    $region37: #{crnn_forward.7} parent=5 // pred_check
      %p2526 = pneg %p2525
    $region38: #{crnn_forward.7} parent=5 // pred_check_branch
      %2528 = sbr.rel (%p2526) target = $region40
    $region39: #{crnn_forward.7} parent=5 // pred_region
      %s2529 = ssub.s32 %s9, 2
      // Predicated region
      $region41: #{crnn_forward.7} parent=39 // pred_check
        %p2530 = pneg %p106
      $region42: #{crnn_forward.7} parent=39 // pred_check_branch
        %2532 = sbr.rel (%p2530) target = $region44
      $region43: #{crnn_forward.7} parent=39 // pred_region
        %p2533 = scmp.lt.s32.totalorder %s15, 1
        %s2534 = scalar_select %p2533, %s15, 1
        %s2535 = smul.addr %s2534, 113
        %s2536 = smul.addr %s2535, 8
        %s2537 = scalar_lea.vmem %s3, %s2536
      $region44: #{crnn_forward.7} parent=39 // pred_fallthru
        _
    $region40: #{crnn_forward.7} parent=5 // pred_fallthru
      _
  $region6: #{crnn_forward.7} parent=0 // loop_footer
    %s13 = sadd.s32 1, %s9
  $region7: #{crnn_forward.7} parent=0 // loop_footer_branch
    %8 = sbr.rel target = $region3
  $region8: #{crnn_forward.7} parent=0 // loop_exit
    _

// kernel: crnn_forward.8
$region0: #{crnn_forward.8}
  #allocation0 [shape = 'u32[]', space=smem, size = 0x4, offset = 0x4, fixed_abs, tag = 'smem constant byte address 0x4 - core index']
  #allocation1 [shape = 'u32[144,128]{1,0:T(1,128)}', space=vmem, size = 0x12000, scoped, tag = 'internal scratch']
  %s0 = inlined_call_operand.vmem [shape: bf16[2,196,288], index: 0, kind: input, shape index: {}]
  %s1 = inlined_call_operand.vmem [shape: bf16[288,32], index: 1, kind: input, shape index: {}]
  %s2 = inlined_call_operand.vmem [shape: f32[1,32], index: 2, kind: input, shape index: {}]
  %s3 = inlined_call_operand.vmem [shape: f32[2,196,32], index: 3, kind: output, shape index: {}]
  %s4 = sld [smem:[#allocation0]]
  $region45: #{crnn_forward.8} parent=0
    _
  %s6 = ssub.s32 1, %s4
  %s7 = scalar_select 0, %s6, %s4
  loop: start=0, step=1, limit=4
  $region2: #{crnn_forward.8} parent=0 // loop_pre_header
    _
  $region3: #{crnn_forward.8} parent=0 // loop_header
    %s9 = sphi 0, %s13
    %p10 = scmp.ge.s32.totalorder %s9, 4
    %s19 = sphi 0, %s21
    %s22 = sphi 0, %s19
    %s23 = sphi 0, %s22
    %s39 = sphi 0, %s23
    %s43 = sphi 0, %s43
    %s45 = sphi 0, %s43
    %s46 = sphi 0, %s45
    %s60 = sphi 0, %s46
    %s64 = sphi 0, %s64
    %s66 = sphi 0, %s64
    %s67 = sphi 0, %s66
    %s81 = sphi 0, %s67
    %s87 = sphi 0, %s89
    %s90 = sphi 0, %s87
    %s91 = sphi 0, %s90
    %s107 = sphi 0, %s91
  $region4: #{crnn_forward.8} parent=0 // loop_header_branch
    %12 = sbr.rel (%p10) target = $region8
  $region5: #{crnn_forward.8} parent=0 // loop_body
    %s14 = ssub.s32 %s9, 1
    %s15 = ssub.s32 %s9, 2
    %s16 = sadd.s32 %s9, 1
    %s17 = ssub.s32 %s9, %s16
    %p18 = scmp.eq.s32.totalorder %s17, 0
    %s20 = sadd.s32 %s19, 1
    %s21 = scalar_select %p18, %s19, %s20
    %p24 = pneg %p18
    %p25 = scmp.eq.s32.totalorder %s9, 1
    %p26 = por %p24, %p25
    %p27 = scmp.ne.s32.totalorder %s19, %s22
    %p28 = scmp.eq.s32.totalorder %s9, 0
    %p29 = por %p27, %p28
    %p30 = scmp.ne.s32.totalorder %s19, %s22
    %p31 = scmp.eq.s32.totalorder %s14, 1
    %p32 = por %p30, %p31
    %p33 = scmp.ne.s32.totalorder %s22, %s23
    %p34 = scmp.eq.s32.totalorder %s14, 0
    %p35 = por %p33, %p34
    %p36 = scmp.ne.s32.totalorder %s22, %s23
    %p37 = scmp.eq.s32.totalorder %s15, 1
    %p38 = por %p36, %p37
    %p40 = scmp.ne.s32.totalorder %s23, %s39
    %p41 = scmp.eq.s32.totalorder %s15, 0
    %p42 = por %p40, %p41
    %s44 = sadd.s32 %s43, 1
    %p47 = scmp.eq.s32.totalorder %s9, 1
    %p48 = scmp.ne.s32.totalorder %s43, %s45
    %p49 = scmp.eq.s32.totalorder %s9, 0
    %p50 = por %p48, %p49
    %p51 = scmp.ne.s32.totalorder %s43, %s45
    %p52 = scmp.eq.s32.totalorder %s14, 1
    %p53 = por %p51, %p52
    %p54 = scmp.ne.s32.totalorder %s45, %s46
    %p55 = scmp.eq.s32.totalorder %s14, 0
    %p56 = por %p54, %p55
    %p57 = scmp.ne.s32.totalorder %s45, %s46
    %p58 = scmp.eq.s32.totalorder %s15, 1
    %p59 = por %p57, %p58
    %p61 = scmp.ne.s32.totalorder %s46, %s60
    %p62 = scmp.eq.s32.totalorder %s15, 0
    %p63 = por %p61, %p62
    %s65 = sadd.s32 %s64, 1
    %p68 = scmp.eq.s32.totalorder %s9, 1
    %p69 = scmp.ne.s32.totalorder %s64, %s66
    %p70 = scmp.eq.s32.totalorder %s9, 0
    %p71 = por %p69, %p70
    %p72 = scmp.ne.s32.totalorder %s64, %s66
    %p73 = scmp.eq.s32.totalorder %s14, 1
    %p74 = por %p72, %p73
    %p75 = scmp.ne.s32.totalorder %s66, %s67
    %p76 = scmp.eq.s32.totalorder %s14, 0
    %p77 = por %p75, %p76
    %p78 = scmp.ne.s32.totalorder %s66, %s67
    %p79 = scmp.eq.s32.totalorder %s15, 1
    %p80 = por %p78, %p79
    %p82 = scmp.ne.s32.totalorder %s67, %s81
    %p83 = scmp.eq.s32.totalorder %s15, 0
    %p84 = por %p82, %p83
    %s85 = ssub.s32 %s9, %s16
    %p86 = scmp.eq.s32.totalorder %s85, 0
    %s88 = sadd.s32 %s87, 1
    %s89 = scalar_select %p86, %s87, %s88
    %p92 = pneg %p86
    %p93 = scmp.eq.s32.totalorder %s9, 1
    %p94 = por %p92, %p93
    %p95 = scmp.ne.s32.totalorder %s87, %s90
    %p96 = scmp.eq.s32.totalorder %s9, 0
    %p97 = por %p95, %p96
    %p98 = scmp.ne.s32.totalorder %s87, %s90
    %p99 = scmp.eq.s32.totalorder %s14, 1
    %p100 = por %p98, %p99
    %p101 = scmp.ne.s32.totalorder %s90, %s91
    %p102 = scmp.eq.s32.totalorder %s14, 0
    %p103 = por %p101, %p102
    %p104 = scmp.ne.s32.totalorder %s90, %s91
    %p105 = scmp.eq.s32.totalorder %s15, 1
    %p106 = por %p104, %p105
    %p108 = scmp.ne.s32.totalorder %s91, %s107
    %p109 = scmp.eq.s32.totalorder %s15, 0
    %p110 = por %p108, %p109
    %p111 = scmp.le.s32.totalorder 1, %s9
    %p112 = scmp.lt.s32.totalorder %s9, 3
    %p113 = pnand %p111, %p112
    %p114 = pneg %p113
    // Predicated region
    $region9: #{crnn_forward.8} parent=5 // pred_check
      _
    $region10: #{crnn_forward.8} parent=5 // pred_check_branch
      %116 = sbr.rel (%p113) target = $region12
    $region11: #{crnn_forward.8} parent=5 // pred_region
      %s117 = ssub.s32 %s9, 1
      // Predicated region
      $region13: #{crnn_forward.8} parent=11 // pred_check
        %p118 = pneg %p56
      $region14: #{crnn_forward.8} parent=11 // pred_check_branch
        %120 = sbr.rel (%p118) target = $region16
      $region15: #{crnn_forward.8} parent=11 // pred_region
        _
      $region16: #{crnn_forward.8} parent=11 // pred_fallthru
        _
      // Predicated region
      $region17: #{crnn_forward.8} parent=11 // pred_check
        %p121 = pneg %p77
      $region18: #{crnn_forward.8} parent=11 // pred_check_branch
        %123 = sbr.rel (%p121) target = $region20
      $region19: #{crnn_forward.8} parent=11 // pred_region
        _
      $region20: #{crnn_forward.8} parent=11 // pred_fallthru
        _
    $region12: #{crnn_forward.8} parent=5 // pred_fallthru
      _
    %p124 = scmp.lt.s32.totalorder %s9, 2
    // Predicated region
    $region21: #{crnn_forward.8} parent=5 // pred_check
      %p125 = pneg %p124
    $region22: #{crnn_forward.8} parent=5 // pred_check_branch
      %127 = sbr.rel (%p125) target = $region24
    $region23: #{crnn_forward.8} parent=5 // pred_region
      // Predicated region
      $region25: #{crnn_forward.8} parent=23 // pred_check
        %p128 = pneg %p29
      $region26: #{crnn_forward.8} parent=23 // pred_check_branch
        %130 = sbr.rel (%p128) target = $region28
      $region27: #{crnn_forward.8} parent=23 // pred_region
        %p131 = scmp.lt.s32.totalorder %s9, 1
        %s132 = scalar_select %p131, %s9, 1
        %s133 = smul.addr %s132, 75
        %s134 = smul.addr %s133, 4
        %s135 = scalar_lea.vmem %s0, %s134
      $region28: #{crnn_forward.8} parent=23 // pred_fallthru
        _
    $region24: #{crnn_forward.8} parent=5 // pred_fallthru
      _
    %p136 = scmp.le.s32.totalorder 1, %s9
    %p137 = scmp.lt.s32.totalorder %s9, 3
    %p138 = pnand %p136, %p137
    %p139 = pneg %p138
    // Predicated region
    $region29: #{crnn_forward.8} parent=5 // pred_check
      _
    $region30: #{crnn_forward.8} parent=5 // pred_check_branch
      %141 = sbr.rel (%p138) target = $region32
    $region31: #{crnn_forward.8} parent=5 // pred_region
      %s142 = ssub.s32 %s9, 1
      %p143 = scmp.lt.s32.totalorder %s14, 1
      %s144 = scalar_select %p143, %s14, 1
      %s145 = smul.addr %s144, 75
      %s146 = smul.addr %s145, 4
      %s147 = scalar_lea.vmem %s0, %s146
      %p148 = pneg %p35
      %p149 = pneg %p32
      %p150 = pneg %p56
      %p151 = pneg %p53
      %p152 = pneg %p77
      %p153 = pneg %p74
      %p154 = pneg %p103
      %p155 = pneg %p100
      %p156 = scmp.lt.s32.totalorder %s14, 1
      %s157 = scalar_select %p156, %s14, 1
      %s158 = smul.addr %s157, 25
      %s159 = smul.addr %s158, 8
      %s160 = scalar_lea.vmem %s3, %s159
      %p161 = scmp.lt.s32.totalorder %s14, 1
      %s162 = scalar_select %p161, %s14, 1
      %s163 = smul.addr %s162, 75
      %s164 = smul.addr %s163, 4
      %s165 = scalar_lea.vmem %s0, %s164
      %p166 = scmp.lt.s32.totalorder %s14, 1
      %s167 = scalar_select %p166, %s14, 1
      %s168 = smul.addr %s167, 25
      %s169 = smul.addr %s168, 8
      %s170 = scalar_lea.vmem %s3, %s169
      %v172 = vld [vmem:[%s165] sm:$0xff]
      %v173 = vld [vmem:[%s165 + $0x8] sm:$0xf]
      %v174 = vld [vmem:[%s165 + $0xc] sm:$0xff]
      %v175 = vld [vmem:[%s165 + $0x14] sm:$0xf]
      %v176 = vld [vmem:[%s165 + $0x18] sm:$0xff]
      %v177 = vld [vmem:[%s165 + $0x20] sm:$0xf]
      %v178 = vld [vmem:[%s165 + $0x24] sm:$0xff]
      %v179 = vld [vmem:[%s165 + $0x2c] sm:$0xf]
      %v180 = vld [vmem:[%s165 + $0x30] sm:$0xff]
      %v181 = vld [vmem:[%s165 + $0x38] sm:$0xf]
      %v182 = vld [vmem:[%s165 + $0x3c] sm:$0xff]
      %v183 = vld [vmem:[%s165 + $0x44] sm:$0xf]
      %v184 = vld [vmem:[%s165 + $0x48] sm:$0xff]
      %v185 = vld [vmem:[%s165 + $0x50] sm:$0xf]
      %v186 = vld [vmem:[%s165 + $0x54] sm:$0xff]
      %v187 = vld [vmem:[%s165 + $0x5c] sm:$0xf]
      %v188 = vld [vmem:[%s165 + $0x60] sm:$0xff]
      %v189 = vld [vmem:[%s165 + $0x68] sm:$0xf]
      %v190 = vld [vmem:[%s165 + $0x6c] sm:$0xff]
      %v191 = vld [vmem:[%s165 + $0x74] sm:$0xf]
      %v192 = vld [vmem:[%s165 + $0x78] sm:$0xff]
      %v193 = vld [vmem:[%s165 + $0x80] sm:$0xf]
      %v194 = vld [vmem:[%s165 + $0x84] sm:$0xff]
      %v195 = vld [vmem:[%s165 + $0x8c] sm:$0xf]
      %v196 = vld [vmem:[%s165 + $0x90] sm:$0xff]
      %v197 = vld [vmem:[%s165 + $0x98] sm:$0xf]
      %v198 = vld [vmem:[%s165 + $0x9c] sm:$0xff]
      %v199 = vld [vmem:[%s165 + $0xa4] sm:$0xf]
      %v200 = vld [vmem:[%s165 + $0xa8] sm:$0xff]
      %v201 = vld [vmem:[%s165 + $0xb0] sm:$0xf]
      %v202 = vld [vmem:[%s165 + $0xb4] sm:$0xff]
      %v203 = vld [vmem:[%s165 + $0xbc] sm:$0xf]
      %v204 = vld [vmem:[%s165 + $0xc0] sm:$0xff]
      %v205 = vld [vmem:[%s165 + $0xc8] sm:$0xf]
      %v206 = vld [vmem:[%s165 + $0xcc] sm:$0xff]
      %v207 = vld [vmem:[%s165 + $0xd4] sm:$0xf]
      %v208 = vld [vmem:[%s165 + $0xd8] sm:$0xff]
      %v209 = vld [vmem:[%s165 + $0xe0] sm:$0xf]
      %v210 = vld [vmem:[%s165 + $0xe4] sm:$0xff]
      %v211 = vld [vmem:[%s165 + $0xec] sm:$0xf]
      %v212 = vld [vmem:[%s165 + $0xf0] sm:$0xff]
      %v213 = vld [vmem:[%s165 + $0xf8] sm:$0xf]
      %v214 = vld [vmem:[%s165 + $0xfc] sm:$0xff]
      %v215 = vld [vmem:[%s165 + $0x104] sm:$0xf]
      %v216 = vld [vmem:[%s165 + $0x108] sm:$0xff]
      %v217 = vld [vmem:[%s165 + $0x110] sm:$0xf]
      %v218 = vld [vmem:[%s165 + $0x114] sm:$0xff]
      %v219 = vld [vmem:[%s165 + $0x11c] sm:$0xf]
      %v220 = vld [vmem:[%s165 + $0x120] sm:$0x33]
      %v221 = vld [vmem:[%s165 + $0x128] sm:$0x3]
      %v222 = vld [vmem:[%s1] sm:$0xf]
      %v223 = vld [vmem:[%s1 + $0x4] sm:$0xf]
      %v224 = vld [vmem:[%s1 + $0x8] sm:$0xf]
      %v225 = vld [vmem:[%s1 + $0xc] sm:$0xf]
      %v226 = vld [vmem:[%s1 + $0x10] sm:$0xf]
      %v227 = vld [vmem:[%s1 + $0x14] sm:$0xf]
      %v228 = vld [vmem:[%s1 + $0x18] sm:$0xf]
      %v229 = vld [vmem:[%s1 + $0x1c] sm:$0xf]
      %v230 = vld [vmem:[%s1 + $0x20] sm:$0xf]
      %v231 = vld [vmem:[%s1 + $0x24] sm:$0xf]
      %v232 = vld [vmem:[%s1 + $0x28] sm:$0xf]
      %v233 = vld [vmem:[%s1 + $0x2c] sm:$0xf]
      %v234 = vld [vmem:[%s1 + $0x30] sm:$0xf]
      %v235 = vld [vmem:[%s1 + $0x34] sm:$0xf]
      %v236 = vld [vmem:[%s1 + $0x38] sm:$0xf]
      %v237 = vld [vmem:[%s1 + $0x3c] sm:$0xf]
      %v238 = vld [vmem:[%s1 + $0x40] sm:$0xf]
      %v239 = vld [vmem:[%s1 + $0x44] sm:$0xf]
      %v240 = vld [vmem:[%s1 + $0x48] sm:$0xf]
      %v241 = vld [vmem:[%s1 + $0x4c] sm:$0xf]
      %v242 = vld [vmem:[%s1 + $0x50] sm:$0xf]
      %v243 = vld [vmem:[%s1 + $0x54] sm:$0xf]
      %v244 = vld [vmem:[%s1 + $0x58] sm:$0xf]
      %v245 = vld [vmem:[%s1 + $0x5c] sm:$0xf]
      %v246 = vld [vmem:[%s1 + $0x60] sm:$0xf]
      %v247 = vld [vmem:[%s1 + $0x64] sm:$0xf]
      %v248 = vld [vmem:[%s1 + $0x68] sm:$0xf]
      %v249 = vld [vmem:[%s1 + $0x6c] sm:$0xf]
      %v250 = vld [vmem:[%s1 + $0x70] sm:$0xf]
      %v251 = vld [vmem:[%s1 + $0x74] sm:$0xf]
      %v252 = vld [vmem:[%s1 + $0x78] sm:$0xf]
      %v253 = vld [vmem:[%s1 + $0x7c] sm:$0xf]
      %v254 = vld [vmem:[%s1 + $0x80] sm:$0xf]
      %v255 = vld [vmem:[%s1 + $0x84] sm:$0xf]
      %v256 = vld [vmem:[%s1 + $0x88] sm:$0xf]
      %v257 = vld [vmem:[%s1 + $0x8c] sm:$0xf]
      %v258 = vld [vmem:[%s2] sm:$0x1]
      %v260 = vlaneseq
      %v261 = vshrl.u32 %v260, 7
      %v262 = vsub.s32 0, %v261
      %v263 = vrot.slane %v258, %v262
      %v315 = vunpack.c.l.b16 %v172
      %v316 = vunpack.c.h.b16 %v172
      %v317 = vunpack.c.l.b16 %v173
      %v318 = vunpack.c.l.b16 %v174
      %v319 = vunpack.c.h.b16 %v174
      %v320 = vunpack.c.l.b16 %v175
      %v321 = vunpack.c.l.b16 %v176
      %v322 = vunpack.c.h.b16 %v176
      %v323 = vunpack.c.l.b16 %v177
      %v324 = vunpack.c.l.b16 %v178
      %v325 = vunpack.c.h.b16 %v178
      %v326 = vunpack.c.l.b16 %v179
      %v327 = vunpack.c.l.b16 %v180
      %v328 = vunpack.c.h.b16 %v180
      %v329 = vunpack.c.l.b16 %v181
      %v330 = vunpack.c.l.b16 %v182
      %v331 = vunpack.c.h.b16 %v182
      %v332 = vunpack.c.l.b16 %v183
      %v333 = vunpack.c.l.b16 %v184
      %v334 = vunpack.c.h.b16 %v184
      %v335 = vunpack.c.l.b16 %v185
      %v336 = vunpack.c.l.b16 %v186
      %v337 = vunpack.c.h.b16 %v186
      %v338 = vunpack.c.l.b16 %v187
      %v339 = vunpack.c.l.b16 %v188
      %v340 = vunpack.c.h.b16 %v188
      %v341 = vunpack.c.l.b16 %v189
      %v342 = vunpack.c.l.b16 %v190
      %v343 = vunpack.c.h.b16 %v190
      %v344 = vunpack.c.l.b16 %v191
      %v345 = vunpack.c.l.b16 %v192
      %v346 = vunpack.c.h.b16 %v192
      %v347 = vunpack.c.l.b16 %v193
      %v348 = vunpack.c.l.b16 %v194
      %v349 = vunpack.c.h.b16 %v194
      %v350 = vunpack.c.l.b16 %v195
      %v351 = vunpack.c.l.b16 %v196
      %v352 = vunpack.c.h.b16 %v196
      %v353 = vunpack.c.l.b16 %v197
      %v354 = vunpack.c.l.b16 %v198
      %v355 = vunpack.c.h.b16 %v198
      %v356 = vunpack.c.l.b16 %v199
      %v357 = vunpack.c.l.b16 %v200
      %v358 = vunpack.c.h.b16 %v200
      %v359 = vunpack.c.l.b16 %v201
      %v360 = vunpack.c.l.b16 %v202
      %v361 = vunpack.c.h.b16 %v202
      %v362 = vunpack.c.l.b16 %v203
      %v363 = vunpack.c.l.b16 %v204
      %v364 = vunpack.c.h.b16 %v204
      %v365 = vunpack.c.l.b16 %v205
      %v366 = vunpack.c.l.b16 %v206
      %v367 = vunpack.c.h.b16 %v206
      %v368 = vunpack.c.l.b16 %v207
      %v369 = vunpack.c.l.b16 %v208
      %v370 = vunpack.c.h.b16 %v208
      %v371 = vunpack.c.l.b16 %v209
      %v372 = vunpack.c.l.b16 %v210
      %v373 = vunpack.c.h.b16 %v210
      %v374 = vunpack.c.l.b16 %v211
      %v375 = vunpack.c.l.b16 %v212
      %v376 = vunpack.c.h.b16 %v212
      %v377 = vunpack.c.l.b16 %v213
      %v378 = vunpack.c.l.b16 %v214
      %v379 = vunpack.c.h.b16 %v214
      %v380 = vunpack.c.l.b16 %v215
      %v381 = vunpack.c.l.b16 %v216
      %v382 = vunpack.c.h.b16 %v216
      %v383 = vunpack.c.l.b16 %v217
      %v384 = vunpack.c.l.b16 %v218
      %v385 = vunpack.c.h.b16 %v218
      %v386 = vunpack.c.l.b16 %v219
      %v387 = vunpack.c.l.b16 %v220
      %v388 = vunpack.c.h.b16 %v220
      %v389 = vunpack.c.l.b16 %v221
      %v390 = vpack.c.b16 %v318, %v315
      %v391 = vpack.c.b16 %v319, %v316
      %v392 = vpack.c.b16 %v320, %v317
      %v393 = vpack.c.b16 %v324, %v321
      %v394 = vpack.c.b16 %v325, %v322
      %v395 = vpack.c.b16 %v326, %v323
      %v396 = vpack.c.b16 %v330, %v327
      %v397 = vpack.c.b16 %v331, %v328
      %v398 = vpack.c.b16 %v332, %v329
      %v399 = vpack.c.b16 %v336, %v333
      %v400 = vpack.c.b16 %v337, %v334
      %v401 = vpack.c.b16 %v338, %v335
      %v402 = vpack.c.b16 %v342, %v339
      %v403 = vpack.c.b16 %v343, %v340
      %v404 = vpack.c.b16 %v344, %v341
      %v405 = vpack.c.b16 %v348, %v345
      %v406 = vpack.c.b16 %v349, %v346
      %v407 = vpack.c.b16 %v350, %v347
      %v408 = vpack.c.b16 %v354, %v351
      %v409 = vpack.c.b16 %v355, %v352
      %v410 = vpack.c.b16 %v356, %v353
      %v411 = vpack.c.b16 %v360, %v357
      %v412 = vpack.c.b16 %v361, %v358
      %v413 = vpack.c.b16 %v362, %v359
      %v414 = vpack.c.b16 %v366, %v363
      %v415 = vpack.c.b16 %v367, %v364
      %v416 = vpack.c.b16 %v368, %v365
      %v417 = vpack.c.b16 %v372, %v369
      %v418 = vpack.c.b16 %v373, %v370
      %v419 = vpack.c.b16 %v374, %v371
      %v420 = vpack.c.b16 %v378, %v375
      %v421 = vpack.c.b16 %v379, %v376
      %v422 = vpack.c.b16 %v380, %v377
      %v423 = vpack.c.b16 %v384, %v381
      %v424 = vpack.c.b16 %v385, %v382
      %v425 = vpack.c.b16 %v386, %v383
      %v426 = vpack.c.b16 %v387, %v387
      %v427 = vpack.c.b16 %v388, %v388
      %v428 = vpack.c.b16 %v389, %v389
      %v491 = vunpack.c.l.b16 %v222
      %v492 = vunpack.c.l.b16 %v223
      %v493 = vunpack.c.l.b16 %v224
      %v494 = vunpack.c.l.b16 %v225
      %v495 = vunpack.c.l.b16 %v226
      %v496 = vunpack.c.l.b16 %v227
      %v497 = vunpack.c.l.b16 %v228
      %v498 = vunpack.c.l.b16 %v229
      %v499 = vunpack.c.l.b16 %v230
      %v500 = vunpack.c.l.b16 %v231
      %v501 = vunpack.c.l.b16 %v232
      %v502 = vunpack.c.l.b16 %v233
      %v503 = vunpack.c.l.b16 %v234
      %v504 = vunpack.c.l.b16 %v235
      %v505 = vunpack.c.l.b16 %v236
      %v506 = vunpack.c.l.b16 %v237
      %v507 = vunpack.c.l.b16 %v238
      %v508 = vunpack.c.l.b16 %v239
      %v509 = vunpack.c.l.b16 %v240
      %v510 = vunpack.c.l.b16 %v241
      %v511 = vunpack.c.l.b16 %v242
      %v512 = vunpack.c.l.b16 %v243
      %v513 = vunpack.c.l.b16 %v244
      %v514 = vunpack.c.l.b16 %v245
      %v515 = vunpack.c.l.b16 %v246
      %v516 = vunpack.c.l.b16 %v247
      %v517 = vunpack.c.l.b16 %v248
      %v518 = vunpack.c.l.b16 %v249
      %v519 = vunpack.c.l.b16 %v250
      %v520 = vunpack.c.l.b16 %v251
      %v521 = vunpack.c.l.b16 %v252
      %v522 = vunpack.c.l.b16 %v253
      %v523 = vunpack.c.l.b16 %v254
      %v524 = vunpack.c.l.b16 %v255
      %v525 = vunpack.c.l.b16 %v256
      %v526 = vunpack.c.l.b16 %v257
      %v527 = vpack.c.b16 %v492, %v491
      %v528 = vpack.c.b16 %v494, %v493
      %v529 = vpack.c.b16 %v496, %v495
      %v530 = vpack.c.b16 %v498, %v497
      %v531 = vpack.c.b16 %v500, %v499
      %v532 = vpack.c.b16 %v502, %v501
      %v533 = vpack.c.b16 %v504, %v503
      %v534 = vpack.c.b16 %v506, %v505
      %v535 = vpack.c.b16 %v508, %v507
      %v536 = vpack.c.b16 %v510, %v509
      %v537 = vpack.c.b16 %v512, %v511
      %v538 = vpack.c.b16 %v514, %v513
      %v539 = vpack.c.b16 %v516, %v515
      %v540 = vpack.c.b16 %v518, %v517
      %v541 = vpack.c.b16 %v520, %v519
      %v542 = vpack.c.b16 %v522, %v521
      %v543 = vpack.c.b16 %v524, %v523
      %v544 = vpack.c.b16 %v526, %v525
      %vm563 = vcmask 261120
      %v565 = vsel %vm563, %v392, 0
      %v568 = vsel %vm563, %v395, 0
      %v571 = vsel %vm563, %v398, 0
      %v574 = vsel %vm563, %v401, 0
      %v577 = vsel %vm563, %v404, 0
      %v580 = vsel %vm563, %v407, 0
      %v583 = vsel %vm563, %v410, 0
      %v586 = vsel %vm563, %v413, 0
      %v589 = vsel %vm563, %v416, 0
      %v592 = vsel %vm563, %v419, 0
      %v595 = vsel %vm563, %v422, 0
      %v598 = vsel %vm563, %v425, 0
      %v601 = vsel %vm563, %v428, 0
      %603 = vmatprep.subr.bf16.mxu0 0
      %604 = vmatpush1.bf16.msra.mxu0 %v527
      %605 = vmatprep.subr.bf16.mxu0 0
      %606 = vmatpush1.bf16.msra.mxu0 %v528
      %607 = vmatprep.subr.bf16.mxu0 0
      %608 = vmatpush1.bf16.msra.mxu0 %v529
      %609 = vmatprep.subr.bf16.mxu0 0
      %610 = vmatpush1.bf16.msra.mxu0 %v530
      %611 = vmatprep.subr.bf16.mxu0 0
      %612 = vmatpush1.bf16.msra.mxu0 %v531
      %613 = vmatprep.subr.bf16.mxu0 0
      %614 = vmatpush1.bf16.msra.mxu0 %v532
      %615 = vmatprep.subr.bf16.mxu0 0
      %616 = vmatpush1.bf16.msra.mxu0 %v533
      %617 = vmatprep.subr.bf16.mxu0 0
      %618 = vmatpush1.bf16.msra.mxu0 %v534
      %619 = vmatprep.subr.bf16.mxu0 0
      %620 = vmatpush1.bf16.msra.mxu0 %v535
      %621 = vmatprep.subr.bf16.mxu0 0
      %622 = vmatpush1.bf16.msra.mxu0 %v536
      %623 = vmatprep.subr.bf16.mxu0 0
      %624 = vmatpush1.bf16.msra.mxu0 %v537
      %625 = vmatprep.subr.bf16.mxu0 0
      %626 = vmatpush1.bf16.msra.mxu0 %v538
      %627 = vmatprep.subr.bf16.mxu0 0
      %628 = vmatpush1.bf16.msra.mxu0 %v539
      %629 = vmatprep.subr.bf16.mxu0 0
      %630 = vmatpush1.bf16.msra.mxu0 %v540
      %631 = vmatprep.subr.bf16.mxu0 0
      %632 = vmatpush1.bf16.msra.mxu0 %v541
      %633 = vmatprep.subr.bf16.mxu0 0
      %634 = vmatpush1.bf16.msra.mxu0 %v542
      %635 = vmatprep.mubr.bf16.mxu0 %v391
      %636 = vmatmul.mubr.bf16.gmra.mrb[0].mxu0 %v390
      %v637 = vpop.f32.mrb[0].mxu0
      %v638 = vadd.f32 %v263, %v637
      %v639 = vpop.f32.mrb[0].mxu0
      %v640 = vpop.f32.mrb[0].mxu0
      %v641 = vadd.f32 %v263, %v640
      %v642 = vpop.f32.mrb[0].mxu0
      %643 = vmatprep.mubr.bf16.mxu0 %v394
      %644 = vmatmul.mubr.bf16.gmra.mrb[0].mxu0 %v393
      %v645 = vpop.f32.mrb[0].mxu0
      %v646 = vadd.f32 %v263, %v645
      %v647 = vpop.f32.mrb[0].mxu0
      %v648 = vpop.f32.mrb[0].mxu0
      %v649 = vadd.f32 %v263, %v648
      %v650 = vpop.f32.mrb[0].mxu0
      %651 = vmatprep.mubr.bf16.mxu0 %v397
      %652 = vmatmul.mubr.bf16.gmra.mrb[0].mxu0 %v396
      %v653 = vpop.f32.mrb[0].mxu0
      %v654 = vadd.f32 %v263, %v653
      %v655 = vpop.f32.mrb[0].mxu0
      %v656 = vpop.f32.mrb[0].mxu0
      %v657 = vadd.f32 %v263, %v656
      %v658 = vpop.f32.mrb[0].mxu0
      %659 = vmatprep.mubr.bf16.mxu0 %v400
      %660 = vmatmul.mubr.bf16.gmra.mrb[0].mxu0 %v399
      %v661 = vpop.f32.mrb[0].mxu0
      %v662 = vadd.f32 %v263, %v661
      %v663 = vpop.f32.mrb[0].mxu0
      %v664 = vpop.f32.mrb[0].mxu0
      %v665 = vadd.f32 %v263, %v664
      %v666 = vpop.f32.mrb[0].mxu0
      %667 = vmatprep.mubr.bf16.mxu0 %v403
      %668 = vmatmul.mubr.bf16.gmra.mrb[0].mxu0 %v402
      %v669 = vpop.f32.mrb[0].mxu0
      %v670 = vadd.f32 %v263, %v669
      %v671 = vpop.f32.mrb[0].mxu0
      %v672 = vpop.f32.mrb[0].mxu0
      %v673 = vadd.f32 %v263, %v672
      %v674 = vpop.f32.mrb[0].mxu0
      %675 = vmatprep.mubr.bf16.mxu0 %v406
      %676 = vmatmul.mubr.bf16.gmra.mrb[0].mxu0 %v405
      %v677 = vpop.f32.mrb[0].mxu0
      %v678 = vadd.f32 %v263, %v677
      %v679 = vpop.f32.mrb[0].mxu0
      %v680 = vpop.f32.mrb[0].mxu0
      %v681 = vadd.f32 %v263, %v680
      %v682 = vpop.f32.mrb[0].mxu0
      %683 = vmatprep.mubr.bf16.mxu0 %v409
      %684 = vmatmul.mubr.bf16.gmra.mrb[0].mxu0 %v408
      %v685 = vpop.f32.mrb[0].mxu0
      %v686 = vadd.f32 %v263, %v685
      %v687 = vpop.f32.mrb[0].mxu0
      %v688 = vpop.f32.mrb[0].mxu0
      %v689 = vadd.f32 %v263, %v688
      %v690 = vpop.f32.mrb[0].mxu0
      %691 = vmatprep.mubr.bf16.mxu0 %v412
      %692 = vmatmul.mubr.bf16.gmra.mrb[0].mxu0 %v411
      %v693 = vpop.f32.mrb[0].mxu0
      %v694 = vadd.f32 %v263, %v693
      %v695 = vpop.f32.mrb[0].mxu0
      %v696 = vpop.f32.mrb[0].mxu0
      %v697 = vadd.f32 %v263, %v696
      %v698 = vpop.f32.mrb[0].mxu0
      %699 = vmatprep.mubr.bf16.mxu0 %v415
      %700 = vmatmul.mubr.bf16.gmra.mrb[0].mxu0 %v414
      %v701 = vpop.f32.mrb[0].mxu0
      %v702 = vadd.f32 %v263, %v701
      %v703 = vpop.f32.mrb[0].mxu0
      %v704 = vpop.f32.mrb[0].mxu0
      %v705 = vadd.f32 %v263, %v704
      %v706 = vpop.f32.mrb[0].mxu0
      %707 = vmatprep.mubr.bf16.mxu0 %v418
      %708 = vmatmul.mubr.bf16.gmra.mrb[0].mxu0 %v417
      %v709 = vpop.f32.mrb[0].mxu0
      %v710 = vadd.f32 %v263, %v709
      %v711 = vpop.f32.mrb[0].mxu0
      %v712 = vpop.f32.mrb[0].mxu0
      %v713 = vadd.f32 %v263, %v712
      %v714 = vpop.f32.mrb[0].mxu0
      %715 = vmatprep.mubr.bf16.mxu0 %v421
      %716 = vmatmul.mubr.bf16.gmra.mrb[0].mxu0 %v420
      %v717 = vpop.f32.mrb[0].mxu0
      %v718 = vadd.f32 %v263, %v717
      %v719 = vpop.f32.mrb[0].mxu0
      %v720 = vpop.f32.mrb[0].mxu0
      %v721 = vadd.f32 %v263, %v720
      %v722 = vpop.f32.mrb[0].mxu0
      %723 = vmatprep.mubr.bf16.mxu0 %v424
      %724 = vmatmul.mubr.bf16.gmra.mrb[0].mxu0 %v423
      %v725 = vpop.f32.mrb[0].mxu0
      %v726 = vadd.f32 %v263, %v725
      %v727 = vpop.f32.mrb[0].mxu0
      %v728 = vpop.f32.mrb[0].mxu0
      %v729 = vadd.f32 %v263, %v728
      %v730 = vpop.f32.mrb[0].mxu0
      %731 = vmatprep.mubr.bf16.mxu0 %v427
      %732 = vmatmul.mubr.bf16.gmra.mrb[0].mxu0 %v426
      %v733 = vpop.f32.mrb[0].mxu0
      %v734 = vadd.f32 %v263, %v733
      %v735 = vpop.f32.mrb[0].mxu0
      %v736 = vpop.f32.mrb[0].mxu0
      %v737 = vpop.f32.mrb[0].mxu0
      %738 = vdwg.mxu0
      %739 = vmatprep.subr.bf16.mxu0 0
      %740 = vmatpush1.bf16.msra.mxu0 %v543
      %741 = vmatprep.subr.bf16.mxu0 0
      %742 = vmatpush1.bf16.msra.mxu0 %v544
      %743 = vmatprep.subr.bf16.mxu0 0
      %744 = vmatpush1.bf16.msra.mxu0 0
      %745 = vmatprep.subr.bf16.mxu0 0
      %746 = vmatpush1.bf16.msra.mxu0 0
      %747 = vmatprep.subr.bf16.mxu0 0
      %748 = vmatpush1.bf16.msra.mxu0 0
      %749 = vmatprep.subr.bf16.mxu0 0
      %750 = vmatpush1.bf16.msra.mxu0 0
      %751 = vmatprep.subr.bf16.mxu0 0
      %752 = vmatpush1.bf16.msra.mxu0 0
      %753 = vmatprep.subr.bf16.mxu0 0
      %754 = vmatpush1.bf16.msra.mxu0 0
      %755 = vmatprep.subr.bf16.mxu0 0
      %756 = vmatpush1.bf16.msra.mxu0 0
      %757 = vmatprep.subr.bf16.mxu0 0
      %758 = vmatpush1.bf16.msra.mxu0 0
      %759 = vmatprep.subr.bf16.mxu0 0
      %760 = vmatpush1.bf16.msra.mxu0 0
      %761 = vmatprep.subr.bf16.mxu0 0
      %762 = vmatpush1.bf16.msra.mxu0 0
      %763 = vmatprep.subr.bf16.mxu0 0
      %764 = vmatpush1.bf16.msra.mxu0 0
      %765 = vmatprep.subr.bf16.mxu0 0
      %766 = vmatpush1.bf16.msra.mxu0 0
      %767 = vmatprep.subr.bf16.mxu0 0
      %768 = vmatpush1.bf16.msra.mxu0 0
      %769 = vmatprep.subr.bf16.mxu0 0
      %770 = vmatpush1.bf16.msra.mxu0 0
      %771 = vmatprep.mubr.bf16.mxu0 0
      %772 = vmatmul.mubr.bf16.gmra.mrb[0].mxu0 %v565
      %v773 = vpop.f32.mrb[0].mxu0
      %v774 = vadd.f32 %v638, %v773
      %v775 = vpop.f32.mrb[0].mxu0
      %v776 = vpop.f32.mrb[0].mxu0
      %v777 = vadd.f32 %v641, %v776
      %v778 = vpop.f32.mrb[0].mxu0
      %779 = vmatprep.mubr.bf16.mxu0 0
      %780 = vmatmul.mubr.bf16.gmra.mrb[0].mxu0 %v568
      %v781 = vpop.f32.mrb[0].mxu0
      %v782 = vadd.f32 %v646, %v781
      %v783 = vpop.f32.mrb[0].mxu0
      %v784 = vpop.f32.mrb[0].mxu0
      %v785 = vadd.f32 %v649, %v784
      %v786 = vpop.f32.mrb[0].mxu0
      %787 = vmatprep.mubr.bf16.mxu0 0
      %788 = vmatmul.mubr.bf16.gmra.mrb[0].mxu0 %v571
      %v789 = vpop.f32.mrb[0].mxu0
      %v790 = vadd.f32 %v654, %v789
      %v791 = vpop.f32.mrb[0].mxu0
      %v792 = vpop.f32.mrb[0].mxu0
      %v793 = vadd.f32 %v657, %v792
      %v794 = vpop.f32.mrb[0].mxu0
      %795 = vmatprep.mubr.bf16.mxu0 0
      %796 = vmatmul.mubr.bf16.gmra.mrb[0].mxu0 %v574
      %v797 = vpop.f32.mrb[0].mxu0
      %v798 = vadd.f32 %v662, %v797
      %v799 = vpop.f32.mrb[0].mxu0
      %v800 = vpop.f32.mrb[0].mxu0
      %v801 = vadd.f32 %v665, %v800
      %v802 = vpop.f32.mrb[0].mxu0
      %803 = vmatprep.mubr.bf16.mxu0 0
      %804 = vmatmul.mubr.bf16.gmra.mrb[0].mxu0 %v577
      %v805 = vpop.f32.mrb[0].mxu0
      %v806 = vadd.f32 %v670, %v805
      %v807 = vpop.f32.mrb[0].mxu0
      %v808 = vpop.f32.mrb[0].mxu0
      %v809 = vadd.f32 %v673, %v808
      %v810 = vpop.f32.mrb[0].mxu0
      %811 = vmatprep.mubr.bf16.mxu0 0
      %812 = vmatmul.mubr.bf16.gmra.mrb[0].mxu0 %v580
      %v813 = vpop.f32.mrb[0].mxu0
      %v814 = vadd.f32 %v678, %v813
      %v815 = vpop.f32.mrb[0].mxu0
      %v816 = vpop.f32.mrb[0].mxu0
      %v817 = vadd.f32 %v681, %v816
      %v818 = vpop.f32.mrb[0].mxu0
      %819 = vmatprep.mubr.bf16.mxu0 0
      %820 = vmatmul.mubr.bf16.gmra.mrb[0].mxu0 %v583
      %v821 = vpop.f32.mrb[0].mxu0
      %v822 = vadd.f32 %v686, %v821
      %v823 = vpop.f32.mrb[0].mxu0
      %v824 = vpop.f32.mrb[0].mxu0
      %v825 = vadd.f32 %v689, %v824
      %v826 = vpop.f32.mrb[0].mxu0
      %827 = vmatprep.mubr.bf16.mxu0 0
      %828 = vmatmul.mubr.bf16.gmra.mrb[0].mxu0 %v586
      %v829 = vpop.f32.mrb[0].mxu0
      %v830 = vadd.f32 %v694, %v829
      %v831 = vpop.f32.mrb[0].mxu0
      %v832 = vpop.f32.mrb[0].mxu0
      %v833 = vadd.f32 %v697, %v832
      %v834 = vpop.f32.mrb[0].mxu0
      %835 = vmatprep.mubr.bf16.mxu0 0
      %836 = vmatmul.mubr.bf16.gmra.mrb[0].mxu0 %v589
      %v837 = vpop.f32.mrb[0].mxu0
      %v838 = vadd.f32 %v702, %v837
      %v839 = vpop.f32.mrb[0].mxu0
      %v840 = vpop.f32.mrb[0].mxu0
      %v841 = vadd.f32 %v705, %v840
      %v842 = vpop.f32.mrb[0].mxu0
      %843 = vmatprep.mubr.bf16.mxu0 0
      %844 = vmatmul.mubr.bf16.gmra.mrb[0].mxu0 %v592
      %v845 = vpop.f32.mrb[0].mxu0
      %v846 = vadd.f32 %v710, %v845
      %v847 = vpop.f32.mrb[0].mxu0
      %v848 = vpop.f32.mrb[0].mxu0
      %v849 = vadd.f32 %v713, %v848
      %v850 = vpop.f32.mrb[0].mxu0
      %851 = vmatprep.mubr.bf16.mxu0 0
      %852 = vmatmul.mubr.bf16.gmra.mrb[0].mxu0 %v595
      %v853 = vpop.f32.mrb[0].mxu0
      %v854 = vadd.f32 %v718, %v853
      %v855 = vpop.f32.mrb[0].mxu0
      %v856 = vpop.f32.mrb[0].mxu0
      %v857 = vadd.f32 %v721, %v856
      %v858 = vpop.f32.mrb[0].mxu0
      %859 = vmatprep.mubr.bf16.mxu0 0
      %860 = vmatmul.mubr.bf16.gmra.mrb[0].mxu0 %v598
      %v861 = vpop.f32.mrb[0].mxu0
      %v862 = vadd.f32 %v726, %v861
      %v863 = vpop.f32.mrb[0].mxu0
      %v864 = vpop.f32.mrb[0].mxu0
      %v865 = vadd.f32 %v729, %v864
      %v866 = vpop.f32.mrb[0].mxu0
      %867 = vmatprep.mubr.bf16.mxu0 0
      %868 = vmatmul.mubr.bf16.gmra.mrb[0].mxu0 %v601
      %v869 = vpop.f32.mrb[0].mxu0
      %v870 = vadd.f32 %v734, %v869
      %v871 = vpop.f32.mrb[0].mxu0
      %v872 = vpop.f32.mrb[0].mxu0
      %v873 = vpop.f32.mrb[0].mxu0
      %874 = vdwg.mxu0
      %v875 = vsel %vm563, %v774, 0.0
      %v876 = vsel %vm563, %v777, 0.0
      %v877 = vadd.f32 %v875, %v876
      %v878 = vsel %vm563, %v782, 0.0
      %v879 = vadd.f32 %v877, %v878
      %v880 = vsel %vm563, %v785, 0.0
      %v881 = vadd.f32 %v879, %v880
      %v882 = vsel %vm563, %v790, 0.0
      %v883 = vadd.f32 %v881, %v882
      %v884 = vsel %vm563, %v793, 0.0
      %v885 = vadd.f32 %v883, %v884
      %v886 = vsel %vm563, %v798, 0.0
      %v887 = vadd.f32 %v885, %v886
      %v888 = vsel %vm563, %v801, 0.0
      %v889 = vadd.f32 %v887, %v888
      %v890 = vsel %vm563, %v806, 0.0
      %v891 = vadd.f32 %v889, %v890
      %v892 = vsel %vm563, %v809, 0.0
      %v893 = vadd.f32 %v891, %v892
      %v894 = vsel %vm563, %v814, 0.0
      %v895 = vadd.f32 %v893, %v894
      %v896 = vsel %vm563, %v817, 0.0
      %v897 = vadd.f32 %v895, %v896
      %v898 = vsel %vm563, %v822, 0.0
      %v899 = vadd.f32 %v897, %v898
      %v900 = vsel %vm563, %v825, 0.0
      %v901 = vadd.f32 %v899, %v900
      %v902 = vsel %vm563, %v830, 0.0
      %v903 = vadd.f32 %v901, %v902
      %v904 = vsel %vm563, %v833, 0.0
      %v905 = vadd.f32 %v903, %v904
      %v906 = vsel %vm563, %v838, 0.0
      %v907 = vadd.f32 %v905, %v906
      %v908 = vsel %vm563, %v841, 0.0
      %v909 = vadd.f32 %v907, %v908
      %v910 = vsel %vm563, %v846, 0.0
      %v911 = vadd.f32 %v909, %v910
      %v912 = vsel %vm563, %v849, 0.0
      %v913 = vadd.f32 %v911, %v912
      %v914 = vsel %vm563, %v854, 0.0
      %v915 = vadd.f32 %v913, %v914
      %v916 = vsel %vm563, %v857, 0.0
      %v917 = vadd.f32 %v915, %v916
      %v918 = vsel %vm563, %v862, 0.0
      %v919 = vadd.f32 %v917, %v918
      %v920 = vsel %vm563, %v865, 0.0
      %v921 = vadd.f32 %v919, %v920
      %vm922 = vcmask 257024
      %v923 = vsel %vm922, %v870, 0.0
      %v924 = vadd.f32 %v921, %v923
      %v925 = vrot.slane %v924, 4
      %v926 = vadd.f32 %v924, %v925
      %v927 = vrot.slane %v926, 2
      %v928 = vadd.f32 %v926, %v927
      %v929 = vrot.slane %v928, 1
      %v930 = vadd.f32 %v928, %v929
      %v931 = vrcp.pop 196.0
      %v932 = vmul.f32 %v930, %v931
      %v933 = vsub.f32 %v774, %v932
      %v934 = vsub.f32 %v777, %v932
      %v935 = vsub.f32 %v782, %v932
      %v936 = vsub.f32 %v785, %v932
      %v937 = vsub.f32 %v790, %v932
      %v938 = vsub.f32 %v793, %v932
      %v939 = vsub.f32 %v798, %v932
      %v940 = vsub.f32 %v801, %v932
      %v941 = vsub.f32 %v806, %v932
      %v942 = vsub.f32 %v809, %v932
      %v943 = vsub.f32 %v814, %v932
      %v944 = vsub.f32 %v817, %v932
      %v945 = vsub.f32 %v822, %v932
      %v946 = vsub.f32 %v825, %v932
      %v947 = vsub.f32 %v830, %v932
      %v948 = vsub.f32 %v833, %v932
      %v949 = vsub.f32 %v838, %v932
      %v950 = vsub.f32 %v841, %v932
      %v951 = vsub.f32 %v846, %v932
      %v952 = vsub.f32 %v849, %v932
      %v953 = vsub.f32 %v854, %v932
      %v954 = vsub.f32 %v857, %v932
      %v955 = vsub.f32 %v862, %v932
      %v956 = vsub.f32 %v865, %v932
      %v957 = vsub.f32 %v870, %v932
      %v958 = vmul.f32 %v933, %v933
      %v959 = vmul.f32 %v934, %v934
      %v960 = vmul.f32 %v935, %v935
      %v961 = vmul.f32 %v936, %v936
      %v962 = vmul.f32 %v937, %v937
      %v963 = vmul.f32 %v938, %v938
      %v964 = vmul.f32 %v939, %v939
      %v965 = vmul.f32 %v940, %v940
      %v966 = vmul.f32 %v941, %v941
      %v967 = vmul.f32 %v942, %v942
      %v968 = vmul.f32 %v943, %v943
      %v969 = vmul.f32 %v944, %v944
      %v970 = vmul.f32 %v945, %v945
      %v971 = vmul.f32 %v946, %v946
      %v972 = vmul.f32 %v947, %v947
      %v973 = vmul.f32 %v948, %v948
      %v974 = vmul.f32 %v949, %v949
      %v975 = vmul.f32 %v950, %v950
      %v976 = vmul.f32 %v951, %v951
      %v977 = vmul.f32 %v952, %v952
      %v978 = vmul.f32 %v953, %v953
      %v979 = vmul.f32 %v954, %v954
      %v980 = vmul.f32 %v955, %v955
      %v981 = vmul.f32 %v956, %v956
      %v982 = vmul.f32 %v957, %v957
      %v983 = vsel %vm563, %v958, 0.0
      %v984 = vsel %vm563, %v959, 0.0
      %v985 = vadd.f32 %v983, %v984
      %v986 = vsel %vm563, %v960, 0.0
      %v987 = vadd.f32 %v985, %v986
      %v988 = vsel %vm563, %v961, 0.0
      %v989 = vadd.f32 %v987, %v988
      %v990 = vsel %vm563, %v962, 0.0
      %v991 = vadd.f32 %v989, %v990
      %v992 = vsel %vm563, %v963, 0.0
      %v993 = vadd.f32 %v991, %v992
      %v994 = vsel %vm563, %v964, 0.0
      %v995 = vadd.f32 %v993, %v994
      %v996 = vsel %vm563, %v965, 0.0
      %v997 = vadd.f32 %v995, %v996
      %v998 = vsel %vm563, %v966, 0.0
      %v999 = vadd.f32 %v997, %v998
      %v1000 = vsel %vm563, %v967, 0.0
      %v1001 = vadd.f32 %v999, %v1000
      %v1002 = vsel %vm563, %v968, 0.0
      %v1003 = vadd.f32 %v1001, %v1002
      %v1004 = vsel %vm563, %v969, 0.0
      %v1005 = vadd.f32 %v1003, %v1004
      %v1006 = vsel %vm563, %v970, 0.0
      %v1007 = vadd.f32 %v1005, %v1006
      %v1008 = vsel %vm563, %v971, 0.0
      %v1009 = vadd.f32 %v1007, %v1008
      %v1010 = vsel %vm563, %v972, 0.0
      %v1011 = vadd.f32 %v1009, %v1010
      %v1012 = vsel %vm563, %v973, 0.0
      %v1013 = vadd.f32 %v1011, %v1012
      %v1014 = vsel %vm563, %v974, 0.0
      %v1015 = vadd.f32 %v1013, %v1014
      %v1016 = vsel %vm563, %v975, 0.0
      %v1017 = vadd.f32 %v1015, %v1016
      %v1018 = vsel %vm563, %v976, 0.0
      %v1019 = vadd.f32 %v1017, %v1018
      %v1020 = vsel %vm563, %v977, 0.0
      %v1021 = vadd.f32 %v1019, %v1020
      %v1022 = vsel %vm563, %v978, 0.0
      %v1023 = vadd.f32 %v1021, %v1022
      %v1024 = vsel %vm563, %v979, 0.0
      %v1025 = vadd.f32 %v1023, %v1024
      %v1026 = vsel %vm563, %v980, 0.0
      %v1027 = vadd.f32 %v1025, %v1026
      %v1028 = vsel %vm563, %v981, 0.0
      %v1029 = vadd.f32 %v1027, %v1028
      %v1030 = vsel %vm922, %v982, 0.0
      %v1031 = vadd.f32 %v1029, %v1030
      %v1032 = vrot.slane %v1031, 4
      %v1033 = vadd.f32 %v1031, %v1032
      %v1034 = vrot.slane %v1033, 2
      %v1035 = vadd.f32 %v1033, %v1034
      %v1036 = vrot.slane %v1035, 1
      %v1037 = vadd.f32 %v1035, %v1036
      %v1038 = vmul.f32 %v1037, %v931
      %v1039 = vadd.f32 %v1038, 1e-05
      %v1040 = vrsqrt.pop %v1039
      %v1041 = vmul.f32 %v933, %v1040
      %v1042 = vmul.f32 %v934, %v1040
      %v1043 = vmul.f32 %v935, %v1040
      %v1044 = vmul.f32 %v936, %v1040
      %v1045 = vmul.f32 %v937, %v1040
      %v1046 = vmul.f32 %v938, %v1040
      %v1047 = vmul.f32 %v939, %v1040
      %v1048 = vmul.f32 %v940, %v1040
      %v1049 = vmul.f32 %v941, %v1040
      %v1050 = vmul.f32 %v942, %v1040
      %v1051 = vmul.f32 %v943, %v1040
      %v1052 = vmul.f32 %v944, %v1040
      %v1053 = vmul.f32 %v945, %v1040
      %v1054 = vmul.f32 %v946, %v1040
      %v1055 = vmul.f32 %v947, %v1040
      %v1056 = vmul.f32 %v948, %v1040
      %v1057 = vmul.f32 %v949, %v1040
      %v1058 = vmul.f32 %v950, %v1040
      %v1059 = vmul.f32 %v951, %v1040
      %v1060 = vmul.f32 %v952, %v1040
      %v1061 = vmul.f32 %v953, %v1040
      %v1062 = vmul.f32 %v954, %v1040
      %v1063 = vmul.f32 %v955, %v1040
      %v1064 = vmul.f32 %v956, %v1040
      %v1065 = vmul.f32 %v957, %v1040
      %vm1066 = vcmp.ge.f32.partialorder %v1041, 0.0
      %vm1067 = vcmp.ge.f32.partialorder %v1042, 0.0
      %vm1068 = vcmp.ge.f32.partialorder %v1043, 0.0
      %vm1069 = vcmp.ge.f32.partialorder %v1044, 0.0
      %vm1070 = vcmp.ge.f32.partialorder %v1045, 0.0
      %vm1071 = vcmp.ge.f32.partialorder %v1046, 0.0
      %vm1072 = vcmp.ge.f32.partialorder %v1047, 0.0
      %vm1073 = vcmp.ge.f32.partialorder %v1048, 0.0
      %vm1074 = vcmp.ge.f32.partialorder %v1049, 0.0
      %vm1075 = vcmp.ge.f32.partialorder %v1050, 0.0
      %vm1076 = vcmp.ge.f32.partialorder %v1051, 0.0
      %vm1077 = vcmp.ge.f32.partialorder %v1052, 0.0
      %vm1078 = vcmp.ge.f32.partialorder %v1053, 0.0
      %vm1079 = vcmp.ge.f32.partialorder %v1054, 0.0
      %vm1080 = vcmp.ge.f32.partialorder %v1055, 0.0
      %vm1081 = vcmp.ge.f32.partialorder %v1056, 0.0
      %vm1082 = vcmp.ge.f32.partialorder %v1057, 0.0
      %vm1083 = vcmp.ge.f32.partialorder %v1058, 0.0
      %vm1084 = vcmp.ge.f32.partialorder %v1059, 0.0
      %vm1085 = vcmp.ge.f32.partialorder %v1060, 0.0
      %vm1086 = vcmp.ge.f32.partialorder %v1061, 0.0
      %vm1087 = vcmp.ge.f32.partialorder %v1062, 0.0
      %vm1088 = vcmp.ge.f32.partialorder %v1063, 0.0
      %vm1089 = vcmp.ge.f32.partialorder %v1064, 0.0
      %vm1090 = vcmp.ge.f32.partialorder %v1065, 0.0
      %v1091 = vmul.f32 %v1041, 0.01
      %v1092 = vmul.f32 %v1042, 0.01
      %v1093 = vmul.f32 %v1043, 0.01
      %v1094 = vmul.f32 %v1044, 0.01
      %v1095 = vmul.f32 %v1045, 0.01
      %v1096 = vmul.f32 %v1046, 0.01
      %v1097 = vmul.f32 %v1047, 0.01
      %v1098 = vmul.f32 %v1048, 0.01
      %v1099 = vmul.f32 %v1049, 0.01
      %v1100 = vmul.f32 %v1050, 0.01
      %v1101 = vmul.f32 %v1051, 0.01
      %v1102 = vmul.f32 %v1052, 0.01
      %v1103 = vmul.f32 %v1053, 0.01
      %v1104 = vmul.f32 %v1054, 0.01
      %v1105 = vmul.f32 %v1055, 0.01
      %v1106 = vmul.f32 %v1056, 0.01
      %v1107 = vmul.f32 %v1057, 0.01
      %v1108 = vmul.f32 %v1058, 0.01
      %v1109 = vmul.f32 %v1059, 0.01
      %v1110 = vmul.f32 %v1060, 0.01
      %v1111 = vmul.f32 %v1061, 0.01
      %v1112 = vmul.f32 %v1062, 0.01
      %v1113 = vmul.f32 %v1063, 0.01
      %v1114 = vmul.f32 %v1064, 0.01
      %v1115 = vmul.f32 %v1065, 0.01
      %v1116 = vsel %vm1066, %v1041, %v1091
      %v1117 = vsel %vm1067, %v1042, %v1092
      %v1118 = vsel %vm1068, %v1043, %v1093
      %v1119 = vsel %vm1069, %v1044, %v1094
      %v1120 = vsel %vm1070, %v1045, %v1095
      %v1121 = vsel %vm1071, %v1046, %v1096
      %v1122 = vsel %vm1072, %v1047, %v1097
      %v1123 = vsel %vm1073, %v1048, %v1098
      %v1124 = vsel %vm1074, %v1049, %v1099
      %v1125 = vsel %vm1075, %v1050, %v1100
      %v1126 = vsel %vm1076, %v1051, %v1101
      %v1127 = vsel %vm1077, %v1052, %v1102
      %v1128 = vsel %vm1078, %v1053, %v1103
      %v1129 = vsel %vm1079, %v1054, %v1104
      %v1130 = vsel %vm1080, %v1055, %v1105
      %v1131 = vsel %vm1081, %v1056, %v1106
      %v1132 = vsel %vm1082, %v1057, %v1107
      %v1133 = vsel %vm1083, %v1058, %v1108
      %v1134 = vsel %vm1084, %v1059, %v1109
      %v1135 = vsel %vm1085, %v1060, %v1110
      %v1136 = vsel %vm1086, %v1061, %v1111
      %v1137 = vsel %vm1087, %v1062, %v1112
      %v1138 = vsel %vm1088, %v1063, %v1113
      %v1139 = vsel %vm1089, %v1064, %v1114
      %v1140 = vsel %vm1090, %v1065, %v1115
      %1141 = vst.msk [vmem:[%s170] sm:$0xff] %vm563, %v1116
      %1142 = vst.msk [vmem:[%s170 + $0x8] sm:$0xff] %vm563, %v1117
      %1143 = vst.msk [vmem:[%s170 + $0x10] sm:$0xff] %vm563, %v1118
      %1144 = vst.msk [vmem:[%s170 + $0x18] sm:$0xff] %vm563, %v1119
      %1145 = vst.msk [vmem:[%s170 + $0x20] sm:$0xff] %vm563, %v1120
      %1146 = vst.msk [vmem:[%s170 + $0x28] sm:$0xff] %vm563, %v1121
      %1147 = vst.msk [vmem:[%s170 + $0x30] sm:$0xff] %vm563, %v1122
      %1148 = vst.msk [vmem:[%s170 + $0x38] sm:$0xff] %vm563, %v1123
      %1149 = vst.msk [vmem:[%s170 + $0x40] sm:$0xff] %vm563, %v1124
      %1150 = vst.msk [vmem:[%s170 + $0x48] sm:$0xff] %vm563, %v1125
      %1151 = vst.msk [vmem:[%s170 + $0x50] sm:$0xff] %vm563, %v1126
      %1152 = vst.msk [vmem:[%s170 + $0x58] sm:$0xff] %vm563, %v1127
      %1153 = vst.msk [vmem:[%s170 + $0x60] sm:$0xff] %vm563, %v1128
      %1154 = vst.msk [vmem:[%s170 + $0x68] sm:$0xff] %vm563, %v1129
      %1155 = vst.msk [vmem:[%s170 + $0x70] sm:$0xff] %vm563, %v1130
      %1156 = vst.msk [vmem:[%s170 + $0x78] sm:$0xff] %vm563, %v1131
      %1157 = vst.msk [vmem:[%s170 + $0x80] sm:$0xff] %vm563, %v1132
      %1158 = vst.msk [vmem:[%s170 + $0x88] sm:$0xff] %vm563, %v1133
      %1159 = vst.msk [vmem:[%s170 + $0x90] sm:$0xff] %vm563, %v1134
      %1160 = vst.msk [vmem:[%s170 + $0x98] sm:$0xff] %vm563, %v1135
      %1161 = vst.msk [vmem:[%s170 + $0xa0] sm:$0xff] %vm563, %v1136
      %1162 = vst.msk [vmem:[%s170 + $0xa8] sm:$0xff] %vm563, %v1137
      %1163 = vst.msk [vmem:[%s170 + $0xb0] sm:$0xff] %vm563, %v1138
      %1164 = vst.msk [vmem:[%s170 + $0xb8] sm:$0xff] %vm563, %v1139
      %1165 = vst.msk [vmem:[%s170 + $0xc0] sm:$0xf] %vm922, %v1140
      %p1166 = scmp.lt.s32.totalorder %s14, 1
      %s1167 = scalar_select %p1166, %s14, 1
      %s1168 = smul.addr %s1167, 25
      %s1169 = smul.addr %s1168, 8
      %s1170 = scalar_lea.vmem %s3, %s1169
      // Predicated region
      $region33: #{crnn_forward.8} parent=31 // pred_check
        %p1171 = pneg %p100
      $region34: #{crnn_forward.8} parent=31 // pred_check_branch
        %1173 = sbr.rel (%p1171) target = $region36
      $region35: #{crnn_forward.8} parent=31 // pred_region
        _
      $region36: #{crnn_forward.8} parent=31 // pred_fallthru
        _
    $region32: #{crnn_forward.8} parent=5 // pred_fallthru
      _
    %p1174 = scmp.le.s32.totalorder 2, %s9
    // Predicated region
    $region37: #{crnn_forward.8} parent=5 // pred_check
      %p1175 = pneg %p1174
    $region38: #{crnn_forward.8} parent=5 // pred_check_branch
      %1177 = sbr.rel (%p1175) target = $region40
    $region39: #{crnn_forward.8} parent=5 // pred_region
      %s1178 = ssub.s32 %s9, 2
      // Predicated region
      $region41: #{crnn_forward.8} parent=39 // pred_check
        %p1179 = pneg %p106
      $region42: #{crnn_forward.8} parent=39 // pred_check_branch
        %1181 = sbr.rel (%p1179) target = $region44
      $region43: #{crnn_forward.8} parent=39 // pred_region
        %p1182 = scmp.lt.s32.totalorder %s15, 1
        %s1183 = scalar_select %p1182, %s15, 1
        %s1184 = smul.addr %s1183, 25
        %s1185 = smul.addr %s1184, 8
        %s1186 = scalar_lea.vmem %s3, %s1185
      $region44: #{crnn_forward.8} parent=39 // pred_fallthru
        _
    $region40: #{crnn_forward.8} parent=5 // pred_fallthru
      _
  $region6: #{crnn_forward.8} parent=0 // loop_footer
    %s13 = sadd.s32 1, %s9
  $region7: #{crnn_forward.8} parent=0 // loop_footer_branch
    %8 = sbr.rel target = $region3
  $region8: #{crnn_forward.8} parent=0 // loop_exit
    _

// kernel: crnn_forward.9
$region0: #{crnn_forward.9}
  #allocation0 [shape = 'u32[]', space=smem, size = 0x4, offset = 0x4, fixed_abs, tag = 'smem constant byte address 0x4 - core index']
  #allocation1 [shape = 'u32[144,128]{1,0:T(1,128)}', space=vmem, size = 0x12000, scoped, tag = 'internal scratch']
  %s0 = inlined_call_operand.vmem [shape: bf16[2,144,288], index: 0, kind: input, shape index: {}]
  %s1 = inlined_call_operand.vmem [shape: bf16[288,64], index: 1, kind: input, shape index: {}]
  %s2 = inlined_call_operand.vmem [shape: f32[1,64], index: 2, kind: input, shape index: {}]
  %s3 = inlined_call_operand.vmem [shape: f32[2,144,64], index: 3, kind: output, shape index: {}]
  %s4 = sld [smem:[#allocation0]]
  $region45: #{crnn_forward.9} parent=0
    _
  %s6 = ssub.s32 1, %s4
  %s7 = scalar_select 0, %s6, %s4
  loop: start=0, step=1, limit=4
  $region2: #{crnn_forward.9} parent=0 // loop_pre_header
    _
  $region3: #{crnn_forward.9} parent=0 // loop_header
    %s9 = sphi 0, %s13
    %p10 = scmp.ge.s32.totalorder %s9, 4
    %s19 = sphi 0, %s21
    %s22 = sphi 0, %s19
    %s23 = sphi 0, %s22
    %s39 = sphi 0, %s23
    %s43 = sphi 0, %s43
    %s45 = sphi 0, %s43
    %s46 = sphi 0, %s45
    %s60 = sphi 0, %s46
    %s64 = sphi 0, %s64
    %s66 = sphi 0, %s64
    %s67 = sphi 0, %s66
    %s81 = sphi 0, %s67
    %s87 = sphi 0, %s89
    %s90 = sphi 0, %s87
    %s91 = sphi 0, %s90
    %s107 = sphi 0, %s91
  $region4: #{crnn_forward.9} parent=0 // loop_header_branch
    %12 = sbr.rel (%p10) target = $region8
  $region5: #{crnn_forward.9} parent=0 // loop_body
    %s14 = ssub.s32 %s9, 1
    %s15 = ssub.s32 %s9, 2
    %s16 = sadd.s32 %s9, 1
    %s17 = ssub.s32 %s9, %s16
    %p18 = scmp.eq.s32.totalorder %s17, 0
    %s20 = sadd.s32 %s19, 1
    %s21 = scalar_select %p18, %s19, %s20
    %p24 = pneg %p18
    %p25 = scmp.eq.s32.totalorder %s9, 1
    %p26 = por %p24, %p25
    %p27 = scmp.ne.s32.totalorder %s19, %s22
    %p28 = scmp.eq.s32.totalorder %s9, 0
    %p29 = por %p27, %p28
    %p30 = scmp.ne.s32.totalorder %s19, %s22
    %p31 = scmp.eq.s32.totalorder %s14, 1
    %p32 = por %p30, %p31
    %p33 = scmp.ne.s32.totalorder %s22, %s23
    %p34 = scmp.eq.s32.totalorder %s14, 0
    %p35 = por %p33, %p34
    %p36 = scmp.ne.s32.totalorder %s22, %s23
    %p37 = scmp.eq.s32.totalorder %s15, 1
    %p38 = por %p36, %p37
    %p40 = scmp.ne.s32.totalorder %s23, %s39
    %p41 = scmp.eq.s32.totalorder %s15, 0
    %p42 = por %p40, %p41
    %s44 = sadd.s32 %s43, 1
    %p47 = scmp.eq.s32.totalorder %s9, 1
    %p48 = scmp.ne.s32.totalorder %s43, %s45
    %p49 = scmp.eq.s32.totalorder %s9, 0
    %p50 = por %p48, %p49
    %p51 = scmp.ne.s32.totalorder %s43, %s45
    %p52 = scmp.eq.s32.totalorder %s14, 1
    %p53 = por %p51, %p52
    %p54 = scmp.ne.s32.totalorder %s45, %s46
    %p55 = scmp.eq.s32.totalorder %s14, 0
    %p56 = por %p54, %p55
    %p57 = scmp.ne.s32.totalorder %s45, %s46
    %p58 = scmp.eq.s32.totalorder %s15, 1
    %p59 = por %p57, %p58
    %p61 = scmp.ne.s32.totalorder %s46, %s60
    %p62 = scmp.eq.s32.totalorder %s15, 0
    %p63 = por %p61, %p62
    %s65 = sadd.s32 %s64, 1
    %p68 = scmp.eq.s32.totalorder %s9, 1
    %p69 = scmp.ne.s32.totalorder %s64, %s66
    %p70 = scmp.eq.s32.totalorder %s9, 0
    %p71 = por %p69, %p70
    %p72 = scmp.ne.s32.totalorder %s64, %s66
    %p73 = scmp.eq.s32.totalorder %s14, 1
    %p74 = por %p72, %p73
    %p75 = scmp.ne.s32.totalorder %s66, %s67
    %p76 = scmp.eq.s32.totalorder %s14, 0
    %p77 = por %p75, %p76
    %p78 = scmp.ne.s32.totalorder %s66, %s67
    %p79 = scmp.eq.s32.totalorder %s15, 1
    %p80 = por %p78, %p79
    %p82 = scmp.ne.s32.totalorder %s67, %s81
    %p83 = scmp.eq.s32.totalorder %s15, 0
    %p84 = por %p82, %p83
    %s85 = ssub.s32 %s9, %s16
    %p86 = scmp.eq.s32.totalorder %s85, 0
    %s88 = sadd.s32 %s87, 1
    %s89 = scalar_select %p86, %s87, %s88
    %p92 = pneg %p86
    %p93 = scmp.eq.s32.totalorder %s9, 1
    %p94 = por %p92, %p93
    %p95 = scmp.ne.s32.totalorder %s87, %s90
    %p96 = scmp.eq.s32.totalorder %s9, 0
    %p97 = por %p95, %p96
    %p98 = scmp.ne.s32.totalorder %s87, %s90
    %p99 = scmp.eq.s32.totalorder %s14, 1
    %p100 = por %p98, %p99
    %p101 = scmp.ne.s32.totalorder %s90, %s91
    %p102 = scmp.eq.s32.totalorder %s14, 0
    %p103 = por %p101, %p102
    %p104 = scmp.ne.s32.totalorder %s90, %s91
    %p105 = scmp.eq.s32.totalorder %s15, 1
    %p106 = por %p104, %p105
    %p108 = scmp.ne.s32.totalorder %s91, %s107
    %p109 = scmp.eq.s32.totalorder %s15, 0
    %p110 = por %p108, %p109
    %p111 = scmp.le.s32.totalorder 1, %s9
    %p112 = scmp.lt.s32.totalorder %s9, 3
    %p113 = pnand %p111, %p112
    %p114 = pneg %p113
    // Predicated region
    $region9: #{crnn_forward.9} parent=5 // pred_check
      _
    $region10: #{crnn_forward.9} parent=5 // pred_check_branch
      %116 = sbr.rel (%p113) target = $region12
    $region11: #{crnn_forward.9} parent=5 // pred_region
      %s117 = ssub.s32 %s9, 1
      // Predicated region
      $region13: #{crnn_forward.9} parent=11 // pred_check
        %p118 = pneg %p56
      $region14: #{crnn_forward.9} parent=11 // pred_check_branch
        %120 = sbr.rel (%p118) target = $region16
      $region15: #{crnn_forward.9} parent=11 // pred_region
        _
      $region16: #{crnn_forward.9} parent=11 // pred_fallthru
        _
      // Predicated region
      $region17: #{crnn_forward.9} parent=11 // pred_check
        %p121 = pneg %p77
      $region18: #{crnn_forward.9} parent=11 // pred_check_branch
        %123 = sbr.rel (%p121) target = $region20
      $region19: #{crnn_forward.9} parent=11 // pred_region
        _
      $region20: #{crnn_forward.9} parent=11 // pred_fallthru
        _
    $region12: #{crnn_forward.9} parent=5 // pred_fallthru
      _
    %p124 = scmp.lt.s32.totalorder %s9, 2
    // Predicated region
    $region21: #{crnn_forward.9} parent=5 // pred_check
      %p125 = pneg %p124
    $region22: #{crnn_forward.9} parent=5 // pred_check_branch
      %127 = sbr.rel (%p125) target = $region24
    $region23: #{crnn_forward.9} parent=5 // pred_region
      // Predicated region
      $region25: #{crnn_forward.9} parent=23 // pred_check
        %p128 = pneg %p29
      $region26: #{crnn_forward.9} parent=23 // pred_check_branch
        %130 = sbr.rel (%p128) target = $region28
      $region27: #{crnn_forward.9} parent=23 // pred_region
        %p131 = scmp.lt.s32.totalorder %s9, 1
        %s132 = scalar_select %p131, %s9, 1
        %s133 = smul.addr %s132, 54
        %s134 = smul.addr %s133, 4
        %s135 = scalar_lea.vmem %s0, %s134
      $region28: #{crnn_forward.9} parent=23 // pred_fallthru
        _
    $region24: #{crnn_forward.9} parent=5 // pred_fallthru
      _
    %p136 = scmp.le.s32.totalorder 1, %s9
    %p137 = scmp.lt.s32.totalorder %s9, 3
    %p138 = pnand %p136, %p137
    %p139 = pneg %p138
    // Predicated region
    $region29: #{crnn_forward.9} parent=5 // pred_check
      _
    $region30: #{crnn_forward.9} parent=5 // pred_check_branch
      %141 = sbr.rel (%p138) target = $region32
    $region31: #{crnn_forward.9} parent=5 // pred_region
      %s142 = ssub.s32 %s9, 1
      %p143 = scmp.lt.s32.totalorder %s14, 1
      %s144 = scalar_select %p143, %s14, 1
      %s145 = smul.addr %s144, 54
      %s146 = smul.addr %s145, 4
      %s147 = scalar_lea.vmem %s0, %s146
      %p148 = pneg %p35
      %p149 = pneg %p32
      %p150 = pneg %p56
      %p151 = pneg %p53
      %p152 = pneg %p77
      %p153 = pneg %p74
      %p154 = pneg %p103
      %p155 = pneg %p100
      %p156 = scmp.lt.s32.totalorder %s14, 1
      %s157 = scalar_select %p156, %s14, 1
      %s158 = smul.addr %s157, 18
      %s159 = smul.addr %s158, 8
      %s160 = scalar_lea.vmem %s3, %s159
      %p161 = scmp.lt.s32.totalorder %s14, 1
      %s162 = scalar_select %p161, %s14, 1
      %s163 = smul.addr %s162, 54
      %s164 = smul.addr %s163, 4
      %s165 = scalar_lea.vmem %s0, %s164
      %p166 = scmp.lt.s32.totalorder %s14, 1
      %s167 = scalar_select %p166, %s14, 1
      %s168 = smul.addr %s167, 18
      %s169 = smul.addr %s168, 8
      %s170 = scalar_lea.vmem %s3, %s169
      %v172 = vld [vmem:[%s165] sm:$0xff]
      %v173 = vld [vmem:[%s165 + $0x8] sm:$0xf]
      %v174 = vld [vmem:[%s165 + $0xc] sm:$0xff]
      %v175 = vld [vmem:[%s165 + $0x14] sm:$0xf]
      %v176 = vld [vmem:[%s165 + $0x18] sm:$0xff]
      %v177 = vld [vmem:[%s165 + $0x20] sm:$0xf]
      %v178 = vld [vmem:[%s165 + $0x24] sm:$0xff]
      %v179 = vld [vmem:[%s165 + $0x2c] sm:$0xf]
      %v180 = vld [vmem:[%s165 + $0x30] sm:$0xff]
      %v181 = vld [vmem:[%s165 + $0x38] sm:$0xf]
      %v182 = vld [vmem:[%s165 + $0x3c] sm:$0xff]
      %v183 = vld [vmem:[%s165 + $0x44] sm:$0xf]
      %v184 = vld [vmem:[%s165 + $0x48] sm:$0xff]
      %v185 = vld [vmem:[%s165 + $0x50] sm:$0xf]
      %v186 = vld [vmem:[%s165 + $0x54] sm:$0xff]
      %v187 = vld [vmem:[%s165 + $0x5c] sm:$0xf]
      %v188 = vld [vmem:[%s165 + $0x60] sm:$0xff]
      %v189 = vld [vmem:[%s165 + $0x68] sm:$0xf]
      %v190 = vld [vmem:[%s165 + $0x6c] sm:$0xff]
      %v191 = vld [vmem:[%s165 + $0x74] sm:$0xf]
      %v192 = vld [vmem:[%s165 + $0x78] sm:$0xff]
      %v193 = vld [vmem:[%s165 + $0x80] sm:$0xf]
      %v194 = vld [vmem:[%s165 + $0x84] sm:$0xff]
      %v195 = vld [vmem:[%s165 + $0x8c] sm:$0xf]
      %v196 = vld [vmem:[%s165 + $0x90] sm:$0xff]
      %v197 = vld [vmem:[%s165 + $0x98] sm:$0xf]
      %v198 = vld [vmem:[%s165 + $0x9c] sm:$0xff]
      %v199 = vld [vmem:[%s165 + $0xa4] sm:$0xf]
      %v200 = vld [vmem:[%s165 + $0xa8] sm:$0xff]
      %v201 = vld [vmem:[%s165 + $0xb0] sm:$0xf]
      %v202 = vld [vmem:[%s165 + $0xb4] sm:$0xff]
      %v203 = vld [vmem:[%s165 + $0xbc] sm:$0xf]
      %v204 = vld [vmem:[%s165 + $0xc0] sm:$0xff]
      %v205 = vld [vmem:[%s165 + $0xc8] sm:$0xf]
      %v206 = vld [vmem:[%s165 + $0xcc] sm:$0xff]
      %v207 = vld [vmem:[%s165 + $0xd4] sm:$0xf]
      %v208 = vld [vmem:[%s1] sm:$0xf]
      %v209 = vld [vmem:[%s1 + $0x4] sm:$0xf]
      %v210 = vld [vmem:[%s1 + $0x8] sm:$0xf]
      %v211 = vld [vmem:[%s1 + $0xc] sm:$0xf]
      %v212 = vld [vmem:[%s1 + $0x10] sm:$0xf]
      %v213 = vld [vmem:[%s1 + $0x14] sm:$0xf]
      %v214 = vld [vmem:[%s1 + $0x18] sm:$0xf]
      %v215 = vld [vmem:[%s1 + $0x1c] sm:$0xf]
      %v216 = vld [vmem:[%s1 + $0x20] sm:$0xf]
      %v217 = vld [vmem:[%s1 + $0x24] sm:$0xf]
      %v218 = vld [vmem:[%s1 + $0x28] sm:$0xf]
      %v219 = vld [vmem:[%s1 + $0x2c] sm:$0xf]
      %v220 = vld [vmem:[%s1 + $0x30] sm:$0xf]
      %v221 = vld [vmem:[%s1 + $0x34] sm:$0xf]
      %v222 = vld [vmem:[%s1 + $0x38] sm:$0xf]
      %v223 = vld [vmem:[%s1 + $0x3c] sm:$0xf]
      %v224 = vld [vmem:[%s1 + $0x40] sm:$0xf]
      %v225 = vld [vmem:[%s1 + $0x44] sm:$0xf]
      %v226 = vld [vmem:[%s1 + $0x48] sm:$0xf]
      %v227 = vld [vmem:[%s1 + $0x4c] sm:$0xf]
      %v228 = vld [vmem:[%s1 + $0x50] sm:$0xf]
      %v229 = vld [vmem:[%s1 + $0x54] sm:$0xf]
      %v230 = vld [vmem:[%s1 + $0x58] sm:$0xf]
      %v231 = vld [vmem:[%s1 + $0x5c] sm:$0xf]
      %v232 = vld [vmem:[%s1 + $0x60] sm:$0xf]
      %v233 = vld [vmem:[%s1 + $0x64] sm:$0xf]
      %v234 = vld [vmem:[%s1 + $0x68] sm:$0xf]
      %v235 = vld [vmem:[%s1 + $0x6c] sm:$0xf]
      %v236 = vld [vmem:[%s1 + $0x70] sm:$0xf]
      %v237 = vld [vmem:[%s1 + $0x74] sm:$0xf]
      %v238 = vld [vmem:[%s1 + $0x78] sm:$0xf]
      %v239 = vld [vmem:[%s1 + $0x7c] sm:$0xf]
      %v240 = vld [vmem:[%s1 + $0x80] sm:$0xf]
      %v241 = vld [vmem:[%s1 + $0x84] sm:$0xf]
      %v242 = vld [vmem:[%s1 + $0x88] sm:$0xf]
      %v243 = vld [vmem:[%s1 + $0x8c] sm:$0xf]
      %v244 = vld [vmem:[%s2] sm:$0x1]
      %v246 = vlaneseq
      %v247 = vshrl.u32 %v246, 7
      %v248 = vsub.s32 0, %v247
      %v249 = vrot.slane %v244, %v248
      %v287 = vunpack.c.l.b16 %v172
      %v288 = vunpack.c.h.b16 %v172
      %v289 = vunpack.c.l.b16 %v173
      %v290 = vunpack.c.l.b16 %v174
      %v291 = vunpack.c.h.b16 %v174
      %v292 = vunpack.c.l.b16 %v175
      %v293 = vunpack.c.l.b16 %v176
      %v294 = vunpack.c.h.b16 %v176
      %v295 = vunpack.c.l.b16 %v177
      %v296 = vunpack.c.l.b16 %v178
      %v297 = vunpack.c.h.b16 %v178
      %v298 = vunpack.c.l.b16 %v179
      %v299 = vunpack.c.l.b16 %v180
      %v300 = vunpack.c.h.b16 %v180
      %v301 = vunpack.c.l.b16 %v181
      %v302 = vunpack.c.l.b16 %v182
      %v303 = vunpack.c.h.b16 %v182
      %v304 = vunpack.c.l.b16 %v183
      %v305 = vunpack.c.l.b16 %v184
      %v306 = vunpack.c.h.b16 %v184
      %v307 = vunpack.c.l.b16 %v185
      %v308 = vunpack.c.l.b16 %v186
      %v309 = vunpack.c.h.b16 %v186
      %v310 = vunpack.c.l.b16 %v187
      %v311 = vunpack.c.l.b16 %v188
      %v312 = vunpack.c.h.b16 %v188
      %v313 = vunpack.c.l.b16 %v189
      %v314 = vunpack.c.l.b16 %v190
      %v315 = vunpack.c.h.b16 %v190
      %v316 = vunpack.c.l.b16 %v191
      %v317 = vunpack.c.l.b16 %v192
      %v318 = vunpack.c.h.b16 %v192
      %v319 = vunpack.c.l.b16 %v193
      %v320 = vunpack.c.l.b16 %v194
      %v321 = vunpack.c.h.b16 %v194
      %v322 = vunpack.c.l.b16 %v195
      %v323 = vunpack.c.l.b16 %v196
      %v324 = vunpack.c.h.b16 %v196
      %v325 = vunpack.c.l.b16 %v197
      %v326 = vunpack.c.l.b16 %v198
      %v327 = vunpack.c.h.b16 %v198
      %v328 = vunpack.c.l.b16 %v199
      %v329 = vunpack.c.l.b16 %v200
      %v330 = vunpack.c.h.b16 %v200
      %v331 = vunpack.c.l.b16 %v201
      %v332 = vunpack.c.l.b16 %v202
      %v333 = vunpack.c.h.b16 %v202
      %v334 = vunpack.c.l.b16 %v203
      %v335 = vunpack.c.l.b16 %v204
      %v336 = vunpack.c.h.b16 %v204
      %v337 = vunpack.c.l.b16 %v205
      %v338 = vunpack.c.l.b16 %v206
      %v339 = vunpack.c.h.b16 %v206
      %v340 = vunpack.c.l.b16 %v207
      %v341 = vpack.c.b16 %v290, %v287
      %v342 = vpack.c.b16 %v291, %v288
      %v343 = vpack.c.b16 %v292, %v289
      %v344 = vpack.c.b16 %v296, %v293
      %v345 = vpack.c.b16 %v297, %v294
      %v346 = vpack.c.b16 %v298, %v295
      %v347 = vpack.c.b16 %v302, %v299
      %v348 = vpack.c.b16 %v303, %v300
      %v349 = vpack.c.b16 %v304, %v301
      %v350 = vpack.c.b16 %v308, %v305
      %v351 = vpack.c.b16 %v309, %v306
      %v352 = vpack.c.b16 %v310, %v307
      %v353 = vpack.c.b16 %v314, %v311
      %v354 = vpack.c.b16 %v315, %v312
      %v355 = vpack.c.b16 %v316, %v313
      %v356 = vpack.c.b16 %v320, %v317
      %v357 = vpack.c.b16 %v321, %v318
      %v358 = vpack.c.b16 %v322, %v319
      %v359 = vpack.c.b16 %v326, %v323
      %v360 = vpack.c.b16 %v327, %v324
      %v361 = vpack.c.b16 %v328, %v325
      %v362 = vpack.c.b16 %v332, %v329
      %v363 = vpack.c.b16 %v333, %v330
      %v364 = vpack.c.b16 %v334, %v331
      %v365 = vpack.c.b16 %v338, %v335
      %v366 = vpack.c.b16 %v339, %v336
      %v367 = vpack.c.b16 %v340, %v337
      %v422 = vunpack.c.l.b16 %v208
      %v423 = vunpack.c.l.b16 %v209
      %v424 = vunpack.c.l.b16 %v210
      %v425 = vunpack.c.l.b16 %v211
      %v426 = vunpack.c.l.b16 %v212
      %v427 = vunpack.c.l.b16 %v213
      %v428 = vunpack.c.l.b16 %v214
      %v429 = vunpack.c.l.b16 %v215
      %v430 = vunpack.c.l.b16 %v216
      %v431 = vunpack.c.l.b16 %v217
      %v432 = vunpack.c.l.b16 %v218
      %v433 = vunpack.c.l.b16 %v219
      %v434 = vunpack.c.l.b16 %v220
      %v435 = vunpack.c.l.b16 %v221
      %v436 = vunpack.c.l.b16 %v222
      %v437 = vunpack.c.l.b16 %v223
      %v438 = vunpack.c.l.b16 %v224
      %v439 = vunpack.c.l.b16 %v225
      %v440 = vunpack.c.l.b16 %v226
      %v441 = vunpack.c.l.b16 %v227
      %v442 = vunpack.c.l.b16 %v228
      %v443 = vunpack.c.l.b16 %v229
      %v444 = vunpack.c.l.b16 %v230
      %v445 = vunpack.c.l.b16 %v231
      %v446 = vunpack.c.l.b16 %v232
      %v447 = vunpack.c.l.b16 %v233
      %v448 = vunpack.c.l.b16 %v234
      %v449 = vunpack.c.l.b16 %v235
      %v450 = vunpack.c.l.b16 %v236
      %v451 = vunpack.c.l.b16 %v237
      %v452 = vunpack.c.l.b16 %v238
      %v453 = vunpack.c.l.b16 %v239
      %v454 = vunpack.c.l.b16 %v240
      %v455 = vunpack.c.l.b16 %v241
      %v456 = vunpack.c.l.b16 %v242
      %v457 = vunpack.c.l.b16 %v243
      %v458 = vpack.c.b16 %v423, %v422
      %v459 = vpack.c.b16 %v425, %v424
      %v460 = vpack.c.b16 %v427, %v426
      %v461 = vpack.c.b16 %v429, %v428
      %v462 = vpack.c.b16 %v431, %v430
      %v463 = vpack.c.b16 %v433, %v432
      %v464 = vpack.c.b16 %v435, %v434
      %v465 = vpack.c.b16 %v437, %v436
      %v466 = vpack.c.b16 %v439, %v438
      %v467 = vpack.c.b16 %v441, %v440
      %v468 = vpack.c.b16 %v443, %v442
      %v469 = vpack.c.b16 %v445, %v444
      %v470 = vpack.c.b16 %v447, %v446
      %v471 = vpack.c.b16 %v449, %v448
      %v472 = vpack.c.b16 %v451, %v450
      %v473 = vpack.c.b16 %v453, %v452
      %v474 = vpack.c.b16 %v455, %v454
      %v475 = vpack.c.b16 %v457, %v456
      %vm494 = vcmask 261120
      %v496 = vsel %vm494, %v343, 0
      %v499 = vsel %vm494, %v346, 0
      %v502 = vsel %vm494, %v349, 0
      %v505 = vsel %vm494, %v352, 0
      %v508 = vsel %vm494, %v355, 0
      %v511 = vsel %vm494, %v358, 0
      %v514 = vsel %vm494, %v361, 0
      %v517 = vsel %vm494, %v364, 0
      %v520 = vsel %vm494, %v367, 0
      %522 = vmatprep.subr.bf16.mxu0 0
      %523 = vmatpush1.bf16.msra.mxu0 %v458
      %524 = vmatprep.subr.bf16.mxu0 0
      %525 = vmatpush1.bf16.msra.mxu0 %v459
      %526 = vmatprep.subr.bf16.mxu0 0
      %527 = vmatpush1.bf16.msra.mxu0 %v460
      %528 = vmatprep.subr.bf16.mxu0 0
      %529 = vmatpush1.bf16.msra.mxu0 %v461
      %530 = vmatprep.subr.bf16.mxu0 0
      %531 = vmatpush1.bf16.msra.mxu0 %v462
      %532 = vmatprep.subr.bf16.mxu0 0
      %533 = vmatpush1.bf16.msra.mxu0 %v463
      %534 = vmatprep.subr.bf16.mxu0 0
      %535 = vmatpush1.bf16.msra.mxu0 %v464
      %536 = vmatprep.subr.bf16.mxu0 0
      %537 = vmatpush1.bf16.msra.mxu0 %v465
      %538 = vmatprep.subr.bf16.mxu0 0
      %539 = vmatpush1.bf16.msra.mxu0 %v466
      %540 = vmatprep.subr.bf16.mxu0 0
      %541 = vmatpush1.bf16.msra.mxu0 %v467
      %542 = vmatprep.subr.bf16.mxu0 0
      %543 = vmatpush1.bf16.msra.mxu0 %v468
      %544 = vmatprep.subr.bf16.mxu0 0
      %545 = vmatpush1.bf16.msra.mxu0 %v469
      %546 = vmatprep.subr.bf16.mxu0 0
      %547 = vmatpush1.bf16.msra.mxu0 %v470
      %548 = vmatprep.subr.bf16.mxu0 0
      %549 = vmatpush1.bf16.msra.mxu0 %v471
      %550 = vmatprep.subr.bf16.mxu0 0
      %551 = vmatpush1.bf16.msra.mxu0 %v472
      %552 = vmatprep.subr.bf16.mxu0 0
      %553 = vmatpush1.bf16.msra.mxu0 %v473
      %554 = vmatprep.mubr.bf16.mxu0 %v342
      %555 = vmatmul.mubr.bf16.gmra.mrb[0].mxu0 %v341
      %v556 = vpop.f32.mrb[0].mxu0
      %v557 = vadd.f32 %v249, %v556
      %v558 = vpop.f32.mrb[0].mxu0
      %v559 = vpop.f32.mrb[0].mxu0
      %v560 = vadd.f32 %v249, %v559
      %v561 = vpop.f32.mrb[0].mxu0
      %562 = vmatprep.mubr.bf16.mxu0 %v345
      %563 = vmatmul.mubr.bf16.gmra.mrb[0].mxu0 %v344
      %v564 = vpop.f32.mrb[0].mxu0
      %v565 = vadd.f32 %v249, %v564
      %v566 = vpop.f32.mrb[0].mxu0
      %v567 = vpop.f32.mrb[0].mxu0
      %v568 = vadd.f32 %v249, %v567
      %v569 = vpop.f32.mrb[0].mxu0
      %570 = vmatprep.mubr.bf16.mxu0 %v348
      %571 = vmatmul.mubr.bf16.gmra.mrb[0].mxu0 %v347
      %v572 = vpop.f32.mrb[0].mxu0
      %v573 = vadd.f32 %v249, %v572
      %v574 = vpop.f32.mrb[0].mxu0
      %v575 = vpop.f32.mrb[0].mxu0
      %v576 = vadd.f32 %v249, %v575
      %v577 = vpop.f32.mrb[0].mxu0
      %578 = vmatprep.mubr.bf16.mxu0 %v351
      %579 = vmatmul.mubr.bf16.gmra.mrb[0].mxu0 %v350
      %v580 = vpop.f32.mrb[0].mxu0
      %v581 = vadd.f32 %v249, %v580
      %v582 = vpop.f32.mrb[0].mxu0
      %v583 = vpop.f32.mrb[0].mxu0
      %v584 = vadd.f32 %v249, %v583
      %v585 = vpop.f32.mrb[0].mxu0
      %586 = vmatprep.mubr.bf16.mxu0 %v354
      %587 = vmatmul.mubr.bf16.gmra.mrb[0].mxu0 %v353
      %v588 = vpop.f32.mrb[0].mxu0
      %v589 = vadd.f32 %v249, %v588
      %v590 = vpop.f32.mrb[0].mxu0
      %v591 = vpop.f32.mrb[0].mxu0
      %v592 = vadd.f32 %v249, %v591
      %v593 = vpop.f32.mrb[0].mxu0
      %594 = vmatprep.mubr.bf16.mxu0 %v357
      %595 = vmatmul.mubr.bf16.gmra.mrb[0].mxu0 %v356
      %v596 = vpop.f32.mrb[0].mxu0
      %v597 = vadd.f32 %v249, %v596
      %v598 = vpop.f32.mrb[0].mxu0
      %v599 = vpop.f32.mrb[0].mxu0
      %v600 = vadd.f32 %v249, %v599
      %v601 = vpop.f32.mrb[0].mxu0
      %602 = vmatprep.mubr.bf16.mxu0 %v360
      %603 = vmatmul.mubr.bf16.gmra.mrb[0].mxu0 %v359
      %v604 = vpop.f32.mrb[0].mxu0
      %v605 = vadd.f32 %v249, %v604
      %v606 = vpop.f32.mrb[0].mxu0
      %v607 = vpop.f32.mrb[0].mxu0
      %v608 = vadd.f32 %v249, %v607
      %v609 = vpop.f32.mrb[0].mxu0
      %610 = vmatprep.mubr.bf16.mxu0 %v363
      %611 = vmatmul.mubr.bf16.gmra.mrb[0].mxu0 %v362
      %v612 = vpop.f32.mrb[0].mxu0
      %v613 = vadd.f32 %v249, %v612
      %v614 = vpop.f32.mrb[0].mxu0
      %v615 = vpop.f32.mrb[0].mxu0
      %v616 = vadd.f32 %v249, %v615
      %v617 = vpop.f32.mrb[0].mxu0
      %618 = vmatprep.mubr.bf16.mxu0 %v366
      %619 = vmatmul.mubr.bf16.gmra.mrb[0].mxu0 %v365
      %v620 = vpop.f32.mrb[0].mxu0
      %v621 = vadd.f32 %v249, %v620
      %v622 = vpop.f32.mrb[0].mxu0
      %v623 = vpop.f32.mrb[0].mxu0
      %v624 = vadd.f32 %v249, %v623
      %v625 = vpop.f32.mrb[0].mxu0
      %626 = vdwg.mxu0
      %627 = vmatprep.subr.bf16.mxu0 0
      %628 = vmatpush1.bf16.msra.mxu0 %v474
      %629 = vmatprep.subr.bf16.mxu0 0
      %630 = vmatpush1.bf16.msra.mxu0 %v475
      %631 = vmatprep.subr.bf16.mxu0 0
      %632 = vmatpush1.bf16.msra.mxu0 0
      %633 = vmatprep.subr.bf16.mxu0 0
      %634 = vmatpush1.bf16.msra.mxu0 0
      %635 = vmatprep.subr.bf16.mxu0 0
      %636 = vmatpush1.bf16.msra.mxu0 0
      %637 = vmatprep.subr.bf16.mxu0 0
      %638 = vmatpush1.bf16.msra.mxu0 0
      %639 = vmatprep.subr.bf16.mxu0 0
      %640 = vmatpush1.bf16.msra.mxu0 0
      %641 = vmatprep.subr.bf16.mxu0 0
      %642 = vmatpush1.bf16.msra.mxu0 0
      %643 = vmatprep.subr.bf16.mxu0 0
      %644 = vmatpush1.bf16.msra.mxu0 0
      %645 = vmatprep.subr.bf16.mxu0 0
      %646 = vmatpush1.bf16.msra.mxu0 0
      %647 = vmatprep.subr.bf16.mxu0 0
      %648 = vmatpush1.bf16.msra.mxu0 0
      %649 = vmatprep.subr.bf16.mxu0 0
      %650 = vmatpush1.bf16.msra.mxu0 0
      %651 = vmatprep.subr.bf16.mxu0 0
      %652 = vmatpush1.bf16.msra.mxu0 0
      %653 = vmatprep.subr.bf16.mxu0 0
      %654 = vmatpush1.bf16.msra.mxu0 0
      %655 = vmatprep.subr.bf16.mxu0 0
      %656 = vmatpush1.bf16.msra.mxu0 0
      %657 = vmatprep.subr.bf16.mxu0 0
      %658 = vmatpush1.bf16.msra.mxu0 0
      %659 = vmatprep.mubr.bf16.mxu0 0
      %660 = vmatmul.mubr.bf16.gmra.mrb[0].mxu0 %v496
      %v661 = vpop.f32.mrb[0].mxu0
      %v662 = vadd.f32 %v557, %v661
      %v663 = vpop.f32.mrb[0].mxu0
      %v664 = vpop.f32.mrb[0].mxu0
      %v665 = vadd.f32 %v560, %v664
      %v666 = vpop.f32.mrb[0].mxu0
      %667 = vmatprep.mubr.bf16.mxu0 0
      %668 = vmatmul.mubr.bf16.gmra.mrb[0].mxu0 %v499
      %v669 = vpop.f32.mrb[0].mxu0
      %v670 = vadd.f32 %v565, %v669
      %v671 = vpop.f32.mrb[0].mxu0
      %v672 = vpop.f32.mrb[0].mxu0
      %v673 = vadd.f32 %v568, %v672
      %v674 = vpop.f32.mrb[0].mxu0
      %675 = vmatprep.mubr.bf16.mxu0 0
      %676 = vmatmul.mubr.bf16.gmra.mrb[0].mxu0 %v502
      %v677 = vpop.f32.mrb[0].mxu0
      %v678 = vadd.f32 %v573, %v677
      %v679 = vpop.f32.mrb[0].mxu0
      %v680 = vpop.f32.mrb[0].mxu0
      %v681 = vadd.f32 %v576, %v680
      %v682 = vpop.f32.mrb[0].mxu0
      %683 = vmatprep.mubr.bf16.mxu0 0
      %684 = vmatmul.mubr.bf16.gmra.mrb[0].mxu0 %v505
      %v685 = vpop.f32.mrb[0].mxu0
      %v686 = vadd.f32 %v581, %v685
      %v687 = vpop.f32.mrb[0].mxu0
      %v688 = vpop.f32.mrb[0].mxu0
      %v689 = vadd.f32 %v584, %v688
      %v690 = vpop.f32.mrb[0].mxu0
      %691 = vmatprep.mubr.bf16.mxu0 0
      %692 = vmatmul.mubr.bf16.gmra.mrb[0].mxu0 %v508
      %v693 = vpop.f32.mrb[0].mxu0
      %v694 = vadd.f32 %v589, %v693
      %v695 = vpop.f32.mrb[0].mxu0
      %v696 = vpop.f32.mrb[0].mxu0
      %v697 = vadd.f32 %v592, %v696
      %v698 = vpop.f32.mrb[0].mxu0
      %699 = vmatprep.mubr.bf16.mxu0 0
      %700 = vmatmul.mubr.bf16.gmra.mrb[0].mxu0 %v511
      %v701 = vpop.f32.mrb[0].mxu0
      %v702 = vadd.f32 %v597, %v701
      %v703 = vpop.f32.mrb[0].mxu0
      %v704 = vpop.f32.mrb[0].mxu0
      %v705 = vadd.f32 %v600, %v704
      %v706 = vpop.f32.mrb[0].mxu0
      %707 = vmatprep.mubr.bf16.mxu0 0
      %708 = vmatmul.mubr.bf16.gmra.mrb[0].mxu0 %v514
      %v709 = vpop.f32.mrb[0].mxu0
      %v710 = vadd.f32 %v605, %v709
      %v711 = vpop.f32.mrb[0].mxu0
      %v712 = vpop.f32.mrb[0].mxu0
      %v713 = vadd.f32 %v608, %v712
      %v714 = vpop.f32.mrb[0].mxu0
      %715 = vmatprep.mubr.bf16.mxu0 0
      %716 = vmatmul.mubr.bf16.gmra.mrb[0].mxu0 %v517
      %v717 = vpop.f32.mrb[0].mxu0
      %v718 = vadd.f32 %v613, %v717
      %v719 = vpop.f32.mrb[0].mxu0
      %v720 = vpop.f32.mrb[0].mxu0
      %v721 = vadd.f32 %v616, %v720
      %v722 = vpop.f32.mrb[0].mxu0
      %723 = vmatprep.mubr.bf16.mxu0 0
      %724 = vmatmul.mubr.bf16.gmra.mrb[0].mxu0 %v520
      %v725 = vpop.f32.mrb[0].mxu0
      %v726 = vadd.f32 %v621, %v725
      %v727 = vpop.f32.mrb[0].mxu0
      %v728 = vpop.f32.mrb[0].mxu0
      %v729 = vadd.f32 %v624, %v728
      %v730 = vpop.f32.mrb[0].mxu0
      %731 = vdwg.mxu0
      %vm732 = vcmask 523264
      %v733 = vsel %vm732, %v662, 0.0
      %v734 = vsel %vm732, %v665, 0.0
      %v735 = vadd.f32 %v733, %v734
      %v736 = vsel %vm732, %v670, 0.0
      %v737 = vadd.f32 %v735, %v736
      %v738 = vsel %vm732, %v673, 0.0
      %v739 = vadd.f32 %v737, %v738
      %v740 = vsel %vm732, %v678, 0.0
      %v741 = vadd.f32 %v739, %v740
      %v742 = vsel %vm732, %v681, 0.0
      %v743 = vadd.f32 %v741, %v742
      %v744 = vsel %vm732, %v686, 0.0
      %v745 = vadd.f32 %v743, %v744
      %v746 = vsel %vm732, %v689, 0.0
      %v747 = vadd.f32 %v745, %v746
      %v748 = vsel %vm732, %v694, 0.0
      %v749 = vadd.f32 %v747, %v748
      %v750 = vsel %vm732, %v697, 0.0
      %v751 = vadd.f32 %v749, %v750
      %v752 = vsel %vm732, %v702, 0.0
      %v753 = vadd.f32 %v751, %v752
      %v754 = vsel %vm732, %v705, 0.0
      %v755 = vadd.f32 %v753, %v754
      %v756 = vsel %vm732, %v710, 0.0
      %v757 = vadd.f32 %v755, %v756
      %v758 = vsel %vm732, %v713, 0.0
      %v759 = vadd.f32 %v757, %v758
      %v760 = vsel %vm732, %v718, 0.0
      %v761 = vadd.f32 %v759, %v760
      %v762 = vsel %vm732, %v721, 0.0
      %v763 = vadd.f32 %v761, %v762
      %v764 = vsel %vm732, %v726, 0.0
      %v765 = vadd.f32 %v763, %v764
      %v766 = vsel %vm732, %v729, 0.0
      %v767 = vadd.f32 %v765, %v766
      %v768 = vrot.slane %v767, 4
      %v769 = vadd.f32 %v767, %v768
      %v770 = vrot.slane %v769, 2
      %v771 = vadd.f32 %v769, %v770
      %v772 = vrot.slane %v771, 1
      %v773 = vadd.f32 %v771, %v772
      %v774 = vrcp.pop 144.0
      %v775 = vmul.f32 %v773, %v774
      %v776 = vsub.f32 %v662, %v775
      %v777 = vsub.f32 %v665, %v775
      %v778 = vsub.f32 %v670, %v775
      %v779 = vsub.f32 %v673, %v775
      %v780 = vsub.f32 %v678, %v775
      %v781 = vsub.f32 %v681, %v775
      %v782 = vsub.f32 %v686, %v775
      %v783 = vsub.f32 %v689, %v775
      %v784 = vsub.f32 %v694, %v775
      %v785 = vsub.f32 %v697, %v775
      %v786 = vsub.f32 %v702, %v775
      %v787 = vsub.f32 %v705, %v775
      %v788 = vsub.f32 %v710, %v775
      %v789 = vsub.f32 %v713, %v775
      %v790 = vsub.f32 %v718, %v775
      %v791 = vsub.f32 %v721, %v775
      %v792 = vsub.f32 %v726, %v775
      %v793 = vsub.f32 %v729, %v775
      %v794 = vmul.f32 %v776, %v776
      %v795 = vmul.f32 %v777, %v777
      %v796 = vmul.f32 %v778, %v778
      %v797 = vmul.f32 %v779, %v779
      %v798 = vmul.f32 %v780, %v780
      %v799 = vmul.f32 %v781, %v781
      %v800 = vmul.f32 %v782, %v782
      %v801 = vmul.f32 %v783, %v783
      %v802 = vmul.f32 %v784, %v784
      %v803 = vmul.f32 %v785, %v785
      %v804 = vmul.f32 %v786, %v786
      %v805 = vmul.f32 %v787, %v787
      %v806 = vmul.f32 %v788, %v788
      %v807 = vmul.f32 %v789, %v789
      %v808 = vmul.f32 %v790, %v790
      %v809 = vmul.f32 %v791, %v791
      %v810 = vmul.f32 %v792, %v792
      %v811 = vmul.f32 %v793, %v793
      %v812 = vsel %vm732, %v794, 0.0
      %v813 = vsel %vm732, %v795, 0.0
      %v814 = vadd.f32 %v812, %v813
      %v815 = vsel %vm732, %v796, 0.0
      %v816 = vadd.f32 %v814, %v815
      %v817 = vsel %vm732, %v797, 0.0
      %v818 = vadd.f32 %v816, %v817
      %v819 = vsel %vm732, %v798, 0.0
      %v820 = vadd.f32 %v818, %v819
      %v821 = vsel %vm732, %v799, 0.0
      %v822 = vadd.f32 %v820, %v821
      %v823 = vsel %vm732, %v800, 0.0
      %v824 = vadd.f32 %v822, %v823
      %v825 = vsel %vm732, %v801, 0.0
      %v826 = vadd.f32 %v824, %v825
      %v827 = vsel %vm732, %v802, 0.0
      %v828 = vadd.f32 %v826, %v827
      %v829 = vsel %vm732, %v803, 0.0
      %v830 = vadd.f32 %v828, %v829
      %v831 = vsel %vm732, %v804, 0.0
      %v832 = vadd.f32 %v830, %v831
      %v833 = vsel %vm732, %v805, 0.0
      %v834 = vadd.f32 %v832, %v833
      %v835 = vsel %vm732, %v806, 0.0
      %v836 = vadd.f32 %v834, %v835
      %v837 = vsel %vm732, %v807, 0.0
      %v838 = vadd.f32 %v836, %v837
      %v839 = vsel %vm732, %v808, 0.0
      %v840 = vadd.f32 %v838, %v839
      %v841 = vsel %vm732, %v809, 0.0
      %v842 = vadd.f32 %v840, %v841
      %v843 = vsel %vm732, %v810, 0.0
      %v844 = vadd.f32 %v842, %v843
      %v845 = vsel %vm732, %v811, 0.0
      %v846 = vadd.f32 %v844, %v845
      %v847 = vrot.slane %v846, 4
      %v848 = vadd.f32 %v846, %v847
      %v849 = vrot.slane %v848, 2
      %v850 = vadd.f32 %v848, %v849
      %v851 = vrot.slane %v850, 1
      %v852 = vadd.f32 %v850, %v851
      %v853 = vmul.f32 %v852, %v774
      %v854 = vadd.f32 %v853, 1e-05
      %v855 = vrsqrt.pop %v854
      %v856 = vmul.f32 %v776, %v855
      %v857 = vmul.f32 %v777, %v855
      %v858 = vmul.f32 %v778, %v855
      %v859 = vmul.f32 %v779, %v855
      %v860 = vmul.f32 %v780, %v855
      %v861 = vmul.f32 %v781, %v855
      %v862 = vmul.f32 %v782, %v855
      %v863 = vmul.f32 %v783, %v855
      %v864 = vmul.f32 %v784, %v855
      %v865 = vmul.f32 %v785, %v855
      %v866 = vmul.f32 %v786, %v855
      %v867 = vmul.f32 %v787, %v855
      %v868 = vmul.f32 %v788, %v855
      %v869 = vmul.f32 %v789, %v855
      %v870 = vmul.f32 %v790, %v855
      %v871 = vmul.f32 %v791, %v855
      %v872 = vmul.f32 %v792, %v855
      %v873 = vmul.f32 %v793, %v855
      %vm874 = vcmp.ge.f32.partialorder %v856, 0.0
      %vm875 = vcmp.ge.f32.partialorder %v857, 0.0
      %vm876 = vcmp.ge.f32.partialorder %v858, 0.0
      %vm877 = vcmp.ge.f32.partialorder %v859, 0.0
      %vm878 = vcmp.ge.f32.partialorder %v860, 0.0
      %vm879 = vcmp.ge.f32.partialorder %v861, 0.0
      %vm880 = vcmp.ge.f32.partialorder %v862, 0.0
      %vm881 = vcmp.ge.f32.partialorder %v863, 0.0
      %vm882 = vcmp.ge.f32.partialorder %v864, 0.0
      %vm883 = vcmp.ge.f32.partialorder %v865, 0.0
      %vm884 = vcmp.ge.f32.partialorder %v866, 0.0
      %vm885 = vcmp.ge.f32.partialorder %v867, 0.0
      %vm886 = vcmp.ge.f32.partialorder %v868, 0.0
      %vm887 = vcmp.ge.f32.partialorder %v869, 0.0
      %vm888 = vcmp.ge.f32.partialorder %v870, 0.0
      %vm889 = vcmp.ge.f32.partialorder %v871, 0.0
      %vm890 = vcmp.ge.f32.partialorder %v872, 0.0
      %vm891 = vcmp.ge.f32.partialorder %v873, 0.0
      %v892 = vmul.f32 %v856, 0.01
      %v893 = vmul.f32 %v857, 0.01
      %v894 = vmul.f32 %v858, 0.01
      %v895 = vmul.f32 %v859, 0.01
      %v896 = vmul.f32 %v860, 0.01
      %v897 = vmul.f32 %v861, 0.01
      %v898 = vmul.f32 %v862, 0.01
      %v899 = vmul.f32 %v863, 0.01
      %v900 = vmul.f32 %v864, 0.01
      %v901 = vmul.f32 %v865, 0.01
      %v902 = vmul.f32 %v866, 0.01
      %v903 = vmul.f32 %v867, 0.01
      %v904 = vmul.f32 %v868, 0.01
      %v905 = vmul.f32 %v869, 0.01
      %v906 = vmul.f32 %v870, 0.01
      %v907 = vmul.f32 %v871, 0.01
      %v908 = vmul.f32 %v872, 0.01
      %v909 = vmul.f32 %v873, 0.01
      %v910 = vsel %vm874, %v856, %v892
      %v911 = vsel %vm875, %v857, %v893
      %v912 = vsel %vm876, %v858, %v894
      %v913 = vsel %vm877, %v859, %v895
      %v914 = vsel %vm878, %v860, %v896
      %v915 = vsel %vm879, %v861, %v897
      %v916 = vsel %vm880, %v862, %v898
      %v917 = vsel %vm881, %v863, %v899
      %v918 = vsel %vm882, %v864, %v900
      %v919 = vsel %vm883, %v865, %v901
      %v920 = vsel %vm884, %v866, %v902
      %v921 = vsel %vm885, %v867, %v903
      %v922 = vsel %vm886, %v868, %v904
      %v923 = vsel %vm887, %v869, %v905
      %v924 = vsel %vm888, %v870, %v906
      %v925 = vsel %vm889, %v871, %v907
      %v926 = vsel %vm890, %v872, %v908
      %v927 = vsel %vm891, %v873, %v909
      %928 = vst.msk [vmem:[%s170] sm:$0xff] %vm732, %v910
      %929 = vst.msk [vmem:[%s170 + $0x8] sm:$0xff] %vm732, %v911
      %930 = vst.msk [vmem:[%s170 + $0x10] sm:$0xff] %vm732, %v912
      %931 = vst.msk [vmem:[%s170 + $0x18] sm:$0xff] %vm732, %v913
      %932 = vst.msk [vmem:[%s170 + $0x20] sm:$0xff] %vm732, %v914
      %933 = vst.msk [vmem:[%s170 + $0x28] sm:$0xff] %vm732, %v915
      %934 = vst.msk [vmem:[%s170 + $0x30] sm:$0xff] %vm732, %v916
      %935 = vst.msk [vmem:[%s170 + $0x38] sm:$0xff] %vm732, %v917
      %936 = vst.msk [vmem:[%s170 + $0x40] sm:$0xff] %vm732, %v918
      %937 = vst.msk [vmem:[%s170 + $0x48] sm:$0xff] %vm732, %v919
      %938 = vst.msk [vmem:[%s170 + $0x50] sm:$0xff] %vm732, %v920
      %939 = vst.msk [vmem:[%s170 + $0x58] sm:$0xff] %vm732, %v921
      %940 = vst.msk [vmem:[%s170 + $0x60] sm:$0xff] %vm732, %v922
      %941 = vst.msk [vmem:[%s170 + $0x68] sm:$0xff] %vm732, %v923
      %942 = vst.msk [vmem:[%s170 + $0x70] sm:$0xff] %vm732, %v924
      %943 = vst.msk [vmem:[%s170 + $0x78] sm:$0xff] %vm732, %v925
      %944 = vst.msk [vmem:[%s170 + $0x80] sm:$0xff] %vm732, %v926
      %945 = vst.msk [vmem:[%s170 + $0x88] sm:$0xff] %vm732, %v927
      %p946 = scmp.lt.s32.totalorder %s14, 1
      %s947 = scalar_select %p946, %s14, 1
      %s948 = smul.addr %s947, 18
      %s949 = smul.addr %s948, 8
      %s950 = scalar_lea.vmem %s3, %s949
      // Predicated region
      $region33: #{crnn_forward.9} parent=31 // pred_check
        %p951 = pneg %p100
      $region34: #{crnn_forward.9} parent=31 // pred_check_branch
        %953 = sbr.rel (%p951) target = $region36
      $region35: #{crnn_forward.9} parent=31 // pred_region
        _
      $region36: #{crnn_forward.9} parent=31 // pred_fallthru
        _
    $region32: #{crnn_forward.9} parent=5 // pred_fallthru
      _
    %p954 = scmp.le.s32.totalorder 2, %s9
    // Predicated region
    $region37: #{crnn_forward.9} parent=5 // pred_check
      %p955 = pneg %p954
    $region38: #{crnn_forward.9} parent=5 // pred_check_branch
      %957 = sbr.rel (%p955) target = $region40
    $region39: #{crnn_forward.9} parent=5 // pred_region
      %s958 = ssub.s32 %s9, 2
      // Predicated region
      $region41: #{crnn_forward.9} parent=39 // pred_check
        %p959 = pneg %p106
      $region42: #{crnn_forward.9} parent=39 // pred_check_branch
        %961 = sbr.rel (%p959) target = $region44
      $region43: #{crnn_forward.9} parent=39 // pred_region
        %p962 = scmp.lt.s32.totalorder %s15, 1
        %s963 = scalar_select %p962, %s15, 1
        %s964 = smul.addr %s963, 18
        %s965 = smul.addr %s964, 8
        %s966 = scalar_lea.vmem %s3, %s965
      $region44: #{crnn_forward.9} parent=39 // pred_fallthru
        _
    $region40: #{crnn_forward.9} parent=5 // pred_fallthru
      _
  $region6: #{crnn_forward.9} parent=0 // loop_footer
    %s13 = sadd.s32 1, %s9
  $region7: #{crnn_forward.9} parent=0 // loop_footer_branch
    %8 = sbr.rel target = $region3
  $region8: #{crnn_forward.9} parent=0 // loop_exit
    _

// kernel: crnn_forward.10
$region0: #{crnn_forward.10}
  #allocation0 [shape = 'u32[]', space=smem, size = 0x4, offset = 0x4, fixed_abs, tag = 'smem constant byte address 0x4 - core index']
  #allocation1 [shape = 'u32[144,128]{1,0:T(1,128)}', space=vmem, size = 0x12000, scoped, tag = 'internal scratch']
  %s0 = inlined_call_operand.vmem [shape: bf16[2,25,576], index: 0, kind: input, shape index: {}]
  %s1 = inlined_call_operand.vmem [shape: bf16[576,64], index: 1, kind: input, shape index: {}]
  %s2 = inlined_call_operand.vmem [shape: f32[1,64], index: 2, kind: input, shape index: {}]
  %s3 = inlined_call_operand.vmem [shape: f32[2,25,64], index: 3, kind: output, shape index: {}]
  %s4 = sld [smem:[#allocation0]]
  $region45: #{crnn_forward.10} parent=0
    _
  %s6 = ssub.s32 1, %s4
  %s7 = scalar_select 0, %s6, %s4
  loop: start=0, step=1, limit=4
  $region2: #{crnn_forward.10} parent=0 // loop_pre_header
    _
  $region3: #{crnn_forward.10} parent=0 // loop_header
    %s9 = sphi 0, %s13
    %p10 = scmp.ge.s32.totalorder %s9, 4
    %s19 = sphi 0, %s21
    %s22 = sphi 0, %s19
    %s23 = sphi 0, %s22
    %s39 = sphi 0, %s23
    %s43 = sphi 0, %s43
    %s45 = sphi 0, %s43
    %s46 = sphi 0, %s45
    %s60 = sphi 0, %s46
    %s64 = sphi 0, %s64
    %s66 = sphi 0, %s64
    %s67 = sphi 0, %s66
    %s81 = sphi 0, %s67
    %s87 = sphi 0, %s89
    %s90 = sphi 0, %s87
    %s91 = sphi 0, %s90
    %s107 = sphi 0, %s91
  $region4: #{crnn_forward.10} parent=0 // loop_header_branch
    %12 = sbr.rel (%p10) target = $region8
  $region5: #{crnn_forward.10} parent=0 // loop_body
    %s14 = ssub.s32 %s9, 1
    %s15 = ssub.s32 %s9, 2
    %s16 = sadd.s32 %s9, 1
    %s17 = ssub.s32 %s9, %s16
    %p18 = scmp.eq.s32.totalorder %s17, 0
    %s20 = sadd.s32 %s19, 1
    %s21 = scalar_select %p18, %s19, %s20
    %p24 = pneg %p18
    %p25 = scmp.eq.s32.totalorder %s9, 1
    %p26 = por %p24, %p25
    %p27 = scmp.ne.s32.totalorder %s19, %s22
    %p28 = scmp.eq.s32.totalorder %s9, 0
    %p29 = por %p27, %p28
    %p30 = scmp.ne.s32.totalorder %s19, %s22
    %p31 = scmp.eq.s32.totalorder %s14, 1
    %p32 = por %p30, %p31
    %p33 = scmp.ne.s32.totalorder %s22, %s23
    %p34 = scmp.eq.s32.totalorder %s14, 0
    %p35 = por %p33, %p34
    %p36 = scmp.ne.s32.totalorder %s22, %s23
    %p37 = scmp.eq.s32.totalorder %s15, 1
    %p38 = por %p36, %p37
    %p40 = scmp.ne.s32.totalorder %s23, %s39
    %p41 = scmp.eq.s32.totalorder %s15, 0
    %p42 = por %p40, %p41
    %s44 = sadd.s32 %s43, 1
    %p47 = scmp.eq.s32.totalorder %s9, 1
    %p48 = scmp.ne.s32.totalorder %s43, %s45
    %p49 = scmp.eq.s32.totalorder %s9, 0
    %p50 = por %p48, %p49
    %p51 = scmp.ne.s32.totalorder %s43, %s45
    %p52 = scmp.eq.s32.totalorder %s14, 1
    %p53 = por %p51, %p52
    %p54 = scmp.ne.s32.totalorder %s45, %s46
    %p55 = scmp.eq.s32.totalorder %s14, 0
    %p56 = por %p54, %p55
    %p57 = scmp.ne.s32.totalorder %s45, %s46
    %p58 = scmp.eq.s32.totalorder %s15, 1
    %p59 = por %p57, %p58
    %p61 = scmp.ne.s32.totalorder %s46, %s60
    %p62 = scmp.eq.s32.totalorder %s15, 0
    %p63 = por %p61, %p62
    %s65 = sadd.s32 %s64, 1
    %p68 = scmp.eq.s32.totalorder %s9, 1
    %p69 = scmp.ne.s32.totalorder %s64, %s66
    %p70 = scmp.eq.s32.totalorder %s9, 0
    %p71 = por %p69, %p70
    %p72 = scmp.ne.s32.totalorder %s64, %s66
    %p73 = scmp.eq.s32.totalorder %s14, 1
    %p74 = por %p72, %p73
    %p75 = scmp.ne.s32.totalorder %s66, %s67
    %p76 = scmp.eq.s32.totalorder %s14, 0
    %p77 = por %p75, %p76
    %p78 = scmp.ne.s32.totalorder %s66, %s67
    %p79 = scmp.eq.s32.totalorder %s15, 1
    %p80 = por %p78, %p79
    %p82 = scmp.ne.s32.totalorder %s67, %s81
    %p83 = scmp.eq.s32.totalorder %s15, 0
    %p84 = por %p82, %p83
    %s85 = ssub.s32 %s9, %s16
    %p86 = scmp.eq.s32.totalorder %s85, 0
    %s88 = sadd.s32 %s87, 1
    %s89 = scalar_select %p86, %s87, %s88
    %p92 = pneg %p86
    %p93 = scmp.eq.s32.totalorder %s9, 1
    %p94 = por %p92, %p93
    %p95 = scmp.ne.s32.totalorder %s87, %s90
    %p96 = scmp.eq.s32.totalorder %s9, 0
    %p97 = por %p95, %p96
    %p98 = scmp.ne.s32.totalorder %s87, %s90
    %p99 = scmp.eq.s32.totalorder %s14, 1
    %p100 = por %p98, %p99
    %p101 = scmp.ne.s32.totalorder %s90, %s91
    %p102 = scmp.eq.s32.totalorder %s14, 0
    %p103 = por %p101, %p102
    %p104 = scmp.ne.s32.totalorder %s90, %s91
    %p105 = scmp.eq.s32.totalorder %s15, 1
    %p106 = por %p104, %p105
    %p108 = scmp.ne.s32.totalorder %s91, %s107
    %p109 = scmp.eq.s32.totalorder %s15, 0
    %p110 = por %p108, %p109
    %p111 = scmp.le.s32.totalorder 1, %s9
    %p112 = scmp.lt.s32.totalorder %s9, 3
    %p113 = pnand %p111, %p112
    %p114 = pneg %p113
    // Predicated region
    $region9: #{crnn_forward.10} parent=5 // pred_check
      _
    $region10: #{crnn_forward.10} parent=5 // pred_check_branch
      %116 = sbr.rel (%p113) target = $region12
    $region11: #{crnn_forward.10} parent=5 // pred_region
      %s117 = ssub.s32 %s9, 1
      // Predicated region
      $region13: #{crnn_forward.10} parent=11 // pred_check
        %p118 = pneg %p56
      $region14: #{crnn_forward.10} parent=11 // pred_check_branch
        %120 = sbr.rel (%p118) target = $region16
      $region15: #{crnn_forward.10} parent=11 // pred_region
        _
      $region16: #{crnn_forward.10} parent=11 // pred_fallthru
        _
      // Predicated region
      $region17: #{crnn_forward.10} parent=11 // pred_check
        %p121 = pneg %p77
      $region18: #{crnn_forward.10} parent=11 // pred_check_branch
        %123 = sbr.rel (%p121) target = $region20
      $region19: #{crnn_forward.10} parent=11 // pred_region
        _
      $region20: #{crnn_forward.10} parent=11 // pred_fallthru
        _
    $region12: #{crnn_forward.10} parent=5 // pred_fallthru
      _
    %p124 = scmp.lt.s32.totalorder %s9, 2
    // Predicated region
    $region21: #{crnn_forward.10} parent=5 // pred_check
      %p125 = pneg %p124
    $region22: #{crnn_forward.10} parent=5 // pred_check_branch
      %127 = sbr.rel (%p125) target = $region24
    $region23: #{crnn_forward.10} parent=5 // pred_region
      // Predicated region
      $region25: #{crnn_forward.10} parent=23 // pred_check
        %p128 = pneg %p29
      $region26: #{crnn_forward.10} parent=23 // pred_check_branch
        %130 = sbr.rel (%p128) target = $region28
      $region27: #{crnn_forward.10} parent=23 // pred_region
        %p131 = scmp.lt.s32.totalorder %s9, 1
        %s132 = scalar_select %p131, %s9, 1
        %s133 = smul.addr %s132, 20
        %s134 = smul.addr %s133, 4
        %s135 = scalar_lea.vmem %s0, %s134
      $region28: #{crnn_forward.10} parent=23 // pred_fallthru
        _
    $region24: #{crnn_forward.10} parent=5 // pred_fallthru
      _
    %p136 = scmp.le.s32.totalorder 1, %s9
    %p137 = scmp.lt.s32.totalorder %s9, 3
    %p138 = pnand %p136, %p137
    %p139 = pneg %p138
    // Predicated region
    $region29: #{crnn_forward.10} parent=5 // pred_check
      _
    $region30: #{crnn_forward.10} parent=5 // pred_check_branch
      %141 = sbr.rel (%p138) target = $region32
    $region31: #{crnn_forward.10} parent=5 // pred_region
      %s142 = ssub.s32 %s9, 1
      %p143 = scmp.lt.s32.totalorder %s14, 1
      %s144 = scalar_select %p143, %s14, 1
      %s145 = smul.addr %s144, 20
      %s146 = smul.addr %s145, 4
      %s147 = scalar_lea.vmem %s0, %s146
      %p148 = pneg %p35
      %p149 = pneg %p32
      %p150 = pneg %p56
      %p151 = pneg %p53
      %p152 = pneg %p77
      %p153 = pneg %p74
      %p154 = pneg %p103
      %p155 = pneg %p100
      %p156 = scmp.lt.s32.totalorder %s14, 1
      %s157 = scalar_select %p156, %s14, 1
      %s158 = smul.addr %s157, 4
      %s159 = smul.addr %s158, 8
      %s160 = scalar_lea.vmem %s3, %s159
      %p161 = scmp.lt.s32.totalorder %s14, 1
      %s162 = scalar_select %p161, %s14, 1
      %s163 = smul.addr %s162, 20
      %s164 = smul.addr %s163, 4
      %s165 = scalar_lea.vmem %s0, %s164
      %p166 = scmp.lt.s32.totalorder %s14, 1
      %s167 = scalar_select %p166, %s14, 1
      %s168 = smul.addr %s167, 4
      %s169 = smul.addr %s168, 8
      %s170 = scalar_lea.vmem %s3, %s169
      %v172 = vld [vmem:[%s165] sm:$0xff]
      %v173 = vld [vmem:[%s165 + $0x8] sm:$0xff]
      %v174 = vld [vmem:[%s165 + $0x10] sm:$0xf]
      %v175 = vld [vmem:[%s165 + $0x14] sm:$0xff]
      %v176 = vld [vmem:[%s165 + $0x1c] sm:$0xff]
      %v177 = vld [vmem:[%s165 + $0x24] sm:$0xf]
      %v178 = vld [vmem:[%s165 + $0x28] sm:$0xff]
      %v179 = vld [vmem:[%s165 + $0x30] sm:$0xff]
      %v180 = vld [vmem:[%s165 + $0x38] sm:$0xf]
      %v181 = vld [vmem:[%s165 + $0x3c] sm:$0x11]
      %v182 = vld [vmem:[%s165 + $0x44] sm:$0x11]
      %v183 = vld [vmem:[%s165 + $0x4c] sm:$0x1]
      %v184 = vld [vmem:[%s1] sm:$0xf]
      %v185 = vld [vmem:[%s1 + $0x4] sm:$0xf]
      %v186 = vld [vmem:[%s1 + $0x8] sm:$0xf]
      %v187 = vld [vmem:[%s1 + $0xc] sm:$0xf]
      %v188 = vld [vmem:[%s1 + $0x10] sm:$0xf]
      %v189 = vld [vmem:[%s1 + $0x14] sm:$0xf]
      %v190 = vld [vmem:[%s1 + $0x18] sm:$0xf]
      %v191 = vld [vmem:[%s1 + $0x1c] sm:$0xf]
      %v192 = vld [vmem:[%s1 + $0x20] sm:$0xf]
      %v193 = vld [vmem:[%s1 + $0x24] sm:$0xf]
      %v194 = vld [vmem:[%s1 + $0x28] sm:$0xf]
      %v195 = vld [vmem:[%s1 + $0x2c] sm:$0xf]
      %v196 = vld [vmem:[%s1 + $0x30] sm:$0xf]
      %v197 = vld [vmem:[%s1 + $0x34] sm:$0xf]
      %v198 = vld [vmem:[%s1 + $0x38] sm:$0xf]
      %v199 = vld [vmem:[%s1 + $0x3c] sm:$0xf]
      %v200 = vld [vmem:[%s1 + $0x40] sm:$0xf]
      %v201 = vld [vmem:[%s1 + $0x44] sm:$0xf]
      %v202 = vld [vmem:[%s1 + $0x48] sm:$0xf]
      %v203 = vld [vmem:[%s1 + $0x4c] sm:$0xf]
      %v204 = vld [vmem:[%s1 + $0x50] sm:$0xf]
      %v205 = vld [vmem:[%s1 + $0x54] sm:$0xf]
      %v206 = vld [vmem:[%s1 + $0x58] sm:$0xf]
      %v207 = vld [vmem:[%s1 + $0x5c] sm:$0xf]
      %v208 = vld [vmem:[%s1 + $0x60] sm:$0xf]
      %v209 = vld [vmem:[%s1 + $0x64] sm:$0xf]
      %v210 = vld [vmem:[%s1 + $0x68] sm:$0xf]
      %v211 = vld [vmem:[%s1 + $0x6c] sm:$0xf]
      %v212 = vld [vmem:[%s1 + $0x70] sm:$0xf]
      %v213 = vld [vmem:[%s1 + $0x74] sm:$0xf]
      %v214 = vld [vmem:[%s1 + $0x78] sm:$0xf]
      %v215 = vld [vmem:[%s1 + $0x7c] sm:$0xf]
      %v216 = vld [vmem:[%s1 + $0x80] sm:$0xf]
      %v217 = vld [vmem:[%s1 + $0x84] sm:$0xf]
      %v218 = vld [vmem:[%s1 + $0x88] sm:$0xf]
      %v219 = vld [vmem:[%s1 + $0x8c] sm:$0xf]
      %v220 = vld [vmem:[%s1 + $0x90] sm:$0xf]
      %v221 = vld [vmem:[%s1 + $0x94] sm:$0xf]
      %v222 = vld [vmem:[%s1 + $0x98] sm:$0xf]
      %v223 = vld [vmem:[%s1 + $0x9c] sm:$0xf]
      %v224 = vld [vmem:[%s1 + $0xa0] sm:$0xf]
      %v225 = vld [vmem:[%s1 + $0xa4] sm:$0xf]
      %v226 = vld [vmem:[%s1 + $0xa8] sm:$0xf]
      %v227 = vld [vmem:[%s1 + $0xac] sm:$0xf]
      %v228 = vld [vmem:[%s1 + $0xb0] sm:$0xf]
      %v229 = vld [vmem:[%s1 + $0xb4] sm:$0xf]
      %v230 = vld [vmem:[%s1 + $0xb8] sm:$0xf]
      %v231 = vld [vmem:[%s1 + $0xbc] sm:$0xf]
      %v232 = vld [vmem:[%s1 + $0xc0] sm:$0xf]
      %v233 = vld [vmem:[%s1 + $0xc4] sm:$0xf]
      %v234 = vld [vmem:[%s1 + $0xc8] sm:$0xf]
      %v235 = vld [vmem:[%s1 + $0xcc] sm:$0xf]
      %v236 = vld [vmem:[%s1 + $0xd0] sm:$0xf]
      %v237 = vld [vmem:[%s1 + $0xd4] sm:$0xf]
      %v238 = vld [vmem:[%s1 + $0xd8] sm:$0xf]
      %v239 = vld [vmem:[%s1 + $0xdc] sm:$0xf]
      %v240 = vld [vmem:[%s1 + $0xe0] sm:$0xf]
      %v241 = vld [vmem:[%s1 + $0xe4] sm:$0xf]
      %v242 = vld [vmem:[%s1 + $0xe8] sm:$0xf]
      %v243 = vld [vmem:[%s1 + $0xec] sm:$0xf]
      %v244 = vld [vmem:[%s1 + $0xf0] sm:$0xf]
      %v245 = vld [vmem:[%s1 + $0xf4] sm:$0xf]
      %v246 = vld [vmem:[%s1 + $0xf8] sm:$0xf]
      %v247 = vld [vmem:[%s1 + $0xfc] sm:$0xf]
      %v248 = vld [vmem:[%s1 + $0x100] sm:$0xf]
      %v249 = vld [vmem:[%s1 + $0x104] sm:$0xf]
      %v250 = vld [vmem:[%s1 + $0x108] sm:$0xf]
      %v251 = vld [vmem:[%s1 + $0x10c] sm:$0xf]
      %v252 = vld [vmem:[%s1 + $0x110] sm:$0xf]
      %v253 = vld [vmem:[%s1 + $0x114] sm:$0xf]
      %v254 = vld [vmem:[%s1 + $0x118] sm:$0xf]
      %v255 = vld [vmem:[%s1 + $0x11c] sm:$0xf]
      %v256 = vld [vmem:[%s2] sm:$0x1]
      %v258 = vlaneseq
      %v259 = vshrl.u32 %v258, 7
      %v260 = vsub.s32 0, %v259
      %v261 = vrot.slane %v256, %v260
      %v275 = vunpack.c.l.b16 %v172
      %v276 = vunpack.c.h.b16 %v172
      %v277 = vunpack.c.l.b16 %v173
      %v278 = vunpack.c.h.b16 %v173
      %v279 = vunpack.c.l.b16 %v174
      %v280 = vunpack.c.l.b16 %v175
      %v281 = vunpack.c.h.b16 %v175
      %v282 = vunpack.c.l.b16 %v176
      %v283 = vunpack.c.h.b16 %v176
      %v284 = vunpack.c.l.b16 %v177
      %v285 = vunpack.c.l.b16 %v178
      %v286 = vunpack.c.h.b16 %v178
      %v287 = vunpack.c.l.b16 %v179
      %v288 = vunpack.c.h.b16 %v179
      %v289 = vunpack.c.l.b16 %v180
      %v290 = vunpack.c.l.b16 %v181
      %v291 = vunpack.c.h.b16 %v181
      %v292 = vunpack.c.l.b16 %v182
      %v293 = vunpack.c.h.b16 %v182
      %v294 = vunpack.c.l.b16 %v183
      %v295 = vpack.c.b16 %v280, %v275
      %v296 = vpack.c.b16 %v281, %v276
      %v297 = vpack.c.b16 %v282, %v277
      %v298 = vpack.c.b16 %v283, %v278
      %v299 = vpack.c.b16 %v284, %v279
      %v300 = vpack.c.b16 %v290, %v285
      %v301 = vpack.c.b16 %v291, %v286
      %v302 = vpack.c.b16 %v292, %v287
      %v303 = vpack.c.b16 %v293, %v288
      %v304 = vpack.c.b16 %v294, %v289
      %v385 = vunpack.c.l.b16 %v184
      %v386 = vunpack.c.l.b16 %v185
      %v387 = vunpack.c.l.b16 %v186
      %v388 = vunpack.c.l.b16 %v187
      %v389 = vunpack.c.l.b16 %v188
      %v390 = vunpack.c.l.b16 %v189
      %v391 = vunpack.c.l.b16 %v190
      %v392 = vunpack.c.l.b16 %v191
      %v393 = vunpack.c.l.b16 %v192
      %v394 = vunpack.c.l.b16 %v193
      %v395 = vunpack.c.l.b16 %v194
      %v396 = vunpack.c.l.b16 %v195
      %v397 = vunpack.c.l.b16 %v196
      %v398 = vunpack.c.l.b16 %v197
      %v399 = vunpack.c.l.b16 %v198
      %v400 = vunpack.c.l.b16 %v199
      %v401 = vunpack.c.l.b16 %v200
      %v402 = vunpack.c.l.b16 %v201
      %v403 = vunpack.c.l.b16 %v202
      %v404 = vunpack.c.l.b16 %v203
      %v405 = vunpack.c.l.b16 %v204
      %v406 = vunpack.c.l.b16 %v205
      %v407 = vunpack.c.l.b16 %v206
      %v408 = vunpack.c.l.b16 %v207
      %v409 = vunpack.c.l.b16 %v208
      %v410 = vunpack.c.l.b16 %v209
      %v411 = vunpack.c.l.b16 %v210
      %v412 = vunpack.c.l.b16 %v211
      %v413 = vunpack.c.l.b16 %v212
      %v414 = vunpack.c.l.b16 %v213
      %v415 = vunpack.c.l.b16 %v214
      %v416 = vunpack.c.l.b16 %v215
      %v417 = vunpack.c.l.b16 %v216
      %v418 = vunpack.c.l.b16 %v217
      %v419 = vunpack.c.l.b16 %v218
      %v420 = vunpack.c.l.b16 %v219
      %v421 = vunpack.c.l.b16 %v220
      %v422 = vunpack.c.l.b16 %v221
      %v423 = vunpack.c.l.b16 %v222
      %v424 = vunpack.c.l.b16 %v223
      %v425 = vunpack.c.l.b16 %v224
      %v426 = vunpack.c.l.b16 %v225
      %v427 = vunpack.c.l.b16 %v226
      %v428 = vunpack.c.l.b16 %v227
      %v429 = vunpack.c.l.b16 %v228
      %v430 = vunpack.c.l.b16 %v229
      %v431 = vunpack.c.l.b16 %v230
      %v432 = vunpack.c.l.b16 %v231
      %v433 = vunpack.c.l.b16 %v232
      %v434 = vunpack.c.l.b16 %v233
      %v435 = vunpack.c.l.b16 %v234
      %v436 = vunpack.c.l.b16 %v235
      %v437 = vunpack.c.l.b16 %v236
      %v438 = vunpack.c.l.b16 %v237
      %v439 = vunpack.c.l.b16 %v238
      %v440 = vunpack.c.l.b16 %v239
      %v441 = vunpack.c.l.b16 %v240
      %v442 = vunpack.c.l.b16 %v241
      %v443 = vunpack.c.l.b16 %v242
      %v444 = vunpack.c.l.b16 %v243
      %v445 = vunpack.c.l.b16 %v244
      %v446 = vunpack.c.l.b16 %v245
      %v447 = vunpack.c.l.b16 %v246
      %v448 = vunpack.c.l.b16 %v247
      %v449 = vunpack.c.l.b16 %v248
      %v450 = vunpack.c.l.b16 %v249
      %v451 = vunpack.c.l.b16 %v250
      %v452 = vunpack.c.l.b16 %v251
      %v453 = vunpack.c.l.b16 %v252
      %v454 = vunpack.c.l.b16 %v253
      %v455 = vunpack.c.l.b16 %v254
      %v456 = vunpack.c.l.b16 %v255
      %v457 = vpack.c.b16 %v386, %v385
      %v458 = vpack.c.b16 %v388, %v387
      %v459 = vpack.c.b16 %v390, %v389
      %v460 = vpack.c.b16 %v392, %v391
      %v461 = vpack.c.b16 %v394, %v393
      %v462 = vpack.c.b16 %v396, %v395
      %v463 = vpack.c.b16 %v398, %v397
      %v464 = vpack.c.b16 %v400, %v399
      %v465 = vpack.c.b16 %v402, %v401
      %v466 = vpack.c.b16 %v404, %v403
      %v467 = vpack.c.b16 %v406, %v405
      %v468 = vpack.c.b16 %v408, %v407
      %v469 = vpack.c.b16 %v410, %v409
      %v470 = vpack.c.b16 %v412, %v411
      %v471 = vpack.c.b16 %v414, %v413
      %v472 = vpack.c.b16 %v416, %v415
      %v473 = vpack.c.b16 %v418, %v417
      %v474 = vpack.c.b16 %v420, %v419
      %v475 = vpack.c.b16 %v422, %v421
      %v476 = vpack.c.b16 %v424, %v423
      %v477 = vpack.c.b16 %v426, %v425
      %v478 = vpack.c.b16 %v428, %v427
      %v479 = vpack.c.b16 %v430, %v429
      %v480 = vpack.c.b16 %v432, %v431
      %v481 = vpack.c.b16 %v434, %v433
      %v482 = vpack.c.b16 %v436, %v435
      %v483 = vpack.c.b16 %v438, %v437
      %v484 = vpack.c.b16 %v440, %v439
      %v485 = vpack.c.b16 %v442, %v441
      %v486 = vpack.c.b16 %v444, %v443
      %v487 = vpack.c.b16 %v446, %v445
      %v488 = vpack.c.b16 %v448, %v447
      %v489 = vpack.c.b16 %v450, %v449
      %v490 = vpack.c.b16 %v452, %v451
      %v491 = vpack.c.b16 %v454, %v453
      %v492 = vpack.c.b16 %v456, %v455
      %vm529 = vcmask 523264
      %v531 = vsel %vm529, %v299, 0
      %v534 = vsel %vm529, %v304, 0
      %536 = vmatprep.subr.bf16.mxu0 0
      %537 = vmatpush1.bf16.msra.mxu0 %v457
      %538 = vmatprep.subr.bf16.mxu0 0
      %539 = vmatpush1.bf16.msra.mxu0 %v458
      %540 = vmatprep.subr.bf16.mxu0 0
      %541 = vmatpush1.bf16.msra.mxu0 %v459
      %542 = vmatprep.subr.bf16.mxu0 0
      %543 = vmatpush1.bf16.msra.mxu0 %v460
      %544 = vmatprep.subr.bf16.mxu0 0
      %545 = vmatpush1.bf16.msra.mxu0 %v461
      %546 = vmatprep.subr.bf16.mxu0 0
      %547 = vmatpush1.bf16.msra.mxu0 %v462
      %548 = vmatprep.subr.bf16.mxu0 0
      %549 = vmatpush1.bf16.msra.mxu0 %v463
      %550 = vmatprep.subr.bf16.mxu0 0
      %551 = vmatpush1.bf16.msra.mxu0 %v464
      %552 = vmatprep.subr.bf16.mxu0 0
      %553 = vmatpush1.bf16.msra.mxu0 %v465
      %554 = vmatprep.subr.bf16.mxu0 0
      %555 = vmatpush1.bf16.msra.mxu0 %v466
      %556 = vmatprep.subr.bf16.mxu0 0
      %557 = vmatpush1.bf16.msra.mxu0 %v467
      %558 = vmatprep.subr.bf16.mxu0 0
      %559 = vmatpush1.bf16.msra.mxu0 %v468
      %560 = vmatprep.subr.bf16.mxu0 0
      %561 = vmatpush1.bf16.msra.mxu0 %v469
      %562 = vmatprep.subr.bf16.mxu0 0
      %563 = vmatpush1.bf16.msra.mxu0 %v470
      %564 = vmatprep.subr.bf16.mxu0 0
      %565 = vmatpush1.bf16.msra.mxu0 %v471
      %566 = vmatprep.subr.bf16.mxu0 0
      %567 = vmatpush1.bf16.msra.mxu0 %v472
      %568 = vmatprep.mubr.bf16.mxu0 %v296
      %569 = vmatmul.mubr.bf16.gmra.mrb[0].mxu0 %v295
      %v570 = vpop.f32.mrb[0].mxu0
      %v571 = vadd.f32 %v261, %v570
      %v572 = vpop.f32.mrb[0].mxu0
      %v573 = vpop.f32.mrb[0].mxu0
      %v574 = vadd.f32 %v261, %v573
      %v575 = vpop.f32.mrb[0].mxu0
      %576 = vmatprep.mubr.bf16.mxu0 %v301
      %577 = vmatmul.mubr.bf16.gmra.mrb[0].mxu0 %v300
      %v578 = vpop.f32.mrb[0].mxu0
      %v579 = vadd.f32 %v261, %v578
      %v580 = vpop.f32.mrb[0].mxu0
      %v581 = vpop.f32.mrb[0].mxu0
      %v582 = vadd.f32 %v261, %v581
      %v583 = vpop.f32.mrb[0].mxu0
      %584 = vdwg.mxu0
      %585 = vmatprep.subr.bf16.mxu0 0
      %586 = vmatpush1.bf16.msra.mxu0 %v473
      %587 = vmatprep.subr.bf16.mxu0 0
      %588 = vmatpush1.bf16.msra.mxu0 %v474
      %589 = vmatprep.subr.bf16.mxu0 0
      %590 = vmatpush1.bf16.msra.mxu0 %v475
      %591 = vmatprep.subr.bf16.mxu0 0
      %592 = vmatpush1.bf16.msra.mxu0 %v476
      %593 = vmatprep.subr.bf16.mxu0 0
      %594 = vmatpush1.bf16.msra.mxu0 %v477
      %595 = vmatprep.subr.bf16.mxu0 0
      %596 = vmatpush1.bf16.msra.mxu0 %v478
      %597 = vmatprep.subr.bf16.mxu0 0
      %598 = vmatpush1.bf16.msra.mxu0 %v479
      %599 = vmatprep.subr.bf16.mxu0 0
      %600 = vmatpush1.bf16.msra.mxu0 %v480
      %601 = vmatprep.subr.bf16.mxu0 0
      %602 = vmatpush1.bf16.msra.mxu0 %v481
      %603 = vmatprep.subr.bf16.mxu0 0
      %604 = vmatpush1.bf16.msra.mxu0 %v482
      %605 = vmatprep.subr.bf16.mxu0 0
      %606 = vmatpush1.bf16.msra.mxu0 %v483
      %607 = vmatprep.subr.bf16.mxu0 0
      %608 = vmatpush1.bf16.msra.mxu0 %v484
      %609 = vmatprep.subr.bf16.mxu0 0
      %610 = vmatpush1.bf16.msra.mxu0 %v485
      %611 = vmatprep.subr.bf16.mxu0 0
      %612 = vmatpush1.bf16.msra.mxu0 %v486
      %613 = vmatprep.subr.bf16.mxu0 0
      %614 = vmatpush1.bf16.msra.mxu0 %v487
      %615 = vmatprep.subr.bf16.mxu0 0
      %616 = vmatpush1.bf16.msra.mxu0 %v488
      %617 = vmatprep.mubr.bf16.mxu0 %v298
      %618 = vmatmul.mubr.bf16.gmra.mrb[0].mxu0 %v297
      %v619 = vpop.f32.mrb[0].mxu0
      %v620 = vadd.f32 %v571, %v619
      %v621 = vpop.f32.mrb[0].mxu0
      %v622 = vpop.f32.mrb[0].mxu0
      %v623 = vadd.f32 %v574, %v622
      %v624 = vpop.f32.mrb[0].mxu0
      %625 = vmatprep.mubr.bf16.mxu0 %v303
      %626 = vmatmul.mubr.bf16.gmra.mrb[0].mxu0 %v302
      %v627 = vpop.f32.mrb[0].mxu0
      %v628 = vadd.f32 %v579, %v627
      %v629 = vpop.f32.mrb[0].mxu0
      %v630 = vpop.f32.mrb[0].mxu0
      %v631 = vadd.f32 %v582, %v630
      %v632 = vpop.f32.mrb[0].mxu0
      %633 = vdwg.mxu0
      %634 = vmatprep.subr.bf16.mxu0 0
      %635 = vmatpush1.bf16.msra.mxu0 %v489
      %636 = vmatprep.subr.bf16.mxu0 0
      %637 = vmatpush1.bf16.msra.mxu0 %v490
      %638 = vmatprep.subr.bf16.mxu0 0
      %639 = vmatpush1.bf16.msra.mxu0 %v491
      %640 = vmatprep.subr.bf16.mxu0 0
      %641 = vmatpush1.bf16.msra.mxu0 %v492
      %642 = vmatprep.subr.bf16.mxu0 0
      %643 = vmatpush1.bf16.msra.mxu0 0
      %644 = vmatprep.subr.bf16.mxu0 0
      %645 = vmatpush1.bf16.msra.mxu0 0
      %646 = vmatprep.subr.bf16.mxu0 0
      %647 = vmatpush1.bf16.msra.mxu0 0
      %648 = vmatprep.subr.bf16.mxu0 0
      %649 = vmatpush1.bf16.msra.mxu0 0
      %650 = vmatprep.subr.bf16.mxu0 0
      %651 = vmatpush1.bf16.msra.mxu0 0
      %652 = vmatprep.subr.bf16.mxu0 0
      %653 = vmatpush1.bf16.msra.mxu0 0
      %654 = vmatprep.subr.bf16.mxu0 0
      %655 = vmatpush1.bf16.msra.mxu0 0
      %656 = vmatprep.subr.bf16.mxu0 0
      %657 = vmatpush1.bf16.msra.mxu0 0
      %658 = vmatprep.subr.bf16.mxu0 0
      %659 = vmatpush1.bf16.msra.mxu0 0
      %660 = vmatprep.subr.bf16.mxu0 0
      %661 = vmatpush1.bf16.msra.mxu0 0
      %662 = vmatprep.subr.bf16.mxu0 0
      %663 = vmatpush1.bf16.msra.mxu0 0
      %664 = vmatprep.subr.bf16.mxu0 0
      %665 = vmatpush1.bf16.msra.mxu0 0
      %666 = vmatprep.mubr.bf16.mxu0 0
      %667 = vmatmul.mubr.bf16.gmra.mrb[0].mxu0 %v531
      %v668 = vpop.f32.mrb[0].mxu0
      %v669 = vadd.f32 %v620, %v668
      %v670 = vpop.f32.mrb[0].mxu0
      %v671 = vpop.f32.mrb[0].mxu0
      %v672 = vadd.f32 %v623, %v671
      %v673 = vpop.f32.mrb[0].mxu0
      %674 = vmatprep.mubr.bf16.mxu0 0
      %675 = vmatmul.mubr.bf16.gmra.mrb[0].mxu0 %v534
      %v676 = vpop.f32.mrb[0].mxu0
      %v677 = vadd.f32 %v628, %v676
      %v678 = vpop.f32.mrb[0].mxu0
      %v679 = vpop.f32.mrb[0].mxu0
      %v680 = vadd.f32 %v631, %v679
      %v681 = vpop.f32.mrb[0].mxu0
      %682 = vdwg.mxu0
      %v683 = vsel %vm529, %v669, 0.0
      %v684 = vsel %vm529, %v672, 0.0
      %v685 = vadd.f32 %v683, %v684
      %v686 = vsel %vm529, %v677, 0.0
      %v687 = vadd.f32 %v685, %v686
      %vm688 = vcmask 516096
      %v689 = vsel %vm688, %v680, 0.0
      %v690 = vadd.f32 %v687, %v689
      %v691 = vrot.slane %v690, 4
      %v692 = vadd.f32 %v690, %v691
      %v693 = vrot.slane %v692, 2
      %v694 = vadd.f32 %v692, %v693
      %v695 = vrot.slane %v694, 1
      %v696 = vadd.f32 %v694, %v695
      %v697 = vrcp.pop 25.0
      %v698 = vmul.f32 %v696, %v697
      %v699 = vsub.f32 %v669, %v698
      %v700 = vsub.f32 %v672, %v698
      %v701 = vsub.f32 %v677, %v698
      %v702 = vsub.f32 %v680, %v698
      %v703 = vmul.f32 %v699, %v699
      %v704 = vmul.f32 %v700, %v700
      %v705 = vmul.f32 %v701, %v701
      %v706 = vmul.f32 %v702, %v702
      %v707 = vsel %vm529, %v703, 0.0
      %v708 = vsel %vm529, %v704, 0.0
      %v709 = vadd.f32 %v707, %v708
      %v710 = vsel %vm529, %v705, 0.0
      %v711 = vadd.f32 %v709, %v710
      %v712 = vsel %vm688, %v706, 0.0
      %v713 = vadd.f32 %v711, %v712
      %v714 = vrot.slane %v713, 4
      %v715 = vadd.f32 %v713, %v714
      %v716 = vrot.slane %v715, 2
      %v717 = vadd.f32 %v715, %v716
      %v718 = vrot.slane %v717, 1
      %v719 = vadd.f32 %v717, %v718
      %v720 = vmul.f32 %v719, %v697
      %v721 = vadd.f32 %v720, 1e-05
      %v722 = vrsqrt.pop %v721
      %v723 = vmul.f32 %v699, %v722
      %v724 = vmul.f32 %v700, %v722
      %v725 = vmul.f32 %v701, %v722
      %v726 = vmul.f32 %v702, %v722
      %vm727 = vcmp.ge.f32.partialorder %v723, 0.0
      %vm728 = vcmp.ge.f32.partialorder %v724, 0.0
      %vm729 = vcmp.ge.f32.partialorder %v725, 0.0
      %vm730 = vcmp.ge.f32.partialorder %v726, 0.0
      %v731 = vmul.f32 %v723, 0.01
      %v732 = vmul.f32 %v724, 0.01
      %v733 = vmul.f32 %v725, 0.01
      %v734 = vmul.f32 %v726, 0.01
      %v735 = vsel %vm727, %v723, %v731
      %v736 = vsel %vm728, %v724, %v732
      %v737 = vsel %vm729, %v725, %v733
      %v738 = vsel %vm730, %v726, %v734
      %739 = vst.msk [vmem:[%s170] sm:$0xff] %vm529, %v735
      %740 = vst.msk [vmem:[%s170 + $0x8] sm:$0xff] %vm529, %v736
      %741 = vst.msk [vmem:[%s170 + $0x10] sm:$0xff] %vm529, %v737
      %742 = vst.msk [vmem:[%s170 + $0x18] sm:$0x1] %vm688, %v738
      %p743 = scmp.lt.s32.totalorder %s14, 1
      %s744 = scalar_select %p743, %s14, 1
      %s745 = smul.addr %s744, 4
      %s746 = smul.addr %s745, 8
      %s747 = scalar_lea.vmem %s3, %s746
      // Predicated region
      $region33: #{crnn_forward.10} parent=31 // pred_check
        %p748 = pneg %p100
      $region34: #{crnn_forward.10} parent=31 // pred_check_branch
        %750 = sbr.rel (%p748) target = $region36
      $region35: #{crnn_forward.10} parent=31 // pred_region
        _
      $region36: #{crnn_forward.10} parent=31 // pred_fallthru
        _
    $region32: #{crnn_forward.10} parent=5 // pred_fallthru
      _
    %p751 = scmp.le.s32.totalorder 2, %s9
    // Predicated region
    $region37: #{crnn_forward.10} parent=5 // pred_check
      %p752 = pneg %p751
    $region38: #{crnn_forward.10} parent=5 // pred_check_branch
      %754 = sbr.rel (%p752) target = $region40
    $region39: #{crnn_forward.10} parent=5 // pred_region
      %s755 = ssub.s32 %s9, 2
      // Predicated region
      $region41: #{crnn_forward.10} parent=39 // pred_check
        %p756 = pneg %p106
      $region42: #{crnn_forward.10} parent=39 // pred_check_branch
        %758 = sbr.rel (%p756) target = $region44
      $region43: #{crnn_forward.10} parent=39 // pred_region
        %p759 = scmp.lt.s32.totalorder %s15, 1
        %s760 = scalar_select %p759, %s15, 1
        %s761 = smul.addr %s760, 4
        %s762 = smul.addr %s761, 8
        %s763 = scalar_lea.vmem %s3, %s762
      $region44: #{crnn_forward.10} parent=39 // pred_fallthru
        _
    $region40: #{crnn_forward.10} parent=5 // pred_fallthru
      _
  $region6: #{crnn_forward.10} parent=0 // loop_footer
    %s13 = sadd.s32 1, %s9
  $region7: #{crnn_forward.10} parent=0 // loop_footer_branch
    %8 = sbr.rel target = $region3
  $region8: #{crnn_forward.10} parent=0 // loop_exit
    _

// kernel: crnn_forward.13
$region0: #{crnn_forward.13}
  #allocation0 [shape = 'u32[]', space=smem, size = 0x4, offset = 0x4, fixed_abs, tag = 'smem constant byte address 0x4 - core index']
  #allocation1 [shape = 'u32[144,128]{1,0:T(1,128)}', space=vmem, size = 0x12000, scoped, tag = 'internal scratch']
  %s0 = inlined_call_operand.vmem [shape: f32[10,256], index: 0, kind: input, shape index: {}]
  %s1 = inlined_call_operand.vmem [shape: bf16[256,128], index: 1, kind: input, shape index: {}]
  %s2 = inlined_call_operand.vmem [shape: f32[1,128], index: 2, kind: input, shape index: {}]
  %s3 = inlined_call_operand.vmem [shape: f32[10,128], index: 3, kind: output, shape index: {}]
  %s4 = sld [smem:[#allocation0]]
  $region22: #{crnn_forward.13} parent=0
    _
  %s6 = ssub.s32 1, %s4
  %s7 = scalar_select 0, %s6, %s4
  // Predicated region
  $region2: #{crnn_forward.13} parent=0 // pred_check
    _
  $region3: #{crnn_forward.13} parent=0 // pred_check_branch
    %9 = sbr.rel (0) target = $region5
  $region4: #{crnn_forward.13} parent=0 // pred_region
    _
  $region5: #{crnn_forward.13} parent=0 // pred_fallthru
    _
  // Predicated region
  $region6: #{crnn_forward.13} parent=0 // pred_check
    _
  $region7: #{crnn_forward.13} parent=0 // pred_check_branch
    %11 = sbr.rel (0) target = $region9
  $region8: #{crnn_forward.13} parent=0 // pred_region
    _
  $region9: #{crnn_forward.13} parent=0 // pred_fallthru
    _
  // Predicated region
  $region10: #{crnn_forward.13} parent=0 // pred_check
    _
  $region11: #{crnn_forward.13} parent=0 // pred_check_branch
    %13 = sbr.rel (0) target = $region13
  $region12: #{crnn_forward.13} parent=0 // pred_region
    _
  $region13: #{crnn_forward.13} parent=0 // pred_fallthru
    _
  %v15 = vld [vmem:[%s0] sm:$0xff]
  %v16 = vld [vmem:[%s0 + $0x8] sm:$0xff]
  %v17 = vld [vmem:[%s0 + $0x10] sm:$0x3]
  %v18 = vld [vmem:[%s0 + $0x18] sm:$0x3]
  %v19 = vpack.c.bf16 %v17, %v15
  %v20 = vpack.c.bf16 %v18, %v16
  %v21 = vld [vmem:[%s1] sm:$0xf]
  %v22 = vld [vmem:[%s1 + $0x4] sm:$0xf]
  %v23 = vld [vmem:[%s1 + $0x8] sm:$0xf]
  %v24 = vld [vmem:[%s1 + $0xc] sm:$0xf]
  %v25 = vld [vmem:[%s1 + $0x10] sm:$0xf]
  %v26 = vld [vmem:[%s1 + $0x14] sm:$0xf]
  %v27 = vld [vmem:[%s1 + $0x18] sm:$0xf]
  %v28 = vld [vmem:[%s1 + $0x1c] sm:$0xf]
  %v29 = vld [vmem:[%s1 + $0x20] sm:$0xf]
  %v30 = vld [vmem:[%s1 + $0x24] sm:$0xf]
  %v31 = vld [vmem:[%s1 + $0x28] sm:$0xf]
  %v32 = vld [vmem:[%s1 + $0x2c] sm:$0xf]
  %v33 = vld [vmem:[%s1 + $0x30] sm:$0xf]
  %v34 = vld [vmem:[%s1 + $0x34] sm:$0xf]
  %v35 = vld [vmem:[%s1 + $0x38] sm:$0xf]
  %v36 = vld [vmem:[%s1 + $0x3c] sm:$0xf]
  %v37 = vld [vmem:[%s1 + $0x40] sm:$0xf]
  %v38 = vld [vmem:[%s1 + $0x44] sm:$0xf]
  %v39 = vld [vmem:[%s1 + $0x48] sm:$0xf]
  %v40 = vld [vmem:[%s1 + $0x4c] sm:$0xf]
  %v41 = vld [vmem:[%s1 + $0x50] sm:$0xf]
  %v42 = vld [vmem:[%s1 + $0x54] sm:$0xf]
  %v43 = vld [vmem:[%s1 + $0x58] sm:$0xf]
  %v44 = vld [vmem:[%s1 + $0x5c] sm:$0xf]
  %v45 = vld [vmem:[%s1 + $0x60] sm:$0xf]
  %v46 = vld [vmem:[%s1 + $0x64] sm:$0xf]
  %v47 = vld [vmem:[%s1 + $0x68] sm:$0xf]
  %v48 = vld [vmem:[%s1 + $0x6c] sm:$0xf]
  %v49 = vld [vmem:[%s1 + $0x70] sm:$0xf]
  %v50 = vld [vmem:[%s1 + $0x74] sm:$0xf]
  %v51 = vld [vmem:[%s1 + $0x78] sm:$0xf]
  %v52 = vld [vmem:[%s1 + $0x7c] sm:$0xf]
  %v53 = vld [vmem:[%s2] sm:$0x1]
  %v55 = vlaneseq
  %v56 = vshrl.u32 %v55, 7
  %v57 = vsub.s32 0, %v56
  %v58 = vrot.slane %v53, %v57
  %v92 = vunpack.c.l.b16 %v21
  %v93 = vunpack.c.l.b16 %v22
  %v94 = vunpack.c.l.b16 %v23
  %v95 = vunpack.c.l.b16 %v24
  %v96 = vunpack.c.l.b16 %v25
  %v97 = vunpack.c.l.b16 %v26
  %v98 = vunpack.c.l.b16 %v27
  %v99 = vunpack.c.l.b16 %v28
  %v100 = vunpack.c.l.b16 %v29
  %v101 = vunpack.c.l.b16 %v30
  %v102 = vunpack.c.l.b16 %v31
  %v103 = vunpack.c.l.b16 %v32
  %v104 = vunpack.c.l.b16 %v33
  %v105 = vunpack.c.l.b16 %v34
  %v106 = vunpack.c.l.b16 %v35
  %v107 = vunpack.c.l.b16 %v36
  %v108 = vunpack.c.l.b16 %v37
  %v109 = vunpack.c.l.b16 %v38
  %v110 = vunpack.c.l.b16 %v39
  %v111 = vunpack.c.l.b16 %v40
  %v112 = vunpack.c.l.b16 %v41
  %v113 = vunpack.c.l.b16 %v42
  %v114 = vunpack.c.l.b16 %v43
  %v115 = vunpack.c.l.b16 %v44
  %v116 = vunpack.c.l.b16 %v45
  %v117 = vunpack.c.l.b16 %v46
  %v118 = vunpack.c.l.b16 %v47
  %v119 = vunpack.c.l.b16 %v48
  %v120 = vunpack.c.l.b16 %v49
  %v121 = vunpack.c.l.b16 %v50
  %v122 = vunpack.c.l.b16 %v51
  %v123 = vunpack.c.l.b16 %v52
  %v124 = vpack.c.b16 %v93, %v92
  %v125 = vpack.c.b16 %v95, %v94
  %v126 = vpack.c.b16 %v97, %v96
  %v127 = vpack.c.b16 %v99, %v98
  %v128 = vpack.c.b16 %v101, %v100
  %v129 = vpack.c.b16 %v103, %v102
  %v130 = vpack.c.b16 %v105, %v104
  %v131 = vpack.c.b16 %v107, %v106
  %v132 = vpack.c.b16 %v109, %v108
  %v133 = vpack.c.b16 %v111, %v110
  %v134 = vpack.c.b16 %v113, %v112
  %v135 = vpack.c.b16 %v115, %v114
  %v136 = vpack.c.b16 %v117, %v116
  %v137 = vpack.c.b16 %v119, %v118
  %v138 = vpack.c.b16 %v121, %v120
  %v139 = vpack.c.b16 %v123, %v122
  %156 = vmatprep.subr.bf16.mxu0 0
  %157 = vmatpush1.bf16.msra.mxu0 %v124
  %158 = vmatprep.subr.bf16.mxu0 0
  %159 = vmatpush1.bf16.msra.mxu0 %v125
  %160 = vmatprep.subr.bf16.mxu0 0
  %161 = vmatpush1.bf16.msra.mxu0 %v126
  %162 = vmatprep.subr.bf16.mxu0 0
  %163 = vmatpush1.bf16.msra.mxu0 %v127
  %164 = vmatprep.subr.bf16.mxu0 0
  %165 = vmatpush1.bf16.msra.mxu0 %v128
  %166 = vmatprep.subr.bf16.mxu0 0
  %167 = vmatpush1.bf16.msra.mxu0 %v129
  %168 = vmatprep.subr.bf16.mxu0 0
  %169 = vmatpush1.bf16.msra.mxu0 %v130
  %170 = vmatprep.subr.bf16.mxu0 0
  %171 = vmatpush1.bf16.msra.mxu0 %v131
  %172 = vmatprep.subr.bf16.mxu0 0
  %173 = vmatpush1.bf16.msra.mxu0 %v132
  %174 = vmatprep.subr.bf16.mxu0 0
  %175 = vmatpush1.bf16.msra.mxu0 %v133
  %176 = vmatprep.subr.bf16.mxu0 0
  %177 = vmatpush1.bf16.msra.mxu0 %v134
  %178 = vmatprep.subr.bf16.mxu0 0
  %179 = vmatpush1.bf16.msra.mxu0 %v135
  %180 = vmatprep.subr.bf16.mxu0 0
  %181 = vmatpush1.bf16.msra.mxu0 %v136
  %182 = vmatprep.subr.bf16.mxu0 0
  %183 = vmatpush1.bf16.msra.mxu0 %v137
  %184 = vmatprep.subr.bf16.mxu0 0
  %185 = vmatpush1.bf16.msra.mxu0 %v138
  %186 = vmatprep.subr.bf16.mxu0 0
  %187 = vmatpush1.bf16.msra.mxu0 %v139
  %188 = vmatprep.mubr.bf16.mxu0 %v20
  %189 = vmatmul.mubr.bf16.gmra.mrb[0].mxu0 %v19
  %v190 = vpop.f32.mrb[0].mxu0
  %v191 = vadd.f32 %v58, %v190
  %v192 = vpop.f32.mrb[0].mxu0
  %v193 = vpop.f32.mrb[0].mxu0
  %v194 = vadd.f32 %v58, %v193
  %v195 = vpop.f32.mrb[0].mxu0
  %196 = vdwg.mxu0
  %197 = vmax.xlane.f32.xlu0 %v191
  %v198 = vpop.xlane.xlu0 %197
  %vm199 = vcmask 1041408
  %v200 = vsel %vm199, %v194, -inf
  %201 = vmax.xlane.f32.xlu0 %v200
  %v202 = vpop.xlane.xlu0 %201
  %v203 = vsub.f32 %v191, %v198
  %v204 = vsub.f32 %v194, %v202
  %v205 = vmul.f32 %v203, 1.442695
  %v206 = vpow.pop %v205
  %v207 = vmul.f32 %v204, 1.442695
  %v208 = vpow.pop %v207
  %209 = vadd.xlane.f32.xlu0 %v206
  %v210 = vpop.xlane.xlu0 %209
  %v211 = vsel %vm199, %v208, 0.0
  %212 = vadd.xlane.f32.xlu0 %v211
  %v213 = vpop.xlane.xlu0 %212
  %v214 = vlog2.pop %v210
  %v215 = vmul.f32 %v214, 0.6931472
  %v216 = vlog2.pop %v213
  %v217 = vmul.f32 %v216, 0.6931472
  %v218 = vsub.f32 %v203, %v215
  %v219 = vsub.f32 %v204, %v217
  %220 = vst [vmem:[%s3] sm:$0xff] %v218
  %221 = vst [vmem:[%s3 + $0x8] sm:$0x3] %v219
  // Predicated region
  $region14: #{crnn_forward.13} parent=0 // pred_check
    _
  $region15: #{crnn_forward.13} parent=0 // pred_check_branch
    %223 = sbr.rel (0) target = $region17
  $region16: #{crnn_forward.13} parent=0 // pred_region
    _
  $region17: #{crnn_forward.13} parent=0 // pred_fallthru
    _
  // Predicated region
  $region18: #{crnn_forward.13} parent=0 // pred_check
    _
  $region19: #{crnn_forward.13} parent=0 // pred_check_branch
    %225 = sbr.rel (0) target = $region21
  $region20: #{crnn_forward.13} parent=0 // pred_region
    _
  $region21: #{crnn_forward.13} parent=0 // pred_fallthru
    _

// kernel: crnn_forward.12
$region0: #{crnn_forward.12}
  #allocation0 [shape = 'u32[]', space=smem, size = 0x4, offset = 0x4, fixed_abs, tag = 'smem constant byte address 0x4 - core index']
  #allocation1 [shape = 'u32[144,128]{1,0:T(1,128)}', space=vmem, size = 0x12000, scoped, tag = 'internal scratch']
  #allocation2 [shape = 'f32[5,2,384]{2,1,0:T(2,128)}', space=vmem, size = 0x3c00, scoped, tag = 'scratch operand']
  %s0 = inlined_call_operand.vmem [shape: f32[10,256], index: 0, kind: input, shape index: {}]
  %s1 = inlined_call_operand.vmem [shape: bf16[2,256,384], index: 1, kind: input, shape index: {}]
  %s2 = inlined_call_operand.vmem [shape: f32[2,1,384], index: 2, kind: input, shape index: {}]
  %s3 = inlined_call_operand.vmem [shape: bf16[2,128,384], index: 3, kind: input, shape index: {}]
  %s4 = inlined_call_operand.vmem [shape: f32[2,1,384], index: 4, kind: input, shape index: {}]
  %s5 = inlined_call_operand.vmem [shape: f32[5,2,256], index: 5, kind: output, shape index: {}]
  %s6 = sld [smem:[#allocation0]]
  $region90: #{crnn_forward.12} parent=0
    _
  %s8 = ssub.s32 1, %s6
  %s9 = scalar_select 0, %s8, %s6
  $region1: #{crnn_forward.12} parent=0
    #allocation3 [shape = 'u8[10240]{0}', space=vmem, size = 0x2800, scoped, tag = 'output window, operand 0']
    loop: start=0, step=1, limit=4
    $region2: #{crnn_forward.12} parent=1 // loop_pre_header
      _
    $region3: #{crnn_forward.12} parent=1 // loop_header
      %s11 = sphi 0, %s15
      %p12 = scmp.ge.s32.totalorder %s11, 4
      %s19 = sphi 0, %s19
      %s21 = sphi 0, %s19
      %s22 = sphi 0, %s21
      %s36 = sphi 0, %s22
      %s42 = sphi 0, %s44
      %s45 = sphi 0, %s42
      %s46 = sphi 0, %s45
      %s62 = sphi 0, %s46
      %s68 = sphi 0, %s70
      %s71 = sphi 0, %s68
      %s72 = sphi 0, %s71
      %s88 = sphi 0, %s72
      %s94 = sphi 0, %s96
      %s97 = sphi 0, %s94
      %s98 = sphi 0, %s97
      %s114 = sphi 0, %s98
      %s120 = sphi 0, %s122
      %s123 = sphi 0, %s120
      %s124 = sphi 0, %s123
      %s140 = sphi 0, %s124
      %s146 = sphi 0, %s148
      %s149 = sphi 0, %s146
      %s150 = sphi 0, %s149
      %s166 = sphi 0, %s150
    $region4: #{crnn_forward.12} parent=1 // loop_header_branch
      %14 = sbr.rel (%p12) target = $region8
    $region5: #{crnn_forward.12} parent=1 // loop_body
      %s16 = ssub.s32 %s11, 1
      %s17 = ssub.s32 %s11, 2
      %s18 = sadd.s32 %s11, 1
      %s20 = sadd.s32 %s19, 1
      %p23 = scmp.eq.s32.totalorder %s11, 1
      %p24 = scmp.ne.s32.totalorder %s19, %s21
      %p25 = scmp.eq.s32.totalorder %s11, 0
      %p26 = por %p24, %p25
      %p27 = scmp.ne.s32.totalorder %s19, %s21
      %p28 = scmp.eq.s32.totalorder %s16, 1
      %p29 = por %p27, %p28
      %p30 = scmp.ne.s32.totalorder %s21, %s22
      %p31 = scmp.eq.s32.totalorder %s16, 0
      %p32 = por %p30, %p31
      %p33 = scmp.ne.s32.totalorder %s21, %s22
      %p34 = scmp.eq.s32.totalorder %s17, 1
      %p35 = por %p33, %p34
      %p37 = scmp.ne.s32.totalorder %s22, %s36
      %p38 = scmp.eq.s32.totalorder %s17, 0
      %p39 = por %p37, %p38
      %s40 = ssub.s32 %s11, %s18
      %p41 = scmp.eq.s32.totalorder %s40, 0
      %s43 = sadd.s32 %s42, 1
      %s44 = scalar_select %p41, %s42, %s43
      %p47 = pneg %p41
      %p48 = scmp.eq.s32.totalorder %s11, 1
      %p49 = por %p47, %p48
      %p50 = scmp.ne.s32.totalorder %s42, %s45
      %p51 = scmp.eq.s32.totalorder %s11, 0
      %p52 = por %p50, %p51
      %p53 = scmp.ne.s32.totalorder %s42, %s45
      %p54 = scmp.eq.s32.totalorder %s16, 1
      %p55 = por %p53, %p54
      %p56 = scmp.ne.s32.totalorder %s45, %s46
      %p57 = scmp.eq.s32.totalorder %s16, 0
      %p58 = por %p56, %p57
      %p59 = scmp.ne.s32.totalorder %s45, %s46
      %p60 = scmp.eq.s32.totalorder %s17, 1
      %p61 = por %p59, %p60
      %p63 = scmp.ne.s32.totalorder %s46, %s62
      %p64 = scmp.eq.s32.totalorder %s17, 0
      %p65 = por %p63, %p64
      %s66 = ssub.s32 %s11, %s18
      %p67 = scmp.eq.s32.totalorder %s66, 0
      %s69 = sadd.s32 %s68, 1
      %s70 = scalar_select %p67, %s68, %s69
      %p73 = pneg %p67
      %p74 = scmp.eq.s32.totalorder %s11, 1
      %p75 = por %p73, %p74
      %p76 = scmp.ne.s32.totalorder %s68, %s71
      %p77 = scmp.eq.s32.totalorder %s11, 0
      %p78 = por %p76, %p77
      %p79 = scmp.ne.s32.totalorder %s68, %s71
      %p80 = scmp.eq.s32.totalorder %s16, 1
      %p81 = por %p79, %p80
      %p82 = scmp.ne.s32.totalorder %s71, %s72
      %p83 = scmp.eq.s32.totalorder %s16, 0
      %p84 = por %p82, %p83
      %p85 = scmp.ne.s32.totalorder %s71, %s72
      %p86 = scmp.eq.s32.totalorder %s17, 1
      %p87 = por %p85, %p86
      %p89 = scmp.ne.s32.totalorder %s72, %s88
      %p90 = scmp.eq.s32.totalorder %s17, 0
      %p91 = por %p89, %p90
      %s92 = ssub.s32 %s11, %s18
      %p93 = scmp.eq.s32.totalorder %s92, 0
      %s95 = sadd.s32 %s94, 1
      %s96 = scalar_select %p93, %s94, %s95
      %p99 = pneg %p93
      %p100 = scmp.eq.s32.totalorder %s11, 1
      %p101 = por %p99, %p100
      %p102 = scmp.ne.s32.totalorder %s94, %s97
      %p103 = scmp.eq.s32.totalorder %s11, 0
      %p104 = por %p102, %p103
      %p105 = scmp.ne.s32.totalorder %s94, %s97
      %p106 = scmp.eq.s32.totalorder %s16, 1
      %p107 = por %p105, %p106
      %p108 = scmp.ne.s32.totalorder %s97, %s98
      %p109 = scmp.eq.s32.totalorder %s16, 0
      %p110 = por %p108, %p109
      %p111 = scmp.ne.s32.totalorder %s97, %s98
      %p112 = scmp.eq.s32.totalorder %s17, 1
      %p113 = por %p111, %p112
      %p115 = scmp.ne.s32.totalorder %s98, %s114
      %p116 = scmp.eq.s32.totalorder %s17, 0
      %p117 = por %p115, %p116
      %s118 = ssub.s32 %s11, %s18
      %p119 = scmp.eq.s32.totalorder %s118, 0
      %s121 = sadd.s32 %s120, 1
      %s122 = scalar_select %p119, %s120, %s121
      %p125 = pneg %p119
      %p126 = scmp.eq.s32.totalorder %s11, 1
      %p127 = por %p125, %p126
      %p128 = scmp.ne.s32.totalorder %s120, %s123
      %p129 = scmp.eq.s32.totalorder %s11, 0
      %p130 = por %p128, %p129
      %p131 = scmp.ne.s32.totalorder %s120, %s123
      %p132 = scmp.eq.s32.totalorder %s16, 1
      %p133 = por %p131, %p132
      %p134 = scmp.ne.s32.totalorder %s123, %s124
      %p135 = scmp.eq.s32.totalorder %s16, 0
      %p136 = por %p134, %p135
      %p137 = scmp.ne.s32.totalorder %s123, %s124
      %p138 = scmp.eq.s32.totalorder %s17, 1
      %p139 = por %p137, %p138
      %p141 = scmp.ne.s32.totalorder %s124, %s140
      %p142 = scmp.eq.s32.totalorder %s17, 0
      %p143 = por %p141, %p142
      %s144 = ssub.s32 %s11, %s18
      %p145 = scmp.eq.s32.totalorder %s144, 0
      %s147 = sadd.s32 %s146, 1
      %s148 = scalar_select %p145, %s146, %s147
      %p151 = pneg %p145
      %p152 = scmp.eq.s32.totalorder %s11, 1
      %p153 = por %p151, %p152
      %p154 = scmp.ne.s32.totalorder %s146, %s149
      %p155 = scmp.eq.s32.totalorder %s11, 0
      %p156 = por %p154, %p155
      %p157 = scmp.ne.s32.totalorder %s146, %s149
      %p158 = scmp.eq.s32.totalorder %s16, 1
      %p159 = por %p157, %p158
      %p160 = scmp.ne.s32.totalorder %s149, %s150
      %p161 = scmp.eq.s32.totalorder %s16, 0
      %p162 = por %p160, %p161
      %p163 = scmp.ne.s32.totalorder %s149, %s150
      %p164 = scmp.eq.s32.totalorder %s17, 1
      %p165 = por %p163, %p164
      %p167 = scmp.ne.s32.totalorder %s150, %s166
      %p168 = scmp.eq.s32.totalorder %s17, 0
      %p169 = por %p167, %p168
      %p170 = scmp.le.s32.totalorder 1, %s11
      %p171 = scmp.lt.s32.totalorder %s11, 3
      %p172 = pnand %p170, %p171
      %p173 = pneg %p172
      // Predicated region
      $region9: #{crnn_forward.12} parent=5 // pred_check
        _
      $region10: #{crnn_forward.12} parent=5 // pred_check_branch
        %175 = sbr.rel (%p172) target = $region12
      $region11: #{crnn_forward.12} parent=5 // pred_region
        %s176 = ssub.s32 %s11, 1
        // Predicated region
        $region13: #{crnn_forward.12} parent=11 // pred_check
          %p177 = pneg %p32
        $region14: #{crnn_forward.12} parent=11 // pred_check_branch
          %179 = sbr.rel (%p177) target = $region16
        $region15: #{crnn_forward.12} parent=11 // pred_region
          _
        $region16: #{crnn_forward.12} parent=11 // pred_fallthru
          _
      $region12: #{crnn_forward.12} parent=5 // pred_fallthru
        _
      %p180 = scmp.lt.s32.totalorder %s11, 2
      // Predicated region
      $region17: #{crnn_forward.12} parent=5 // pred_check
        %p181 = pneg %p180
      $region18: #{crnn_forward.12} parent=5 // pred_check_branch
        %183 = sbr.rel (%p181) target = $region20
      $region19: #{crnn_forward.12} parent=5 // pred_region
        // Predicated region
        $region21: #{crnn_forward.12} parent=19 // pred_check
          %p184 = pneg %p52
        $region22: #{crnn_forward.12} parent=19 // pred_check_branch
          %186 = sbr.rel (%p184) target = $region24
        $region23: #{crnn_forward.12} parent=19 // pred_region
          %p187 = scmp.lt.s32.totalorder %s11, 1
          %s188 = scalar_select %p187, %s11, 1
          %s189 = smul.addr %s188, 96
          %s190 = smul.addr %s189, 4
          %s191 = scalar_lea.vmem %s1, %s190
        $region24: #{crnn_forward.12} parent=19 // pred_fallthru
          _
        // Predicated region
        $region25: #{crnn_forward.12} parent=19 // pred_check
          %p192 = pneg %p78
        $region26: #{crnn_forward.12} parent=19 // pred_check_branch
          %194 = sbr.rel (%p192) target = $region28
        $region27: #{crnn_forward.12} parent=19 // pred_region
          %p195 = scmp.lt.s32.totalorder %s11, 1
          %s196 = scalar_select %p195, %s11, 1
          %s197 = smul.addr %s196, 3
          %s198 = scalar_lea.vmem %s2, %s197
        $region28: #{crnn_forward.12} parent=19 // pred_fallthru
          _
        // Predicated region
        $region29: #{crnn_forward.12} parent=19 // pred_check
          %p199 = pneg %p104
        $region30: #{crnn_forward.12} parent=19 // pred_check_branch
          %201 = sbr.rel (%p199) target = $region32
        $region31: #{crnn_forward.12} parent=19 // pred_region
          %p202 = scmp.lt.s32.totalorder %s11, 1
          %s203 = scalar_select %p202, %s11, 1
          %s204 = smul.addr %s203, 48
          %s205 = smul.addr %s204, 4
          %s206 = scalar_lea.vmem %s3, %s205
        $region32: #{crnn_forward.12} parent=19 // pred_fallthru
          _
        // Predicated region
        $region33: #{crnn_forward.12} parent=19 // pred_check
          %p207 = pneg %p130
        $region34: #{crnn_forward.12} parent=19 // pred_check_branch
          %209 = sbr.rel (%p207) target = $region36
        $region35: #{crnn_forward.12} parent=19 // pred_region
          %p210 = scmp.lt.s32.totalorder %s11, 1
          %s211 = scalar_select %p210, %s11, 1
          %s212 = smul.addr %s211, 3
          %s213 = scalar_lea.vmem %s4, %s212
        $region36: #{crnn_forward.12} parent=19 // pred_fallthru
          _
      $region20: #{crnn_forward.12} parent=5 // pred_fallthru
        _
      %p214 = scmp.le.s32.totalorder 1, %s11
      %p215 = scmp.lt.s32.totalorder %s11, 3
      %p216 = pnand %p214, %p215
      %p217 = pneg %p216
      // Predicated region
      $region37: #{crnn_forward.12} parent=5 // pred_check
        _
      $region38: #{crnn_forward.12} parent=5 // pred_check_branch
        %219 = sbr.rel (%p216) target = $region40
      $region39: #{crnn_forward.12} parent=5 // pred_region
        %s220 = ssub.s32 %s11, 1
        %p221 = pneg %p32
        %p222 = pneg %p29
        %p223 = scmp.lt.s32.totalorder %s16, 1
        %s224 = scalar_select %p223, %s16, 1
        %s225 = smul.addr %s224, 96
        %s226 = smul.addr %s225, 4
        %s227 = scalar_lea.vmem %s1, %s226
        %p228 = pneg %p58
        %p229 = pneg %p55
        %p230 = scmp.lt.s32.totalorder %s16, 1
        %s231 = scalar_select %p230, %s16, 1
        %s232 = smul.addr %s231, 3
        %s233 = scalar_lea.vmem %s2, %s232
        %p234 = pneg %p84
        %p235 = pneg %p81
        %p236 = scmp.lt.s32.totalorder %s16, 1
        %s237 = scalar_select %p236, %s16, 1
        %s238 = smul.addr %s237, 48
        %s239 = smul.addr %s238, 4
        %s240 = scalar_lea.vmem %s3, %s239
        %p241 = pneg %p110
        %p242 = pneg %p107
        %p243 = scmp.lt.s32.totalorder %s16, 1
        %s244 = scalar_select %p243, %s16, 1
        %s245 = smul.addr %s244, 3
        %s246 = scalar_lea.vmem %s4, %s245
        %p247 = pneg %p136
        %p248 = pneg %p133
        %p249 = pneg %p162
        %p250 = pneg %p159
        %s251 = sand.u32 %s149, 1
        %s252 = sand.u32 %s149, 1
        %s253 = smul.addr %s252, 10
        %s254 = scalar_lea.vmem [#allocation3], %s253
        %p255 = scmp.lt.s32.totalorder %s16, 1
        %s256 = scalar_select %p255, %s16, 1
        %s257 = smul.addr %s256, 96
        %s258 = smul.addr %s257, 4
        %s259 = scalar_lea.vmem %s1, %s258
        %p260 = scmp.lt.s32.totalorder %s16, 1
        %s261 = scalar_select %p260, %s16, 1
        %s262 = smul.addr %s261, 3
        %s263 = scalar_lea.vmem %s2, %s262
        %p264 = scmp.lt.s32.totalorder %s16, 1
        %s265 = scalar_select %p264, %s16, 1
        %s266 = smul.addr %s265, 48
        %s267 = smul.addr %s266, 4
        %s268 = scalar_lea.vmem %s3, %s267
        %p269 = scmp.lt.s32.totalorder %s16, 1
        %s270 = scalar_select %p269, %s16, 1
        %s271 = smul.addr %s270, 3
        %s272 = scalar_lea.vmem %s4, %s271
        %v274 = vld [vmem:[%s0] sm:$0xff]
        %v275 = vld [vmem:[%s0 + $0x8] sm:$0xff]
        %v276 = vld [vmem:[%s0 + $0x10] sm:$0x3]
        %v277 = vld [vmem:[%s0 + $0x18] sm:$0x3]
        %v278 = vpack.c.bf16 %v276, %v274
        %v279 = vpack.c.bf16 %v277, %v275
        %v280 = vld [vmem:[%s259] sm:$0xff]
        %v281 = vld [vmem:[%s259 + $0x8] sm:$0xf]
        %v282 = vld [vmem:[%s259 + $0xc] sm:$0xff]
        %v283 = vld [vmem:[%s259 + $0x14] sm:$0xf]
        %v284 = vld [vmem:[%s259 + $0x18] sm:$0xff]
        %v285 = vld [vmem:[%s259 + $0x20] sm:$0xf]
        %v286 = vld [vmem:[%s259 + $0x24] sm:$0xff]
        %v287 = vld [vmem:[%s259 + $0x2c] sm:$0xf]
        %v288 = vld [vmem:[%s259 + $0x30] sm:$0xff]
        %v289 = vld [vmem:[%s259 + $0x38] sm:$0xf]
        %v290 = vld [vmem:[%s259 + $0x3c] sm:$0xff]
        %v291 = vld [vmem:[%s259 + $0x44] sm:$0xf]
        %v292 = vld [vmem:[%s259 + $0x48] sm:$0xff]
        %v293 = vld [vmem:[%s259 + $0x50] sm:$0xf]
        %v294 = vld [vmem:[%s259 + $0x54] sm:$0xff]
        %v295 = vld [vmem:[%s259 + $0x5c] sm:$0xf]
        %v296 = vld [vmem:[%s259 + $0x60] sm:$0xff]
        %v297 = vld [vmem:[%s259 + $0x68] sm:$0xf]
        %v298 = vld [vmem:[%s259 + $0x6c] sm:$0xff]
        %v299 = vld [vmem:[%s259 + $0x74] sm:$0xf]
        %v300 = vld [vmem:[%s259 + $0x78] sm:$0xff]
        %v301 = vld [vmem:[%s259 + $0x80] sm:$0xf]
        %v302 = vld [vmem:[%s259 + $0x84] sm:$0xff]
        %v303 = vld [vmem:[%s259 + $0x8c] sm:$0xf]
        %v304 = vld [vmem:[%s259 + $0x90] sm:$0xff]
        %v305 = vld [vmem:[%s259 + $0x98] sm:$0xf]
        %v306 = vld [vmem:[%s259 + $0x9c] sm:$0xff]
        %v307 = vld [vmem:[%s259 + $0xa4] sm:$0xf]
        %v308 = vld [vmem:[%s259 + $0xa8] sm:$0xff]
        %v309 = vld [vmem:[%s259 + $0xb0] sm:$0xf]
        %v310 = vld [vmem:[%s259 + $0xb4] sm:$0xff]
        %v311 = vld [vmem:[%s259 + $0xbc] sm:$0xf]
        %v312 = vld [vmem:[%s259 + $0xc0] sm:$0xff]
        %v313 = vld [vmem:[%s259 + $0xc8] sm:$0xf]
        %v314 = vld [vmem:[%s259 + $0xcc] sm:$0xff]
        %v315 = vld [vmem:[%s259 + $0xd4] sm:$0xf]
        %v316 = vld [vmem:[%s259 + $0xd8] sm:$0xff]
        %v317 = vld [vmem:[%s259 + $0xe0] sm:$0xf]
        %v318 = vld [vmem:[%s259 + $0xe4] sm:$0xff]
        %v319 = vld [vmem:[%s259 + $0xec] sm:$0xf]
        %v320 = vld [vmem:[%s259 + $0xf0] sm:$0xff]
        %v321 = vld [vmem:[%s259 + $0xf8] sm:$0xf]
        %v322 = vld [vmem:[%s259 + $0xfc] sm:$0xff]
        %v323 = vld [vmem:[%s259 + $0x104] sm:$0xf]
        %v324 = vld [vmem:[%s259 + $0x108] sm:$0xff]
        %v325 = vld [vmem:[%s259 + $0x110] sm:$0xf]
        %v326 = vld [vmem:[%s259 + $0x114] sm:$0xff]
        %v327 = vld [vmem:[%s259 + $0x11c] sm:$0xf]
        %v328 = vld [vmem:[%s259 + $0x120] sm:$0xff]
        %v329 = vld [vmem:[%s259 + $0x128] sm:$0xf]
        %v330 = vld [vmem:[%s259 + $0x12c] sm:$0xff]
        %v331 = vld [vmem:[%s259 + $0x134] sm:$0xf]
        %v332 = vld [vmem:[%s259 + $0x138] sm:$0xff]
        %v333 = vld [vmem:[%s259 + $0x140] sm:$0xf]
        %v334 = vld [vmem:[%s259 + $0x144] sm:$0xff]
        %v335 = vld [vmem:[%s259 + $0x14c] sm:$0xf]
        %v336 = vld [vmem:[%s259 + $0x150] sm:$0xff]
        %v337 = vld [vmem:[%s259 + $0x158] sm:$0xf]
        %v338 = vld [vmem:[%s259 + $0x15c] sm:$0xff]
        %v339 = vld [vmem:[%s259 + $0x164] sm:$0xf]
        %v340 = vld [vmem:[%s259 + $0x168] sm:$0xff]
        %v341 = vld [vmem:[%s259 + $0x170] sm:$0xf]
        %v342 = vld [vmem:[%s259 + $0x174] sm:$0xff]
        %v343 = vld [vmem:[%s259 + $0x17c] sm:$0xf]
        %v344 = vld [vmem:[%s263] sm:$0x7]
        %v346 = vlaneseq
        %v347 = vshrl.u32 %v346, 7
        %v348 = vsub.s32 0, %v347
        %v349 = vrot.slane %v344, %v348
        %v350 = vlaneseq
        %v351 = vshrl.u32 %v350, 7
        %v352 = vsub.s32 1, %v351
        %v353 = vrot.slane %v344, %v352
        %v354 = vlaneseq
        %v355 = vshrl.u32 %v354, 7
        %v356 = vsub.s32 2, %v355
        %v357 = vrot.slane %v344, %v356
        %v425 = vunpack.c.l.b16 %v280
        %v426 = vunpack.c.h.b16 %v280
        %v427 = vunpack.c.l.b16 %v281
        %v428 = vunpack.c.l.b16 %v282
        %v429 = vunpack.c.h.b16 %v282
        %v430 = vunpack.c.l.b16 %v283
        %v431 = vunpack.c.l.b16 %v284
        %v432 = vunpack.c.h.b16 %v284
        %v433 = vunpack.c.l.b16 %v285
        %v434 = vunpack.c.l.b16 %v286
        %v435 = vunpack.c.h.b16 %v286
        %v436 = vunpack.c.l.b16 %v287
        %v437 = vunpack.c.l.b16 %v288
        %v438 = vunpack.c.h.b16 %v288
        %v439 = vunpack.c.l.b16 %v289
        %v440 = vunpack.c.l.b16 %v290
        %v441 = vunpack.c.h.b16 %v290
        %v442 = vunpack.c.l.b16 %v291
        %v443 = vunpack.c.l.b16 %v292
        %v444 = vunpack.c.h.b16 %v292
        %v445 = vunpack.c.l.b16 %v293
        %v446 = vunpack.c.l.b16 %v294
        %v447 = vunpack.c.h.b16 %v294
        %v448 = vunpack.c.l.b16 %v295
        %v449 = vunpack.c.l.b16 %v296
        %v450 = vunpack.c.h.b16 %v296
        %v451 = vunpack.c.l.b16 %v297
        %v452 = vunpack.c.l.b16 %v298
        %v453 = vunpack.c.h.b16 %v298
        %v454 = vunpack.c.l.b16 %v299
        %v455 = vunpack.c.l.b16 %v300
        %v456 = vunpack.c.h.b16 %v300
        %v457 = vunpack.c.l.b16 %v301
        %v458 = vunpack.c.l.b16 %v302
        %v459 = vunpack.c.h.b16 %v302
        %v460 = vunpack.c.l.b16 %v303
        %v461 = vunpack.c.l.b16 %v304
        %v462 = vunpack.c.h.b16 %v304
        %v463 = vunpack.c.l.b16 %v305
        %v464 = vunpack.c.l.b16 %v306
        %v465 = vunpack.c.h.b16 %v306
        %v466 = vunpack.c.l.b16 %v307
        %v467 = vunpack.c.l.b16 %v308
        %v468 = vunpack.c.h.b16 %v308
        %v469 = vunpack.c.l.b16 %v309
        %v470 = vunpack.c.l.b16 %v310
        %v471 = vunpack.c.h.b16 %v310
        %v472 = vunpack.c.l.b16 %v311
        %v473 = vunpack.c.l.b16 %v312
        %v474 = vunpack.c.h.b16 %v312
        %v475 = vunpack.c.l.b16 %v313
        %v476 = vunpack.c.l.b16 %v314
        %v477 = vunpack.c.h.b16 %v314
        %v478 = vunpack.c.l.b16 %v315
        %v479 = vunpack.c.l.b16 %v316
        %v480 = vunpack.c.h.b16 %v316
        %v481 = vunpack.c.l.b16 %v317
        %v482 = vunpack.c.l.b16 %v318
        %v483 = vunpack.c.h.b16 %v318
        %v484 = vunpack.c.l.b16 %v319
        %v485 = vunpack.c.l.b16 %v320
        %v486 = vunpack.c.h.b16 %v320
        %v487 = vunpack.c.l.b16 %v321
        %v488 = vunpack.c.l.b16 %v322
        %v489 = vunpack.c.h.b16 %v322
        %v490 = vunpack.c.l.b16 %v323
        %v491 = vunpack.c.l.b16 %v324
        %v492 = vunpack.c.h.b16 %v324
        %v493 = vunpack.c.l.b16 %v325
        %v494 = vunpack.c.l.b16 %v326
        %v495 = vunpack.c.h.b16 %v326
        %v496 = vunpack.c.l.b16 %v327
        %v497 = vunpack.c.l.b16 %v328
        %v498 = vunpack.c.h.b16 %v328
        %v499 = vunpack.c.l.b16 %v329
        %v500 = vunpack.c.l.b16 %v330
        %v501 = vunpack.c.h.b16 %v330
        %v502 = vunpack.c.l.b16 %v331
        %v503 = vunpack.c.l.b16 %v332
        %v504 = vunpack.c.h.b16 %v332
        %v505 = vunpack.c.l.b16 %v333
        %v506 = vunpack.c.l.b16 %v334
        %v507 = vunpack.c.h.b16 %v334
        %v508 = vunpack.c.l.b16 %v335
        %v509 = vunpack.c.l.b16 %v336
        %v510 = vunpack.c.h.b16 %v336
        %v511 = vunpack.c.l.b16 %v337
        %v512 = vunpack.c.l.b16 %v338
        %v513 = vunpack.c.h.b16 %v338
        %v514 = vunpack.c.l.b16 %v339
        %v515 = vunpack.c.l.b16 %v340
        %v516 = vunpack.c.h.b16 %v340
        %v517 = vunpack.c.l.b16 %v341
        %v518 = vunpack.c.l.b16 %v342
        %v519 = vunpack.c.h.b16 %v342
        %v520 = vunpack.c.l.b16 %v343
        %v521 = vpack.c.b16 %v428, %v425
        %v522 = vpack.c.b16 %v429, %v426
        %v523 = vpack.c.b16 %v430, %v427
        %v524 = vpack.c.b16 %v434, %v431
        %v525 = vpack.c.b16 %v435, %v432
        %v526 = vpack.c.b16 %v436, %v433
        %v527 = vpack.c.b16 %v440, %v437
        %v528 = vpack.c.b16 %v441, %v438
        %v529 = vpack.c.b16 %v442, %v439
        %v530 = vpack.c.b16 %v446, %v443
        %v531 = vpack.c.b16 %v447, %v444
        %v532 = vpack.c.b16 %v448, %v445
        %v533 = vpack.c.b16 %v452, %v449
        %v534 = vpack.c.b16 %v453, %v450
        %v535 = vpack.c.b16 %v454, %v451
        %v536 = vpack.c.b16 %v458, %v455
        %v537 = vpack.c.b16 %v459, %v456
        %v538 = vpack.c.b16 %v460, %v457
        %v539 = vpack.c.b16 %v464, %v461
        %v540 = vpack.c.b16 %v465, %v462
        %v541 = vpack.c.b16 %v466, %v463
        %v542 = vpack.c.b16 %v470, %v467
        %v543 = vpack.c.b16 %v471, %v468
        %v544 = vpack.c.b16 %v472, %v469
        %v545 = vpack.c.b16 %v476, %v473
        %v546 = vpack.c.b16 %v477, %v474
        %v547 = vpack.c.b16 %v478, %v475
        %v548 = vpack.c.b16 %v482, %v479
        %v549 = vpack.c.b16 %v483, %v480
        %v550 = vpack.c.b16 %v484, %v481
        %v551 = vpack.c.b16 %v488, %v485
        %v552 = vpack.c.b16 %v489, %v486
        %v553 = vpack.c.b16 %v490, %v487
        %v554 = vpack.c.b16 %v494, %v491
        %v555 = vpack.c.b16 %v495, %v492
        %v556 = vpack.c.b16 %v496, %v493
        %v557 = vpack.c.b16 %v500, %v497
        %v558 = vpack.c.b16 %v501, %v498
        %v559 = vpack.c.b16 %v502, %v499
        %v560 = vpack.c.b16 %v506, %v503
        %v561 = vpack.c.b16 %v507, %v504
        %v562 = vpack.c.b16 %v508, %v505
        %v563 = vpack.c.b16 %v512, %v509
        %v564 = vpack.c.b16 %v513, %v510
        %v565 = vpack.c.b16 %v514, %v511
        %v566 = vpack.c.b16 %v518, %v515
        %v567 = vpack.c.b16 %v519, %v516
        %v568 = vpack.c.b16 %v520, %v517
        %617 = vmatprep.subr.bf16.mxu0 %v522
        %618 = vmatpush1.bf16.msra.mxu0 %v521
        %619 = vmatprep.subr.bf16.mxu0 %v525
        %620 = vmatpush1.bf16.msra.mxu0 %v524
        %621 = vmatprep.subr.bf16.mxu0 %v528
        %622 = vmatpush1.bf16.msra.mxu0 %v527
        %623 = vmatprep.subr.bf16.mxu0 %v531
        %624 = vmatpush1.bf16.msra.mxu0 %v530
        %625 = vmatprep.subr.bf16.mxu0 %v534
        %626 = vmatpush1.bf16.msra.mxu0 %v533
        %627 = vmatprep.subr.bf16.mxu0 %v537
        %628 = vmatpush1.bf16.msra.mxu0 %v536
        %629 = vmatprep.subr.bf16.mxu0 %v540
        %630 = vmatpush1.bf16.msra.mxu0 %v539
        %631 = vmatprep.subr.bf16.mxu0 %v543
        %632 = vmatpush1.bf16.msra.mxu0 %v542
        %633 = vmatprep.subr.bf16.mxu0 %v546
        %634 = vmatpush1.bf16.msra.mxu0 %v545
        %635 = vmatprep.subr.bf16.mxu0 %v549
        %636 = vmatpush1.bf16.msra.mxu0 %v548
        %637 = vmatprep.subr.bf16.mxu0 %v552
        %638 = vmatpush1.bf16.msra.mxu0 %v551
        %639 = vmatprep.subr.bf16.mxu0 %v555
        %640 = vmatpush1.bf16.msra.mxu0 %v554
        %641 = vmatprep.subr.bf16.mxu0 %v558
        %642 = vmatpush1.bf16.msra.mxu0 %v557
        %643 = vmatprep.subr.bf16.mxu0 %v561
        %644 = vmatpush1.bf16.msra.mxu0 %v560
        %645 = vmatprep.subr.bf16.mxu0 %v564
        %646 = vmatpush1.bf16.msra.mxu0 %v563
        %647 = vmatprep.subr.bf16.mxu0 %v567
        %648 = vmatpush1.bf16.msra.mxu0 %v566
        %649 = vmatprep.mubr.bf16.mxu0 %v279
        %650 = vmatmul.mubr.bf16.gmra.mrb[0].mxu0 %v278
        %v651 = vpop.f32.mrb[0].mxu0
        %v652 = vadd.f32 %v349, %v651
        %v653 = vpop.f32.mrb[0].mxu0
        %v654 = vadd.f32 %v353, %v653
        %v655 = vpop.f32.mrb[0].mxu0
        %v656 = vadd.f32 %v349, %v655
        %v657 = vpop.f32.mrb[0].mxu0
        %v658 = vadd.f32 %v353, %v657
        %659 = vdwg.mxu0
        %660 = vmatprep.subr.bf16.mxu0 0
        %661 = vmatpush1.bf16.msra.mxu0 %v523
        %662 = vmatprep.subr.bf16.mxu0 0
        %663 = vmatpush1.bf16.msra.mxu0 %v526
        %664 = vmatprep.subr.bf16.mxu0 0
        %665 = vmatpush1.bf16.msra.mxu0 %v529
        %666 = vmatprep.subr.bf16.mxu0 0
        %667 = vmatpush1.bf16.msra.mxu0 %v532
        %668 = vmatprep.subr.bf16.mxu0 0
        %669 = vmatpush1.bf16.msra.mxu0 %v535
        %670 = vmatprep.subr.bf16.mxu0 0
        %671 = vmatpush1.bf16.msra.mxu0 %v538
        %672 = vmatprep.subr.bf16.mxu0 0
        %673 = vmatpush1.bf16.msra.mxu0 %v541
        %674 = vmatprep.subr.bf16.mxu0 0
        %675 = vmatpush1.bf16.msra.mxu0 %v544
        %676 = vmatprep.subr.bf16.mxu0 0
        %677 = vmatpush1.bf16.msra.mxu0 %v547
        %678 = vmatprep.subr.bf16.mxu0 0
        %679 = vmatpush1.bf16.msra.mxu0 %v550
        %680 = vmatprep.subr.bf16.mxu0 0
        %681 = vmatpush1.bf16.msra.mxu0 %v553
        %682 = vmatprep.subr.bf16.mxu0 0
        %683 = vmatpush1.bf16.msra.mxu0 %v556
        %684 = vmatprep.subr.bf16.mxu0 0
        %685 = vmatpush1.bf16.msra.mxu0 %v559
        %686 = vmatprep.subr.bf16.mxu0 0
        %687 = vmatpush1.bf16.msra.mxu0 %v562
        %688 = vmatprep.subr.bf16.mxu0 0
        %689 = vmatpush1.bf16.msra.mxu0 %v565
        %690 = vmatprep.subr.bf16.mxu0 0
        %691 = vmatpush1.bf16.msra.mxu0 %v568
        %692 = vmatprep.mubr.bf16.mxu0 %v279
        %693 = vmatmul.mubr.bf16.gmra.mrb[0].mxu0 %v278
        %v694 = vpop.f32.mrb[0].mxu0
        %v695 = vadd.f32 %v357, %v694
        %v696 = vpop.f32.mrb[0].mxu0
        %v697 = vpop.f32.mrb[0].mxu0
        %v698 = vadd.f32 %v357, %v697
        %v699 = vpop.f32.mrb[0].mxu0
        %700 = vdwg.mxu0
        %v704 = vcombine.low %v652, %v654
        %v706 = vunpack.c.l.s4 1983009808
        %v707 = vunpack.c.0.s8 %v706
        %v708 = vlaneseq
        %v709 = vshrl.u32 %v708, 7
        %v710 = vsub.s32 %v707, %v709
        %v711 = vrot.slane %v704, %v710
        %v713 = vunpack.c.l.s4 1983009808
        %v714 = vunpack.c.0.s8 %v713
        %v715 = vlaneseq
        %v716 = vshrl.u32 %v715, 7
        %v717 = vsub.s32 %v714, %v716
        %v718 = vrot.slane %v695, %v717
        %v719 = vcombine.low %v711, %v718
        %721 = vst [vmem:[#allocation2] sm:$0x3f] %v719
        %v722 = vcombine.high %v711, %v718
        %s724 = scalar_lea.vmem [#allocation2], 6
        %725 = vst [vmem:[%s724] sm:$0x3f] %v722
        %v726 = vcombine.high %v652, %v654
        %v727 = vcombine.high %v695, %v695
        %v729 = vunpack.c.l.s4 1983009808
        %v730 = vunpack.c.0.s8 %v729
        %v731 = vlaneseq
        %v732 = vshrl.u32 %v731, 7
        %v733 = vsub.s32 %v730, %v732
        %v734 = vrot.slane %v726, %v733
        %v736 = vunpack.c.l.s4 1983009808
        %v737 = vunpack.c.0.s8 %v736
        %v738 = vlaneseq
        %v739 = vshrl.u32 %v738, 7
        %v740 = vsub.s32 %v737, %v739
        %v741 = vrot.slane %v727, %v740
        %v742 = vcombine.low %v734, %v741
        %s744 = scalar_lea.vmem [#allocation2], 12
        %745 = vst [vmem:[%s744] sm:$0x3f] %v742
        %v746 = vcombine.high %v734, %v741
        %s748 = scalar_lea.vmem [#allocation2], 18
        %749 = vst [vmem:[%s748] sm:$0x3f] %v746
        %v753 = vcombine.low %v656, %v658
        %v755 = vunpack.c.l.s4 1983009808
        %v756 = vunpack.c.0.s8 %v755
        %v757 = vlaneseq
        %v758 = vshrl.u32 %v757, 7
        %v759 = vsub.s32 %v756, %v758
        %v760 = vrot.slane %v753, %v759
        %v762 = vunpack.c.l.s4 1983009808
        %v763 = vunpack.c.0.s8 %v762
        %v764 = vlaneseq
        %v765 = vshrl.u32 %v764, 7
        %v766 = vsub.s32 %v763, %v765
        %v767 = vrot.slane %v698, %v766
        %v768 = vcombine.low %v760, %v767
        %s770 = scalar_lea.vmem [#allocation2], 24
        %771 = vst [vmem:[%s770] sm:$0x3f] %v768
        %v772 = vld [vmem:[%s268] sm:$0xff]
        %v773 = vld [vmem:[%s268 + $0x8] sm:$0xf]
        %v774 = vld [vmem:[%s268 + $0xc] sm:$0xff]
        %v775 = vld [vmem:[%s268 + $0x14] sm:$0xf]
        %v776 = vld [vmem:[%s268 + $0x18] sm:$0xff]
        %v777 = vld [vmem:[%s268 + $0x20] sm:$0xf]
        %v778 = vld [vmem:[%s268 + $0x24] sm:$0xff]
        %v779 = vld [vmem:[%s268 + $0x2c] sm:$0xf]
        %v780 = vld [vmem:[%s268 + $0x30] sm:$0xff]
        %v781 = vld [vmem:[%s268 + $0x38] sm:$0xf]
        %v782 = vld [vmem:[%s268 + $0x3c] sm:$0xff]
        %v783 = vld [vmem:[%s268 + $0x44] sm:$0xf]
        %v784 = vld [vmem:[%s268 + $0x48] sm:$0xff]
        %v785 = vld [vmem:[%s268 + $0x50] sm:$0xf]
        %v786 = vld [vmem:[%s268 + $0x54] sm:$0xff]
        %v787 = vld [vmem:[%s268 + $0x5c] sm:$0xf]
        %v788 = vld [vmem:[%s268 + $0x60] sm:$0xff]
        %v789 = vld [vmem:[%s268 + $0x68] sm:$0xf]
        %v790 = vld [vmem:[%s268 + $0x6c] sm:$0xff]
        %v791 = vld [vmem:[%s268 + $0x74] sm:$0xf]
        %v792 = vld [vmem:[%s268 + $0x78] sm:$0xff]
        %v793 = vld [vmem:[%s268 + $0x80] sm:$0xf]
        %v794 = vld [vmem:[%s268 + $0x84] sm:$0xff]
        %v795 = vld [vmem:[%s268 + $0x8c] sm:$0xf]
        %v796 = vld [vmem:[%s268 + $0x90] sm:$0xff]
        %v797 = vld [vmem:[%s268 + $0x98] sm:$0xf]
        %v798 = vld [vmem:[%s268 + $0x9c] sm:$0xff]
        %v799 = vld [vmem:[%s268 + $0xa4] sm:$0xf]
        %v800 = vld [vmem:[%s268 + $0xa8] sm:$0xff]
        %v801 = vld [vmem:[%s268 + $0xb0] sm:$0xf]
        %v802 = vld [vmem:[%s268 + $0xb4] sm:$0xff]
        %v803 = vld [vmem:[%s268 + $0xbc] sm:$0xf]
        %v804 = vld [vmem:[%s272] sm:$0x7]
        %p805 = scmp.eq.s32.totalorder %s16, 0
        %s806 = scalar_select %p805, 0, 4
        %s807 = smul.u32 %s806, 3
        %s808 = smul.addr %s807, 2
        %s809 = scalar_lea.vmem [#allocation2], %s808
        %v810 = vld [vmem:[%s809] sm:$0x3f]
        %v812 = vlaneseq
        %v813 = vshrl.u32 %v812, 7
        %v814 = vsub.s32 0, %v813
        %v815 = vrot.slane %v804, %v814
        %v816 = vlaneseq
        %v817 = vshrl.u32 %v816, 7
        %v818 = vsub.s32 1, %v817
        %v819 = vrot.slane %v804, %v818
        %v820 = vlaneseq
        %v821 = vshrl.u32 %v820, 7
        %v822 = vsub.s32 2, %v821
        %v823 = vrot.slane %v804, %v822
        %v859 = vunpack.c.l.b16 %v772
        %v860 = vunpack.c.h.b16 %v772
        %v861 = vunpack.c.l.b16 %v773
        %v862 = vunpack.c.l.b16 %v774
        %v863 = vunpack.c.h.b16 %v774
        %v864 = vunpack.c.l.b16 %v775
        %v865 = vunpack.c.l.b16 %v776
        %v866 = vunpack.c.h.b16 %v776
        %v867 = vunpack.c.l.b16 %v777
        %v868 = vunpack.c.l.b16 %v778
        %v869 = vunpack.c.h.b16 %v778
        %v870 = vunpack.c.l.b16 %v779
        %v871 = vunpack.c.l.b16 %v780
        %v872 = vunpack.c.h.b16 %v780
        %v873 = vunpack.c.l.b16 %v781
        %v874 = vunpack.c.l.b16 %v782
        %v875 = vunpack.c.h.b16 %v782
        %v876 = vunpack.c.l.b16 %v783
        %v877 = vunpack.c.l.b16 %v784
        %v878 = vunpack.c.h.b16 %v784
        %v879 = vunpack.c.l.b16 %v785
        %v880 = vunpack.c.l.b16 %v786
        %v881 = vunpack.c.h.b16 %v786
        %v882 = vunpack.c.l.b16 %v787
        %v883 = vunpack.c.l.b16 %v788
        %v884 = vunpack.c.h.b16 %v788
        %v885 = vunpack.c.l.b16 %v789
        %v886 = vunpack.c.l.b16 %v790
        %v887 = vunpack.c.h.b16 %v790
        %v888 = vunpack.c.l.b16 %v791
        %v889 = vunpack.c.l.b16 %v792
        %v890 = vunpack.c.h.b16 %v792
        %v891 = vunpack.c.l.b16 %v793
        %v892 = vunpack.c.l.b16 %v794
        %v893 = vunpack.c.h.b16 %v794
        %v894 = vunpack.c.l.b16 %v795
        %v895 = vunpack.c.l.b16 %v796
        %v896 = vunpack.c.h.b16 %v796
        %v897 = vunpack.c.l.b16 %v797
        %v898 = vunpack.c.l.b16 %v798
        %v899 = vunpack.c.h.b16 %v798
        %v900 = vunpack.c.l.b16 %v799
        %v901 = vunpack.c.l.b16 %v800
        %v902 = vunpack.c.h.b16 %v800
        %v903 = vunpack.c.l.b16 %v801
        %v904 = vunpack.c.l.b16 %v802
        %v905 = vunpack.c.h.b16 %v802
        %v906 = vunpack.c.l.b16 %v803
        %v907 = vpack.c.b16 %v862, %v859
        %v908 = vpack.c.b16 %v863, %v860
        %v909 = vpack.c.b16 %v864, %v861
        %v910 = vpack.c.b16 %v868, %v865
        %v911 = vpack.c.b16 %v869, %v866
        %v912 = vpack.c.b16 %v870, %v867
        %v913 = vpack.c.b16 %v874, %v871
        %v914 = vpack.c.b16 %v875, %v872
        %v915 = vpack.c.b16 %v876, %v873
        %v916 = vpack.c.b16 %v880, %v877
        %v917 = vpack.c.b16 %v881, %v878
        %v918 = vpack.c.b16 %v882, %v879
        %v919 = vpack.c.b16 %v886, %v883
        %v920 = vpack.c.b16 %v887, %v884
        %v921 = vpack.c.b16 %v888, %v885
        %v922 = vpack.c.b16 %v892, %v889
        %v923 = vpack.c.b16 %v893, %v890
        %v924 = vpack.c.b16 %v894, %v891
        %v925 = vpack.c.b16 %v898, %v895
        %v926 = vpack.c.b16 %v899, %v896
        %v927 = vpack.c.b16 %v900, %v897
        %v928 = vpack.c.b16 %v904, %v901
        %v929 = vpack.c.b16 %v905, %v902
        %v930 = vpack.c.b16 %v906, %v903
        %955 = vmatprep.subr.bf16.mxu0 %v908
        %956 = vmatpush1.bf16.msra.mxu0 %v907
        %957 = vmatprep.subr.bf16.mxu0 %v911
        %958 = vmatpush1.bf16.msra.mxu0 %v910
        %959 = vmatprep.subr.bf16.mxu0 %v914
        %960 = vmatpush1.bf16.msra.mxu0 %v913
        %961 = vmatprep.subr.bf16.mxu0 %v917
        %962 = vmatpush1.bf16.msra.mxu0 %v916
        %963 = vmatprep.subr.bf16.mxu0 %v920
        %964 = vmatpush1.bf16.msra.mxu0 %v919
        %965 = vmatprep.subr.bf16.mxu0 %v923
        %966 = vmatpush1.bf16.msra.mxu0 %v922
        %967 = vmatprep.subr.bf16.mxu0 %v926
        %968 = vmatpush1.bf16.msra.mxu0 %v925
        %969 = vmatprep.subr.bf16.mxu0 %v929
        %970 = vmatpush1.bf16.msra.mxu0 %v928
        %971 = vmatprep.subr.bf16.mxu0 0
        %972 = vmatpush1.bf16.msra.mxu0 0
        %973 = vmatprep.subr.bf16.mxu0 0
        %974 = vmatpush1.bf16.msra.mxu0 0
        %975 = vmatprep.subr.bf16.mxu0 0
        %976 = vmatpush1.bf16.msra.mxu0 0
        %977 = vmatprep.subr.bf16.mxu0 0
        %978 = vmatpush1.bf16.msra.mxu0 0
        %979 = vmatprep.subr.bf16.mxu0 0
        %980 = vmatpush1.bf16.msra.mxu0 0
        %981 = vmatprep.subr.bf16.mxu0 0
        %982 = vmatpush1.bf16.msra.mxu0 0
        %983 = vmatprep.subr.bf16.mxu0 0
        %984 = vmatpush1.bf16.msra.mxu0 0
        %985 = vmatprep.subr.bf16.mxu0 0
        %986 = vmatpush1.bf16.msra.mxu0 0
        %987 = vmatprep.mubr.bf16.mxu0 0
        %988 = vmatmul.mubr.bf16.gmra.mrb[0].mxu0 0
        %v989 = vpop.f32.mrb[0].mxu0
        %v990 = vadd.f32 %v815, %v989
        %v991 = vpop.f32.mrb[0].mxu0
        %v992 = vadd.f32 %v819, %v991
        %v993 = vpop.f32.mrb[0].mxu0
        %v994 = vpop.f32.mrb[0].mxu0
        %995 = vdwg.mxu0
        %996 = vmatprep.subr.bf16.mxu0 0
        %997 = vmatpush1.bf16.msra.mxu0 %v909
        %998 = vmatprep.subr.bf16.mxu0 0
        %999 = vmatpush1.bf16.msra.mxu0 %v912
        %1000 = vmatprep.subr.bf16.mxu0 0
        %1001 = vmatpush1.bf16.msra.mxu0 %v915
        %1002 = vmatprep.subr.bf16.mxu0 0
        %1003 = vmatpush1.bf16.msra.mxu0 %v918
        %1004 = vmatprep.subr.bf16.mxu0 0
        %1005 = vmatpush1.bf16.msra.mxu0 %v921
        %1006 = vmatprep.subr.bf16.mxu0 0
        %1007 = vmatpush1.bf16.msra.mxu0 %v924
        %1008 = vmatprep.subr.bf16.mxu0 0
        %1009 = vmatpush1.bf16.msra.mxu0 %v927
        %1010 = vmatprep.subr.bf16.mxu0 0
        %1011 = vmatpush1.bf16.msra.mxu0 %v930
        %1012 = vmatprep.subr.bf16.mxu0 0
        %1013 = vmatpush1.bf16.msra.mxu0 0
        %1014 = vmatprep.subr.bf16.mxu0 0
        %1015 = vmatpush1.bf16.msra.mxu0 0
        %1016 = vmatprep.subr.bf16.mxu0 0
        %1017 = vmatpush1.bf16.msra.mxu0 0
        %1018 = vmatprep.subr.bf16.mxu0 0
        %1019 = vmatpush1.bf16.msra.mxu0 0
        %1020 = vmatprep.subr.bf16.mxu0 0
        %1021 = vmatpush1.bf16.msra.mxu0 0
        %1022 = vmatprep.subr.bf16.mxu0 0
        %1023 = vmatpush1.bf16.msra.mxu0 0
        %1024 = vmatprep.subr.bf16.mxu0 0
        %1025 = vmatpush1.bf16.msra.mxu0 0
        %1026 = vmatprep.subr.bf16.mxu0 0
        %1027 = vmatpush1.bf16.msra.mxu0 0
        %1028 = vmatprep.mubr.bf16.mxu0 0
        %1029 = vmatmul.mubr.bf16.gmra.mrb[0].mxu0 0
        %v1030 = vpop.f32.mrb[0].mxu0
        %v1031 = vadd.f32 %v823, %v1030
        %v1032 = vpop.f32.mrb[0].mxu0
        %v1033 = vpop.f32.mrb[0].mxu0
        %v1034 = vpop.f32.mrb[0].mxu0
        %1035 = vdwg.mxu0
        %v1036 = vadd.f32 %v810, %v990
        %v1037 = vxor.u32 %v1036, 2147483648
        %v1038 = vmul.f32 %v1037, 1.442695
        %v1039 = vpow.pop %v1038
        %v1040 = vadd.f32 %v1039, 1.0
        %v1041 = vrcp.pop %v1040
        %v1042 = vmul.f32 1.0, %v1041
        %v1044 = vrot.slane %v810, 2
        %v1046 = vadd.f32 %v1044, %v992
        %v1047 = vxor.u32 %v1046, 2147483648
        %v1048 = vmul.f32 %v1047, 1.442695
        %v1049 = vpow.pop %v1048
        %v1050 = vadd.f32 %v1049, 1.0
        %v1051 = vrcp.pop %v1050
        %v1052 = vmul.f32 1.0, %v1051
        %v1053 = vmul.f32 %v1042, %v1031
        %v1054 = vrot.slane %v810, 4
        %v1056 = vadd.f32 %v1054, %v1053
        %v1057 = vtanh.pop %v1056
        %v1058 = vsub.f32 1.0, %v1052
        %v1059 = vmul.f32 %v1058, %v1057
        %v1060 = vmul.f32 %v1052, 0.0
        %v1061 = vadd.f32 %v1059, %v1060
        %s1062 = smul.u32 %s806, 2
        %s1063 = scalar_lea.vmem %s254, %s1062 [#allocation3]
        %1064 = vst [vmem:[%s1063] sm:$0x3] %v1061
        %s1065 = scalar_select %p805, 1, 3
        %s1066 = smul.u32 %s1065, 3
        %s1067 = smul.addr %s1066, 2
        %s1068 = scalar_lea.vmem [#allocation2], %s1067
        %v1069 = vld [vmem:[%s1068] sm:$0x3f]
        %v1070 = vpack.c.bf16 %v1061, %v1061
        %1071 = vmatprep.subr.bf16.mxu0 %v908
        %1072 = vmatpush1.bf16.msra.mxu0 %v907
        %1073 = vmatprep.subr.bf16.mxu0 %v911
        %1074 = vmatpush1.bf16.msra.mxu0 %v910
        %1075 = vmatprep.subr.bf16.mxu0 %v914
        %1076 = vmatpush1.bf16.msra.mxu0 %v913
        %1077 = vmatprep.subr.bf16.mxu0 %v917
        %1078 = vmatpush1.bf16.msra.mxu0 %v916
        %1079 = vmatprep.subr.bf16.mxu0 %v920
        %1080 = vmatpush1.bf16.msra.mxu0 %v919
        %1081 = vmatprep.subr.bf16.mxu0 %v923
        %1082 = vmatpush1.bf16.msra.mxu0 %v922
        %1083 = vmatprep.subr.bf16.mxu0 %v926
        %1084 = vmatpush1.bf16.msra.mxu0 %v925
        %1085 = vmatprep.subr.bf16.mxu0 %v929
        %1086 = vmatpush1.bf16.msra.mxu0 %v928
        %1087 = vmatprep.subr.bf16.mxu0 0
        %1088 = vmatpush1.bf16.msra.mxu0 0
        %1089 = vmatprep.subr.bf16.mxu0 0
        %1090 = vmatpush1.bf16.msra.mxu0 0
        %1091 = vmatprep.subr.bf16.mxu0 0
        %1092 = vmatpush1.bf16.msra.mxu0 0
        %1093 = vmatprep.subr.bf16.mxu0 0
        %1094 = vmatpush1.bf16.msra.mxu0 0
        %1095 = vmatprep.subr.bf16.mxu0 0
        %1096 = vmatpush1.bf16.msra.mxu0 0
        %1097 = vmatprep.subr.bf16.mxu0 0
        %1098 = vmatpush1.bf16.msra.mxu0 0
        %1099 = vmatprep.subr.bf16.mxu0 0
        %1100 = vmatpush1.bf16.msra.mxu0 0
        %1101 = vmatprep.subr.bf16.mxu0 0
        %1102 = vmatpush1.bf16.msra.mxu0 0
        %1103 = vmatprep.mubr.bf16.mxu0 0
        %1104 = vmatmul.mubr.bf16.gmra.mrb[0].mxu0 %v1070
        %v1105 = vpop.f32.mrb[0].mxu0
        %v1106 = vadd.f32 %v815, %v1105
        %v1107 = vpop.f32.mrb[0].mxu0
        %v1108 = vadd.f32 %v819, %v1107
        %v1109 = vpop.f32.mrb[0].mxu0
        %v1110 = vpop.f32.mrb[0].mxu0
        %1111 = vdwg.mxu0
        %1112 = vmatprep.subr.bf16.mxu0 0
        %1113 = vmatpush1.bf16.msra.mxu0 %v909
        %1114 = vmatprep.subr.bf16.mxu0 0
        %1115 = vmatpush1.bf16.msra.mxu0 %v912
        %1116 = vmatprep.subr.bf16.mxu0 0
        %1117 = vmatpush1.bf16.msra.mxu0 %v915
        %1118 = vmatprep.subr.bf16.mxu0 0
        %1119 = vmatpush1.bf16.msra.mxu0 %v918
        %1120 = vmatprep.subr.bf16.mxu0 0
        %1121 = vmatpush1.bf16.msra.mxu0 %v921
        %1122 = vmatprep.subr.bf16.mxu0 0
        %1123 = vmatpush1.bf16.msra.mxu0 %v924
        %1124 = vmatprep.subr.bf16.mxu0 0
        %1125 = vmatpush1.bf16.msra.mxu0 %v927
        %1126 = vmatprep.subr.bf16.mxu0 0
        %1127 = vmatpush1.bf16.msra.mxu0 %v930
        %1128 = vmatprep.subr.bf16.mxu0 0
        %1129 = vmatpush1.bf16.msra.mxu0 0
        %1130 = vmatprep.subr.bf16.mxu0 0
        %1131 = vmatpush1.bf16.msra.mxu0 0
        %1132 = vmatprep.subr.bf16.mxu0 0
        %1133 = vmatpush1.bf16.msra.mxu0 0
        %1134 = vmatprep.subr.bf16.mxu0 0
        %1135 = vmatpush1.bf16.msra.mxu0 0
        %1136 = vmatprep.subr.bf16.mxu0 0
        %1137 = vmatpush1.bf16.msra.mxu0 0
        %1138 = vmatprep.subr.bf16.mxu0 0
        %1139 = vmatpush1.bf16.msra.mxu0 0
        %1140 = vmatprep.subr.bf16.mxu0 0
        %1141 = vmatpush1.bf16.msra.mxu0 0
        %1142 = vmatprep.subr.bf16.mxu0 0
        %1143 = vmatpush1.bf16.msra.mxu0 0
        %1144 = vmatprep.mubr.bf16.mxu0 0
        %1145 = vmatmul.mubr.bf16.gmra.mrb[0].mxu0 %v1070
        %v1146 = vpop.f32.mrb[0].mxu0
        %v1147 = vadd.f32 %v823, %v1146
        %v1148 = vpop.f32.mrb[0].mxu0
        %v1149 = vpop.f32.mrb[0].mxu0
        %v1150 = vpop.f32.mrb[0].mxu0
        %1151 = vdwg.mxu0
        %v1152 = vadd.f32 %v1069, %v1106
        %v1153 = vxor.u32 %v1152, 2147483648
        %v1154 = vmul.f32 %v1153, 1.442695
        %v1155 = vpow.pop %v1154
        %v1156 = vadd.f32 %v1155, 1.0
        %v1157 = vrcp.pop %v1156
        %v1158 = vmul.f32 1.0, %v1157
        %v1160 = vrot.slane %v1069, 2
        %v1162 = vadd.f32 %v1160, %v1108
        %v1163 = vxor.u32 %v1162, 2147483648
        %v1164 = vmul.f32 %v1163, 1.442695
        %v1165 = vpow.pop %v1164
        %v1166 = vadd.f32 %v1165, 1.0
        %v1167 = vrcp.pop %v1166
        %v1168 = vmul.f32 1.0, %v1167
        %v1169 = vmul.f32 %v1158, %v1147
        %v1170 = vrot.slane %v1069, 4
        %v1172 = vadd.f32 %v1170, %v1169
        %v1173 = vtanh.pop %v1172
        %v1174 = vsub.f32 1.0, %v1168
        %v1175 = vmul.f32 %v1174, %v1173
        %v1176 = vmul.f32 %v1168, %v1061
        %v1177 = vadd.f32 %v1175, %v1176
        %s1178 = smul.u32 %s1065, 2
        %s1179 = scalar_lea.vmem %s254, %s1178 [#allocation3]
        %1180 = vst [vmem:[%s1179] sm:$0x3] %v1177
        %v1181 = vld [vmem:[%s744] sm:$0x3f]
        %v1182 = vpack.c.bf16 %v1177, %v1177
        %1183 = vmatprep.subr.bf16.mxu0 %v908
        %1184 = vmatpush1.bf16.msra.mxu0 %v907
        %1185 = vmatprep.subr.bf16.mxu0 %v911
        %1186 = vmatpush1.bf16.msra.mxu0 %v910
        %1187 = vmatprep.subr.bf16.mxu0 %v914
        %1188 = vmatpush1.bf16.msra.mxu0 %v913
        %1189 = vmatprep.subr.bf16.mxu0 %v917
        %1190 = vmatpush1.bf16.msra.mxu0 %v916
        %1191 = vmatprep.subr.bf16.mxu0 %v920
        %1192 = vmatpush1.bf16.msra.mxu0 %v919
        %1193 = vmatprep.subr.bf16.mxu0 %v923
        %1194 = vmatpush1.bf16.msra.mxu0 %v922
        %1195 = vmatprep.subr.bf16.mxu0 %v926
        %1196 = vmatpush1.bf16.msra.mxu0 %v925
        %1197 = vmatprep.subr.bf16.mxu0 %v929
        %1198 = vmatpush1.bf16.msra.mxu0 %v928
        %1199 = vmatprep.subr.bf16.mxu0 0
        %1200 = vmatpush1.bf16.msra.mxu0 0
        %1201 = vmatprep.subr.bf16.mxu0 0
        %1202 = vmatpush1.bf16.msra.mxu0 0
        %1203 = vmatprep.subr.bf16.mxu0 0
        %1204 = vmatpush1.bf16.msra.mxu0 0
        %1205 = vmatprep.subr.bf16.mxu0 0
        %1206 = vmatpush1.bf16.msra.mxu0 0
        %1207 = vmatprep.subr.bf16.mxu0 0
        %1208 = vmatpush1.bf16.msra.mxu0 0
        %1209 = vmatprep.subr.bf16.mxu0 0
        %1210 = vmatpush1.bf16.msra.mxu0 0
        %1211 = vmatprep.subr.bf16.mxu0 0
        %1212 = vmatpush1.bf16.msra.mxu0 0
        %1213 = vmatprep.subr.bf16.mxu0 0
        %1214 = vmatpush1.bf16.msra.mxu0 0
        %1215 = vmatprep.mubr.bf16.mxu0 0
        %1216 = vmatmul.mubr.bf16.gmra.mrb[0].mxu0 %v1182
        %v1217 = vpop.f32.mrb[0].mxu0
        %v1218 = vadd.f32 %v815, %v1217
        %v1219 = vpop.f32.mrb[0].mxu0
        %v1220 = vadd.f32 %v819, %v1219
        %v1221 = vpop.f32.mrb[0].mxu0
        %v1222 = vpop.f32.mrb[0].mxu0
        %1223 = vdwg.mxu0
        %1224 = vmatprep.subr.bf16.mxu0 0
        %1225 = vmatpush1.bf16.msra.mxu0 %v909
        %1226 = vmatprep.subr.bf16.mxu0 0
        %1227 = vmatpush1.bf16.msra.mxu0 %v912
        %1228 = vmatprep.subr.bf16.mxu0 0
        %1229 = vmatpush1.bf16.msra.mxu0 %v915
        %1230 = vmatprep.subr.bf16.mxu0 0
        %1231 = vmatpush1.bf16.msra.mxu0 %v918
        %1232 = vmatprep.subr.bf16.mxu0 0
        %1233 = vmatpush1.bf16.msra.mxu0 %v921
        %1234 = vmatprep.subr.bf16.mxu0 0
        %1235 = vmatpush1.bf16.msra.mxu0 %v924
        %1236 = vmatprep.subr.bf16.mxu0 0
        %1237 = vmatpush1.bf16.msra.mxu0 %v927
        %1238 = vmatprep.subr.bf16.mxu0 0
        %1239 = vmatpush1.bf16.msra.mxu0 %v930
        %1240 = vmatprep.subr.bf16.mxu0 0
        %1241 = vmatpush1.bf16.msra.mxu0 0
        %1242 = vmatprep.subr.bf16.mxu0 0
        %1243 = vmatpush1.bf16.msra.mxu0 0
        %1244 = vmatprep.subr.bf16.mxu0 0
        %1245 = vmatpush1.bf16.msra.mxu0 0
        %1246 = vmatprep.subr.bf16.mxu0 0
        %1247 = vmatpush1.bf16.msra.mxu0 0
        %1248 = vmatprep.subr.bf16.mxu0 0
        %1249 = vmatpush1.bf16.msra.mxu0 0
        %1250 = vmatprep.subr.bf16.mxu0 0
        %1251 = vmatpush1.bf16.msra.mxu0 0
        %1252 = vmatprep.subr.bf16.mxu0 0
        %1253 = vmatpush1.bf16.msra.mxu0 0
        %1254 = vmatprep.subr.bf16.mxu0 0
        %1255 = vmatpush1.bf16.msra.mxu0 0
        %1256 = vmatprep.mubr.bf16.mxu0 0
        %1257 = vmatmul.mubr.bf16.gmra.mrb[0].mxu0 %v1182
        %v1258 = vpop.f32.mrb[0].mxu0
        %v1259 = vadd.f32 %v823, %v1258
        %v1260 = vpop.f32.mrb[0].mxu0
        %v1261 = vpop.f32.mrb[0].mxu0
        %v1262 = vpop.f32.mrb[0].mxu0
        %1263 = vdwg.mxu0
        %v1264 = vadd.f32 %v1181, %v1218
        %v1265 = vxor.u32 %v1264, 2147483648
        %v1266 = vmul.f32 %v1265, 1.442695
        %v1267 = vpow.pop %v1266
        %v1268 = vadd.f32 %v1267, 1.0
        %v1269 = vrcp.pop %v1268
        %v1270 = vmul.f32 1.0, %v1269
        %v1272 = vrot.slane %v1181, 2
        %v1274 = vadd.f32 %v1272, %v1220
        %v1275 = vxor.u32 %v1274, 2147483648
        %v1276 = vmul.f32 %v1275, 1.442695
        %v1277 = vpow.pop %v1276
        %v1278 = vadd.f32 %v1277, 1.0
        %v1279 = vrcp.pop %v1278
        %v1280 = vmul.f32 1.0, %v1279
        %v1281 = vmul.f32 %v1270, %v1259
        %v1282 = vrot.slane %v1181, 4
        %v1284 = vadd.f32 %v1282, %v1281
        %v1285 = vtanh.pop %v1284
        %v1286 = vsub.f32 1.0, %v1280
        %v1287 = vmul.f32 %v1286, %v1285
        %v1288 = vmul.f32 %v1280, %v1177
        %v1289 = vadd.f32 %v1287, %v1288
        %s1290 = scalar_lea.vmem %s254, 4 [#allocation3]
        %1291 = vst [vmem:[%s1290] sm:$0x3] %v1289
        %s1292 = scalar_select %p805, 3, 1
        %s1293 = smul.u32 %s1292, 3
        %s1294 = smul.addr %s1293, 2
        %s1295 = scalar_lea.vmem [#allocation2], %s1294
        %v1296 = vld [vmem:[%s1295] sm:$0x3f]
        %v1297 = vpack.c.bf16 %v1289, %v1289
        %1298 = vmatprep.subr.bf16.mxu0 %v908
        %1299 = vmatpush1.bf16.msra.mxu0 %v907
        %1300 = vmatprep.subr.bf16.mxu0 %v911
        %1301 = vmatpush1.bf16.msra.mxu0 %v910
        %1302 = vmatprep.subr.bf16.mxu0 %v914
        %1303 = vmatpush1.bf16.msra.mxu0 %v913
        %1304 = vmatprep.subr.bf16.mxu0 %v917
        %1305 = vmatpush1.bf16.msra.mxu0 %v916
        %1306 = vmatprep.subr.bf16.mxu0 %v920
        %1307 = vmatpush1.bf16.msra.mxu0 %v919
        %1308 = vmatprep.subr.bf16.mxu0 %v923
        %1309 = vmatpush1.bf16.msra.mxu0 %v922
        %1310 = vmatprep.subr.bf16.mxu0 %v926
        %1311 = vmatpush1.bf16.msra.mxu0 %v925
        %1312 = vmatprep.subr.bf16.mxu0 %v929
        %1313 = vmatpush1.bf16.msra.mxu0 %v928
        %1314 = vmatprep.subr.bf16.mxu0 0
        %1315 = vmatpush1.bf16.msra.mxu0 0
        %1316 = vmatprep.subr.bf16.mxu0 0
        %1317 = vmatpush1.bf16.msra.mxu0 0
        %1318 = vmatprep.subr.bf16.mxu0 0
        %1319 = vmatpush1.bf16.msra.mxu0 0
        %1320 = vmatprep.subr.bf16.mxu0 0
        %1321 = vmatpush1.bf16.msra.mxu0 0
        %1322 = vmatprep.subr.bf16.mxu0 0
        %1323 = vmatpush1.bf16.msra.mxu0 0
        %1324 = vmatprep.subr.bf16.mxu0 0
        %1325 = vmatpush1.bf16.msra.mxu0 0
        %1326 = vmatprep.subr.bf16.mxu0 0
        %1327 = vmatpush1.bf16.msra.mxu0 0
        %1328 = vmatprep.subr.bf16.mxu0 0
        %1329 = vmatpush1.bf16.msra.mxu0 0
        %1330 = vmatprep.mubr.bf16.mxu0 0
        %1331 = vmatmul.mubr.bf16.gmra.mrb[0].mxu0 %v1297
        %v1332 = vpop.f32.mrb[0].mxu0
        %v1333 = vadd.f32 %v815, %v1332
        %v1334 = vpop.f32.mrb[0].mxu0
        %v1335 = vadd.f32 %v819, %v1334
        %v1336 = vpop.f32.mrb[0].mxu0
        %v1337 = vpop.f32.mrb[0].mxu0
        %1338 = vdwg.mxu0
        %1339 = vmatprep.subr.bf16.mxu0 0
        %1340 = vmatpush1.bf16.msra.mxu0 %v909
        %1341 = vmatprep.subr.bf16.mxu0 0
        %1342 = vmatpush1.bf16.msra.mxu0 %v912
        %1343 = vmatprep.subr.bf16.mxu0 0
        %1344 = vmatpush1.bf16.msra.mxu0 %v915
        %1345 = vmatprep.subr.bf16.mxu0 0
        %1346 = vmatpush1.bf16.msra.mxu0 %v918
        %1347 = vmatprep.subr.bf16.mxu0 0
        %1348 = vmatpush1.bf16.msra.mxu0 %v921
        %1349 = vmatprep.subr.bf16.mxu0 0
        %1350 = vmatpush1.bf16.msra.mxu0 %v924
        %1351 = vmatprep.subr.bf16.mxu0 0
        %1352 = vmatpush1.bf16.msra.mxu0 %v927
        %1353 = vmatprep.subr.bf16.mxu0 0
        %1354 = vmatpush1.bf16.msra.mxu0 %v930
        %1355 = vmatprep.subr.bf16.mxu0 0
        %1356 = vmatpush1.bf16.msra.mxu0 0
        %1357 = vmatprep.subr.bf16.mxu0 0
        %1358 = vmatpush1.bf16.msra.mxu0 0
        %1359 = vmatprep.subr.bf16.mxu0 0
        %1360 = vmatpush1.bf16.msra.mxu0 0
        %1361 = vmatprep.subr.bf16.mxu0 0
        %1362 = vmatpush1.bf16.msra.mxu0 0
        %1363 = vmatprep.subr.bf16.mxu0 0
        %1364 = vmatpush1.bf16.msra.mxu0 0
        %1365 = vmatprep.subr.bf16.mxu0 0
        %1366 = vmatpush1.bf16.msra.mxu0 0
        %1367 = vmatprep.subr.bf16.mxu0 0
        %1368 = vmatpush1.bf16.msra.mxu0 0
        %1369 = vmatprep.subr.bf16.mxu0 0
        %1370 = vmatpush1.bf16.msra.mxu0 0
        %1371 = vmatprep.mubr.bf16.mxu0 0
        %1372 = vmatmul.mubr.bf16.gmra.mrb[0].mxu0 %v1297
        %v1373 = vpop.f32.mrb[0].mxu0
        %v1374 = vadd.f32 %v823, %v1373
        %v1375 = vpop.f32.mrb[0].mxu0
        %v1376 = vpop.f32.mrb[0].mxu0
        %v1377 = vpop.f32.mrb[0].mxu0
        %1378 = vdwg.mxu0
        %v1379 = vadd.f32 %v1296, %v1333
        %v1380 = vxor.u32 %v1379, 2147483648
        %v1381 = vmul.f32 %v1380, 1.442695
        %v1382 = vpow.pop %v1381
        %v1383 = vadd.f32 %v1382, 1.0
        %v1384 = vrcp.pop %v1383
        %v1385 = vmul.f32 1.0, %v1384
        %v1387 = vrot.slane %v1296, 2
        %v1389 = vadd.f32 %v1387, %v1335
        %v1390 = vxor.u32 %v1389, 2147483648
        %v1391 = vmul.f32 %v1390, 1.442695
        %v1392 = vpow.pop %v1391
        %v1393 = vadd.f32 %v1392, 1.0
        %v1394 = vrcp.pop %v1393
        %v1395 = vmul.f32 1.0, %v1394
        %v1396 = vmul.f32 %v1385, %v1374
        %v1397 = vrot.slane %v1296, 4
        %v1399 = vadd.f32 %v1397, %v1396
        %v1400 = vtanh.pop %v1399
        %v1401 = vsub.f32 1.0, %v1395
        %v1402 = vmul.f32 %v1401, %v1400
        %v1403 = vmul.f32 %v1395, %v1289
        %v1404 = vadd.f32 %v1402, %v1403
        %s1405 = smul.u32 %s1292, 2
        %s1406 = scalar_lea.vmem %s254, %s1405 [#allocation3]
        %1407 = vst [vmem:[%s1406] sm:$0x3] %v1404
        %s1408 = scalar_select %p805, 4, 0
        %s1409 = smul.u32 %s1408, 3
        %s1410 = smul.addr %s1409, 2
        %s1411 = scalar_lea.vmem [#allocation2], %s1410
        %v1412 = vld [vmem:[%s1411] sm:$0x3f]
        %v1413 = vpack.c.bf16 %v1404, %v1404
        %1414 = vmatprep.subr.bf16.mxu0 %v908
        %1415 = vmatpush1.bf16.msra.mxu0 %v907
        %1416 = vmatprep.subr.bf16.mxu0 %v911
        %1417 = vmatpush1.bf16.msra.mxu0 %v910
        %1418 = vmatprep.subr.bf16.mxu0 %v914
        %1419 = vmatpush1.bf16.msra.mxu0 %v913
        %1420 = vmatprep.subr.bf16.mxu0 %v917
        %1421 = vmatpush1.bf16.msra.mxu0 %v916
        %1422 = vmatprep.subr.bf16.mxu0 %v920
        %1423 = vmatpush1.bf16.msra.mxu0 %v919
        %1424 = vmatprep.subr.bf16.mxu0 %v923
        %1425 = vmatpush1.bf16.msra.mxu0 %v922
        %1426 = vmatprep.subr.bf16.mxu0 %v926
        %1427 = vmatpush1.bf16.msra.mxu0 %v925
        %1428 = vmatprep.subr.bf16.mxu0 %v929
        %1429 = vmatpush1.bf16.msra.mxu0 %v928
        %1430 = vmatprep.subr.bf16.mxu0 0
        %1431 = vmatpush1.bf16.msra.mxu0 0
        %1432 = vmatprep.subr.bf16.mxu0 0
        %1433 = vmatpush1.bf16.msra.mxu0 0
        %1434 = vmatprep.subr.bf16.mxu0 0
        %1435 = vmatpush1.bf16.msra.mxu0 0
        %1436 = vmatprep.subr.bf16.mxu0 0
        %1437 = vmatpush1.bf16.msra.mxu0 0
        %1438 = vmatprep.subr.bf16.mxu0 0
        %1439 = vmatpush1.bf16.msra.mxu0 0
        %1440 = vmatprep.subr.bf16.mxu0 0
        %1441 = vmatpush1.bf16.msra.mxu0 0
        %1442 = vmatprep.subr.bf16.mxu0 0
        %1443 = vmatpush1.bf16.msra.mxu0 0
        %1444 = vmatprep.subr.bf16.mxu0 0
        %1445 = vmatpush1.bf16.msra.mxu0 0
        %1446 = vmatprep.mubr.bf16.mxu0 0
        %1447 = vmatmul.mubr.bf16.gmra.mrb[0].mxu0 %v1413
        %v1448 = vpop.f32.mrb[0].mxu0
        %v1449 = vadd.f32 %v815, %v1448
        %v1450 = vpop.f32.mrb[0].mxu0
        %v1451 = vadd.f32 %v819, %v1450
        %v1452 = vpop.f32.mrb[0].mxu0
        %v1453 = vpop.f32.mrb[0].mxu0
        %1454 = vdwg.mxu0
        %1455 = vmatprep.subr.bf16.mxu0 0
        %1456 = vmatpush1.bf16.msra.mxu0 %v909
        %1457 = vmatprep.subr.bf16.mxu0 0
        %1458 = vmatpush1.bf16.msra.mxu0 %v912
        %1459 = vmatprep.subr.bf16.mxu0 0
        %1460 = vmatpush1.bf16.msra.mxu0 %v915
        %1461 = vmatprep.subr.bf16.mxu0 0
        %1462 = vmatpush1.bf16.msra.mxu0 %v918
        %1463 = vmatprep.subr.bf16.mxu0 0
        %1464 = vmatpush1.bf16.msra.mxu0 %v921
        %1465 = vmatprep.subr.bf16.mxu0 0
        %1466 = vmatpush1.bf16.msra.mxu0 %v924
        %1467 = vmatprep.subr.bf16.mxu0 0
        %1468 = vmatpush1.bf16.msra.mxu0 %v927
        %1469 = vmatprep.subr.bf16.mxu0 0
        %1470 = vmatpush1.bf16.msra.mxu0 %v930
        %1471 = vmatprep.subr.bf16.mxu0 0
        %1472 = vmatpush1.bf16.msra.mxu0 0
        %1473 = vmatprep.subr.bf16.mxu0 0
        %1474 = vmatpush1.bf16.msra.mxu0 0
        %1475 = vmatprep.subr.bf16.mxu0 0
        %1476 = vmatpush1.bf16.msra.mxu0 0
        %1477 = vmatprep.subr.bf16.mxu0 0
        %1478 = vmatpush1.bf16.msra.mxu0 0
        %1479 = vmatprep.subr.bf16.mxu0 0
        %1480 = vmatpush1.bf16.msra.mxu0 0
        %1481 = vmatprep.subr.bf16.mxu0 0
        %1482 = vmatpush1.bf16.msra.mxu0 0
        %1483 = vmatprep.subr.bf16.mxu0 0
        %1484 = vmatpush1.bf16.msra.mxu0 0
        %1485 = vmatprep.subr.bf16.mxu0 0
        %1486 = vmatpush1.bf16.msra.mxu0 0
        %1487 = vmatprep.mubr.bf16.mxu0 0
        %1488 = vmatmul.mubr.bf16.gmra.mrb[0].mxu0 %v1413
        %v1489 = vpop.f32.mrb[0].mxu0
        %v1490 = vadd.f32 %v823, %v1489
        %v1491 = vpop.f32.mrb[0].mxu0
        %v1492 = vpop.f32.mrb[0].mxu0
        %v1493 = vpop.f32.mrb[0].mxu0
        %1494 = vdwg.mxu0
        %v1495 = vadd.f32 %v1412, %v1449
        %v1496 = vxor.u32 %v1495, 2147483648
        %v1497 = vmul.f32 %v1496, 1.442695
        %v1498 = vpow.pop %v1497
        %v1499 = vadd.f32 %v1498, 1.0
        %v1500 = vrcp.pop %v1499
        %v1501 = vmul.f32 1.0, %v1500
        %v1503 = vrot.slane %v1412, 2
        %v1505 = vadd.f32 %v1503, %v1451
        %v1506 = vxor.u32 %v1505, 2147483648
        %v1507 = vmul.f32 %v1506, 1.442695
        %v1508 = vpow.pop %v1507
        %v1509 = vadd.f32 %v1508, 1.0
        %v1510 = vrcp.pop %v1509
        %v1511 = vmul.f32 1.0, %v1510
        %v1512 = vmul.f32 %v1501, %v1490
        %v1513 = vrot.slane %v1412, 4
        %v1515 = vadd.f32 %v1513, %v1512
        %v1516 = vtanh.pop %v1515
        %v1517 = vsub.f32 1.0, %v1511
        %v1518 = vmul.f32 %v1517, %v1516
        %v1519 = vmul.f32 %v1511, %v1404
        %v1520 = vadd.f32 %v1518, %v1519
        %s1521 = smul.u32 %s1408, 2
        %s1522 = scalar_lea.vmem %s254, %s1521 [#allocation3]
        %1523 = vst [vmem:[%s1522] sm:$0x3] %v1520
        %s1524 = sand.u32 %s149, 1
        %s1525 = sand.u32 %s149, 1
        %s1526 = smul.addr %s1525, 10
        %s1527 = scalar_lea.vmem [#allocation3], %s1526
        // Predicated region
        $region41: #{crnn_forward.12} parent=39 // pred_check
          %p1528 = pneg %p159
        $region42: #{crnn_forward.12} parent=39 // pred_check_branch
          %1530 = sbr.rel (%p1528) target = $region44
        $region43: #{crnn_forward.12} parent=39 // pred_region
          %s1531 = smul.addr %s16, 2
          %s1532 = scalar_lea.vmem %s5, %s1531
          // Predicated region
          $region45: #{crnn_forward.12} parent=43 // pred_check
            _
          $region46: #{crnn_forward.12} parent=43 // pred_check_branch
            %1534 = sbr.rel (0) target = $region48
          $region47: #{crnn_forward.12} parent=43 // pred_region
            // Predicated region
            $region49: #{crnn_forward.12} parent=47 // pred_check
              _
            $region50: #{crnn_forward.12} parent=47 // pred_check_branch
              %1536 = sbr.rel target = $region52
            $region51: #{crnn_forward.12} parent=47 // pred_region
              // Predicated region
              $region64: #{crnn_forward.12} parent=51 // pred_check
                _
              $region65: #{crnn_forward.12} parent=51 // pred_check_branch
                %1559 = sbr.rel (0) target = $region67
              $region66: #{crnn_forward.12} parent=51 // pred_region
                loop: start=0, step=1, limit=1
                $region68: #{crnn_forward.12} parent=66 // loop_pre_header
                  _
                $region69: #{crnn_forward.12} parent=66 // loop_header
                  %s1561 = sphi 0, %s1565
                  %p1562 = scmp.ge.s32.totalorder %s1561, 1
                  %s1566 = sphi %s1527, %s1527
                  %s1567 = sphi %s1532, %s1532
                $region70: #{crnn_forward.12} parent=66 // loop_header_branch
                  %1564 = sbr.rel (%p1562) target = $region74
                $region71: #{crnn_forward.12} parent=66 // loop_body
                  _
                $region72: #{crnn_forward.12} parent=66 // loop_footer
                  %s1565 = sadd.s32 1, %s1561
                $region73: #{crnn_forward.12} parent=66 // loop_footer_branch
                  %1560 = sbr.rel target = $region69
                $region74: #{crnn_forward.12} parent=66 // loop_exit
                  _
                loop: start=0, step=1, limit=1
                $region75: #{crnn_forward.12} parent=66 // loop_pre_header
                  _
                $region76: #{crnn_forward.12} parent=66 // loop_header
                  %s1570 = sphi 0, %s1574
                  %p1571 = scmp.ge.s32.totalorder %s1570, 1
                  %s1575 = sphi %s1527, %s1527
                  %s1576 = sphi %s1532, %s1532
                $region77: #{crnn_forward.12} parent=66 // loop_header_branch
                  %1573 = sbr.rel (%p1571) target = $region81
                $region78: #{crnn_forward.12} parent=66 // loop_body
                  %v1577 = vld [vmem:[%s1575] sm:$0x3]
                  %1578 = vst [vmem:[%s1576] sm:$0x3] %v1577
                  %v1579 = vld [vmem:[%s1575 + $0x2] sm:$0x3]
                  %1580 = vst [vmem:[%s1576 + $0x4] sm:$0x3] %v1579
                  %v1581 = vld [vmem:[%s1575 + $0x4] sm:$0x3]
                  %1582 = vst [vmem:[%s1576 + $0x8] sm:$0x3] %v1581
                  %v1583 = vld [vmem:[%s1575 + $0x6] sm:$0x3]
                  %1584 = vst [vmem:[%s1576 + $0xc] sm:$0x3] %v1583
                  %v1585 = vld [vmem:[%s1575 + $0x8] sm:$0x3]
                  %1586 = vst [vmem:[%s1576 + $0x10] sm:$0x3] %v1585
                $region79: #{crnn_forward.12} parent=66 // loop_footer
                  %s1574 = sadd.s32 1, %s1570
                $region80: #{crnn_forward.12} parent=66 // loop_footer_branch
                  %1569 = sbr.rel target = $region76
                $region81: #{crnn_forward.12} parent=66 // loop_exit
                  _
              $region67: #{crnn_forward.12} parent=51 // pred_fallthru
                _
            $region52: #{crnn_forward.12} parent=47 // pred_fallthru
              _
            // Predicated region
            $region53: #{crnn_forward.12} parent=47 // pred_check
              _
            $region54: #{crnn_forward.12} parent=47 // pred_check_branch
              %1538 = sbr.rel (0) target = $region56
            $region55: #{crnn_forward.12} parent=47 // pred_region
              loop: start=0, step=1, limit=1
              $region57: #{crnn_forward.12} parent=55 // loop_pre_header
                _
              $region58: #{crnn_forward.12} parent=55 // loop_header
                %s1541 = sphi 0, %s1545
                %p1542 = scmp.ge.s32.totalorder %s1541, 1
                %s1546 = sphi %s1527, %s1527
                %s1547 = sphi %s1532, %s1532
              $region59: #{crnn_forward.12} parent=55 // loop_header_branch
                %1544 = sbr.rel (%p1542) target = $region63
              $region60: #{crnn_forward.12} parent=55 // loop_body
                %v1548 = vld [vmem:[%s1546] sm:$0x3]
                %1549 = vst [vmem:[%s1547] sm:$0x3] %v1548
                %v1550 = vld [vmem:[%s1546 + $0x2] sm:$0x3]
                %1551 = vst [vmem:[%s1547 + $0x4] sm:$0x3] %v1550
                %v1552 = vld [vmem:[%s1546 + $0x4] sm:$0x3]
                %1553 = vst [vmem:[%s1547 + $0x8] sm:$0x3] %v1552
                %v1554 = vld [vmem:[%s1546 + $0x6] sm:$0x3]
                %1555 = vst [vmem:[%s1547 + $0xc] sm:$0x3] %v1554
                %v1556 = vld [vmem:[%s1546 + $0x8] sm:$0x3]
                %1557 = vst [vmem:[%s1547 + $0x10] sm:$0x3] %v1556
              $region61: #{crnn_forward.12} parent=55 // loop_footer
                %s1545 = sadd.s32 1, %s1541
              $region62: #{crnn_forward.12} parent=55 // loop_footer_branch
                %1540 = sbr.rel target = $region58
              $region63: #{crnn_forward.12} parent=55 // loop_exit
                _
            $region56: #{crnn_forward.12} parent=47 // pred_fallthru
              _
          $region48: #{crnn_forward.12} parent=43 // pred_fallthru
            _
          %1587 = vnop
        $region44: #{crnn_forward.12} parent=39 // pred_fallthru
          _
      $region40: #{crnn_forward.12} parent=5 // pred_fallthru
        _
      %p1588 = scmp.le.s32.totalorder 2, %s11
      // Predicated region
      $region82: #{crnn_forward.12} parent=5 // pred_check
        %p1589 = pneg %p1588
      $region83: #{crnn_forward.12} parent=5 // pred_check_branch
        %1591 = sbr.rel (%p1589) target = $region85
      $region84: #{crnn_forward.12} parent=5 // pred_region
        %s1592 = ssub.s32 %s11, 2
        // Predicated region
        $region86: #{crnn_forward.12} parent=84 // pred_check
          %p1593 = pneg %p165
        $region87: #{crnn_forward.12} parent=84 // pred_check_branch
          %1595 = sbr.rel (%p1593) target = $region89
        $region88: #{crnn_forward.12} parent=84 // pred_region
          %s1596 = sand.u32 %s150, 1
          %s1597 = sand.u32 %s150, 1
          %s1598 = smul.addr %s1597, 10
          %s1599 = scalar_lea.vmem [#allocation3], %s1598
        $region89: #{crnn_forward.12} parent=84 // pred_fallthru
          _
      $region85: #{crnn_forward.12} parent=5 // pred_fallthru
        _
    $region6: #{crnn_forward.12} parent=1 // loop_footer
      %s15 = sadd.s32 1, %s11
    $region7: #{crnn_forward.12} parent=1 // loop_footer_branch
      %10 = sbr.rel target = $region3
    $region8: #{crnn_forward.12} parent=1 // loop_exit
      _

// kernel: crnn_forward.11
$region0: #{crnn_forward.11}
  #allocation0 [shape = 'u32[]', space=smem, size = 0x4, offset = 0x4, fixed_abs, tag = 'smem constant byte address 0x4 - core index']
  #allocation1 [shape = 'u32[144,128]{1,0:T(1,128)}', space=vmem, size = 0x12000, scoped, tag = 'internal scratch']
  #allocation2 [shape = 'f32[5,2,384]{2,1,0:T(2,128)}', space=vmem, size = 0x3c00, scoped, tag = 'scratch operand']
  %s0 = inlined_call_operand.vmem [shape: f32[10,320], index: 0, kind: input, shape index: {}]
  %s1 = inlined_call_operand.vmem [shape: bf16[2,320,384], index: 1, kind: input, shape index: {}]
  %s2 = inlined_call_operand.vmem [shape: f32[2,1,384], index: 2, kind: input, shape index: {}]
  %s3 = inlined_call_operand.vmem [shape: bf16[2,128,384], index: 3, kind: input, shape index: {}]
  %s4 = inlined_call_operand.vmem [shape: f32[2,1,384], index: 4, kind: input, shape index: {}]
  %s5 = inlined_call_operand.vmem [shape: f32[5,2,256], index: 5, kind: output, shape index: {}]
  %s6 = sld [smem:[#allocation0]]
  $region90: #{crnn_forward.11} parent=0
    _
  %s8 = ssub.s32 1, %s6
  %s9 = scalar_select 0, %s8, %s6
  $region1: #{crnn_forward.11} parent=0
    #allocation3 [shape = 'u8[10240]{0}', space=vmem, size = 0x2800, scoped, tag = 'output window, operand 0']
    loop: start=0, step=1, limit=4
    $region2: #{crnn_forward.11} parent=1 // loop_pre_header
      _
    $region3: #{crnn_forward.11} parent=1 // loop_header
      %s11 = sphi 0, %s15
      %p12 = scmp.ge.s32.totalorder %s11, 4
      %s19 = sphi 0, %s19
      %s21 = sphi 0, %s19
      %s22 = sphi 0, %s21
      %s36 = sphi 0, %s22
      %s42 = sphi 0, %s44
      %s45 = sphi 0, %s42
      %s46 = sphi 0, %s45
      %s62 = sphi 0, %s46
      %s68 = sphi 0, %s70
      %s71 = sphi 0, %s68
      %s72 = sphi 0, %s71
      %s88 = sphi 0, %s72
      %s94 = sphi 0, %s96
      %s97 = sphi 0, %s94
      %s98 = sphi 0, %s97
      %s114 = sphi 0, %s98
      %s120 = sphi 0, %s122
      %s123 = sphi 0, %s120
      %s124 = sphi 0, %s123
      %s140 = sphi 0, %s124
      %s146 = sphi 0, %s148
      %s149 = sphi 0, %s146
      %s150 = sphi 0, %s149
      %s166 = sphi 0, %s150
    $region4: #{crnn_forward.11} parent=1 // loop_header_branch
      %14 = sbr.rel (%p12) target = $region8
    $region5: #{crnn_forward.11} parent=1 // loop_body
      %s16 = ssub.s32 %s11, 1
      %s17 = ssub.s32 %s11, 2
      %s18 = sadd.s32 %s11, 1
      %s20 = sadd.s32 %s19, 1
      %p23 = scmp.eq.s32.totalorder %s11, 1
      %p24 = scmp.ne.s32.totalorder %s19, %s21
      %p25 = scmp.eq.s32.totalorder %s11, 0
      %p26 = por %p24, %p25
      %p27 = scmp.ne.s32.totalorder %s19, %s21
      %p28 = scmp.eq.s32.totalorder %s16, 1
      %p29 = por %p27, %p28
      %p30 = scmp.ne.s32.totalorder %s21, %s22
      %p31 = scmp.eq.s32.totalorder %s16, 0
      %p32 = por %p30, %p31
      %p33 = scmp.ne.s32.totalorder %s21, %s22
      %p34 = scmp.eq.s32.totalorder %s17, 1
      %p35 = por %p33, %p34
      %p37 = scmp.ne.s32.totalorder %s22, %s36
      %p38 = scmp.eq.s32.totalorder %s17, 0
      %p39 = por %p37, %p38
      %s40 = ssub.s32 %s11, %s18
      %p41 = scmp.eq.s32.totalorder %s40, 0
      %s43 = sadd.s32 %s42, 1
      %s44 = scalar_select %p41, %s42, %s43
      %p47 = pneg %p41
      %p48 = scmp.eq.s32.totalorder %s11, 1
      %p49 = por %p47, %p48
      %p50 = scmp.ne.s32.totalorder %s42, %s45
      %p51 = scmp.eq.s32.totalorder %s11, 0
      %p52 = por %p50, %p51
      %p53 = scmp.ne.s32.totalorder %s42, %s45
      %p54 = scmp.eq.s32.totalorder %s16, 1
      %p55 = por %p53, %p54
      %p56 = scmp.ne.s32.totalorder %s45, %s46
      %p57 = scmp.eq.s32.totalorder %s16, 0
      %p58 = por %p56, %p57
      %p59 = scmp.ne.s32.totalorder %s45, %s46
      %p60 = scmp.eq.s32.totalorder %s17, 1
      %p61 = por %p59, %p60
      %p63 = scmp.ne.s32.totalorder %s46, %s62
      %p64 = scmp.eq.s32.totalorder %s17, 0
      %p65 = por %p63, %p64
      %s66 = ssub.s32 %s11, %s18
      %p67 = scmp.eq.s32.totalorder %s66, 0
      %s69 = sadd.s32 %s68, 1
      %s70 = scalar_select %p67, %s68, %s69
      %p73 = pneg %p67
      %p74 = scmp.eq.s32.totalorder %s11, 1
      %p75 = por %p73, %p74
      %p76 = scmp.ne.s32.totalorder %s68, %s71
      %p77 = scmp.eq.s32.totalorder %s11, 0
      %p78 = por %p76, %p77
      %p79 = scmp.ne.s32.totalorder %s68, %s71
      %p80 = scmp.eq.s32.totalorder %s16, 1
      %p81 = por %p79, %p80
      %p82 = scmp.ne.s32.totalorder %s71, %s72
      %p83 = scmp.eq.s32.totalorder %s16, 0
      %p84 = por %p82, %p83
      %p85 = scmp.ne.s32.totalorder %s71, %s72
      %p86 = scmp.eq.s32.totalorder %s17, 1
      %p87 = por %p85, %p86
      %p89 = scmp.ne.s32.totalorder %s72, %s88
      %p90 = scmp.eq.s32.totalorder %s17, 0
      %p91 = por %p89, %p90
      %s92 = ssub.s32 %s11, %s18
      %p93 = scmp.eq.s32.totalorder %s92, 0
      %s95 = sadd.s32 %s94, 1
      %s96 = scalar_select %p93, %s94, %s95
      %p99 = pneg %p93
      %p100 = scmp.eq.s32.totalorder %s11, 1
      %p101 = por %p99, %p100
      %p102 = scmp.ne.s32.totalorder %s94, %s97
      %p103 = scmp.eq.s32.totalorder %s11, 0
      %p104 = por %p102, %p103
      %p105 = scmp.ne.s32.totalorder %s94, %s97
      %p106 = scmp.eq.s32.totalorder %s16, 1
      %p107 = por %p105, %p106
      %p108 = scmp.ne.s32.totalorder %s97, %s98
      %p109 = scmp.eq.s32.totalorder %s16, 0
      %p110 = por %p108, %p109
      %p111 = scmp.ne.s32.totalorder %s97, %s98
      %p112 = scmp.eq.s32.totalorder %s17, 1
      %p113 = por %p111, %p112
      %p115 = scmp.ne.s32.totalorder %s98, %s114
      %p116 = scmp.eq.s32.totalorder %s17, 0
      %p117 = por %p115, %p116
      %s118 = ssub.s32 %s11, %s18
      %p119 = scmp.eq.s32.totalorder %s118, 0
      %s121 = sadd.s32 %s120, 1
      %s122 = scalar_select %p119, %s120, %s121
      %p125 = pneg %p119
      %p126 = scmp.eq.s32.totalorder %s11, 1
      %p127 = por %p125, %p126
      %p128 = scmp.ne.s32.totalorder %s120, %s123
      %p129 = scmp.eq.s32.totalorder %s11, 0
      %p130 = por %p128, %p129
      %p131 = scmp.ne.s32.totalorder %s120, %s123
      %p132 = scmp.eq.s32.totalorder %s16, 1
      %p133 = por %p131, %p132
      %p134 = scmp.ne.s32.totalorder %s123, %s124
      %p135 = scmp.eq.s32.totalorder %s16, 0
      %p136 = por %p134, %p135
      %p137 = scmp.ne.s32.totalorder %s123, %s124
      %p138 = scmp.eq.s32.totalorder %s17, 1
      %p139 = por %p137, %p138
      %p141 = scmp.ne.s32.totalorder %s124, %s140
      %p142 = scmp.eq.s32.totalorder %s17, 0
      %p143 = por %p141, %p142
      %s144 = ssub.s32 %s11, %s18
      %p145 = scmp.eq.s32.totalorder %s144, 0
      %s147 = sadd.s32 %s146, 1
      %s148 = scalar_select %p145, %s146, %s147
      %p151 = pneg %p145
      %p152 = scmp.eq.s32.totalorder %s11, 1
      %p153 = por %p151, %p152
      %p154 = scmp.ne.s32.totalorder %s146, %s149
      %p155 = scmp.eq.s32.totalorder %s11, 0
      %p156 = por %p154, %p155
      %p157 = scmp.ne.s32.totalorder %s146, %s149
      %p158 = scmp.eq.s32.totalorder %s16, 1
      %p159 = por %p157, %p158
      %p160 = scmp.ne.s32.totalorder %s149, %s150
      %p161 = scmp.eq.s32.totalorder %s16, 0
      %p162 = por %p160, %p161
      %p163 = scmp.ne.s32.totalorder %s149, %s150
      %p164 = scmp.eq.s32.totalorder %s17, 1
      %p165 = por %p163, %p164
      %p167 = scmp.ne.s32.totalorder %s150, %s166
      %p168 = scmp.eq.s32.totalorder %s17, 0
      %p169 = por %p167, %p168
      %p170 = scmp.le.s32.totalorder 1, %s11
      %p171 = scmp.lt.s32.totalorder %s11, 3
      %p172 = pnand %p170, %p171
      %p173 = pneg %p172
      // Predicated region
      $region9: #{crnn_forward.11} parent=5 // pred_check
        _
      $region10: #{crnn_forward.11} parent=5 // pred_check_branch
        %175 = sbr.rel (%p172) target = $region12
      $region11: #{crnn_forward.11} parent=5 // pred_region
        %s176 = ssub.s32 %s11, 1
        // Predicated region
        $region13: #{crnn_forward.11} parent=11 // pred_check
          %p177 = pneg %p32
        $region14: #{crnn_forward.11} parent=11 // pred_check_branch
          %179 = sbr.rel (%p177) target = $region16
        $region15: #{crnn_forward.11} parent=11 // pred_region
          _
        $region16: #{crnn_forward.11} parent=11 // pred_fallthru
          _
      $region12: #{crnn_forward.11} parent=5 // pred_fallthru
        _
      %p180 = scmp.lt.s32.totalorder %s11, 2
      // Predicated region
      $region17: #{crnn_forward.11} parent=5 // pred_check
        %p181 = pneg %p180
      $region18: #{crnn_forward.11} parent=5 // pred_check_branch
        %183 = sbr.rel (%p181) target = $region20
      $region19: #{crnn_forward.11} parent=5 // pred_region
        // Predicated region
        $region21: #{crnn_forward.11} parent=19 // pred_check
          %p184 = pneg %p52
        $region22: #{crnn_forward.11} parent=19 // pred_check_branch
          %186 = sbr.rel (%p184) target = $region24
        $region23: #{crnn_forward.11} parent=19 // pred_region
          %p187 = scmp.lt.s32.totalorder %s11, 1
          %s188 = scalar_select %p187, %s11, 1
          %s189 = smul.addr %s188, 120
          %s190 = smul.addr %s189, 4
          %s191 = scalar_lea.vmem %s1, %s190
        $region24: #{crnn_forward.11} parent=19 // pred_fallthru
          _
        // Predicated region
        $region25: #{crnn_forward.11} parent=19 // pred_check
          %p192 = pneg %p78
        $region26: #{crnn_forward.11} parent=19 // pred_check_branch
          %194 = sbr.rel (%p192) target = $region28
        $region27: #{crnn_forward.11} parent=19 // pred_region
          %p195 = scmp.lt.s32.totalorder %s11, 1
          %s196 = scalar_select %p195, %s11, 1
          %s197 = smul.addr %s196, 3
          %s198 = scalar_lea.vmem %s2, %s197
        $region28: #{crnn_forward.11} parent=19 // pred_fallthru
          _
        // Predicated region
        $region29: #{crnn_forward.11} parent=19 // pred_check
          %p199 = pneg %p104
        $region30: #{crnn_forward.11} parent=19 // pred_check_branch
          %201 = sbr.rel (%p199) target = $region32
        $region31: #{crnn_forward.11} parent=19 // pred_region
          %p202 = scmp.lt.s32.totalorder %s11, 1
          %s203 = scalar_select %p202, %s11, 1
          %s204 = smul.addr %s203, 48
          %s205 = smul.addr %s204, 4
          %s206 = scalar_lea.vmem %s3, %s205
        $region32: #{crnn_forward.11} parent=19 // pred_fallthru
          _
        // Predicated region
        $region33: #{crnn_forward.11} parent=19 // pred_check
          %p207 = pneg %p130
        $region34: #{crnn_forward.11} parent=19 // pred_check_branch
          %209 = sbr.rel (%p207) target = $region36
        $region35: #{crnn_forward.11} parent=19 // pred_region
          %p210 = scmp.lt.s32.totalorder %s11, 1
          %s211 = scalar_select %p210, %s11, 1
          %s212 = smul.addr %s211, 3
          %s213 = scalar_lea.vmem %s4, %s212
        $region36: #{crnn_forward.11} parent=19 // pred_fallthru
          _
      $region20: #{crnn_forward.11} parent=5 // pred_fallthru
        _
      %p214 = scmp.le.s32.totalorder 1, %s11
      %p215 = scmp.lt.s32.totalorder %s11, 3
      %p216 = pnand %p214, %p215
      %p217 = pneg %p216
      // Predicated region
      $region37: #{crnn_forward.11} parent=5 // pred_check
        _
      $region38: #{crnn_forward.11} parent=5 // pred_check_branch
        %219 = sbr.rel (%p216) target = $region40
      $region39: #{crnn_forward.11} parent=5 // pred_region
        %s220 = ssub.s32 %s11, 1
        %p221 = pneg %p32
        %p222 = pneg %p29
        %p223 = scmp.lt.s32.totalorder %s16, 1
        %s224 = scalar_select %p223, %s16, 1
        %s225 = smul.addr %s224, 120
        %s226 = smul.addr %s225, 4
        %s227 = scalar_lea.vmem %s1, %s226
        %p228 = pneg %p58
        %p229 = pneg %p55
        %p230 = scmp.lt.s32.totalorder %s16, 1
        %s231 = scalar_select %p230, %s16, 1
        %s232 = smul.addr %s231, 3
        %s233 = scalar_lea.vmem %s2, %s232
        %p234 = pneg %p84
        %p235 = pneg %p81
        %p236 = scmp.lt.s32.totalorder %s16, 1
        %s237 = scalar_select %p236, %s16, 1
        %s238 = smul.addr %s237, 48
        %s239 = smul.addr %s238, 4
        %s240 = scalar_lea.vmem %s3, %s239
        %p241 = pneg %p110
        %p242 = pneg %p107
        %p243 = scmp.lt.s32.totalorder %s16, 1
        %s244 = scalar_select %p243, %s16, 1
        %s245 = smul.addr %s244, 3
        %s246 = scalar_lea.vmem %s4, %s245
        %p247 = pneg %p136
        %p248 = pneg %p133
        %p249 = pneg %p162
        %p250 = pneg %p159
        %s251 = sand.u32 %s149, 1
        %s252 = sand.u32 %s149, 1
        %s253 = smul.addr %s252, 10
        %s254 = scalar_lea.vmem [#allocation3], %s253
        %p255 = scmp.lt.s32.totalorder %s16, 1
        %s256 = scalar_select %p255, %s16, 1
        %s257 = smul.addr %s256, 120
        %s258 = smul.addr %s257, 4
        %s259 = scalar_lea.vmem %s1, %s258
        %p260 = scmp.lt.s32.totalorder %s16, 1
        %s261 = scalar_select %p260, %s16, 1
        %s262 = smul.addr %s261, 3
        %s263 = scalar_lea.vmem %s2, %s262
        %p264 = scmp.lt.s32.totalorder %s16, 1
        %s265 = scalar_select %p264, %s16, 1
        %s266 = smul.addr %s265, 48
        %s267 = smul.addr %s266, 4
        %s268 = scalar_lea.vmem %s3, %s267
        %p269 = scmp.lt.s32.totalorder %s16, 1
        %s270 = scalar_select %p269, %s16, 1
        %s271 = smul.addr %s270, 3
        %s272 = scalar_lea.vmem %s4, %s271
        %v274 = vld [vmem:[%s0] sm:$0xff]
        %v275 = vld [vmem:[%s0 + $0x8] sm:$0xff]
        %v276 = vld [vmem:[%s0 + $0x10] sm:$0xff]
        %v277 = vld [vmem:[%s0 + $0x18] sm:$0x3]
        %v278 = vld [vmem:[%s0 + $0x20] sm:$0x3]
        %v279 = vld [vmem:[%s0 + $0x28] sm:$0x3]
        %v280 = vpack.c.bf16 %v277, %v274
        %v281 = vpack.c.bf16 %v278, %v275
        %v282 = vpack.c.bf16 %v279, %v276
        %v283 = vld [vmem:[%s259] sm:$0xff]
        %v284 = vld [vmem:[%s259 + $0x8] sm:$0xf]
        %v285 = vld [vmem:[%s259 + $0xc] sm:$0xff]
        %v286 = vld [vmem:[%s259 + $0x14] sm:$0xf]
        %v287 = vld [vmem:[%s259 + $0x18] sm:$0xff]
        %v288 = vld [vmem:[%s259 + $0x20] sm:$0xf]
        %v289 = vld [vmem:[%s259 + $0x24] sm:$0xff]
        %v290 = vld [vmem:[%s259 + $0x2c] sm:$0xf]
        %v291 = vld [vmem:[%s259 + $0x30] sm:$0xff]
        %v292 = vld [vmem:[%s259 + $0x38] sm:$0xf]
        %v293 = vld [vmem:[%s259 + $0x3c] sm:$0xff]
        %v294 = vld [vmem:[%s259 + $0x44] sm:$0xf]
        %v295 = vld [vmem:[%s259 + $0x48] sm:$0xff]
        %v296 = vld [vmem:[%s259 + $0x50] sm:$0xf]
        %v297 = vld [vmem:[%s259 + $0x54] sm:$0xff]
        %v298 = vld [vmem:[%s259 + $0x5c] sm:$0xf]
        %v299 = vld [vmem:[%s259 + $0x60] sm:$0xff]
        %v300 = vld [vmem:[%s259 + $0x68] sm:$0xf]
        %v301 = vld [vmem:[%s259 + $0x6c] sm:$0xff]
        %v302 = vld [vmem:[%s259 + $0x74] sm:$0xf]
        %v303 = vld [vmem:[%s259 + $0x78] sm:$0xff]
        %v304 = vld [vmem:[%s259 + $0x80] sm:$0xf]
        %v305 = vld [vmem:[%s259 + $0x84] sm:$0xff]
        %v306 = vld [vmem:[%s259 + $0x8c] sm:$0xf]
        %v307 = vld [vmem:[%s259 + $0x90] sm:$0xff]
        %v308 = vld [vmem:[%s259 + $0x98] sm:$0xf]
        %v309 = vld [vmem:[%s259 + $0x9c] sm:$0xff]
        %v310 = vld [vmem:[%s259 + $0xa4] sm:$0xf]
        %v311 = vld [vmem:[%s259 + $0xa8] sm:$0xff]
        %v312 = vld [vmem:[%s259 + $0xb0] sm:$0xf]
        %v313 = vld [vmem:[%s259 + $0xb4] sm:$0xff]
        %v314 = vld [vmem:[%s259 + $0xbc] sm:$0xf]
        %v315 = vld [vmem:[%s259 + $0xc0] sm:$0xff]
        %v316 = vld [vmem:[%s259 + $0xc8] sm:$0xf]
        %v317 = vld [vmem:[%s259 + $0xcc] sm:$0xff]
        %v318 = vld [vmem:[%s259 + $0xd4] sm:$0xf]
        %v319 = vld [vmem:[%s259 + $0xd8] sm:$0xff]
        %v320 = vld [vmem:[%s259 + $0xe0] sm:$0xf]
        %v321 = vld [vmem:[%s259 + $0xe4] sm:$0xff]
        %v322 = vld [vmem:[%s259 + $0xec] sm:$0xf]
        %v323 = vld [vmem:[%s259 + $0xf0] sm:$0xff]
        %v324 = vld [vmem:[%s259 + $0xf8] sm:$0xf]
        %v325 = vld [vmem:[%s259 + $0xfc] sm:$0xff]
        %v326 = vld [vmem:[%s259 + $0x104] sm:$0xf]
        %v327 = vld [vmem:[%s259 + $0x108] sm:$0xff]
        %v328 = vld [vmem:[%s259 + $0x110] sm:$0xf]
        %v329 = vld [vmem:[%s259 + $0x114] sm:$0xff]
        %v330 = vld [vmem:[%s259 + $0x11c] sm:$0xf]
        %v331 = vld [vmem:[%s259 + $0x120] sm:$0xff]
        %v332 = vld [vmem:[%s259 + $0x128] sm:$0xf]
        %v333 = vld [vmem:[%s259 + $0x12c] sm:$0xff]
        %v334 = vld [vmem:[%s259 + $0x134] sm:$0xf]
        %v335 = vld [vmem:[%s259 + $0x138] sm:$0xff]
        %v336 = vld [vmem:[%s259 + $0x140] sm:$0xf]
        %v337 = vld [vmem:[%s259 + $0x144] sm:$0xff]
        %v338 = vld [vmem:[%s259 + $0x14c] sm:$0xf]
        %v339 = vld [vmem:[%s259 + $0x150] sm:$0xff]
        %v340 = vld [vmem:[%s259 + $0x158] sm:$0xf]
        %v341 = vld [vmem:[%s259 + $0x15c] sm:$0xff]
        %v342 = vld [vmem:[%s259 + $0x164] sm:$0xf]
        %v343 = vld [vmem:[%s259 + $0x168] sm:$0xff]
        %v344 = vld [vmem:[%s259 + $0x170] sm:$0xf]
        %v345 = vld [vmem:[%s259 + $0x174] sm:$0xff]
        %v346 = vld [vmem:[%s259 + $0x17c] sm:$0xf]
        %v347 = vld [vmem:[%s259 + $0x180] sm:$0xff]
        %v348 = vld [vmem:[%s259 + $0x188] sm:$0xf]
        %v349 = vld [vmem:[%s259 + $0x18c] sm:$0xff]
        %v350 = vld [vmem:[%s259 + $0x194] sm:$0xf]
        %v351 = vld [vmem:[%s259 + $0x198] sm:$0xff]
        %v352 = vld [vmem:[%s259 + $0x1a0] sm:$0xf]
        %v353 = vld [vmem:[%s259 + $0x1a4] sm:$0xff]
        %v354 = vld [vmem:[%s259 + $0x1ac] sm:$0xf]
        %v355 = vld [vmem:[%s259 + $0x1b0] sm:$0xff]
        %v356 = vld [vmem:[%s259 + $0x1b8] sm:$0xf]
        %v357 = vld [vmem:[%s259 + $0x1bc] sm:$0xff]
        %v358 = vld [vmem:[%s259 + $0x1c4] sm:$0xf]
        %v359 = vld [vmem:[%s259 + $0x1c8] sm:$0xff]
        %v360 = vld [vmem:[%s259 + $0x1d0] sm:$0xf]
        %v361 = vld [vmem:[%s259 + $0x1d4] sm:$0xff]
        %v362 = vld [vmem:[%s259 + $0x1dc] sm:$0xf]
        %v363 = vld [vmem:[%s263] sm:$0x7]
        %v365 = vlaneseq
        %v366 = vshrl.u32 %v365, 7
        %v367 = vsub.s32 0, %v366
        %v368 = vrot.slane %v363, %v367
        %v369 = vlaneseq
        %v370 = vshrl.u32 %v369, 7
        %v371 = vsub.s32 1, %v370
        %v372 = vrot.slane %v363, %v371
        %v373 = vlaneseq
        %v374 = vshrl.u32 %v373, 7
        %v375 = vsub.s32 2, %v374
        %v376 = vrot.slane %v363, %v375
        %v460 = vunpack.c.l.b16 %v283
        %v461 = vunpack.c.h.b16 %v283
        %v462 = vunpack.c.l.b16 %v284
        %v463 = vunpack.c.l.b16 %v285
        %v464 = vunpack.c.h.b16 %v285
        %v465 = vunpack.c.l.b16 %v286
        %v466 = vunpack.c.l.b16 %v287
        %v467 = vunpack.c.h.b16 %v287
        %v468 = vunpack.c.l.b16 %v288
        %v469 = vunpack.c.l.b16 %v289
        %v470 = vunpack.c.h.b16 %v289
        %v471 = vunpack.c.l.b16 %v290
        %v472 = vunpack.c.l.b16 %v291
        %v473 = vunpack.c.h.b16 %v291
        %v474 = vunpack.c.l.b16 %v292
        %v475 = vunpack.c.l.b16 %v293
        %v476 = vunpack.c.h.b16 %v293
        %v477 = vunpack.c.l.b16 %v294
        %v478 = vunpack.c.l.b16 %v295
        %v479 = vunpack.c.h.b16 %v295
        %v480 = vunpack.c.l.b16 %v296
        %v481 = vunpack.c.l.b16 %v297
        %v482 = vunpack.c.h.b16 %v297
        %v483 = vunpack.c.l.b16 %v298
        %v484 = vunpack.c.l.b16 %v299
        %v485 = vunpack.c.h.b16 %v299
        %v486 = vunpack.c.l.b16 %v300
        %v487 = vunpack.c.l.b16 %v301
        %v488 = vunpack.c.h.b16 %v301
        %v489 = vunpack.c.l.b16 %v302
        %v490 = vunpack.c.l.b16 %v303
        %v491 = vunpack.c.h.b16 %v303
        %v492 = vunpack.c.l.b16 %v304
        %v493 = vunpack.c.l.b16 %v305
        %v494 = vunpack.c.h.b16 %v305
        %v495 = vunpack.c.l.b16 %v306
        %v496 = vunpack.c.l.b16 %v307
        %v497 = vunpack.c.h.b16 %v307
        %v498 = vunpack.c.l.b16 %v308
        %v499 = vunpack.c.l.b16 %v309
        %v500 = vunpack.c.h.b16 %v309
        %v501 = vunpack.c.l.b16 %v310
        %v502 = vunpack.c.l.b16 %v311
        %v503 = vunpack.c.h.b16 %v311
        %v504 = vunpack.c.l.b16 %v312
        %v505 = vunpack.c.l.b16 %v313
        %v506 = vunpack.c.h.b16 %v313
        %v507 = vunpack.c.l.b16 %v314
        %v508 = vunpack.c.l.b16 %v315
        %v509 = vunpack.c.h.b16 %v315
        %v510 = vunpack.c.l.b16 %v316
        %v511 = vunpack.c.l.b16 %v317
        %v512 = vunpack.c.h.b16 %v317
        %v513 = vunpack.c.l.b16 %v318
        %v514 = vunpack.c.l.b16 %v319
        %v515 = vunpack.c.h.b16 %v319
        %v516 = vunpack.c.l.b16 %v320
        %v517 = vunpack.c.l.b16 %v321
        %v518 = vunpack.c.h.b16 %v321
        %v519 = vunpack.c.l.b16 %v322
        %v520 = vunpack.c.l.b16 %v323
        %v521 = vunpack.c.h.b16 %v323
        %v522 = vunpack.c.l.b16 %v324
        %v523 = vunpack.c.l.b16 %v325
        %v524 = vunpack.c.h.b16 %v325
        %v525 = vunpack.c.l.b16 %v326
        %v526 = vunpack.c.l.b16 %v327
        %v527 = vunpack.c.h.b16 %v327
        %v528 = vunpack.c.l.b16 %v328
        %v529 = vunpack.c.l.b16 %v329
        %v530 = vunpack.c.h.b16 %v329
        %v531 = vunpack.c.l.b16 %v330
        %v532 = vunpack.c.l.b16 %v331
        %v533 = vunpack.c.h.b16 %v331
        %v534 = vunpack.c.l.b16 %v332
        %v535 = vunpack.c.l.b16 %v333
        %v536 = vunpack.c.h.b16 %v333
        %v537 = vunpack.c.l.b16 %v334
        %v538 = vunpack.c.l.b16 %v335
        %v539 = vunpack.c.h.b16 %v335
        %v540 = vunpack.c.l.b16 %v336
        %v541 = vunpack.c.l.b16 %v337
        %v542 = vunpack.c.h.b16 %v337
        %v543 = vunpack.c.l.b16 %v338
        %v544 = vunpack.c.l.b16 %v339
        %v545 = vunpack.c.h.b16 %v339
        %v546 = vunpack.c.l.b16 %v340
        %v547 = vunpack.c.l.b16 %v341
        %v548 = vunpack.c.h.b16 %v341
        %v549 = vunpack.c.l.b16 %v342
        %v550 = vunpack.c.l.b16 %v343
        %v551 = vunpack.c.h.b16 %v343
        %v552 = vunpack.c.l.b16 %v344
        %v553 = vunpack.c.l.b16 %v345
        %v554 = vunpack.c.h.b16 %v345
        %v555 = vunpack.c.l.b16 %v346
        %v556 = vunpack.c.l.b16 %v347
        %v557 = vunpack.c.h.b16 %v347
        %v558 = vunpack.c.l.b16 %v348
        %v559 = vunpack.c.l.b16 %v349
        %v560 = vunpack.c.h.b16 %v349
        %v561 = vunpack.c.l.b16 %v350
        %v562 = vunpack.c.l.b16 %v351
        %v563 = vunpack.c.h.b16 %v351
        %v564 = vunpack.c.l.b16 %v352
        %v565 = vunpack.c.l.b16 %v353
        %v566 = vunpack.c.h.b16 %v353
        %v567 = vunpack.c.l.b16 %v354
        %v568 = vunpack.c.l.b16 %v355
        %v569 = vunpack.c.h.b16 %v355
        %v570 = vunpack.c.l.b16 %v356
        %v571 = vunpack.c.l.b16 %v357
        %v572 = vunpack.c.h.b16 %v357
        %v573 = vunpack.c.l.b16 %v358
        %v574 = vunpack.c.l.b16 %v359
        %v575 = vunpack.c.h.b16 %v359
        %v576 = vunpack.c.l.b16 %v360
        %v577 = vunpack.c.l.b16 %v361
        %v578 = vunpack.c.h.b16 %v361
        %v579 = vunpack.c.l.b16 %v362
        %v580 = vpack.c.b16 %v463, %v460
        %v581 = vpack.c.b16 %v464, %v461
        %v582 = vpack.c.b16 %v465, %v462
        %v583 = vpack.c.b16 %v469, %v466
        %v584 = vpack.c.b16 %v470, %v467
        %v585 = vpack.c.b16 %v471, %v468
        %v586 = vpack.c.b16 %v475, %v472
        %v587 = vpack.c.b16 %v476, %v473
        %v588 = vpack.c.b16 %v477, %v474
        %v589 = vpack.c.b16 %v481, %v478
        %v590 = vpack.c.b16 %v482, %v479
        %v591 = vpack.c.b16 %v483, %v480
        %v592 = vpack.c.b16 %v487, %v484
        %v593 = vpack.c.b16 %v488, %v485
        %v594 = vpack.c.b16 %v489, %v486
        %v595 = vpack.c.b16 %v493, %v490
        %v596 = vpack.c.b16 %v494, %v491
        %v597 = vpack.c.b16 %v495, %v492
        %v598 = vpack.c.b16 %v499, %v496
        %v599 = vpack.c.b16 %v500, %v497
        %v600 = vpack.c.b16 %v501, %v498
        %v601 = vpack.c.b16 %v505, %v502
        %v602 = vpack.c.b16 %v506, %v503
        %v603 = vpack.c.b16 %v507, %v504
        %v604 = vpack.c.b16 %v511, %v508
        %v605 = vpack.c.b16 %v512, %v509
        %v606 = vpack.c.b16 %v513, %v510
        %v607 = vpack.c.b16 %v517, %v514
        %v608 = vpack.c.b16 %v518, %v515
        %v609 = vpack.c.b16 %v519, %v516
        %v610 = vpack.c.b16 %v523, %v520
        %v611 = vpack.c.b16 %v524, %v521
        %v612 = vpack.c.b16 %v525, %v522
        %v613 = vpack.c.b16 %v529, %v526
        %v614 = vpack.c.b16 %v530, %v527
        %v615 = vpack.c.b16 %v531, %v528
        %v616 = vpack.c.b16 %v535, %v532
        %v617 = vpack.c.b16 %v536, %v533
        %v618 = vpack.c.b16 %v537, %v534
        %v619 = vpack.c.b16 %v541, %v538
        %v620 = vpack.c.b16 %v542, %v539
        %v621 = vpack.c.b16 %v543, %v540
        %v622 = vpack.c.b16 %v547, %v544
        %v623 = vpack.c.b16 %v548, %v545
        %v624 = vpack.c.b16 %v549, %v546
        %v625 = vpack.c.b16 %v553, %v550
        %v626 = vpack.c.b16 %v554, %v551
        %v627 = vpack.c.b16 %v555, %v552
        %v628 = vpack.c.b16 %v559, %v556
        %v629 = vpack.c.b16 %v560, %v557
        %v630 = vpack.c.b16 %v561, %v558
        %v631 = vpack.c.b16 %v565, %v562
        %v632 = vpack.c.b16 %v566, %v563
        %v633 = vpack.c.b16 %v567, %v564
        %v634 = vpack.c.b16 %v571, %v568
        %v635 = vpack.c.b16 %v572, %v569
        %v636 = vpack.c.b16 %v573, %v570
        %v637 = vpack.c.b16 %v577, %v574
        %v638 = vpack.c.b16 %v578, %v575
        %v639 = vpack.c.b16 %v579, %v576
        %vm700 = vcmask 523264
        %v702 = vsel %vm700, %v282, 0
        %704 = vmatprep.subr.bf16.mxu0 %v581
        %705 = vmatpush1.bf16.msra.mxu0 %v580
        %706 = vmatprep.subr.bf16.mxu0 %v584
        %707 = vmatpush1.bf16.msra.mxu0 %v583
        %708 = vmatprep.subr.bf16.mxu0 %v587
        %709 = vmatpush1.bf16.msra.mxu0 %v586
        %710 = vmatprep.subr.bf16.mxu0 %v590
        %711 = vmatpush1.bf16.msra.mxu0 %v589
        %712 = vmatprep.subr.bf16.mxu0 %v593
        %713 = vmatpush1.bf16.msra.mxu0 %v592
        %714 = vmatprep.subr.bf16.mxu0 %v596
        %715 = vmatpush1.bf16.msra.mxu0 %v595
        %716 = vmatprep.subr.bf16.mxu0 %v599
        %717 = vmatpush1.bf16.msra.mxu0 %v598
        %718 = vmatprep.subr.bf16.mxu0 %v602
        %719 = vmatpush1.bf16.msra.mxu0 %v601
        %720 = vmatprep.subr.bf16.mxu0 %v605
        %721 = vmatpush1.bf16.msra.mxu0 %v604
        %722 = vmatprep.subr.bf16.mxu0 %v608
        %723 = vmatpush1.bf16.msra.mxu0 %v607
        %724 = vmatprep.subr.bf16.mxu0 %v611
        %725 = vmatpush1.bf16.msra.mxu0 %v610
        %726 = vmatprep.subr.bf16.mxu0 %v614
        %727 = vmatpush1.bf16.msra.mxu0 %v613
        %728 = vmatprep.subr.bf16.mxu0 %v617
        %729 = vmatpush1.bf16.msra.mxu0 %v616
        %730 = vmatprep.subr.bf16.mxu0 %v620
        %731 = vmatpush1.bf16.msra.mxu0 %v619
        %732 = vmatprep.subr.bf16.mxu0 %v623
        %733 = vmatpush1.bf16.msra.mxu0 %v622
        %734 = vmatprep.subr.bf16.mxu0 %v626
        %735 = vmatpush1.bf16.msra.mxu0 %v625
        %736 = vmatprep.mubr.bf16.mxu0 %v281
        %737 = vmatmul.mubr.bf16.gmra.mrb[0].mxu0 %v280
        %v738 = vpop.f32.mrb[0].mxu0
        %v739 = vadd.f32 %v368, %v738
        %v740 = vpop.f32.mrb[0].mxu0
        %v741 = vadd.f32 %v372, %v740
        %v742 = vpop.f32.mrb[0].mxu0
        %v743 = vadd.f32 %v368, %v742
        %v744 = vpop.f32.mrb[0].mxu0
        %v745 = vadd.f32 %v372, %v744
        %746 = vdwg.mxu0
        %747 = vmatprep.subr.bf16.mxu0 %v629
        %748 = vmatpush1.bf16.msra.mxu0 %v628
        %749 = vmatprep.subr.bf16.mxu0 %v632
        %750 = vmatpush1.bf16.msra.mxu0 %v631
        %751 = vmatprep.subr.bf16.mxu0 %v635
        %752 = vmatpush1.bf16.msra.mxu0 %v634
        %753 = vmatprep.subr.bf16.mxu0 %v638
        %754 = vmatpush1.bf16.msra.mxu0 %v637
        %755 = vmatprep.subr.bf16.mxu0 0
        %756 = vmatpush1.bf16.msra.mxu0 0
        %757 = vmatprep.subr.bf16.mxu0 0
        %758 = vmatpush1.bf16.msra.mxu0 0
        %759 = vmatprep.subr.bf16.mxu0 0
        %760 = vmatpush1.bf16.msra.mxu0 0
        %761 = vmatprep.subr.bf16.mxu0 0
        %762 = vmatpush1.bf16.msra.mxu0 0
        %763 = vmatprep.subr.bf16.mxu0 0
        %764 = vmatpush1.bf16.msra.mxu0 0
        %765 = vmatprep.subr.bf16.mxu0 0
        %766 = vmatpush1.bf16.msra.mxu0 0
        %767 = vmatprep.subr.bf16.mxu0 0
        %768 = vmatpush1.bf16.msra.mxu0 0
        %769 = vmatprep.subr.bf16.mxu0 0
        %770 = vmatpush1.bf16.msra.mxu0 0
        %771 = vmatprep.subr.bf16.mxu0 0
        %772 = vmatpush1.bf16.msra.mxu0 0
        %773 = vmatprep.subr.bf16.mxu0 0
        %774 = vmatpush1.bf16.msra.mxu0 0
        %775 = vmatprep.subr.bf16.mxu0 0
        %776 = vmatpush1.bf16.msra.mxu0 0
        %777 = vmatprep.subr.bf16.mxu0 0
        %778 = vmatpush1.bf16.msra.mxu0 0
        %779 = vmatprep.mubr.bf16.mxu0 0
        %780 = vmatmul.mubr.bf16.gmra.mrb[0].mxu0 %v702
        %v781 = vpop.f32.mrb[0].mxu0
        %v782 = vadd.f32 %v739, %v781
        %v783 = vpop.f32.mrb[0].mxu0
        %v784 = vadd.f32 %v741, %v783
        %v785 = vpop.f32.mrb[0].mxu0
        %v786 = vadd.f32 %v743, %v785
        %v787 = vpop.f32.mrb[0].mxu0
        %v788 = vadd.f32 %v745, %v787
        %789 = vdwg.mxu0
        %790 = vmatprep.subr.bf16.mxu0 0
        %791 = vmatpush1.bf16.msra.mxu0 %v582
        %792 = vmatprep.subr.bf16.mxu0 0
        %793 = vmatpush1.bf16.msra.mxu0 %v585
        %794 = vmatprep.subr.bf16.mxu0 0
        %795 = vmatpush1.bf16.msra.mxu0 %v588
        %796 = vmatprep.subr.bf16.mxu0 0
        %797 = vmatpush1.bf16.msra.mxu0 %v591
        %798 = vmatprep.subr.bf16.mxu0 0
        %799 = vmatpush1.bf16.msra.mxu0 %v594
        %800 = vmatprep.subr.bf16.mxu0 0
        %801 = vmatpush1.bf16.msra.mxu0 %v597
        %802 = vmatprep.subr.bf16.mxu0 0
        %803 = vmatpush1.bf16.msra.mxu0 %v600
        %804 = vmatprep.subr.bf16.mxu0 0
        %805 = vmatpush1.bf16.msra.mxu0 %v603
        %806 = vmatprep.subr.bf16.mxu0 0
        %807 = vmatpush1.bf16.msra.mxu0 %v606
        %808 = vmatprep.subr.bf16.mxu0 0
        %809 = vmatpush1.bf16.msra.mxu0 %v609
        %810 = vmatprep.subr.bf16.mxu0 0
        %811 = vmatpush1.bf16.msra.mxu0 %v612
        %812 = vmatprep.subr.bf16.mxu0 0
        %813 = vmatpush1.bf16.msra.mxu0 %v615
        %814 = vmatprep.subr.bf16.mxu0 0
        %815 = vmatpush1.bf16.msra.mxu0 %v618
        %816 = vmatprep.subr.bf16.mxu0 0
        %817 = vmatpush1.bf16.msra.mxu0 %v621
        %818 = vmatprep.subr.bf16.mxu0 0
        %819 = vmatpush1.bf16.msra.mxu0 %v624
        %820 = vmatprep.subr.bf16.mxu0 0
        %821 = vmatpush1.bf16.msra.mxu0 %v627
        %822 = vmatprep.mubr.bf16.mxu0 %v281
        %823 = vmatmul.mubr.bf16.gmra.mrb[0].mxu0 %v280
        %v824 = vpop.f32.mrb[0].mxu0
        %v825 = vadd.f32 %v376, %v824
        %v826 = vpop.f32.mrb[0].mxu0
        %v827 = vpop.f32.mrb[0].mxu0
        %v828 = vadd.f32 %v376, %v827
        %v829 = vpop.f32.mrb[0].mxu0
        %830 = vdwg.mxu0
        %831 = vmatprep.subr.bf16.mxu0 0
        %832 = vmatpush1.bf16.msra.mxu0 %v630
        %833 = vmatprep.subr.bf16.mxu0 0
        %834 = vmatpush1.bf16.msra.mxu0 %v633
        %835 = vmatprep.subr.bf16.mxu0 0
        %836 = vmatpush1.bf16.msra.mxu0 %v636
        %837 = vmatprep.subr.bf16.mxu0 0
        %838 = vmatpush1.bf16.msra.mxu0 %v639
        %839 = vmatprep.subr.bf16.mxu0 0
        %840 = vmatpush1.bf16.msra.mxu0 0
        %841 = vmatprep.subr.bf16.mxu0 0
        %842 = vmatpush1.bf16.msra.mxu0 0
        %843 = vmatprep.subr.bf16.mxu0 0
        %844 = vmatpush1.bf16.msra.mxu0 0
        %845 = vmatprep.subr.bf16.mxu0 0
        %846 = vmatpush1.bf16.msra.mxu0 0
        %847 = vmatprep.subr.bf16.mxu0 0
        %848 = vmatpush1.bf16.msra.mxu0 0
        %849 = vmatprep.subr.bf16.mxu0 0
        %850 = vmatpush1.bf16.msra.mxu0 0
        %851 = vmatprep.subr.bf16.mxu0 0
        %852 = vmatpush1.bf16.msra.mxu0 0
        %853 = vmatprep.subr.bf16.mxu0 0
        %854 = vmatpush1.bf16.msra.mxu0 0
        %855 = vmatprep.subr.bf16.mxu0 0
        %856 = vmatpush1.bf16.msra.mxu0 0
        %857 = vmatprep.subr.bf16.mxu0 0
        %858 = vmatpush1.bf16.msra.mxu0 0
        %859 = vmatprep.subr.bf16.mxu0 0
        %860 = vmatpush1.bf16.msra.mxu0 0
        %861 = vmatprep.subr.bf16.mxu0 0
        %862 = vmatpush1.bf16.msra.mxu0 0
        %863 = vmatprep.mubr.bf16.mxu0 0
        %864 = vmatmul.mubr.bf16.gmra.mrb[0].mxu0 %v702
        %v865 = vpop.f32.mrb[0].mxu0
        %v866 = vadd.f32 %v825, %v865
        %v867 = vpop.f32.mrb[0].mxu0
        %v868 = vpop.f32.mrb[0].mxu0
        %v869 = vadd.f32 %v828, %v868
        %v870 = vpop.f32.mrb[0].mxu0
        %871 = vdwg.mxu0
        %v875 = vcombine.low %v782, %v784
        %v877 = vunpack.c.l.s4 1983009808
        %v878 = vunpack.c.0.s8 %v877
        %v879 = vlaneseq
        %v880 = vshrl.u32 %v879, 7
        %v881 = vsub.s32 %v878, %v880
        %v882 = vrot.slane %v875, %v881
        %v884 = vunpack.c.l.s4 1983009808
        %v885 = vunpack.c.0.s8 %v884
        %v886 = vlaneseq
        %v887 = vshrl.u32 %v886, 7
        %v888 = vsub.s32 %v885, %v887
        %v889 = vrot.slane %v866, %v888
        %v890 = vcombine.low %v882, %v889
        %892 = vst [vmem:[#allocation2] sm:$0x3f] %v890
        %v893 = vcombine.high %v882, %v889
        %s895 = scalar_lea.vmem [#allocation2], 6
        %896 = vst [vmem:[%s895] sm:$0x3f] %v893
        %v897 = vcombine.high %v782, %v784
        %v898 = vcombine.high %v866, %v866
        %v900 = vunpack.c.l.s4 1983009808
        %v901 = vunpack.c.0.s8 %v900
        %v902 = vlaneseq
        %v903 = vshrl.u32 %v902, 7
        %v904 = vsub.s32 %v901, %v903
        %v905 = vrot.slane %v897, %v904
        %v907 = vunpack.c.l.s4 1983009808
        %v908 = vunpack.c.0.s8 %v907
        %v909 = vlaneseq
        %v910 = vshrl.u32 %v909, 7
        %v911 = vsub.s32 %v908, %v910
        %v912 = vrot.slane %v898, %v911
        %v913 = vcombine.low %v905, %v912
        %s915 = scalar_lea.vmem [#allocation2], 12
        %916 = vst [vmem:[%s915] sm:$0x3f] %v913
        %v917 = vcombine.high %v905, %v912
        %s919 = scalar_lea.vmem [#allocation2], 18
        %920 = vst [vmem:[%s919] sm:$0x3f] %v917
        %v924 = vcombine.low %v786, %v788
        %v926 = vunpack.c.l.s4 1983009808
        %v927 = vunpack.c.0.s8 %v926
        %v928 = vlaneseq
        %v929 = vshrl.u32 %v928, 7
        %v930 = vsub.s32 %v927, %v929
        %v931 = vrot.slane %v924, %v930
        %v933 = vunpack.c.l.s4 1983009808
        %v934 = vunpack.c.0.s8 %v933
        %v935 = vlaneseq
        %v936 = vshrl.u32 %v935, 7
        %v937 = vsub.s32 %v934, %v936
        %v938 = vrot.slane %v869, %v937
        %v939 = vcombine.low %v931, %v938
        %s941 = scalar_lea.vmem [#allocation2], 24
        %942 = vst [vmem:[%s941] sm:$0x3f] %v939
        %v943 = vld [vmem:[%s268] sm:$0xff]
        %v944 = vld [vmem:[%s268 + $0x8] sm:$0xf]
        %v945 = vld [vmem:[%s268 + $0xc] sm:$0xff]
        %v946 = vld [vmem:[%s268 + $0x14] sm:$0xf]
        %v947 = vld [vmem:[%s268 + $0x18] sm:$0xff]
        %v948 = vld [vmem:[%s268 + $0x20] sm:$0xf]
        %v949 = vld [vmem:[%s268 + $0x24] sm:$0xff]
        %v950 = vld [vmem:[%s268 + $0x2c] sm:$0xf]
        %v951 = vld [vmem:[%s268 + $0x30] sm:$0xff]
        %v952 = vld [vmem:[%s268 + $0x38] sm:$0xf]
        %v953 = vld [vmem:[%s268 + $0x3c] sm:$0xff]
        %v954 = vld [vmem:[%s268 + $0x44] sm:$0xf]
        %v955 = vld [vmem:[%s268 + $0x48] sm:$0xff]
        %v956 = vld [vmem:[%s268 + $0x50] sm:$0xf]
        %v957 = vld [vmem:[%s268 + $0x54] sm:$0xff]
        %v958 = vld [vmem:[%s268 + $0x5c] sm:$0xf]
        %v959 = vld [vmem:[%s268 + $0x60] sm:$0xff]
        %v960 = vld [vmem:[%s268 + $0x68] sm:$0xf]
        %v961 = vld [vmem:[%s268 + $0x6c] sm:$0xff]
        %v962 = vld [vmem:[%s268 + $0x74] sm:$0xf]
        %v963 = vld [vmem:[%s268 + $0x78] sm:$0xff]
        %v964 = vld [vmem:[%s268 + $0x80] sm:$0xf]
        %v965 = vld [vmem:[%s268 + $0x84] sm:$0xff]
        %v966 = vld [vmem:[%s268 + $0x8c] sm:$0xf]
        %v967 = vld [vmem:[%s268 + $0x90] sm:$0xff]
        %v968 = vld [vmem:[%s268 + $0x98] sm:$0xf]
        %v969 = vld [vmem:[%s268 + $0x9c] sm:$0xff]
        %v970 = vld [vmem:[%s268 + $0xa4] sm:$0xf]
        %v971 = vld [vmem:[%s268 + $0xa8] sm:$0xff]
        %v972 = vld [vmem:[%s268 + $0xb0] sm:$0xf]
        %v973 = vld [vmem:[%s268 + $0xb4] sm:$0xff]
        %v974 = vld [vmem:[%s268 + $0xbc] sm:$0xf]
        %v975 = vld [vmem:[%s272] sm:$0x7]
        %p976 = scmp.eq.s32.totalorder %s16, 0
        %s977 = scalar_select %p976, 0, 4
        %s978 = smul.u32 %s977, 3
        %s979 = smul.addr %s978, 2
        %s980 = scalar_lea.vmem [#allocation2], %s979
        %v981 = vld [vmem:[%s980] sm:$0x3f]
        %v983 = vlaneseq
        %v984 = vshrl.u32 %v983, 7
        %v985 = vsub.s32 0, %v984
        %v986 = vrot.slane %v975, %v985
        %v987 = vlaneseq
        %v988 = vshrl.u32 %v987, 7
        %v989 = vsub.s32 1, %v988
        %v990 = vrot.slane %v975, %v989
        %v991 = vlaneseq
        %v992 = vshrl.u32 %v991, 7
        %v993 = vsub.s32 2, %v992
        %v994 = vrot.slane %v975, %v993
        %v1030 = vunpack.c.l.b16 %v943
        %v1031 = vunpack.c.h.b16 %v943
        %v1032 = vunpack.c.l.b16 %v944
        %v1033 = vunpack.c.l.b16 %v945
        %v1034 = vunpack.c.h.b16 %v945
        %v1035 = vunpack.c.l.b16 %v946
        %v1036 = vunpack.c.l.b16 %v947
        %v1037 = vunpack.c.h.b16 %v947
        %v1038 = vunpack.c.l.b16 %v948
        %v1039 = vunpack.c.l.b16 %v949
        %v1040 = vunpack.c.h.b16 %v949
        %v1041 = vunpack.c.l.b16 %v950
        %v1042 = vunpack.c.l.b16 %v951
        %v1043 = vunpack.c.h.b16 %v951
        %v1044 = vunpack.c.l.b16 %v952
        %v1045 = vunpack.c.l.b16 %v953
        %v1046 = vunpack.c.h.b16 %v953
        %v1047 = vunpack.c.l.b16 %v954
        %v1048 = vunpack.c.l.b16 %v955
        %v1049 = vunpack.c.h.b16 %v955
        %v1050 = vunpack.c.l.b16 %v956
        %v1051 = vunpack.c.l.b16 %v957
        %v1052 = vunpack.c.h.b16 %v957
        %v1053 = vunpack.c.l.b16 %v958
        %v1054 = vunpack.c.l.b16 %v959
        %v1055 = vunpack.c.h.b16 %v959
        %v1056 = vunpack.c.l.b16 %v960
        %v1057 = vunpack.c.l.b16 %v961
        %v1058 = vunpack.c.h.b16 %v961
        %v1059 = vunpack.c.l.b16 %v962
        %v1060 = vunpack.c.l.b16 %v963
        %v1061 = vunpack.c.h.b16 %v963
        %v1062 = vunpack.c.l.b16 %v964
        %v1063 = vunpack.c.l.b16 %v965
        %v1064 = vunpack.c.h.b16 %v965
        %v1065 = vunpack.c.l.b16 %v966
        %v1066 = vunpack.c.l.b16 %v967
        %v1067 = vunpack.c.h.b16 %v967
        %v1068 = vunpack.c.l.b16 %v968
        %v1069 = vunpack.c.l.b16 %v969
        %v1070 = vunpack.c.h.b16 %v969
        %v1071 = vunpack.c.l.b16 %v970
        %v1072 = vunpack.c.l.b16 %v971
        %v1073 = vunpack.c.h.b16 %v971
        %v1074 = vunpack.c.l.b16 %v972
        %v1075 = vunpack.c.l.b16 %v973
        %v1076 = vunpack.c.h.b16 %v973
        %v1077 = vunpack.c.l.b16 %v974
        %v1078 = vpack.c.b16 %v1033, %v1030
        %v1079 = vpack.c.b16 %v1034, %v1031
        %v1080 = vpack.c.b16 %v1035, %v1032
        %v1081 = vpack.c.b16 %v1039, %v1036
        %v1082 = vpack.c.b16 %v1040, %v1037
        %v1083 = vpack.c.b16 %v1041, %v1038
        %v1084 = vpack.c.b16 %v1045, %v1042
        %v1085 = vpack.c.b16 %v1046, %v1043
        %v1086 = vpack.c.b16 %v1047, %v1044
        %v1087 = vpack.c.b16 %v1051, %v1048
        %v1088 = vpack.c.b16 %v1052, %v1049
        %v1089 = vpack.c.b16 %v1053, %v1050
        %v1090 = vpack.c.b16 %v1057, %v1054
        %v1091 = vpack.c.b16 %v1058, %v1055
        %v1092 = vpack.c.b16 %v1059, %v1056
        %v1093 = vpack.c.b16 %v1063, %v1060
        %v1094 = vpack.c.b16 %v1064, %v1061
        %v1095 = vpack.c.b16 %v1065, %v1062
        %v1096 = vpack.c.b16 %v1069, %v1066
        %v1097 = vpack.c.b16 %v1070, %v1067
        %v1098 = vpack.c.b16 %v1071, %v1068
        %v1099 = vpack.c.b16 %v1075, %v1072
        %v1100 = vpack.c.b16 %v1076, %v1073
        %v1101 = vpack.c.b16 %v1077, %v1074
        %1126 = vmatprep.subr.bf16.mxu0 %v1079
        %1127 = vmatpush1.bf16.msra.mxu0 %v1078
        %1128 = vmatprep.subr.bf16.mxu0 %v1082
        %1129 = vmatpush1.bf16.msra.mxu0 %v1081
        %1130 = vmatprep.subr.bf16.mxu0 %v1085
        %1131 = vmatpush1.bf16.msra.mxu0 %v1084
        %1132 = vmatprep.subr.bf16.mxu0 %v1088
        %1133 = vmatpush1.bf16.msra.mxu0 %v1087
        %1134 = vmatprep.subr.bf16.mxu0 %v1091
        %1135 = vmatpush1.bf16.msra.mxu0 %v1090
        %1136 = vmatprep.subr.bf16.mxu0 %v1094
        %1137 = vmatpush1.bf16.msra.mxu0 %v1093
        %1138 = vmatprep.subr.bf16.mxu0 %v1097
        %1139 = vmatpush1.bf16.msra.mxu0 %v1096
        %1140 = vmatprep.subr.bf16.mxu0 %v1100
        %1141 = vmatpush1.bf16.msra.mxu0 %v1099
        %1142 = vmatprep.subr.bf16.mxu0 0
        %1143 = vmatpush1.bf16.msra.mxu0 0
        %1144 = vmatprep.subr.bf16.mxu0 0
        %1145 = vmatpush1.bf16.msra.mxu0 0
        %1146 = vmatprep.subr.bf16.mxu0 0
        %1147 = vmatpush1.bf16.msra.mxu0 0
        %1148 = vmatprep.subr.bf16.mxu0 0
        %1149 = vmatpush1.bf16.msra.mxu0 0
        %1150 = vmatprep.subr.bf16.mxu0 0
        %1151 = vmatpush1.bf16.msra.mxu0 0
        %1152 = vmatprep.subr.bf16.mxu0 0
        %1153 = vmatpush1.bf16.msra.mxu0 0
        %1154 = vmatprep.subr.bf16.mxu0 0
        %1155 = vmatpush1.bf16.msra.mxu0 0
        %1156 = vmatprep.subr.bf16.mxu0 0
        %1157 = vmatpush1.bf16.msra.mxu0 0
        %1158 = vmatprep.mubr.bf16.mxu0 0
        %1159 = vmatmul.mubr.bf16.gmra.mrb[0].mxu0 0
        %v1160 = vpop.f32.mrb[0].mxu0
        %v1161 = vadd.f32 %v986, %v1160
        %v1162 = vpop.f32.mrb[0].mxu0
        %v1163 = vadd.f32 %v990, %v1162
        %v1164 = vpop.f32.mrb[0].mxu0
        %v1165 = vpop.f32.mrb[0].mxu0
        %1166 = vdwg.mxu0
        %1167 = vmatprep.subr.bf16.mxu0 0
        %1168 = vmatpush1.bf16.msra.mxu0 %v1080
        %1169 = vmatprep.subr.bf16.mxu0 0
        %1170 = vmatpush1.bf16.msra.mxu0 %v1083
        %1171 = vmatprep.subr.bf16.mxu0 0
        %1172 = vmatpush1.bf16.msra.mxu0 %v1086
        %1173 = vmatprep.subr.bf16.mxu0 0
        %1174 = vmatpush1.bf16.msra.mxu0 %v1089
        %1175 = vmatprep.subr.bf16.mxu0 0
        %1176 = vmatpush1.bf16.msra.mxu0 %v1092
        %1177 = vmatprep.subr.bf16.mxu0 0
        %1178 = vmatpush1.bf16.msra.mxu0 %v1095
        %1179 = vmatprep.subr.bf16.mxu0 0
        %1180 = vmatpush1.bf16.msra.mxu0 %v1098
        %1181 = vmatprep.subr.bf16.mxu0 0
        %1182 = vmatpush1.bf16.msra.mxu0 %v1101
        %1183 = vmatprep.subr.bf16.mxu0 0
        %1184 = vmatpush1.bf16.msra.mxu0 0
        %1185 = vmatprep.subr.bf16.mxu0 0
        %1186 = vmatpush1.bf16.msra.mxu0 0
        %1187 = vmatprep.subr.bf16.mxu0 0
        %1188 = vmatpush1.bf16.msra.mxu0 0
        %1189 = vmatprep.subr.bf16.mxu0 0
        %1190 = vmatpush1.bf16.msra.mxu0 0
        %1191 = vmatprep.subr.bf16.mxu0 0
        %1192 = vmatpush1.bf16.msra.mxu0 0
        %1193 = vmatprep.subr.bf16.mxu0 0
        %1194 = vmatpush1.bf16.msra.mxu0 0
        %1195 = vmatprep.subr.bf16.mxu0 0
        %1196 = vmatpush1.bf16.msra.mxu0 0
        %1197 = vmatprep.subr.bf16.mxu0 0
        %1198 = vmatpush1.bf16.msra.mxu0 0
        %1199 = vmatprep.mubr.bf16.mxu0 0
        %1200 = vmatmul.mubr.bf16.gmra.mrb[0].mxu0 0
        %v1201 = vpop.f32.mrb[0].mxu0
        %v1202 = vadd.f32 %v994, %v1201
        %v1203 = vpop.f32.mrb[0].mxu0
        %v1204 = vpop.f32.mrb[0].mxu0
        %v1205 = vpop.f32.mrb[0].mxu0
        %1206 = vdwg.mxu0
        %v1207 = vadd.f32 %v981, %v1161
        %v1208 = vxor.u32 %v1207, 2147483648
        %v1209 = vmul.f32 %v1208, 1.442695
        %v1210 = vpow.pop %v1209
        %v1211 = vadd.f32 %v1210, 1.0
        %v1212 = vrcp.pop %v1211
        %v1213 = vmul.f32 1.0, %v1212
        %v1215 = vrot.slane %v981, 2
        %v1217 = vadd.f32 %v1215, %v1163
        %v1218 = vxor.u32 %v1217, 2147483648
        %v1219 = vmul.f32 %v1218, 1.442695
        %v1220 = vpow.pop %v1219
        %v1221 = vadd.f32 %v1220, 1.0
        %v1222 = vrcp.pop %v1221
        %v1223 = vmul.f32 1.0, %v1222
        %v1224 = vmul.f32 %v1213, %v1202
        %v1225 = vrot.slane %v981, 4
        %v1227 = vadd.f32 %v1225, %v1224
        %v1228 = vtanh.pop %v1227
        %v1229 = vsub.f32 1.0, %v1223
        %v1230 = vmul.f32 %v1229, %v1228
        %v1231 = vmul.f32 %v1223, 0.0
        %v1232 = vadd.f32 %v1230, %v1231
        %s1233 = smul.u32 %s977, 2
        %s1234 = scalar_lea.vmem %s254, %s1233 [#allocation3]
        %1235 = vst [vmem:[%s1234] sm:$0x3] %v1232
        %s1236 = scalar_select %p976, 1, 3
        %s1237 = smul.u32 %s1236, 3
        %s1238 = smul.addr %s1237, 2
        %s1239 = scalar_lea.vmem [#allocation2], %s1238
        %v1240 = vld [vmem:[%s1239] sm:$0x3f]
        %v1241 = vpack.c.bf16 %v1232, %v1232
        %1242 = vmatprep.subr.bf16.mxu0 %v1079
        %1243 = vmatpush1.bf16.msra.mxu0 %v1078
        %1244 = vmatprep.subr.bf16.mxu0 %v1082
        %1245 = vmatpush1.bf16.msra.mxu0 %v1081
        %1246 = vmatprep.subr.bf16.mxu0 %v1085
        %1247 = vmatpush1.bf16.msra.mxu0 %v1084
        %1248 = vmatprep.subr.bf16.mxu0 %v1088
        %1249 = vmatpush1.bf16.msra.mxu0 %v1087
        %1250 = vmatprep.subr.bf16.mxu0 %v1091
        %1251 = vmatpush1.bf16.msra.mxu0 %v1090
        %1252 = vmatprep.subr.bf16.mxu0 %v1094
        %1253 = vmatpush1.bf16.msra.mxu0 %v1093
        %1254 = vmatprep.subr.bf16.mxu0 %v1097
        %1255 = vmatpush1.bf16.msra.mxu0 %v1096
        %1256 = vmatprep.subr.bf16.mxu0 %v1100
        %1257 = vmatpush1.bf16.msra.mxu0 %v1099
        %1258 = vmatprep.subr.bf16.mxu0 0
        %1259 = vmatpush1.bf16.msra.mxu0 0
        %1260 = vmatprep.subr.bf16.mxu0 0
        %1261 = vmatpush1.bf16.msra.mxu0 0
        %1262 = vmatprep.subr.bf16.mxu0 0
        %1263 = vmatpush1.bf16.msra.mxu0 0
        %1264 = vmatprep.subr.bf16.mxu0 0
        %1265 = vmatpush1.bf16.msra.mxu0 0
        %1266 = vmatprep.subr.bf16.mxu0 0
        %1267 = vmatpush1.bf16.msra.mxu0 0
        %1268 = vmatprep.subr.bf16.mxu0 0
        %1269 = vmatpush1.bf16.msra.mxu0 0
        %1270 = vmatprep.subr.bf16.mxu0 0
        %1271 = vmatpush1.bf16.msra.mxu0 0
        %1272 = vmatprep.subr.bf16.mxu0 0
        %1273 = vmatpush1.bf16.msra.mxu0 0
        %1274 = vmatprep.mubr.bf16.mxu0 0
        %1275 = vmatmul.mubr.bf16.gmra.mrb[0].mxu0 %v1241
        %v1276 = vpop.f32.mrb[0].mxu0
        %v1277 = vadd.f32 %v986, %v1276
        %v1278 = vpop.f32.mrb[0].mxu0
        %v1279 = vadd.f32 %v990, %v1278
        %v1280 = vpop.f32.mrb[0].mxu0
        %v1281 = vpop.f32.mrb[0].mxu0
        %1282 = vdwg.mxu0
        %1283 = vmatprep.subr.bf16.mxu0 0
        %1284 = vmatpush1.bf16.msra.mxu0 %v1080
        %1285 = vmatprep.subr.bf16.mxu0 0
        %1286 = vmatpush1.bf16.msra.mxu0 %v1083
        %1287 = vmatprep.subr.bf16.mxu0 0
        %1288 = vmatpush1.bf16.msra.mxu0 %v1086
        %1289 = vmatprep.subr.bf16.mxu0 0
        %1290 = vmatpush1.bf16.msra.mxu0 %v1089
        %1291 = vmatprep.subr.bf16.mxu0 0
        %1292 = vmatpush1.bf16.msra.mxu0 %v1092
        %1293 = vmatprep.subr.bf16.mxu0 0
        %1294 = vmatpush1.bf16.msra.mxu0 %v1095
        %1295 = vmatprep.subr.bf16.mxu0 0
        %1296 = vmatpush1.bf16.msra.mxu0 %v1098
        %1297 = vmatprep.subr.bf16.mxu0 0
        %1298 = vmatpush1.bf16.msra.mxu0 %v1101
        %1299 = vmatprep.subr.bf16.mxu0 0
        %1300 = vmatpush1.bf16.msra.mxu0 0
        %1301 = vmatprep.subr.bf16.mxu0 0
        %1302 = vmatpush1.bf16.msra.mxu0 0
        %1303 = vmatprep.subr.bf16.mxu0 0
        %1304 = vmatpush1.bf16.msra.mxu0 0
        %1305 = vmatprep.subr.bf16.mxu0 0
        %1306 = vmatpush1.bf16.msra.mxu0 0
        %1307 = vmatprep.subr.bf16.mxu0 0
        %1308 = vmatpush1.bf16.msra.mxu0 0
        %1309 = vmatprep.subr.bf16.mxu0 0
        %1310 = vmatpush1.bf16.msra.mxu0 0
        %1311 = vmatprep.subr.bf16.mxu0 0
        %1312 = vmatpush1.bf16.msra.mxu0 0
        %1313 = vmatprep.subr.bf16.mxu0 0
        %1314 = vmatpush1.bf16.msra.mxu0 0
        %1315 = vmatprep.mubr.bf16.mxu0 0
        %1316 = vmatmul.mubr.bf16.gmra.mrb[0].mxu0 %v1241
        %v1317 = vpop.f32.mrb[0].mxu0
        %v1318 = vadd.f32 %v994, %v1317
        %v1319 = vpop.f32.mrb[0].mxu0
        %v1320 = vpop.f32.mrb[0].mxu0
        %v1321 = vpop.f32.mrb[0].mxu0
        %1322 = vdwg.mxu0
        %v1323 = vadd.f32 %v1240, %v1277
        %v1324 = vxor.u32 %v1323, 2147483648
        %v1325 = vmul.f32 %v1324, 1.442695
        %v1326 = vpow.pop %v1325
        %v1327 = vadd.f32 %v1326, 1.0
        %v1328 = vrcp.pop %v1327
        %v1329 = vmul.f32 1.0, %v1328
        %v1331 = vrot.slane %v1240, 2
        %v1333 = vadd.f32 %v1331, %v1279
        %v1334 = vxor.u32 %v1333, 2147483648
        %v1335 = vmul.f32 %v1334, 1.442695
        %v1336 = vpow.pop %v1335
        %v1337 = vadd.f32 %v1336, 1.0
        %v1338 = vrcp.pop %v1337
        %v1339 = vmul.f32 1.0, %v1338
        %v1340 = vmul.f32 %v1329, %v1318
        %v1341 = vrot.slane %v1240, 4
        %v1343 = vadd.f32 %v1341, %v1340
        %v1344 = vtanh.pop %v1343
        %v1345 = vsub.f32 1.0, %v1339
        %v1346 = vmul.f32 %v1345, %v1344
        %v1347 = vmul.f32 %v1339, %v1232
        %v1348 = vadd.f32 %v1346, %v1347
        %s1349 = smul.u32 %s1236, 2
        %s1350 = scalar_lea.vmem %s254, %s1349 [#allocation3]
        %1351 = vst [vmem:[%s1350] sm:$0x3] %v1348
        %v1352 = vld [vmem:[%s915] sm:$0x3f]
        %v1353 = vpack.c.bf16 %v1348, %v1348
        %1354 = vmatprep.subr.bf16.mxu0 %v1079
        %1355 = vmatpush1.bf16.msra.mxu0 %v1078
        %1356 = vmatprep.subr.bf16.mxu0 %v1082
        %1357 = vmatpush1.bf16.msra.mxu0 %v1081
        %1358 = vmatprep.subr.bf16.mxu0 %v1085
        %1359 = vmatpush1.bf16.msra.mxu0 %v1084
        %1360 = vmatprep.subr.bf16.mxu0 %v1088
        %1361 = vmatpush1.bf16.msra.mxu0 %v1087
        %1362 = vmatprep.subr.bf16.mxu0 %v1091
        %1363 = vmatpush1.bf16.msra.mxu0 %v1090
        %1364 = vmatprep.subr.bf16.mxu0 %v1094
        %1365 = vmatpush1.bf16.msra.mxu0 %v1093
        %1366 = vmatprep.subr.bf16.mxu0 %v1097
        %1367 = vmatpush1.bf16.msra.mxu0 %v1096
        %1368 = vmatprep.subr.bf16.mxu0 %v1100
        %1369 = vmatpush1.bf16.msra.mxu0 %v1099
        %1370 = vmatprep.subr.bf16.mxu0 0
        %1371 = vmatpush1.bf16.msra.mxu0 0
        %1372 = vmatprep.subr.bf16.mxu0 0
        %1373 = vmatpush1.bf16.msra.mxu0 0
        %1374 = vmatprep.subr.bf16.mxu0 0
        %1375 = vmatpush1.bf16.msra.mxu0 0
        %1376 = vmatprep.subr.bf16.mxu0 0
        %1377 = vmatpush1.bf16.msra.mxu0 0
        %1378 = vmatprep.subr.bf16.mxu0 0
        %1379 = vmatpush1.bf16.msra.mxu0 0
        %1380 = vmatprep.subr.bf16.mxu0 0
        %1381 = vmatpush1.bf16.msra.mxu0 0
        %1382 = vmatprep.subr.bf16.mxu0 0
        %1383 = vmatpush1.bf16.msra.mxu0 0
        %1384 = vmatprep.subr.bf16.mxu0 0
        %1385 = vmatpush1.bf16.msra.mxu0 0
        %1386 = vmatprep.mubr.bf16.mxu0 0
        %1387 = vmatmul.mubr.bf16.gmra.mrb[0].mxu0 %v1353
        %v1388 = vpop.f32.mrb[0].mxu0
        %v1389 = vadd.f32 %v986, %v1388
        %v1390 = vpop.f32.mrb[0].mxu0
        %v1391 = vadd.f32 %v990, %v1390
        %v1392 = vpop.f32.mrb[0].mxu0
        %v1393 = vpop.f32.mrb[0].mxu0
        %1394 = vdwg.mxu0
        %1395 = vmatprep.subr.bf16.mxu0 0
        %1396 = vmatpush1.bf16.msra.mxu0 %v1080
        %1397 = vmatprep.subr.bf16.mxu0 0
        %1398 = vmatpush1.bf16.msra.mxu0 %v1083
        %1399 = vmatprep.subr.bf16.mxu0 0
        %1400 = vmatpush1.bf16.msra.mxu0 %v1086
        %1401 = vmatprep.subr.bf16.mxu0 0
        %1402 = vmatpush1.bf16.msra.mxu0 %v1089
        %1403 = vmatprep.subr.bf16.mxu0 0
        %1404 = vmatpush1.bf16.msra.mxu0 %v1092
        %1405 = vmatprep.subr.bf16.mxu0 0
        %1406 = vmatpush1.bf16.msra.mxu0 %v1095
        %1407 = vmatprep.subr.bf16.mxu0 0
        %1408 = vmatpush1.bf16.msra.mxu0 %v1098
        %1409 = vmatprep.subr.bf16.mxu0 0
        %1410 = vmatpush1.bf16.msra.mxu0 %v1101
        %1411 = vmatprep.subr.bf16.mxu0 0
        %1412 = vmatpush1.bf16.msra.mxu0 0
        %1413 = vmatprep.subr.bf16.mxu0 0
        %1414 = vmatpush1.bf16.msra.mxu0 0
        %1415 = vmatprep.subr.bf16.mxu0 0
        %1416 = vmatpush1.bf16.msra.mxu0 0
        %1417 = vmatprep.subr.bf16.mxu0 0
        %1418 = vmatpush1.bf16.msra.mxu0 0
        %1419 = vmatprep.subr.bf16.mxu0 0
        %1420 = vmatpush1.bf16.msra.mxu0 0
        %1421 = vmatprep.subr.bf16.mxu0 0
        %1422 = vmatpush1.bf16.msra.mxu0 0
        %1423 = vmatprep.subr.bf16.mxu0 0
        %1424 = vmatpush1.bf16.msra.mxu0 0
        %1425 = vmatprep.subr.bf16.mxu0 0
        %1426 = vmatpush1.bf16.msra.mxu0 0
        %1427 = vmatprep.mubr.bf16.mxu0 0
        %1428 = vmatmul.mubr.bf16.gmra.mrb[0].mxu0 %v1353
        %v1429 = vpop.f32.mrb[0].mxu0
        %v1430 = vadd.f32 %v994, %v1429
        %v1431 = vpop.f32.mrb[0].mxu0
        %v1432 = vpop.f32.mrb[0].mxu0
        %v1433 = vpop.f32.mrb[0].mxu0
        %1434 = vdwg.mxu0
        %v1435 = vadd.f32 %v1352, %v1389
        %v1436 = vxor.u32 %v1435, 2147483648
        %v1437 = vmul.f32 %v1436, 1.442695
        %v1438 = vpow.pop %v1437
        %v1439 = vadd.f32 %v1438, 1.0
        %v1440 = vrcp.pop %v1439
        %v1441 = vmul.f32 1.0, %v1440
        %v1443 = vrot.slane %v1352, 2
        %v1445 = vadd.f32 %v1443, %v1391
        %v1446 = vxor.u32 %v1445, 2147483648
        %v1447 = vmul.f32 %v1446, 1.442695
        %v1448 = vpow.pop %v1447
        %v1449 = vadd.f32 %v1448, 1.0
        %v1450 = vrcp.pop %v1449
        %v1451 = vmul.f32 1.0, %v1450
        %v1452 = vmul.f32 %v1441, %v1430
        %v1453 = vrot.slane %v1352, 4
        %v1455 = vadd.f32 %v1453, %v1452
        %v1456 = vtanh.pop %v1455
        %v1457 = vsub.f32 1.0, %v1451
        %v1458 = vmul.f32 %v1457, %v1456
        %v1459 = vmul.f32 %v1451, %v1348
        %v1460 = vadd.f32 %v1458, %v1459
        %s1461 = scalar_lea.vmem %s254, 4 [#allocation3]
        %1462 = vst [vmem:[%s1461] sm:$0x3] %v1460
        %s1463 = scalar_select %p976, 3, 1
        %s1464 = smul.u32 %s1463, 3
        %s1465 = smul.addr %s1464, 2
        %s1466 = scalar_lea.vmem [#allocation2], %s1465
        %v1467 = vld [vmem:[%s1466] sm:$0x3f]
        %v1468 = vpack.c.bf16 %v1460, %v1460
        %1469 = vmatprep.subr.bf16.mxu0 %v1079
        %1470 = vmatpush1.bf16.msra.mxu0 %v1078
        %1471 = vmatprep.subr.bf16.mxu0 %v1082
        %1472 = vmatpush1.bf16.msra.mxu0 %v1081
        %1473 = vmatprep.subr.bf16.mxu0 %v1085
        %1474 = vmatpush1.bf16.msra.mxu0 %v1084
        %1475 = vmatprep.subr.bf16.mxu0 %v1088
        %1476 = vmatpush1.bf16.msra.mxu0 %v1087
        %1477 = vmatprep.subr.bf16.mxu0 %v1091
        %1478 = vmatpush1.bf16.msra.mxu0 %v1090
        %1479 = vmatprep.subr.bf16.mxu0 %v1094
        %1480 = vmatpush1.bf16.msra.mxu0 %v1093
        %1481 = vmatprep.subr.bf16.mxu0 %v1097
        %1482 = vmatpush1.bf16.msra.mxu0 %v1096
        %1483 = vmatprep.subr.bf16.mxu0 %v1100
        %1484 = vmatpush1.bf16.msra.mxu0 %v1099
        %1485 = vmatprep.subr.bf16.mxu0 0
        %1486 = vmatpush1.bf16.msra.mxu0 0
        %1487 = vmatprep.subr.bf16.mxu0 0
        %1488 = vmatpush1.bf16.msra.mxu0 0
        %1489 = vmatprep.subr.bf16.mxu0 0
        %1490 = vmatpush1.bf16.msra.mxu0 0
        %1491 = vmatprep.subr.bf16.mxu0 0
        %1492 = vmatpush1.bf16.msra.mxu0 0
        %1493 = vmatprep.subr.bf16.mxu0 0
        %1494 = vmatpush1.bf16.msra.mxu0 0
        %1495 = vmatprep.subr.bf16.mxu0 0
        %1496 = vmatpush1.bf16.msra.mxu0 0
        %1497 = vmatprep.subr.bf16.mxu0 0
        %1498 = vmatpush1.bf16.msra.mxu0 0
        %1499 = vmatprep.subr.bf16.mxu0 0
        %1500 = vmatpush1.bf16.msra.mxu0 0
        %1501 = vmatprep.mubr.bf16.mxu0 0
        %1502 = vmatmul.mubr.bf16.gmra.mrb[0].mxu0 %v1468
        %v1503 = vpop.f32.mrb[0].mxu0
        %v1504 = vadd.f32 %v986, %v1503
        %v1505 = vpop.f32.mrb[0].mxu0
        %v1506 = vadd.f32 %v990, %v1505
        %v1507 = vpop.f32.mrb[0].mxu0
        %v1508 = vpop.f32.mrb[0].mxu0
        %1509 = vdwg.mxu0
        %1510 = vmatprep.subr.bf16.mxu0 0
        %1511 = vmatpush1.bf16.msra.mxu0 %v1080
        %1512 = vmatprep.subr.bf16.mxu0 0
        %1513 = vmatpush1.bf16.msra.mxu0 %v1083
        %1514 = vmatprep.subr.bf16.mxu0 0
        %1515 = vmatpush1.bf16.msra.mxu0 %v1086
        %1516 = vmatprep.subr.bf16.mxu0 0
        %1517 = vmatpush1.bf16.msra.mxu0 %v1089
        %1518 = vmatprep.subr.bf16.mxu0 0
        %1519 = vmatpush1.bf16.msra.mxu0 %v1092
        %1520 = vmatprep.subr.bf16.mxu0 0
        %1521 = vmatpush1.bf16.msra.mxu0 %v1095
        %1522 = vmatprep.subr.bf16.mxu0 0
        %1523 = vmatpush1.bf16.msra.mxu0 %v1098
        %1524 = vmatprep.subr.bf16.mxu0 0
        %1525 = vmatpush1.bf16.msra.mxu0 %v1101
        %1526 = vmatprep.subr.bf16.mxu0 0
        %1527 = vmatpush1.bf16.msra.mxu0 0
        %1528 = vmatprep.subr.bf16.mxu0 0
        %1529 = vmatpush1.bf16.msra.mxu0 0
        %1530 = vmatprep.subr.bf16.mxu0 0
        %1531 = vmatpush1.bf16.msra.mxu0 0
        %1532 = vmatprep.subr.bf16.mxu0 0
        %1533 = vmatpush1.bf16.msra.mxu0 0
        %1534 = vmatprep.subr.bf16.mxu0 0
        %1535 = vmatpush1.bf16.msra.mxu0 0
        %1536 = vmatprep.subr.bf16.mxu0 0
        %1537 = vmatpush1.bf16.msra.mxu0 0
        %1538 = vmatprep.subr.bf16.mxu0 0
        %1539 = vmatpush1.bf16.msra.mxu0 0
        %1540 = vmatprep.subr.bf16.mxu0 0
        %1541 = vmatpush1.bf16.msra.mxu0 0
        %1542 = vmatprep.mubr.bf16.mxu0 0
        %1543 = vmatmul.mubr.bf16.gmra.mrb[0].mxu0 %v1468
        %v1544 = vpop.f32.mrb[0].mxu0
        %v1545 = vadd.f32 %v994, %v1544
        %v1546 = vpop.f32.mrb[0].mxu0
        %v1547 = vpop.f32.mrb[0].mxu0
        %v1548 = vpop.f32.mrb[0].mxu0
        %1549 = vdwg.mxu0
        %v1550 = vadd.f32 %v1467, %v1504
        %v1551 = vxor.u32 %v1550, 2147483648
        %v1552 = vmul.f32 %v1551, 1.442695
        %v1553 = vpow.pop %v1552
        %v1554 = vadd.f32 %v1553, 1.0
        %v1555 = vrcp.pop %v1554
        %v1556 = vmul.f32 1.0, %v1555
        %v1558 = vrot.slane %v1467, 2
        %v1560 = vadd.f32 %v1558, %v1506
        %v1561 = vxor.u32 %v1560, 2147483648
        %v1562 = vmul.f32 %v1561, 1.442695
        %v1563 = vpow.pop %v1562
        %v1564 = vadd.f32 %v1563, 1.0
        %v1565 = vrcp.pop %v1564
        %v1566 = vmul.f32 1.0, %v1565
        %v1567 = vmul.f32 %v1556, %v1545
        %v1568 = vrot.slane %v1467, 4
        %v1570 = vadd.f32 %v1568, %v1567
        %v1571 = vtanh.pop %v1570
        %v1572 = vsub.f32 1.0, %v1566
        %v1573 = vmul.f32 %v1572, %v1571
        %v1574 = vmul.f32 %v1566, %v1460
        %v1575 = vadd.f32 %v1573, %v1574
        %s1576 = smul.u32 %s1463, 2
        %s1577 = scalar_lea.vmem %s254, %s1576 [#allocation3]
        %1578 = vst [vmem:[%s1577] sm:$0x3] %v1575
        %s1579 = scalar_select %p976, 4, 0
        %s1580 = smul.u32 %s1579, 3
        %s1581 = smul.addr %s1580, 2
        %s1582 = scalar_lea.vmem [#allocation2], %s1581
        %v1583 = vld [vmem:[%s1582] sm:$0x3f]
        %v1584 = vpack.c.bf16 %v1575, %v1575
        %1585 = vmatprep.subr.bf16.mxu0 %v1079
        %1586 = vmatpush1.bf16.msra.mxu0 %v1078
        %1587 = vmatprep.subr.bf16.mxu0 %v1082
        %1588 = vmatpush1.bf16.msra.mxu0 %v1081
        %1589 = vmatprep.subr.bf16.mxu0 %v1085
        %1590 = vmatpush1.bf16.msra.mxu0 %v1084
        %1591 = vmatprep.subr.bf16.mxu0 %v1088
        %1592 = vmatpush1.bf16.msra.mxu0 %v1087
        %1593 = vmatprep.subr.bf16.mxu0 %v1091
        %1594 = vmatpush1.bf16.msra.mxu0 %v1090
        %1595 = vmatprep.subr.bf16.mxu0 %v1094
        %1596 = vmatpush1.bf16.msra.mxu0 %v1093
        %1597 = vmatprep.subr.bf16.mxu0 %v1097
        %1598 = vmatpush1.bf16.msra.mxu0 %v1096
        %1599 = vmatprep.subr.bf16.mxu0 %v1100
        %1600 = vmatpush1.bf16.msra.mxu0 %v1099
        %1601 = vmatprep.subr.bf16.mxu0 0
        %1602 = vmatpush1.bf16.msra.mxu0 0
        %1603 = vmatprep.subr.bf16.mxu0 0
        %1604 = vmatpush1.bf16.msra.mxu0 0
        %1605 = vmatprep.subr.bf16.mxu0 0
        %1606 = vmatpush1.bf16.msra.mxu0 0
        %1607 = vmatprep.subr.bf16.mxu0 0
        %1608 = vmatpush1.bf16.msra.mxu0 0
        %1609 = vmatprep.subr.bf16.mxu0 0
        %1610 = vmatpush1.bf16.msra.mxu0 0
        %1611 = vmatprep.subr.bf16.mxu0 0
        %1612 = vmatpush1.bf16.msra.mxu0 0
        %1613 = vmatprep.subr.bf16.mxu0 0
        %1614 = vmatpush1.bf16.msra.mxu0 0
        %1615 = vmatprep.subr.bf16.mxu0 0
        %1616 = vmatpush1.bf16.msra.mxu0 0
        %1617 = vmatprep.mubr.bf16.mxu0 0
        %1618 = vmatmul.mubr.bf16.gmra.mrb[0].mxu0 %v1584
        %v1619 = vpop.f32.mrb[0].mxu0
        %v1620 = vadd.f32 %v986, %v1619
        %v1621 = vpop.f32.mrb[0].mxu0
        %v1622 = vadd.f32 %v990, %v1621
        %v1623 = vpop.f32.mrb[0].mxu0
        %v1624 = vpop.f32.mrb[0].mxu0
        %1625 = vdwg.mxu0
        %1626 = vmatprep.subr.bf16.mxu0 0
        %1627 = vmatpush1.bf16.msra.mxu0 %v1080
        %1628 = vmatprep.subr.bf16.mxu0 0
        %1629 = vmatpush1.bf16.msra.mxu0 %v1083
        %1630 = vmatprep.subr.bf16.mxu0 0
        %1631 = vmatpush1.bf16.msra.mxu0 %v1086
        %1632 = vmatprep.subr.bf16.mxu0 0
        %1633 = vmatpush1.bf16.msra.mxu0 %v1089
        %1634 = vmatprep.subr.bf16.mxu0 0
        %1635 = vmatpush1.bf16.msra.mxu0 %v1092
        %1636 = vmatprep.subr.bf16.mxu0 0
        %1637 = vmatpush1.bf16.msra.mxu0 %v1095
        %1638 = vmatprep.subr.bf16.mxu0 0
        %1639 = vmatpush1.bf16.msra.mxu0 %v1098
        %1640 = vmatprep.subr.bf16.mxu0 0
        %1641 = vmatpush1.bf16.msra.mxu0 %v1101
        %1642 = vmatprep.subr.bf16.mxu0 0
        %1643 = vmatpush1.bf16.msra.mxu0 0
        %1644 = vmatprep.subr.bf16.mxu0 0
        %1645 = vmatpush1.bf16.msra.mxu0 0
        %1646 = vmatprep.subr.bf16.mxu0 0
        %1647 = vmatpush1.bf16.msra.mxu0 0
        %1648 = vmatprep.subr.bf16.mxu0 0
        %1649 = vmatpush1.bf16.msra.mxu0 0
        %1650 = vmatprep.subr.bf16.mxu0 0
        %1651 = vmatpush1.bf16.msra.mxu0 0
        %1652 = vmatprep.subr.bf16.mxu0 0
        %1653 = vmatpush1.bf16.msra.mxu0 0
        %1654 = vmatprep.subr.bf16.mxu0 0
        %1655 = vmatpush1.bf16.msra.mxu0 0
        %1656 = vmatprep.subr.bf16.mxu0 0
        %1657 = vmatpush1.bf16.msra.mxu0 0
        %1658 = vmatprep.mubr.bf16.mxu0 0
        %1659 = vmatmul.mubr.bf16.gmra.mrb[0].mxu0 %v1584
        %v1660 = vpop.f32.mrb[0].mxu0
        %v1661 = vadd.f32 %v994, %v1660
        %v1662 = vpop.f32.mrb[0].mxu0
        %v1663 = vpop.f32.mrb[0].mxu0
        %v1664 = vpop.f32.mrb[0].mxu0
        %1665 = vdwg.mxu0
        %v1666 = vadd.f32 %v1583, %v1620
        %v1667 = vxor.u32 %v1666, 2147483648
        %v1668 = vmul.f32 %v1667, 1.442695
        %v1669 = vpow.pop %v1668
        %v1670 = vadd.f32 %v1669, 1.0
        %v1671 = vrcp.pop %v1670
        %v1672 = vmul.f32 1.0, %v1671
        %v1674 = vrot.slane %v1583, 2
        %v1676 = vadd.f32 %v1674, %v1622
        %v1677 = vxor.u32 %v1676, 2147483648
        %v1678 = vmul.f32 %v1677, 1.442695
        %v1679 = vpow.pop %v1678
        %v1680 = vadd.f32 %v1679, 1.0
        %v1681 = vrcp.pop %v1680
        %v1682 = vmul.f32 1.0, %v1681
        %v1683 = vmul.f32 %v1672, %v1661
        %v1684 = vrot.slane %v1583, 4
        %v1686 = vadd.f32 %v1684, %v1683
        %v1687 = vtanh.pop %v1686
        %v1688 = vsub.f32 1.0, %v1682
        %v1689 = vmul.f32 %v1688, %v1687
        %v1690 = vmul.f32 %v1682, %v1575
        %v1691 = vadd.f32 %v1689, %v1690
        %s1692 = smul.u32 %s1579, 2
        %s1693 = scalar_lea.vmem %s254, %s1692 [#allocation3]
        %1694 = vst [vmem:[%s1693] sm:$0x3] %v1691
        %s1695 = sand.u32 %s149, 1
        %s1696 = sand.u32 %s149, 1
        %s1697 = smul.addr %s1696, 10
        %s1698 = scalar_lea.vmem [#allocation3], %s1697
        // Predicated region
        $region41: #{crnn_forward.11} parent=39 // pred_check
          %p1699 = pneg %p159
        $region42: #{crnn_forward.11} parent=39 // pred_check_branch
          %1701 = sbr.rel (%p1699) target = $region44
        $region43: #{crnn_forward.11} parent=39 // pred_region
          %s1702 = smul.addr %s16, 2
          %s1703 = scalar_lea.vmem %s5, %s1702
          // Predicated region
          $region45: #{crnn_forward.11} parent=43 // pred_check
            _
          $region46: #{crnn_forward.11} parent=43 // pred_check_branch
            %1705 = sbr.rel (0) target = $region48
          $region47: #{crnn_forward.11} parent=43 // pred_region
            // Predicated region
            $region49: #{crnn_forward.11} parent=47 // pred_check
              _
            $region50: #{crnn_forward.11} parent=47 // pred_check_branch
              %1707 = sbr.rel target = $region52
            $region51: #{crnn_forward.11} parent=47 // pred_region
              // Predicated region
              $region64: #{crnn_forward.11} parent=51 // pred_check
                _
              $region65: #{crnn_forward.11} parent=51 // pred_check_branch
                %1730 = sbr.rel (0) target = $region67
              $region66: #{crnn_forward.11} parent=51 // pred_region
                loop: start=0, step=1, limit=1
                $region68: #{crnn_forward.11} parent=66 // loop_pre_header
                  _
                $region69: #{crnn_forward.11} parent=66 // loop_header
                  %s1732 = sphi 0, %s1736
                  %p1733 = scmp.ge.s32.totalorder %s1732, 1
                  %s1737 = sphi %s1698, %s1698
                  %s1738 = sphi %s1703, %s1703
                $region70: #{crnn_forward.11} parent=66 // loop_header_branch
                  %1735 = sbr.rel (%p1733) target = $region74
                $region71: #{crnn_forward.11} parent=66 // loop_body
                  _
                $region72: #{crnn_forward.11} parent=66 // loop_footer
                  %s1736 = sadd.s32 1, %s1732
                $region73: #{crnn_forward.11} parent=66 // loop_footer_branch
                  %1731 = sbr.rel target = $region69
                $region74: #{crnn_forward.11} parent=66 // loop_exit
                  _
                loop: start=0, step=1, limit=1
                $region75: #{crnn_forward.11} parent=66 // loop_pre_header
                  _
                $region76: #{crnn_forward.11} parent=66 // loop_header
                  %s1741 = sphi 0, %s1745
                  %p1742 = scmp.ge.s32.totalorder %s1741, 1
                  %s1746 = sphi %s1698, %s1698
                  %s1747 = sphi %s1703, %s1703
                $region77: #{crnn_forward.11} parent=66 // loop_header_branch
                  %1744 = sbr.rel (%p1742) target = $region81
                $region78: #{crnn_forward.11} parent=66 // loop_body
                  %v1748 = vld [vmem:[%s1746] sm:$0x3]
                  %1749 = vst [vmem:[%s1747] sm:$0x3] %v1748
                  %v1750 = vld [vmem:[%s1746 + $0x2] sm:$0x3]
                  %1751 = vst [vmem:[%s1747 + $0x4] sm:$0x3] %v1750
                  %v1752 = vld [vmem:[%s1746 + $0x4] sm:$0x3]
                  %1753 = vst [vmem:[%s1747 + $0x8] sm:$0x3] %v1752
                  %v1754 = vld [vmem:[%s1746 + $0x6] sm:$0x3]
                  %1755 = vst [vmem:[%s1747 + $0xc] sm:$0x3] %v1754
                  %v1756 = vld [vmem:[%s1746 + $0x8] sm:$0x3]
                  %1757 = vst [vmem:[%s1747 + $0x10] sm:$0x3] %v1756
                $region79: #{crnn_forward.11} parent=66 // loop_footer
                  %s1745 = sadd.s32 1, %s1741
                $region80: #{crnn_forward.11} parent=66 // loop_footer_branch
                  %1740 = sbr.rel target = $region76
                $region81: #{crnn_forward.11} parent=66 // loop_exit
                  _
              $region67: #{crnn_forward.11} parent=51 // pred_fallthru
                _
            $region52: #{crnn_forward.11} parent=47 // pred_fallthru
              _
            // Predicated region
            $region53: #{crnn_forward.11} parent=47 // pred_check
              _
            $region54: #{crnn_forward.11} parent=47 // pred_check_branch
              %1709 = sbr.rel (0) target = $region56
            $region55: #{crnn_forward.11} parent=47 // pred_region
              loop: start=0, step=1, limit=1
              $region57: #{crnn_forward.11} parent=55 // loop_pre_header
                _
              $region58: #{crnn_forward.11} parent=55 // loop_header
                %s1712 = sphi 0, %s1716
                %p1713 = scmp.ge.s32.totalorder %s1712, 1
                %s1717 = sphi %s1698, %s1698
                %s1718 = sphi %s1703, %s1703
              $region59: #{crnn_forward.11} parent=55 // loop_header_branch
                %1715 = sbr.rel (%p1713) target = $region63
              $region60: #{crnn_forward.11} parent=55 // loop_body
                %v1719 = vld [vmem:[%s1717] sm:$0x3]
                %1720 = vst [vmem:[%s1718] sm:$0x3] %v1719
                %v1721 = vld [vmem:[%s1717 + $0x2] sm:$0x3]
                %1722 = vst [vmem:[%s1718 + $0x4] sm:$0x3] %v1721
                %v1723 = vld [vmem:[%s1717 + $0x4] sm:$0x3]
                %1724 = vst [vmem:[%s1718 + $0x8] sm:$0x3] %v1723
                %v1725 = vld [vmem:[%s1717 + $0x6] sm:$0x3]
                %1726 = vst [vmem:[%s1718 + $0xc] sm:$0x3] %v1725
                %v1727 = vld [vmem:[%s1717 + $0x8] sm:$0x3]
                %1728 = vst [vmem:[%s1718 + $0x10] sm:$0x3] %v1727
              $region61: #{crnn_forward.11} parent=55 // loop_footer
                %s1716 = sadd.s32 1, %s1712
              $region62: #{crnn_forward.11} parent=55 // loop_footer_branch
                %1711 = sbr.rel target = $region58
              $region63: #{crnn_forward.11} parent=55 // loop_exit
                _
            $region56: #{crnn_forward.11} parent=47 // pred_fallthru
              _
          $region48: #{crnn_forward.11} parent=43 // pred_fallthru
            _
          %1758 = vnop
        $region44: #{crnn_forward.11} parent=39 // pred_fallthru
          _
      $region40: #{crnn_forward.11} parent=5 // pred_fallthru
        _
      %p1759 = scmp.le.s32.totalorder 2, %s11
      // Predicated region
      $region82: #{crnn_forward.11} parent=5 // pred_check
        %p1760 = pneg %p1759
      $region83: #{crnn_forward.11} parent=5 // pred_check_branch
        %1762 = sbr.rel (%p1760) target = $region85
      $region84: #{crnn_forward.11} parent=5 // pred_region
        %s1763 = ssub.s32 %s11, 2
        // Predicated region
        $region86: #{crnn_forward.11} parent=84 // pred_check
          %p1764 = pneg %p165
        $region87: #{crnn_forward.11} parent=84 // pred_check_branch
          %1766 = sbr.rel (%p1764) target = $region89
        $region88: #{crnn_forward.11} parent=84 // pred_region
          %s1767 = sand.u32 %s150, 1
          %s1768 = sand.u32 %s150, 1
          %s1769 = smul.addr %s1768, 10
          %s1770 = scalar_lea.vmem [#allocation3], %s1769
        $region89: #{crnn_forward.11} parent=84 // pred_fallthru
          _
      $region85: #{crnn_forward.11} parent=5 // pred_fallthru
        _
    $region6: #{crnn_forward.11} parent=1 // loop_footer
      %s15 = sadd.s32 1, %s11
    $region7: #{crnn_forward.11} parent=1 // loop_footer_branch
      %10 = sbr.rel target = $region3
    $region8: #{crnn_forward.11} parent=1 // loop_exit
      _

</llo_original>
